<compile_context>
chip_gen: v6e
topology: v6e:2x2x1
jax: 0.10.0
libtpu: 0.0.40
codegen_flags: <defaults>
</compile_context>

<pallas_src>
import functools

import numpy as np
import jax
import jax.numpy as jnp
from jax.experimental import pallas as pl
from jax.experimental.pallas import tpu as pltpu


def _round_up(x, m):
    return ((x + m - 1) // m) * m


# ----------------------------------------------------------------------------
# Static geometry of the conv stack in the "flat padded" layout.
# ----------------------------------------------------------------------------
def compute_geometry(im_size, params_cnn, kernel_sizes):
    _, H, W = im_size
    pool_k = kernel_sizes[2]
    pool_s = 2
    n_conv = len(params_cnn) - 1
    geom = []
    h, w = H, W
    for i in range(n_conv):
        k = kernel_sizes[i]
        assert k % 2 == 1, "only odd ('same') conv kernels supported"
        pad = (k - 1) // 2
        cin, cout = params_cnn[i], params_cnn[i + 1]
        if i > 0:
            assert cin % 8 == 0, "previous cout must be sublane (8) aligned"
        cin_p = _round_up(cin, 8)               # sublane-aligned channel count
        pooled = i < n_conv - 2                 # pool after conv_1 .. conv_3
        hp, wp = h + 2 * pad, w + 2 * pad
        lp = hp * wp                            # per-image padded flat length
        reach = (k - 1) * wp + (k - 1)          # max conv tap offset
        if pooled:
            reach = max(reach, (pool_k - 1) * wp + (pool_k - 1))
        ext = reach
        geom.append(dict(cin=cin, cin_p=cin_p, cout=cout, k=k, pad=pad,
                         h=h, w=w, hp=hp, wp=wp, lp=lp, ext=ext,
                         olen=lp + ext, alen=lp + 2 * ext,
                         pooled=pooled, pool_k=pool_k, pool_s=pool_s))
        if pooled:
            h = (h - pool_k) // pool_s + 1
            w = (w - pool_k) // pool_s + 1
    return geom


def build_repack_matrix(g, gnext):
    """Constant 0/1 matrix fusing (optional stride-2 max-pool anchor selection)
    with re-padding into the next conv layer's flat padded layout."""
    R = np.zeros((g['lp'], gnext['alen']), np.float32)
    po = gnext['pad']
    if g['pooled']:
        pk, ps = g['pool_k'], g['pool_s']
        ho = (g['h'] - pk) // ps + 1
        wo = (g['w'] - pk) // ps + 1
        for yo in range(ho):
            for xo in range(wo):
                R[ps * (yo * g['wp'] + xo),
                  (yo + po) * gnext['wp'] + (xo + po)] = 1.0
    else:
        for y in range(g['h']):
            for x in range(g['w']):
                R[y * g['wp'] + x, (y + po) * gnext['wp'] + (x + po)] = 1.0
    return R


# ----------------------------------------------------------------------------
# Parameter setup (deterministic; mirrors the PyTorch module's shapes).
# ----------------------------------------------------------------------------
def init_params(key, geom, n_classes):
    params = {}
    n_conv = len(geom)
    keys = jax.random.split(key, 2 * n_conv + 6)
    ki = 0
    for i, g in enumerate(geom):
        k, cin, cout = g['k'], g['cin'], g['cout']
        w = jax.random.normal(keys[ki], (k, k, cin, cout), jnp.float32) / np.sqrt(k * k * cin)
        ki += 1
        b = jax.random.normal(keys[ki], (cout,), jnp.float32) * 0.01
        ki += 1
        # BatchNorm2d default stats, eval mode.
        gamma = jnp.ones((cout,), jnp.float32)
        beta = jnp.zeros((cout,), jnp.float32)
        mean = jnp.zeros((cout,), jnp.float32)
        var = jnp.ones((cout,), jnp.float32)
        params[f"conv_{i + 1}"] = (w, b, gamma, beta, mean, var)
    gl = geom[-1]
    in_shape = gl['cout'] * gl['h'] * gl['w']
    dims = [(in_shape, in_shape), (in_shape, in_shape // 2), (in_shape // 2, n_classes)]
    for j, (din, dout) in enumerate(dims):
        w = jax.random.normal(keys[ki], (din, dout), jnp.float32) / np.sqrt(din)
        ki += 1
        b = jax.random.normal(keys[ki], (dout,), jnp.float32) * 0.01
        ki += 1
        params[f"linear_{j + 1}"] = (w, b)
    return params


def pack_params(params, geom, eps=1e-5):
    """Repack torch-style parameters into the fused kernel's operand list."""
    ops = []
    n_conv = len(geom)
    for i, g in enumerate(geom):
        w, b, gamma, beta, mean, var = params[f"conv_{i + 1}"]
        k, cin, cin_p, cout = g['k'], g['cin'], g['cin_p'], g['cout']
        w = jnp.pad(w, ((0, 0), (0, 0), (0, cin_p - cin), (0, 0)))
        wmat = w.reshape(k * k * cin_p, cout).T             # (cout, k*k*cin_p)
        scale = gamma / jnp.sqrt(var + eps)
        wmat = wmat * scale[:, None]                        # BN scale folded into W
        shift = beta + (b - mean) * scale                   # conv bias + BN shift
        ops += [wmat, shift.reshape(cout, 1)]
    # Repack matrices in bf16 (0/1 exact; halves VMEM residency + MXU feed).
    for i in range(n_conv - 1):
        ops.append(jnp.asarray(build_repack_matrix(geom[i], geom[i + 1]),
                               dtype=jnp.bfloat16))
    # linear_1 with the NCHW flatten folded into its (re-ordered) rows.
    gl = geom[-1]
    c5, h5, w5, wp5 = gl['cout'], gl['h'], gl['w'], gl['wp']
    ml = h5 * wp5
    w1, b1 = params["linear_1"]
    w1_np = np.asarray(w1)
    w1big = np.zeros((c5 * ml, w1_np.shape[1]), np.float32)
    for c in range(c5):
        for y in range(h5):
            for x in range(w5):
                w1big[c * ml + y * wp5 + x] = w1_np[c * h5 * w5 + y * w5 + x]
    w2, b2 = params["linear_2"]
    w3, b3 = params["linear_3"]
    ncls = w3.shape[1]
    assert ncls <= 128
    w3p = jnp.pad(w3, ((0, 0), (0, 128 - ncls)))            # lane-dense output slab
    b3p = jnp.pad(b3.reshape(1, -1), ((0, 0), (0, 128 - ncls)))
    ops += [jnp.asarray(w1big), b1.reshape(1, -1),
            w2, b2.reshape(1, -1), w3p, b3p]
    return ops


# ----------------------------------------------------------------------------
# The single fused kernel: conv stack + pools + flatten + MLP.
# `nimg` images are processed per grid step, each in its own 128-aligned lane
# segment of width strides[i].
# ----------------------------------------------------------------------------
def make_kernel(geom, nimg, strides):
    n_conv = len(geom)

    def kernel(*refs):
        a_ref = refs[0]
        pos = 1
        conv_p = []
        for _ in range(n_conv):
            conv_p.append(refs[pos:pos + 2])                # (folded W, shift)
            pos += 2
        r_refs = refs[pos:pos + n_conv - 1]
        pos += n_conv - 1
        w1_ref, b1_ref, w2_ref, b2_ref, w3_ref, b3_ref = refs[pos:pos + 6]
        pos += 6
        out_ref = refs[pos]
        xcol = refs[pos + 1]

        # Per-image activations in the flat padded (C, Hp*Wp + slack) layout.
        acts = [a_ref[b] for b in range(nimg)]
        bn = None
        for i, g in enumerate(geom):
            w_ref, sh_ref = conv_p[i]
            cin_p, k, wp = g['cin_p'], g['k'], g['wp']
            lp, ol, cout = g['lp'], g['olen'], g['cout']
            st = strides[i]
            kk = k * k
            ltot = (nimg - 1) * st + ol
            # im2col staging: taps folded into the contraction dim; static
            # lane offsets only.  One lane segment per image.
            for b in range(nimg):
                base = b * st
                for t in range(kk):
                    off = (t // k) * wp + (t % k)
                    xcol[t * cin_p:(t + 1) * cin_p, base:base + ol] = \
                        acts[b][:, off:off + ol]
            # One MXU matmul per conv layer (BN scale pre-folded into w_ref);
            # folded conv-bias/BN-shift + ReLU epilogue.
            conv = jnp.dot(w_ref[...], xcol[0:kk * cin_p, 0:ltot],
                           preferred_element_type=jnp.float32)
            bn = jnp.maximum(conv + sh_ref[...], 0.0)

            if i < n_conv - 1:
                if g['pooled']:
                    # Separable 3x3 stride-1 max (stride-2 anchor selection is
                    # done by the repack matmul): 2 lane-shift maxes then
                    # 2 row-shift maxes instead of the 8-shift double loop.
                    pk = g['pool_k']
                    lr = ltot - (pk - 1)
                    row = bn[:, 0:lr]
                    for d in range(1, pk):
                        row = jnp.maximum(row, bn[:, d:d + lr])
                    lc = lr - (pk - 1) * wp
                    pooled = row[:, 0:lc]
                    for d in range(1, pk):
                        pooled = jnp.maximum(pooled, row[:, d * wp:d * wp + lc])
                else:
                    pooled = bn
                # One repack matmul for ALL images: per-image blocks stacked on
                # the (8-aligned) M axis; R is fed in bf16 with f32 accumulate.
                if nimg == 1:
                    stacked = pooled[:, 0:lp]
                else:
                    for b in range(nimg):
                        xcol[b * cout:(b + 1) * cout, 0:lp] = \
                            pooled[:, b * st:b * st + lp]
                    stacked = xcol[0:nimg * cout, 0:lp]
                rep = jnp.dot(stacked.astype(jnp.bfloat16), r_refs[i][...],
                              preferred_element_type=jnp.float32)
                acts = [rep[b * cout:(b + 1) * cout, :] for b in range(nimg)]

        # Flatten in PyTorch NCHW .view(N, -1) order (mapping baked into
        # w1_ref's row layout; junk columns hit all-zero rows).
        gl = geom[-1]
        c5, ml = gl['cout'], gl['h'] * gl['wp']
        st = strides[-1]
        for b in range(nimg):
            for c in range(c5):
                xcol[b:b + 1, c * ml:(c + 1) * ml] = bn[c:c + 1, b * st:b * st + ml]
        lin_in = xcol[0:nimg, 0:c5 * ml]
        h1 = jnp.maximum(
            jnp.dot(lin_in, w1_ref[...], preferred_element_type=jnp.float32)
            + b1_ref[...], 0.0)
        h2 = jnp.maximum(
            jnp.dot(h1, w2_ref[...], preferred_element_type=jnp.float32)
            + b2_ref[...], 0.0)
        h3 = (jnp.dot(h2, w3_ref[...], preferred_element_type=jnp.float32)
              + b3_ref[...])
        out_ref[...] = h3.reshape(out_ref.shape).astype(out_ref.dtype)

    return kernel


def _whole_spec(shape):
    zero = (0,) * len(shape)
    return pl.BlockSpec(shape, lambda n, _z=zero: _z)


def _num_tensorcores():
    """2 TensorCores per device on v7x-class (megacore) parts, else 1."""
    try:
        kind = jax.devices()[0].device_kind.lower()
    except Exception:
        return 1
    return 2 if ("v7" in kind or "7x" in kind or "v4" in kind) else 1


def mymodel_forward(ops, images, *, geom, n_classes):
    N = images.shape[0]
    g0 = geom[0]

    # Batch placement: single-TC chips (v5e/v6e) fold the whole batch into the
    # lane axis of one grid step; 2-TC chips (v7x) keep a parallel batch grid.
    n_tc = _num_tensorcores()
    if n_tc >= 2:
        nimg = N // 2 if (N % 2 == 0 and N >= 2) else 1
    else:
        nimg = N
    grid_n = N // nimg
    assert grid_n * nimg == N

    strides = [_round_up(g['olen'], 128) for g in geom]   # 128-aligned segments

    # One-time glue: pad channels to a sublane multiple, 'same'-pad spatially,
    # flatten padded spatial onto the lane axis, append tap-overrun slack.
    x = jnp.pad(images.astype(jnp.float32),
                ((0, 0), (0, g0['cin_p'] - g0['cin']),
                 (g0['pad'], g0['pad']), (g0['pad'], g0['pad'])))
    x = x.reshape(N, g0['cin_p'], g0['lp'])
    a1 = jnp.pad(x, ((0, 0), (0, 0), (0, g0['alen'] - g0['lp'])))

    gl = geom[-1]
    scr_rows = max(g['k'] * g['k'] * g['cin_p'] for g in geom)
    scr_cols = max([(nimg - 1) * strides[i] + g['olen']
                    for i, g in enumerate(geom)]
                   + [gl['cout'] * gl['h'] * gl['wp']])
    scr_cols = _round_up(scr_cols, 128)

    in_specs = [pl.BlockSpec((nimg, g0['cin_p'], g0['alen']),
                             lambda n: (n, 0, 0))]
    in_specs += [_whole_spec(op.shape) for op in ops]

    out = pl.pallas_call(
        make_kernel(geom, nimg, strides),
        out_shape=jax.ShapeDtypeStruct((grid_n, nimg, 128), jnp.float32),
        grid=(grid_n,),
        in_specs=in_specs,
        out_specs=pl.BlockSpec((1, nimg, 128), lambda n: (n, 0, 0)),
        scratch_shapes=[pltpu.VMEM((scr_rows, scr_cols), jnp.float32)],
        compiler_params=pltpu.CompilerParams(
            dimension_semantics=("parallel",)),
    )(a1, *ops)
    return out.reshape(N, 128)[:, :n_classes]


if __name__ == "__main__":
    im_size = (3, 32, 32)                 # (C, H, W)
    params_cnn = [3, 8, 8, 16, 16, 16]    # 5 conv layers
    kernel_sizes = (3, 3, 3, 3, 3)        # kernel_sizes[2] is also the pool size
    n_classes = 10
    batch = 2

    geom = compute_geometry(im_size, params_cnn, kernel_sizes)
    key = jax.random.PRNGKey(0)
    pkey, xkey = jax.random.split(key)
    params = init_params(pkey, geom, n_classes)
    ops = pack_params(params, geom)
    images = jax.random.normal(xkey, (batch,) + im_size, jnp.float32)   # NCHW

    fwd = jax.jit(functools.partial(mymodel_forward, geom=geom, n_classes=n_classes))
    out = jax.block_until_ready(fwd(ops, images))

    assert out.shape == (batch, n_classes), out.shape
    assert bool(jnp.all(jnp.isfinite(out)))
    print("KERNEL_OK")
</pallas_src>

<mosaic_0001>
module attributes {stable_mosaic.version = 11 : i64} {
  func.func @kernel(%arg0: i32, %arg1: memref<2x8x1296xf32, #tpu.memory_space<vmem>>, %arg2: memref<8x72xf32, #tpu.memory_space<vmem>>, %arg3: memref<8x1xf32, #tpu.memory_space<vmem>>, %arg4: memref<8x72xf32, #tpu.memory_space<vmem>>, %arg5: memref<8x1xf32, #tpu.memory_space<vmem>>, %arg6: memref<16x72xf32, #tpu.memory_space<vmem>>, %arg7: memref<16x1xf32, #tpu.memory_space<vmem>>, %arg8: memref<16x144xf32, #tpu.memory_space<vmem>>, %arg9: memref<16x1xf32, #tpu.memory_space<vmem>>, %arg10: memref<16x144xf32, #tpu.memory_space<vmem>>, %arg11: memref<16x1xf32, #tpu.memory_space<vmem>>, %arg12: memref<1156x361xbf16, #tpu.memory_space<vmem>>, %arg13: memref<289x121xbf16, #tpu.memory_space<vmem>>, %arg14: memref<81x49xbf16, #tpu.memory_space<vmem>>, %arg15: memref<25x49xbf16, #tpu.memory_space<vmem>>, %arg16: memref<240x144xf32, #tpu.memory_space<vmem>>, %arg17: memref<1x144xf32, #tpu.memory_space<vmem>>, %arg18: memref<144x72xf32, #tpu.memory_space<vmem>>, %arg19: memref<1x72xf32, #tpu.memory_space<vmem>>, %arg20: memref<72x128xf32, #tpu.memory_space<vmem>>, %arg21: memref<1x128xf32, #tpu.memory_space<vmem>>, %arg22: memref<1x2x128xf32, #tpu.memory_space<vmem>>, %arg23: memref<144x2560xf32, #tpu.memory_space<vmem>>) attributes {dimension_semantics = [#tpu.dimension_semantics<parallel>], iteration_bounds = array<i64: 1>, scalar_prefetch = 0 : i64, scratch_operands = 1 : i64, tpu.core_type = #tpu.core_type<tc>, window_params = [{transform_indices = @transform_0, window_bounds = array<i64: 2, 8, 1296>}, {pipeline_mode = #tpu.pipeline_mode<synchronous>, transform_indices = @transform_1, window_bounds = array<i64: 8, 72>}, {pipeline_mode = #tpu.pipeline_mode<synchronous>, transform_indices = @transform_2, window_bounds = array<i64: 8, 1>}, {pipeline_mode = #tpu.pipeline_mode<synchronous>, transform_indices = @transform_3, window_bounds = array<i64: 8, 72>}, {pipeline_mode = #tpu.pipeline_mode<synchronous>, transform_indices = @transform_4, window_bounds = array<i64: 8, 1>}, {pipeline_mode = #tpu.pipeline_mode<synchronous>, transform_indices = @transform_5, window_bounds = array<i64: 16, 72>}, {pipeline_mode = #tpu.pipeline_mode<synchronous>, transform_indices = @transform_6, window_bounds = array<i64: 16, 1>}, {pipeline_mode = #tpu.pipeline_mode<synchronous>, transform_indices = @transform_7, window_bounds = array<i64: 16, 144>}, {pipeline_mode = #tpu.pipeline_mode<synchronous>, transform_indices = @transform_8, window_bounds = array<i64: 16, 1>}, {pipeline_mode = #tpu.pipeline_mode<synchronous>, transform_indices = @transform_9, window_bounds = array<i64: 16, 144>}, {pipeline_mode = #tpu.pipeline_mode<synchronous>, transform_indices = @transform_10, window_bounds = array<i64: 16, 1>}, {pipeline_mode = #tpu.pipeline_mode<synchronous>, transform_indices = @transform_11, window_bounds = array<i64: 1156, 361>}, {pipeline_mode = #tpu.pipeline_mode<synchronous>, transform_indices = @transform_12, window_bounds = array<i64: 289, 121>}, {pipeline_mode = #tpu.pipeline_mode<synchronous>, transform_indices = @transform_13, window_bounds = array<i64: 81, 49>}, {pipeline_mode = #tpu.pipeline_mode<synchronous>, transform_indices = @transform_14, window_bounds = array<i64: 25, 49>}, {pipeline_mode = #tpu.pipeline_mode<synchronous>, transform_indices = @transform_15, window_bounds = array<i64: 240, 144>}, {pipeline_mode = #tpu.pipeline_mode<synchronous>, transform_indices = @transform_16, window_bounds = array<i64: 1, 144>}, {pipeline_mode = #tpu.pipeline_mode<synchronous>, transform_indices = @transform_17, window_bounds = array<i64: 144, 72>}, {pipeline_mode = #tpu.pipeline_mode<synchronous>, transform_indices = @transform_18, window_bounds = array<i64: 1, 72>}, {pipeline_mode = #tpu.pipeline_mode<synchronous>, transform_indices = @transform_19, window_bounds = array<i64: 72, 128>}, {pipeline_mode = #tpu.pipeline_mode<synchronous>, transform_indices = @transform_20, window_bounds = array<i64: 1, 128>}, {transform_indices = @transform_21, window_bounds = array<i64: 1, 2, 128>}]} {
    %c0 = arith.constant 0 : index
    %c0_0 = arith.constant 0 : index
    %c0_1 = arith.constant 0 : index
    %0 = vector.load %arg1[%c0, %c0_0, %c0_1] : memref<2x8x1296xf32, #tpu.memory_space<vmem>>, vector<1x8x1296xf32>
    %1 = vector.shape_cast %0 : vector<1x8x1296xf32> to vector<8x1296xf32>
    %c1 = arith.constant 1 : index
    %c0_2 = arith.constant 0 : index
    %c0_3 = arith.constant 0 : index
    %2 = vector.load %arg1[%c1, %c0_2, %c0_3] : memref<2x8x1296xf32, #tpu.memory_space<vmem>>, vector<1x8x1296xf32>
    %3 = vector.shape_cast %2 : vector<1x8x1296xf32> to vector<8x1296xf32>
    %4 = vector.extract_strided_slice %1 {offsets = [0, 0], sizes = [8, 1226], strides = [1, 1]} : vector<8x1296xf32> to vector<8x1226xf32>
    %c0_4 = arith.constant 0 : index
    %c0_5 = arith.constant 0 : index
    %5 = vector.load %arg23[%c0_4, %c0_5] : memref<144x2560xf32, #tpu.memory_space<vmem>>, vector<8x1226xf32>
    tpu.vector_store %arg23[%c0_4, %c0_5], %4 {strides = array<i32>} : memref<144x2560xf32, #tpu.memory_space<vmem>>, vector<8x1226xf32>,
    %6 = vector.extract_strided_slice %1 {offsets = [0, 1], sizes = [8, 1226], strides = [1, 1]} : vector<8x1296xf32> to vector<8x1226xf32>
    %c8 = arith.constant 8 : index
    %c0_6 = arith.constant 0 : index
    %7 = vector.load %arg23[%c8, %c0_6] : memref<144x2560xf32, #tpu.memory_space<vmem>>, vector<8x1226xf32>
    tpu.vector_store %arg23[%c8, %c0_6], %6 {strides = array<i32>} : memref<144x2560xf32, #tpu.memory_space<vmem>>, vector<8x1226xf32>,
    %8 = vector.extract_strided_slice %1 {offsets = [0, 2], sizes = [8, 1226], strides = [1, 1]} : vector<8x1296xf32> to vector<8x1226xf32>
    %c16 = arith.constant 16 : index
    %c0_7 = arith.constant 0 : index
    %9 = vector.load %arg23[%c16, %c0_7] : memref<144x2560xf32, #tpu.memory_space<vmem>>, vector<8x1226xf32>
    tpu.vector_store %arg23[%c16, %c0_7], %8 {strides = array<i32>} : memref<144x2560xf32, #tpu.memory_space<vmem>>, vector<8x1226xf32>,
    %10 = vector.extract_strided_slice %1 {offsets = [0, 34], sizes = [8, 1226], strides = [1, 1]} : vector<8x1296xf32> to vector<8x1226xf32>
    %c24 = arith.constant 24 : index
    %c0_8 = arith.constant 0 : index
    %11 = vector.load %arg23[%c24, %c0_8] : memref<144x2560xf32, #tpu.memory_space<vmem>>, vector<8x1226xf32>
    tpu.vector_store %arg23[%c24, %c0_8], %10 {strides = array<i32>} : memref<144x2560xf32, #tpu.memory_space<vmem>>, vector<8x1226xf32>,
    %12 = vector.extract_strided_slice %1 {offsets = [0, 35], sizes = [8, 1226], strides = [1, 1]} : vector<8x1296xf32> to vector<8x1226xf32>
    %c32 = arith.constant 32 : index
    %c0_9 = arith.constant 0 : index
    %13 = vector.load %arg23[%c32, %c0_9] : memref<144x2560xf32, #tpu.memory_space<vmem>>, vector<8x1226xf32>
    tpu.vector_store %arg23[%c32, %c0_9], %12 {strides = array<i32>} : memref<144x2560xf32, #tpu.memory_space<vmem>>, vector<8x1226xf32>,
    %14 = vector.extract_strided_slice %1 {offsets = [0, 36], sizes = [8, 1226], strides = [1, 1]} : vector<8x1296xf32> to vector<8x1226xf32>
    %c40 = arith.constant 40 : index
    %c0_10 = arith.constant 0 : index
    %15 = vector.load %arg23[%c40, %c0_10] : memref<144x2560xf32, #tpu.memory_space<vmem>>, vector<8x1226xf32>
    tpu.vector_store %arg23[%c40, %c0_10], %14 {strides = array<i32>} : memref<144x2560xf32, #tpu.memory_space<vmem>>, vector<8x1226xf32>,
    %16 = vector.extract_strided_slice %1 {offsets = [0, 68], sizes = [8, 1226], strides = [1, 1]} : vector<8x1296xf32> to vector<8x1226xf32>
    %c48 = arith.constant 48 : index
    %c0_11 = arith.constant 0 : index
    %17 = vector.load %arg23[%c48, %c0_11] : memref<144x2560xf32, #tpu.memory_space<vmem>>, vector<8x1226xf32>
    tpu.vector_store %arg23[%c48, %c0_11], %16 {strides = array<i32>} : memref<144x2560xf32, #tpu.memory_space<vmem>>, vector<8x1226xf32>,
    %18 = vector.extract_strided_slice %1 {offsets = [0, 69], sizes = [8, 1226], strides = [1, 1]} : vector<8x1296xf32> to vector<8x1226xf32>
    %c56 = arith.constant 56 : index
    %c0_12 = arith.constant 0 : index
    %19 = vector.load %arg23[%c56, %c0_12] : memref<144x2560xf32, #tpu.memory_space<vmem>>, vector<8x1226xf32>
    tpu.vector_store %arg23[%c56, %c0_12], %18 {strides = array<i32>} : memref<144x2560xf32, #tpu.memory_space<vmem>>, vector<8x1226xf32>,
    %20 = vector.extract_strided_slice %1 {offsets = [0, 70], sizes = [8, 1226], strides = [1, 1]} : vector<8x1296xf32> to vector<8x1226xf32>
    %c64 = arith.constant 64 : index
    %c0_13 = arith.constant 0 : index
    %21 = vector.load %arg23[%c64, %c0_13] : memref<144x2560xf32, #tpu.memory_space<vmem>>, vector<8x1226xf32>
    tpu.vector_store %arg23[%c64, %c0_13], %20 {strides = array<i32>} : memref<144x2560xf32, #tpu.memory_space<vmem>>, vector<8x1226xf32>,
    %22 = vector.extract_strided_slice %3 {offsets = [0, 0], sizes = [8, 1226], strides = [1, 1]} : vector<8x1296xf32> to vector<8x1226xf32>
    %c0_14 = arith.constant 0 : index
    %c1280 = arith.constant 1280 : index
    %23 = vector.load %arg23[%c0_14, %c1280] : memref<144x2560xf32, #tpu.memory_space<vmem>>, vector<8x1226xf32>
    tpu.vector_store %arg23[%c0_14, %c1280], %22 {strides = array<i32>} : memref<144x2560xf32, #tpu.memory_space<vmem>>, vector<8x1226xf32>,
    %24 = vector.extract_strided_slice %3 {offsets = [0, 1], sizes = [8, 1226], strides = [1, 1]} : vector<8x1296xf32> to vector<8x1226xf32>
    %c8_15 = arith.constant 8 : index
    %c1280_16 = arith.constant 1280 : index
    %25 = vector.load %arg23[%c8_15, %c1280_16] : memref<144x2560xf32, #tpu.memory_space<vmem>>, vector<8x1226xf32>
    tpu.vector_store %arg23[%c8_15, %c1280_16], %24 {strides = array<i32>} : memref<144x2560xf32, #tpu.memory_space<vmem>>, vector<8x1226xf32>,
    %26 = vector.extract_strided_slice %3 {offsets = [0, 2], sizes = [8, 1226], strides = [1, 1]} : vector<8x1296xf32> to vector<8x1226xf32>
    %c16_17 = arith.constant 16 : index
    %c1280_18 = arith.constant 1280 : index
    %27 = vector.load %arg23[%c16_17, %c1280_18] : memref<144x2560xf32, #tpu.memory_space<vmem>>, vector<8x1226xf32>
    tpu.vector_store %arg23[%c16_17, %c1280_18], %26 {strides = array<i32>} : memref<144x2560xf32, #tpu.memory_space<vmem>>, vector<8x1226xf32>,
    %28 = vector.extract_strided_slice %3 {offsets = [0, 34], sizes = [8, 1226], strides = [1, 1]} : vector<8x1296xf32> to vector<8x1226xf32>
    %c24_19 = arith.constant 24 : index
    %c1280_20 = arith.constant 1280 : index
    %29 = vector.load %arg23[%c24_19, %c1280_20] : memref<144x2560xf32, #tpu.memory_space<vmem>>, vector<8x1226xf32>
    tpu.vector_store %arg23[%c24_19, %c1280_20], %28 {strides = array<i32>} : memref<144x2560xf32, #tpu.memory_space<vmem>>, vector<8x1226xf32>,
    %30 = vector.extract_strided_slice %3 {offsets = [0, 35], sizes = [8, 1226], strides = [1, 1]} : vector<8x1296xf32> to vector<8x1226xf32>
    %c32_21 = arith.constant 32 : index
    %c1280_22 = arith.constant 1280 : index
    %31 = vector.load %arg23[%c32_21, %c1280_22] : memref<144x2560xf32, #tpu.memory_space<vmem>>, vector<8x1226xf32>
    tpu.vector_store %arg23[%c32_21, %c1280_22], %30 {strides = array<i32>} : memref<144x2560xf32, #tpu.memory_space<vmem>>, vector<8x1226xf32>,
    %32 = vector.extract_strided_slice %3 {offsets = [0, 36], sizes = [8, 1226], strides = [1, 1]} : vector<8x1296xf32> to vector<8x1226xf32>
    %c40_23 = arith.constant 40 : index
    %c1280_24 = arith.constant 1280 : index
    %33 = vector.load %arg23[%c40_23, %c1280_24] : memref<144x2560xf32, #tpu.memory_space<vmem>>, vector<8x1226xf32>
    tpu.vector_store %arg23[%c40_23, %c1280_24], %32 {strides = array<i32>} : memref<144x2560xf32, #tpu.memory_space<vmem>>, vector<8x1226xf32>,
    %34 = vector.extract_strided_slice %3 {offsets = [0, 68], sizes = [8, 1226], strides = [1, 1]} : vector<8x1296xf32> to vector<8x1226xf32>
    %c48_25 = arith.constant 48 : index
    %c1280_26 = arith.constant 1280 : index
    %35 = vector.load %arg23[%c48_25, %c1280_26] : memref<144x2560xf32, #tpu.memory_space<vmem>>, vector<8x1226xf32>
    tpu.vector_store %arg23[%c48_25, %c1280_26], %34 {strides = array<i32>} : memref<144x2560xf32, #tpu.memory_space<vmem>>, vector<8x1226xf32>,
    %36 = vector.extract_strided_slice %3 {offsets = [0, 69], sizes = [8, 1226], strides = [1, 1]} : vector<8x1296xf32> to vector<8x1226xf32>
    %c56_27 = arith.constant 56 : index
    %c1280_28 = arith.constant 1280 : index
    %37 = vector.load %arg23[%c56_27, %c1280_28] : memref<144x2560xf32, #tpu.memory_space<vmem>>, vector<8x1226xf32>
    tpu.vector_store %arg23[%c56_27, %c1280_28], %36 {strides = array<i32>} : memref<144x2560xf32, #tpu.memory_space<vmem>>, vector<8x1226xf32>,
    %38 = vector.extract_strided_slice %3 {offsets = [0, 70], sizes = [8, 1226], strides = [1, 1]} : vector<8x1296xf32> to vector<8x1226xf32>
    %c64_29 = arith.constant 64 : index
    %c1280_30 = arith.constant 1280 : index
    %39 = vector.load %arg23[%c64_29, %c1280_30] : memref<144x2560xf32, #tpu.memory_space<vmem>>, vector<8x1226xf32>
    tpu.vector_store %arg23[%c64_29, %c1280_30], %38 {strides = array<i32>} : memref<144x2560xf32, #tpu.memory_space<vmem>>, vector<8x1226xf32>,
    %c0_31 = arith.constant 0 : index
    %c0_32 = arith.constant 0 : index
    %40 = vector.load %arg2[%c0_31, %c0_32] : memref<8x72xf32, #tpu.memory_space<vmem>>, vector<8x72xf32>
    %c0_33 = arith.constant 0 : index
    %c0_34 = arith.constant 0 : index
    %41 = vector.load %arg23[%c0_33, %c0_34] : memref<144x2560xf32, #tpu.memory_space<vmem>>, vector<72x2506xf32>
    %cst = arith.constant dense<0.000000e+00> : vector<8x2506xf32>
    %42 = tpu.matmul %40, %41, %cst {dimension_numbers = #tpu.dot_dimension_numbers<[1], [0], [0], [1], [0, 0, 1, 1], [], []>} : vector<8x72xf32>, vector<72x2506xf32>, vector<8x2506xf32> -> vector<8x2506xf32>
    %c0_35 = arith.constant 0 : index
    %c0_36 = arith.constant 0 : index
    %43 = vector.load %arg3[%c0_35, %c0_36] : memref<8x1xf32, #tpu.memory_space<vmem>>, vector<8x1xf32>
    %44 = vector.broadcast %43 : vector<8x1xf32> to vector<8x2506xf32>
    %45 = arith.addf %42, %44 : vector<8x2506xf32>
    %cst_37 = arith.constant 0.000000e+00 : f32
    %46 = vector.broadcast %cst_37 : f32 to vector<8x2506xf32>
    %47 = arith.maximumf %45, %46 : vector<8x2506xf32>
    %48 = vector.extract_strided_slice %47 {offsets = [0, 0], sizes = [8, 2504], strides = [1, 1]} : vector<8x2506xf32> to vector<8x2504xf32>
    %49 = vector.extract_strided_slice %47 {offsets = [0, 1], sizes = [8, 2504], strides = [1, 1]} : vector<8x2506xf32> to vector<8x2504xf32>
    %50 = arith.maximumf %48, %49 : vector<8x2504xf32>
    %51 = vector.extract_strided_slice %47 {offsets = [0, 2], sizes = [8, 2504], strides = [1, 1]} : vector<8x2506xf32> to vector<8x2504xf32>
    %52 = arith.maximumf %50, %51 : vector<8x2504xf32>
    %53 = vector.extract_strided_slice %52 {offsets = [0, 0], sizes = [8, 2436], strides = [1, 1]} : vector<8x2504xf32> to vector<8x2436xf32>
    %54 = vector.extract_strided_slice %52 {offsets = [0, 34], sizes = [8, 2436], strides = [1, 1]} : vector<8x2504xf32> to vector<8x2436xf32>
    %55 = arith.maximumf %53, %54 : vector<8x2436xf32>
    %56 = vector.extract_strided_slice %52 {offsets = [0, 68], sizes = [8, 2436], strides = [1, 1]} : vector<8x2504xf32> to vector<8x2436xf32>
    %57 = arith.maximumf %55, %56 : vector<8x2436xf32>
    %58 = vector.extract_strided_slice %57 {offsets = [0, 0], sizes = [8, 1156], strides = [1, 1]} : vector<8x2436xf32> to vector<8x1156xf32>
    %c0_38 = arith.constant 0 : index
    %c0_39 = arith.constant 0 : index
    %59 = vector.load %arg23[%c0_38, %c0_39] : memref<144x2560xf32, #tpu.memory_space<vmem>>, vector<8x1156xf32>
    tpu.vector_store %arg23[%c0_38, %c0_39], %58 {strides = array<i32>} : memref<144x2560xf32, #tpu.memory_space<vmem>>, vector<8x1156xf32>,
    %60 = vector.extract_strided_slice %57 {offsets = [0, 1280], sizes = [8, 1156], strides = [1, 1]} : vector<8x2436xf32> to vector<8x1156xf32>
    %c8_40 = arith.constant 8 : index
    %c0_41 = arith.constant 0 : index
    %61 = vector.load %arg23[%c8_40, %c0_41] : memref<144x2560xf32, #tpu.memory_space<vmem>>, vector<8x1156xf32>
    tpu.vector_store %arg23[%c8_40, %c0_41], %60 {strides = array<i32>} : memref<144x2560xf32, #tpu.memory_space<vmem>>, vector<8x1156xf32>,
    %c0_42 = arith.constant 0 : index
    %c0_43 = arith.constant 0 : index
    %62 = vector.load %arg23[%c0_42, %c0_43] : memref<144x2560xf32, #tpu.memory_space<vmem>>, vector<16x1156xf32>
    %63 = arith.truncf %62 : vector<16x1156xf32> to vector<16x1156xbf16>
    %c0_44 = arith.constant 0 : index
    %c0_45 = arith.constant 0 : index
    %64 = vector.load %arg12[%c0_44, %c0_45] : memref<1156x361xbf16, #tpu.memory_space<vmem>>, vector<1156x361xbf16>
    %cst_46 = arith.constant dense<0.000000e+00> : vector<16x361xf32>
    %65 = tpu.matmul %63, %64, %cst_46 {dimension_numbers = #tpu.dot_dimension_numbers<[1], [0], [0], [1], [0, 0, 1, 1], [], []>} : vector<16x1156xbf16>, vector<1156x361xbf16>, vector<16x361xf32> -> vector<16x361xf32>
    %66 = vector.extract_strided_slice %65 {offsets = [0, 0], sizes = [8, 361], strides = [1, 1]} : vector<16x361xf32> to vector<8x361xf32>
    %67 = vector.extract_strided_slice %65 {offsets = [8, 0], sizes = [8, 361], strides = [1, 1]} : vector<16x361xf32> to vector<8x361xf32>
    %68 = vector.extract_strided_slice %66 {offsets = [0, 0], sizes = [8, 325], strides = [1, 1]} : vector<8x361xf32> to vector<8x325xf32>
    %c0_47 = arith.constant 0 : index
    %c0_48 = arith.constant 0 : index
    %69 = vector.load %arg23[%c0_47, %c0_48] : memref<144x2560xf32, #tpu.memory_space<vmem>>, vector<8x325xf32>
    tpu.vector_store %arg23[%c0_47, %c0_48], %68 {strides = array<i32>} : memref<144x2560xf32, #tpu.memory_space<vmem>>, vector<8x325xf32>,
    %70 = vector.extract_strided_slice %66 {offsets = [0, 1], sizes = [8, 325], strides = [1, 1]} : vector<8x361xf32> to vector<8x325xf32>
    %c8_49 = arith.constant 8 : index
    %c0_50 = arith.constant 0 : index
    %71 = vector.load %arg23[%c8_49, %c0_50] : memref<144x2560xf32, #tpu.memory_space<vmem>>, vector<8x325xf32>
    tpu.vector_store %arg23[%c8_49, %c0_50], %70 {strides = array<i32>} : memref<144x2560xf32, #tpu.memory_space<vmem>>, vector<8x325xf32>,
    %72 = vector.extract_strided_slice %66 {offsets = [0, 2], sizes = [8, 325], strides = [1, 1]} : vector<8x361xf32> to vector<8x325xf32>
    %c16_51 = arith.constant 16 : index
    %c0_52 = arith.constant 0 : index
    %73 = vector.load %arg23[%c16_51, %c0_52] : memref<144x2560xf32, #tpu.memory_space<vmem>>, vector<8x325xf32>
    tpu.vector_store %arg23[%c16_51, %c0_52], %72 {strides = array<i32>} : memref<144x2560xf32, #tpu.memory_space<vmem>>, vector<8x325xf32>,
    %74 = vector.extract_strided_slice %66 {offsets = [0, 17], sizes = [8, 325], strides = [1, 1]} : vector<8x361xf32> to vector<8x325xf32>
    %c24_53 = arith.constant 24 : index
    %c0_54 = arith.constant 0 : index
    %75 = vector.load %arg23[%c24_53, %c0_54] : memref<144x2560xf32, #tpu.memory_space<vmem>>, vector<8x325xf32>
    tpu.vector_store %arg23[%c24_53, %c0_54], %74 {strides = array<i32>} : memref<144x2560xf32, #tpu.memory_space<vmem>>, vector<8x325xf32>,
    %76 = vector.extract_strided_slice %66 {offsets = [0, 18], sizes = [8, 325], strides = [1, 1]} : vector<8x361xf32> to vector<8x325xf32>
    %c32_55 = arith.constant 32 : index
    %c0_56 = arith.constant 0 : index
    %77 = vector.load %arg23[%c32_55, %c0_56] : memref<144x2560xf32, #tpu.memory_space<vmem>>, vector<8x325xf32>
    tpu.vector_store %arg23[%c32_55, %c0_56], %76 {strides = array<i32>} : memref<144x2560xf32, #tpu.memory_space<vmem>>, vector<8x325xf32>,
    %78 = vector.extract_strided_slice %66 {offsets = [0, 19], sizes = [8, 325], strides = [1, 1]} : vector<8x361xf32> to vector<8x325xf32>
    %c40_57 = arith.constant 40 : index
    %c0_58 = arith.constant 0 : index
    %79 = vector.load %arg23[%c40_57, %c0_58] : memref<144x2560xf32, #tpu.memory_space<vmem>>, vector<8x325xf32>
    tpu.vector_store %arg23[%c40_57, %c0_58], %78 {strides = array<i32>} : memref<144x2560xf32, #tpu.memory_space<vmem>>, vector<8x325xf32>,
    %80 = vector.extract_strided_slice %66 {offsets = [0, 34], sizes = [8, 325], strides = [1, 1]} : vector<8x361xf32> to vector<8x325xf32>
    %c48_59 = arith.constant 48 : index
    %c0_60 = arith.constant 0 : index
    %81 = vector.load %arg23[%c48_59, %c0_60] : memref<144x2560xf32, #tpu.memory_space<vmem>>, vector<8x325xf32>
    tpu.vector_store %arg23[%c48_59, %c0_60], %80 {strides = array<i32>} : memref<144x2560xf32, #tpu.memory_space<vmem>>, vector<8x325xf32>,
    %82 = vector.extract_strided_slice %66 {offsets = [0, 35], sizes = [8, 325], strides = [1, 1]} : vector<8x361xf32> to vector<8x325xf32>
    %c56_61 = arith.constant 56 : index
    %c0_62 = arith.constant 0 : index
    %83 = vector.load %arg23[%c56_61, %c0_62] : memref<144x2560xf32, #tpu.memory_space<vmem>>, vector<8x325xf32>
    tpu.vector_store %arg23[%c56_61, %c0_62], %82 {strides = array<i32>} : memref<144x2560xf32, #tpu.memory_space<vmem>>, vector<8x325xf32>,
    %84 = vector.extract_strided_slice %66 {offsets = [0, 36], sizes = [8, 325], strides = [1, 1]} : vector<8x361xf32> to vector<8x325xf32>
    %c64_63 = arith.constant 64 : index
    %c0_64 = arith.constant 0 : index
    %85 = vector.load %arg23[%c64_63, %c0_64] : memref<144x2560xf32, #tpu.memory_space<vmem>>, vector<8x325xf32>
    tpu.vector_store %arg23[%c64_63, %c0_64], %84 {strides = array<i32>} : memref<144x2560xf32, #tpu.memory_space<vmem>>, vector<8x325xf32>,
    %86 = vector.extract_strided_slice %67 {offsets = [0, 0], sizes = [8, 325], strides = [1, 1]} : vector<8x361xf32> to vector<8x325xf32>
    %c0_65 = arith.constant 0 : index
    %c384 = arith.constant 384 : index
    %87 = vector.load %arg23[%c0_65, %c384] : memref<144x2560xf32, #tpu.memory_space<vmem>>, vector<8x325xf32>
    tpu.vector_store %arg23[%c0_65, %c384], %86 {strides = array<i32>} : memref<144x2560xf32, #tpu.memory_space<vmem>>, vector<8x325xf32>,
    %88 = vector.extract_strided_slice %67 {offsets = [0, 1], sizes = [8, 325], strides = [1, 1]} : vector<8x361xf32> to vector<8x325xf32>
    %c8_66 = arith.constant 8 : index
    %c384_67 = arith.constant 384 : index
    %89 = vector.load %arg23[%c8_66, %c384_67] : memref<144x2560xf32, #tpu.memory_space<vmem>>, vector<8x325xf32>
    tpu.vector_store %arg23[%c8_66, %c384_67], %88 {strides = array<i32>} : memref<144x2560xf32, #tpu.memory_space<vmem>>, vector<8x325xf32>,
    %90 = vector.extract_strided_slice %67 {offsets = [0, 2], sizes = [8, 325], strides = [1, 1]} : vector<8x361xf32> to vector<8x325xf32>
    %c16_68 = arith.constant 16 : index
    %c384_69 = arith.constant 384 : index
    %91 = vector.load %arg23[%c16_68, %c384_69] : memref<144x2560xf32, #tpu.memory_space<vmem>>, vector<8x325xf32>
    tpu.vector_store %arg23[%c16_68, %c384_69], %90 {strides = array<i32>} : memref<144x2560xf32, #tpu.memory_space<vmem>>, vector<8x325xf32>,
    %92 = vector.extract_strided_slice %67 {offsets = [0, 17], sizes = [8, 325], strides = [1, 1]} : vector<8x361xf32> to vector<8x325xf32>
    %c24_70 = arith.constant 24 : index
    %c384_71 = arith.constant 384 : index
    %93 = vector.load %arg23[%c24_70, %c384_71] : memref<144x2560xf32, #tpu.memory_space<vmem>>, vector<8x325xf32>
    tpu.vector_store %arg23[%c24_70, %c384_71], %92 {strides = array<i32>} : memref<144x2560xf32, #tpu.memory_space<vmem>>, vector<8x325xf32>,
    %94 = vector.extract_strided_slice %67 {offsets = [0, 18], sizes = [8, 325], strides = [1, 1]} : vector<8x361xf32> to vector<8x325xf32>
    %c32_72 = arith.constant 32 : index
    %c384_73 = arith.constant 384 : index
    %95 = vector.load %arg23[%c32_72, %c384_73] : memref<144x2560xf32, #tpu.memory_space<vmem>>, vector<8x325xf32>
    tpu.vector_store %arg23[%c32_72, %c384_73], %94 {strides = array<i32>} : memref<144x2560xf32, #tpu.memory_space<vmem>>, vector<8x325xf32>,
    %96 = vector.extract_strided_slice %67 {offsets = [0, 19], sizes = [8, 325], strides = [1, 1]} : vector<8x361xf32> to vector<8x325xf32>
    %c40_74 = arith.constant 40 : index
    %c384_75 = arith.constant 384 : index
    %97 = vector.load %arg23[%c40_74, %c384_75] : memref<144x2560xf32, #tpu.memory_space<vmem>>, vector<8x325xf32>
    tpu.vector_store %arg23[%c40_74, %c384_75], %96 {strides = array<i32>} : memref<144x2560xf32, #tpu.memory_space<vmem>>, vector<8x325xf32>,
    %98 = vector.extract_strided_slice %67 {offsets = [0, 34], sizes = [8, 325], strides = [1, 1]} : vector<8x361xf32> to vector<8x325xf32>
    %c48_76 = arith.constant 48 : index
    %c384_77 = arith.constant 384 : index
    %99 = vector.load %arg23[%c48_76, %c384_77] : memref<144x2560xf32, #tpu.memory_space<vmem>>, vector<8x325xf32>
    tpu.vector_store %arg23[%c48_76, %c384_77], %98 {strides = array<i32>} : memref<144x2560xf32, #tpu.memory_space<vmem>>, vector<8x325xf32>,
    %100 = vector.extract_strided_slice %67 {offsets = [0, 35], sizes = [8, 325], strides = [1, 1]} : vector<8x361xf32> to vector<8x325xf32>
    %c56_78 = arith.constant 56 : index
    %c384_79 = arith.constant 384 : index
    %101 = vector.load %arg23[%c56_78, %c384_79] : memref<144x2560xf32, #tpu.memory_space<vmem>>, vector<8x325xf32>
    tpu.vector_store %arg23[%c56_78, %c384_79], %100 {strides = array<i32>} : memref<144x2560xf32, #tpu.memory_space<vmem>>, vector<8x325xf32>,
    %102 = vector.extract_strided_slice %67 {offsets = [0, 36], sizes = [8, 325], strides = [1, 1]} : vector<8x361xf32> to vector<8x325xf32>
    %c64_80 = arith.constant 64 : index
    %c384_81 = arith.constant 384 : index
    %103 = vector.load %arg23[%c64_80, %c384_81] : memref<144x2560xf32, #tpu.memory_space<vmem>>, vector<8x325xf32>
    tpu.vector_store %arg23[%c64_80, %c384_81], %102 {strides = array<i32>} : memref<144x2560xf32, #tpu.memory_space<vmem>>, vector<8x325xf32>,
    %c0_82 = arith.constant 0 : index
    %c0_83 = arith.constant 0 : index
    %104 = vector.load %arg4[%c0_82, %c0_83] : memref<8x72xf32, #tpu.memory_space<vmem>>, vector<8x72xf32>
    %c0_84 = arith.constant 0 : index
    %c0_85 = arith.constant 0 : index
    %105 = vector.load %arg23[%c0_84, %c0_85] : memref<144x2560xf32, #tpu.memory_space<vmem>>, vector<72x709xf32>
    %cst_86 = arith.constant dense<0.000000e+00> : vector<8x709xf32>
    %106 = tpu.matmul %104, %105, %cst_86 {dimension_numbers = #tpu.dot_dimension_numbers<[1], [0], [0], [1], [0, 0, 1, 1], [], []>} : vector<8x72xf32>, vector<72x709xf32>, vector<8x709xf32> -> vector<8x709xf32>
    %c0_87 = arith.constant 0 : index
    %c0_88 = arith.constant 0 : index
    %107 = vector.load %arg5[%c0_87, %c0_88] : memref<8x1xf32, #tpu.memory_space<vmem>>, vector<8x1xf32>
    %108 = vector.broadcast %107 : vector<8x1xf32> to vector<8x709xf32>
    %109 = arith.addf %106, %108 : vector<8x709xf32>
    %cst_89 = arith.constant 0.000000e+00 : f32
    %110 = vector.broadcast %cst_89 : f32 to vector<8x709xf32>
    %111 = arith.maximumf %109, %110 : vector<8x709xf32>
    %112 = vector.extract_strided_slice %111 {offsets = [0, 0], sizes = [8, 707], strides = [1, 1]} : vector<8x709xf32> to vector<8x707xf32>
    %113 = vector.extract_strided_slice %111 {offsets = [0, 1], sizes = [8, 707], strides = [1, 1]} : vector<8x709xf32> to vector<8x707xf32>
    %114 = arith.maximumf %112, %113 : vector<8x707xf32>
    %115 = vector.extract_strided_slice %111 {offsets = [0, 2], sizes = [8, 707], strides = [1, 1]} : vector<8x709xf32> to vector<8x707xf32>
    %116 = arith.maximumf %114, %115 : vector<8x707xf32>
    %117 = vector.extract_strided_slice %116 {offsets = [0, 0], sizes = [8, 673], strides = [1, 1]} : vector<8x707xf32> to vector<8x673xf32>
    %118 = vector.extract_strided_slice %116 {offsets = [0, 17], sizes = [8, 673], strides = [1, 1]} : vector<8x707xf32> to vector<8x673xf32>
    %119 = arith.maximumf %117, %118 : vector<8x673xf32>
    %120 = vector.extract_strided_slice %116 {offsets = [0, 34], sizes = [8, 673], strides = [1, 1]} : vector<8x707xf32> to vector<8x673xf32>
    %121 = arith.maximumf %119, %120 : vector<8x673xf32>
    %122 = vector.extract_strided_slice %121 {offsets = [0, 0], sizes = [8, 289], strides = [1, 1]} : vector<8x673xf32> to vector<8x289xf32>
    %c0_90 = arith.constant 0 : index
    %c0_91 = arith.constant 0 : index
    %123 = vector.load %arg23[%c0_90, %c0_91] : memref<144x2560xf32, #tpu.memory_space<vmem>>, vector<8x289xf32>
    tpu.vector_store %arg23[%c0_90, %c0_91], %122 {strides = array<i32>} : memref<144x2560xf32, #tpu.memory_space<vmem>>, vector<8x289xf32>,
    %124 = vector.extract_strided_slice %121 {offsets = [0, 384], sizes = [8, 289], strides = [1, 1]} : vector<8x673xf32> to vector<8x289xf32>
    %c8_92 = arith.constant 8 : index
    %c0_93 = arith.constant 0 : index
    %125 = vector.load %arg23[%c8_92, %c0_93] : memref<144x2560xf32, #tpu.memory_space<vmem>>, vector<8x289xf32>
    tpu.vector_store %arg23[%c8_92, %c0_93], %124 {strides = array<i32>} : memref<144x2560xf32, #tpu.memory_space<vmem>>, vector<8x289xf32>,
    %c0_94 = arith.constant 0 : index
    %c0_95 = arith.constant 0 : index
    %126 = vector.load %arg23[%c0_94, %c0_95] : memref<144x2560xf32, #tpu.memory_space<vmem>>, vector<16x289xf32>
    %127 = arith.truncf %126 : vector<16x289xf32> to vector<16x289xbf16>
    %c0_96 = arith.constant 0 : index
    %c0_97 = arith.constant 0 : index
    %128 = vector.load %arg13[%c0_96, %c0_97] : memref<289x121xbf16, #tpu.memory_space<vmem>>, vector<289x121xbf16>
    %cst_98 = arith.constant dense<0.000000e+00> : vector<16x121xf32>
    %129 = tpu.matmul %127, %128, %cst_98 {dimension_numbers = #tpu.dot_dimension_numbers<[1], [0], [0], [1], [0, 0, 1, 1], [], []>} : vector<16x289xbf16>, vector<289x121xbf16>, vector<16x121xf32> -> vector<16x121xf32>
    %130 = vector.extract_strided_slice %129 {offsets = [0, 0], sizes = [8, 121], strides = [1, 1]} : vector<16x121xf32> to vector<8x121xf32>
    %131 = vector.extract_strided_slice %129 {offsets = [8, 0], sizes = [8, 121], strides = [1, 1]} : vector<16x121xf32> to vector<8x121xf32>
    %132 = vector.extract_strided_slice %130 {offsets = [0, 0], sizes = [8, 101], strides = [1, 1]} : vector<8x121xf32> to vector<8x101xf32>
    %c0_99 = arith.constant 0 : index
    %c0_100 = arith.constant 0 : index
    %133 = vector.load %arg23[%c0_99, %c0_100] : memref<144x2560xf32, #tpu.memory_space<vmem>>, vector<8x101xf32>
    tpu.vector_store %arg23[%c0_99, %c0_100], %132 {strides = array<i32>} : memref<144x2560xf32, #tpu.memory_space<vmem>>, vector<8x101xf32>,
    %134 = vector.extract_strided_slice %130 {offsets = [0, 1], sizes = [8, 101], strides = [1, 1]} : vector<8x121xf32> to vector<8x101xf32>
    %c8_101 = arith.constant 8 : index
    %c0_102 = arith.constant 0 : index
    %135 = vector.load %arg23[%c8_101, %c0_102] : memref<144x2560xf32, #tpu.memory_space<vmem>>, vector<8x101xf32>
    tpu.vector_store %arg23[%c8_101, %c0_102], %134 {strides = array<i32>} : memref<144x2560xf32, #tpu.memory_space<vmem>>, vector<8x101xf32>,
    %136 = vector.extract_strided_slice %130 {offsets = [0, 2], sizes = [8, 101], strides = [1, 1]} : vector<8x121xf32> to vector<8x101xf32>
    %c16_103 = arith.constant 16 : index
    %c0_104 = arith.constant 0 : index
    %137 = vector.load %arg23[%c16_103, %c0_104] : memref<144x2560xf32, #tpu.memory_space<vmem>>, vector<8x101xf32>
    tpu.vector_store %arg23[%c16_103, %c0_104], %136 {strides = array<i32>} : memref<144x2560xf32, #tpu.memory_space<vmem>>, vector<8x101xf32>,
    %138 = vector.extract_strided_slice %130 {offsets = [0, 9], sizes = [8, 101], strides = [1, 1]} : vector<8x121xf32> to vector<8x101xf32>
    %c24_105 = arith.constant 24 : index
    %c0_106 = arith.constant 0 : index
    %139 = vector.load %arg23[%c24_105, %c0_106] : memref<144x2560xf32, #tpu.memory_space<vmem>>, vector<8x101xf32>
    tpu.vector_store %arg23[%c24_105, %c0_106], %138 {strides = array<i32>} : memref<144x2560xf32, #tpu.memory_space<vmem>>, vector<8x101xf32>,
    %140 = vector.extract_strided_slice %130 {offsets = [0, 10], sizes = [8, 101], strides = [1, 1]} : vector<8x121xf32> to vector<8x101xf32>
    %c32_107 = arith.constant 32 : index
    %c0_108 = arith.constant 0 : index
    %141 = vector.load %arg23[%c32_107, %c0_108] : memref<144x2560xf32, #tpu.memory_space<vmem>>, vector<8x101xf32>
    tpu.vector_store %arg23[%c32_107, %c0_108], %140 {strides = array<i32>} : memref<144x2560xf32, #tpu.memory_space<vmem>>, vector<8x101xf32>,
    %142 = vector.extract_strided_slice %130 {offsets = [0, 11], sizes = [8, 101], strides = [1, 1]} : vector<8x121xf32> to vector<8x101xf32>
    %c40_109 = arith.constant 40 : index
    %c0_110 = arith.constant 0 : index
    %143 = vector.load %arg23[%c40_109, %c0_110] : memref<144x2560xf32, #tpu.memory_space<vmem>>, vector<8x101xf32>
    tpu.vector_store %arg23[%c40_109, %c0_110], %142 {strides = array<i32>} : memref<144x2560xf32, #tpu.memory_space<vmem>>, vector<8x101xf32>,
    %144 = vector.extract_strided_slice %130 {offsets = [0, 18], sizes = [8, 101], strides = [1, 1]} : vector<8x121xf32> to vector<8x101xf32>
    %c48_111 = arith.constant 48 : index
    %c0_112 = arith.constant 0 : index
    %145 = vector.load %arg23[%c48_111, %c0_112] : memref<144x2560xf32, #tpu.memory_space<vmem>>, vector<8x101xf32>
    tpu.vector_store %arg23[%c48_111, %c0_112], %144 {strides = array<i32>} : memref<144x2560xf32, #tpu.memory_space<vmem>>, vector<8x101xf32>,
    %146 = vector.extract_strided_slice %130 {offsets = [0, 19], sizes = [8, 101], strides = [1, 1]} : vector<8x121xf32> to vector<8x101xf32>
    %c56_113 = arith.constant 56 : index
    %c0_114 = arith.constant 0 : index
    %147 = vector.load %arg23[%c56_113, %c0_114] : memref<144x2560xf32, #tpu.memory_space<vmem>>, vector<8x101xf32>
    tpu.vector_store %arg23[%c56_113, %c0_114], %146 {strides = array<i32>} : memref<144x2560xf32, #tpu.memory_space<vmem>>, vector<8x101xf32>,
    %148 = vector.extract_strided_slice %130 {offsets = [0, 20], sizes = [8, 101], strides = [1, 1]} : vector<8x121xf32> to vector<8x101xf32>
    %c64_115 = arith.constant 64 : index
    %c0_116 = arith.constant 0 : index
    %149 = vector.load %arg23[%c64_115, %c0_116] : memref<144x2560xf32, #tpu.memory_space<vmem>>, vector<8x101xf32>
    tpu.vector_store %arg23[%c64_115, %c0_116], %148 {strides = array<i32>} : memref<144x2560xf32, #tpu.memory_space<vmem>>, vector<8x101xf32>,
    %150 = vector.extract_strided_slice %131 {offsets = [0, 0], sizes = [8, 101], strides = [1, 1]} : vector<8x121xf32> to vector<8x101xf32>
    %c0_117 = arith.constant 0 : index
    %c128 = arith.constant 128 : index
    %151 = vector.load %arg23[%c0_117, %c128] : memref<144x2560xf32, #tpu.memory_space<vmem>>, vector<8x101xf32>
    tpu.vector_store %arg23[%c0_117, %c128], %150 {strides = array<i32>} : memref<144x2560xf32, #tpu.memory_space<vmem>>, vector<8x101xf32>,
    %152 = vector.extract_strided_slice %131 {offsets = [0, 1], sizes = [8, 101], strides = [1, 1]} : vector<8x121xf32> to vector<8x101xf32>
    %c8_118 = arith.constant 8 : index
    %c128_119 = arith.constant 128 : index
    %153 = vector.load %arg23[%c8_118, %c128_119] : memref<144x2560xf32, #tpu.memory_space<vmem>>, vector<8x101xf32>
    tpu.vector_store %arg23[%c8_118, %c128_119], %152 {strides = array<i32>} : memref<144x2560xf32, #tpu.memory_space<vmem>>, vector<8x101xf32>,
    %154 = vector.extract_strided_slice %131 {offsets = [0, 2], sizes = [8, 101], strides = [1, 1]} : vector<8x121xf32> to vector<8x101xf32>
    %c16_120 = arith.constant 16 : index
    %c128_121 = arith.constant 128 : index
    %155 = vector.load %arg23[%c16_120, %c128_121] : memref<144x2560xf32, #tpu.memory_space<vmem>>, vector<8x101xf32>
    tpu.vector_store %arg23[%c16_120, %c128_121], %154 {strides = array<i32>} : memref<144x2560xf32, #tpu.memory_space<vmem>>, vector<8x101xf32>,
    %156 = vector.extract_strided_slice %131 {offsets = [0, 9], sizes = [8, 101], strides = [1, 1]} : vector<8x121xf32> to vector<8x101xf32>
    %c24_122 = arith.constant 24 : index
    %c128_123 = arith.constant 128 : index
    %157 = vector.load %arg23[%c24_122, %c128_123] : memref<144x2560xf32, #tpu.memory_space<vmem>>, vector<8x101xf32>
    tpu.vector_store %arg23[%c24_122, %c128_123], %156 {strides = array<i32>} : memref<144x2560xf32, #tpu.memory_space<vmem>>, vector<8x101xf32>,
    %158 = vector.extract_strided_slice %131 {offsets = [0, 10], sizes = [8, 101], strides = [1, 1]} : vector<8x121xf32> to vector<8x101xf32>
    %c32_124 = arith.constant 32 : index
    %c128_125 = arith.constant 128 : index
    %159 = vector.load %arg23[%c32_124, %c128_125] : memref<144x2560xf32, #tpu.memory_space<vmem>>, vector<8x101xf32>
    tpu.vector_store %arg23[%c32_124, %c128_125], %158 {strides = array<i32>} : memref<144x2560xf32, #tpu.memory_space<vmem>>, vector<8x101xf32>,
    %160 = vector.extract_strided_slice %131 {offsets = [0, 11], sizes = [8, 101], strides = [1, 1]} : vector<8x121xf32> to vector<8x101xf32>
    %c40_126 = arith.constant 40 : index
    %c128_127 = arith.constant 128 : index
    %161 = vector.load %arg23[%c40_126, %c128_127] : memref<144x2560xf32, #tpu.memory_space<vmem>>, vector<8x101xf32>
    tpu.vector_store %arg23[%c40_126, %c128_127], %160 {strides = array<i32>} : memref<144x2560xf32, #tpu.memory_space<vmem>>, vector<8x101xf32>,
    %162 = vector.extract_strided_slice %131 {offsets = [0, 18], sizes = [8, 101], strides = [1, 1]} : vector<8x121xf32> to vector<8x101xf32>
    %c48_128 = arith.constant 48 : index
    %c128_129 = arith.constant 128 : index
    %163 = vector.load %arg23[%c48_128, %c128_129] : memref<144x2560xf32, #tpu.memory_space<vmem>>, vector<8x101xf32>
    tpu.vector_store %arg23[%c48_128, %c128_129], %162 {strides = array<i32>} : memref<144x2560xf32, #tpu.memory_space<vmem>>, vector<8x101xf32>,
    %164 = vector.extract_strided_slice %131 {offsets = [0, 19], sizes = [8, 101], strides = [1, 1]} : vector<8x121xf32> to vector<8x101xf32>
    %c56_130 = arith.constant 56 : index
    %c128_131 = arith.constant 128 : index
    %165 = vector.load %arg23[%c56_130, %c128_131] : memref<144x2560xf32, #tpu.memory_space<vmem>>, vector<8x101xf32>
    tpu.vector_store %arg23[%c56_130, %c128_131], %164 {strides = array<i32>} : memref<144x2560xf32, #tpu.memory_space<vmem>>, vector<8x101xf32>,
    %166 = vector.extract_strided_slice %131 {offsets = [0, 20], sizes = [8, 101], strides = [1, 1]} : vector<8x121xf32> to vector<8x101xf32>
    %c64_132 = arith.constant 64 : index
    %c128_133 = arith.constant 128 : index
    %167 = vector.load %arg23[%c64_132, %c128_133] : memref<144x2560xf32, #tpu.memory_space<vmem>>, vector<8x101xf32>
    tpu.vector_store %arg23[%c64_132, %c128_133], %166 {strides = array<i32>} : memref<144x2560xf32, #tpu.memory_space<vmem>>, vector<8x101xf32>,
    %c0_134 = arith.constant 0 : index
    %c0_135 = arith.constant 0 : index
    %168 = vector.load %arg6[%c0_134, %c0_135] : memref<16x72xf32, #tpu.memory_space<vmem>>, vector<16x72xf32>
    %c0_136 = arith.constant 0 : index
    %c0_137 = arith.constant 0 : index
    %169 = vector.load %arg23[%c0_136, %c0_137] : memref<144x2560xf32, #tpu.memory_space<vmem>>, vector<72x229xf32>
    %cst_138 = arith.constant dense<0.000000e+00> : vector<16x229xf32>
    %170 = tpu.matmul %168, %169, %cst_138 {dimension_numbers = #tpu.dot_dimension_numbers<[1], [0], [0], [1], [0, 0, 1, 1], [], []>} : vector<16x72xf32>, vector<72x229xf32>, vector<16x229xf32> -> vector<16x229xf32>
    %c0_139 = arith.constant 0 : index
    %c0_140 = arith.constant 0 : index
    %171 = vector.load %arg7[%c0_139, %c0_140] : memref<16x1xf32, #tpu.memory_space<vmem>>, vector<16x1xf32>
    %172 = vector.broadcast %171 : vector<16x1xf32> to vector<16x229xf32>
    %173 = arith.addf %170, %172 : vector<16x229xf32>
    %cst_141 = arith.constant 0.000000e+00 : f32
    %174 = vector.broadcast %cst_141 : f32 to vector<16x229xf32>
    %175 = arith.maximumf %173, %174 : vector<16x229xf32>
    %176 = vector.extract_strided_slice %175 {offsets = [0, 0], sizes = [16, 227], strides = [1, 1]} : vector<16x229xf32> to vector<16x227xf32>
    %177 = vector.extract_strided_slice %175 {offsets = [0, 1], sizes = [16, 227], strides = [1, 1]} : vector<16x229xf32> to vector<16x227xf32>
    %178 = arith.maximumf %176, %177 : vector<16x227xf32>
    %179 = vector.extract_strided_slice %175 {offsets = [0, 2], sizes = [16, 227], strides = [1, 1]} : vector<16x229xf32> to vector<16x227xf32>
    %180 = arith.maximumf %178, %179 : vector<16x227xf32>
    %181 = vector.extract_strided_slice %180 {offsets = [0, 0], sizes = [16, 209], strides = [1, 1]} : vector<16x227xf32> to vector<16x209xf32>
    %182 = vector.extract_strided_slice %180 {offsets = [0, 9], sizes = [16, 209], strides = [1, 1]} : vector<16x227xf32> to vector<16x209xf32>
    %183 = arith.maximumf %181, %182 : vector<16x209xf32>
    %184 = vector.extract_strided_slice %180 {offsets = [0, 18], sizes = [16, 209], strides = [1, 1]} : vector<16x227xf32> to vector<16x209xf32>
    %185 = arith.maximumf %183, %184 : vector<16x209xf32>
    %186 = vector.extract_strided_slice %185 {offsets = [0, 0], sizes = [16, 81], strides = [1, 1]} : vector<16x209xf32> to vector<16x81xf32>
    %c0_142 = arith.constant 0 : index
    %c0_143 = arith.constant 0 : index
    %187 = vector.load %arg23[%c0_142, %c0_143] : memref<144x2560xf32, #tpu.memory_space<vmem>>, vector<16x81xf32>
    tpu.vector_store %arg23[%c0_142, %c0_143], %186 {strides = array<i32>} : memref<144x2560xf32, #tpu.memory_space<vmem>>, vector<16x81xf32>,
    %188 = vector.extract_strided_slice %185 {offsets = [0, 128], sizes = [16, 81], strides = [1, 1]} : vector<16x209xf32> to vector<16x81xf32>
    %c16_144 = arith.constant 16 : index
    %c0_145 = arith.constant 0 : index
    %189 = vector.load %arg23[%c16_144, %c0_145] : memref<144x2560xf32, #tpu.memory_space<vmem>>, vector<16x81xf32>
    tpu.vector_store %arg23[%c16_144, %c0_145], %188 {strides = array<i32>} : memref<144x2560xf32, #tpu.memory_space<vmem>>, vector<16x81xf32>,
    %c0_146 = arith.constant 0 : index
    %c0_147 = arith.constant 0 : index
    %190 = vector.load %arg23[%c0_146, %c0_147] : memref<144x2560xf32, #tpu.memory_space<vmem>>, vector<32x81xf32>
    %191 = arith.truncf %190 : vector<32x81xf32> to vector<32x81xbf16>
    %c0_148 = arith.constant 0 : index
    %c0_149 = arith.constant 0 : index
    %192 = vector.load %arg14[%c0_148, %c0_149] : memref<81x49xbf16, #tpu.memory_space<vmem>>, vector<81x49xbf16>
    %cst_150 = arith.constant dense<0.000000e+00> : vector<32x49xf32>
    %193 = tpu.matmul %191, %192, %cst_150 {dimension_numbers = #tpu.dot_dimension_numbers<[1], [0], [0], [1], [0, 0, 1, 1], [], []>} : vector<32x81xbf16>, vector<81x49xbf16>, vector<32x49xf32> -> vector<32x49xf32>
    %194 = vector.extract_strided_slice %193 {offsets = [0, 0], sizes = [16, 49], strides = [1, 1]} : vector<32x49xf32> to vector<16x49xf32>
    %195 = vector.extract_strided_slice %193 {offsets = [16, 0], sizes = [16, 49], strides = [1, 1]} : vector<32x49xf32> to vector<16x49xf32>
    %196 = vector.extract_strided_slice %194 {offsets = [0, 0], sizes = [16, 37], strides = [1, 1]} : vector<16x49xf32> to vector<16x37xf32>
    %c0_151 = arith.constant 0 : index
    %c0_152 = arith.constant 0 : index
    %197 = vector.load %arg23[%c0_151, %c0_152] : memref<144x2560xf32, #tpu.memory_space<vmem>>, vector<16x37xf32>
    tpu.vector_store %arg23[%c0_151, %c0_152], %196 {strides = array<i32>} : memref<144x2560xf32, #tpu.memory_space<vmem>>, vector<16x37xf32>,
    %198 = vector.extract_strided_slice %194 {offsets = [0, 1], sizes = [16, 37], strides = [1, 1]} : vector<16x49xf32> to vector<16x37xf32>
    %c16_153 = arith.constant 16 : index
    %c0_154 = arith.constant 0 : index
    %199 = vector.load %arg23[%c16_153, %c0_154] : memref<144x2560xf32, #tpu.memory_space<vmem>>, vector<16x37xf32>
    tpu.vector_store %arg23[%c16_153, %c0_154], %198 {strides = array<i32>} : memref<144x2560xf32, #tpu.memory_space<vmem>>, vector<16x37xf32>,
    %200 = vector.extract_strided_slice %194 {offsets = [0, 2], sizes = [16, 37], strides = [1, 1]} : vector<16x49xf32> to vector<16x37xf32>
    %c32_155 = arith.constant 32 : index
    %c0_156 = arith.constant 0 : index
    %201 = vector.load %arg23[%c32_155, %c0_156] : memref<144x2560xf32, #tpu.memory_space<vmem>>, vector<16x37xf32>
    tpu.vector_store %arg23[%c32_155, %c0_156], %200 {strides = array<i32>} : memref<144x2560xf32, #tpu.memory_space<vmem>>, vector<16x37xf32>,
    %202 = vector.extract_strided_slice %194 {offsets = [0, 5], sizes = [16, 37], strides = [1, 1]} : vector<16x49xf32> to vector<16x37xf32>
    %c48_157 = arith.constant 48 : index
    %c0_158 = arith.constant 0 : index
    %203 = vector.load %arg23[%c48_157, %c0_158] : memref<144x2560xf32, #tpu.memory_space<vmem>>, vector<16x37xf32>
    tpu.vector_store %arg23[%c48_157, %c0_158], %202 {strides = array<i32>} : memref<144x2560xf32, #tpu.memory_space<vmem>>, vector<16x37xf32>,
    %204 = vector.extract_strided_slice %194 {offsets = [0, 6], sizes = [16, 37], strides = [1, 1]} : vector<16x49xf32> to vector<16x37xf32>
    %c64_159 = arith.constant 64 : index
    %c0_160 = arith.constant 0 : index
    %205 = vector.load %arg23[%c64_159, %c0_160] : memref<144x2560xf32, #tpu.memory_space<vmem>>, vector<16x37xf32>
    tpu.vector_store %arg23[%c64_159, %c0_160], %204 {strides = array<i32>} : memref<144x2560xf32, #tpu.memory_space<vmem>>, vector<16x37xf32>,
    %206 = vector.extract_strided_slice %194 {offsets = [0, 7], sizes = [16, 37], strides = [1, 1]} : vector<16x49xf32> to vector<16x37xf32>
    %c80 = arith.constant 80 : index
    %c0_161 = arith.constant 0 : index
    %207 = vector.load %arg23[%c80, %c0_161] : memref<144x2560xf32, #tpu.memory_space<vmem>>, vector<16x37xf32>
    tpu.vector_store %arg23[%c80, %c0_161], %206 {strides = array<i32>} : memref<144x2560xf32, #tpu.memory_space<vmem>>, vector<16x37xf32>,
    %208 = vector.extract_strided_slice %194 {offsets = [0, 10], sizes = [16, 37], strides = [1, 1]} : vector<16x49xf32> to vector<16x37xf32>
    %c96 = arith.constant 96 : index
    %c0_162 = arith.constant 0 : index
    %209 = vector.load %arg23[%c96, %c0_162] : memref<144x2560xf32, #tpu.memory_space<vmem>>, vector<16x37xf32>
    tpu.vector_store %arg23[%c96, %c0_162], %208 {strides = array<i32>} : memref<144x2560xf32, #tpu.memory_space<vmem>>, vector<16x37xf32>,
    %210 = vector.extract_strided_slice %194 {offsets = [0, 11], sizes = [16, 37], strides = [1, 1]} : vector<16x49xf32> to vector<16x37xf32>
    %c112 = arith.constant 112 : index
    %c0_163 = arith.constant 0 : index
    %211 = vector.load %arg23[%c112, %c0_163] : memref<144x2560xf32, #tpu.memory_space<vmem>>, vector<16x37xf32>
    tpu.vector_store %arg23[%c112, %c0_163], %210 {strides = array<i32>} : memref<144x2560xf32, #tpu.memory_space<vmem>>, vector<16x37xf32>,
    %212 = vector.extract_strided_slice %194 {offsets = [0, 12], sizes = [16, 37], strides = [1, 1]} : vector<16x49xf32> to vector<16x37xf32>
    %c128_164 = arith.constant 128 : index
    %c0_165 = arith.constant 0 : index
    %213 = vector.load %arg23[%c128_164, %c0_165] : memref<144x2560xf32, #tpu.memory_space<vmem>>, vector<16x37xf32>
    tpu.vector_store %arg23[%c128_164, %c0_165], %212 {strides = array<i32>} : memref<144x2560xf32, #tpu.memory_space<vmem>>, vector<16x37xf32>,
    %214 = vector.extract_strided_slice %195 {offsets = [0, 0], sizes = [16, 37], strides = [1, 1]} : vector<16x49xf32> to vector<16x37xf32>
    %c0_166 = arith.constant 0 : index
    %c128_167 = arith.constant 128 : index
    %215 = vector.load %arg23[%c0_166, %c128_167] : memref<144x2560xf32, #tpu.memory_space<vmem>>, vector<16x37xf32>
    tpu.vector_store %arg23[%c0_166, %c128_167], %214 {strides = array<i32>} : memref<144x2560xf32, #tpu.memory_space<vmem>>, vector<16x37xf32>,
    %216 = vector.extract_strided_slice %195 {offsets = [0, 1], sizes = [16, 37], strides = [1, 1]} : vector<16x49xf32> to vector<16x37xf32>
    %c16_168 = arith.constant 16 : index
    %c128_169 = arith.constant 128 : index
    %217 = vector.load %arg23[%c16_168, %c128_169] : memref<144x2560xf32, #tpu.memory_space<vmem>>, vector<16x37xf32>
    tpu.vector_store %arg23[%c16_168, %c128_169], %216 {strides = array<i32>} : memref<144x2560xf32, #tpu.memory_space<vmem>>, vector<16x37xf32>,
    %218 = vector.extract_strided_slice %195 {offsets = [0, 2], sizes = [16, 37], strides = [1, 1]} : vector<16x49xf32> to vector<16x37xf32>
    %c32_170 = arith.constant 32 : index
    %c128_171 = arith.constant 128 : index
    %219 = vector.load %arg23[%c32_170, %c128_171] : memref<144x2560xf32, #tpu.memory_space<vmem>>, vector<16x37xf32>
    tpu.vector_store %arg23[%c32_170, %c128_171], %218 {strides = array<i32>} : memref<144x2560xf32, #tpu.memory_space<vmem>>, vector<16x37xf32>,
    %220 = vector.extract_strided_slice %195 {offsets = [0, 5], sizes = [16, 37], strides = [1, 1]} : vector<16x49xf32> to vector<16x37xf32>
    %c48_172 = arith.constant 48 : index
    %c128_173 = arith.constant 128 : index
    %221 = vector.load %arg23[%c48_172, %c128_173] : memref<144x2560xf32, #tpu.memory_space<vmem>>, vector<16x37xf32>
    tpu.vector_store %arg23[%c48_172, %c128_173], %220 {strides = array<i32>} : memref<144x2560xf32, #tpu.memory_space<vmem>>, vector<16x37xf32>,
    %222 = vector.extract_strided_slice %195 {offsets = [0, 6], sizes = [16, 37], strides = [1, 1]} : vector<16x49xf32> to vector<16x37xf32>
    %c64_174 = arith.constant 64 : index
    %c128_175 = arith.constant 128 : index
    %223 = vector.load %arg23[%c64_174, %c128_175] : memref<144x2560xf32, #tpu.memory_space<vmem>>, vector<16x37xf32>
    tpu.vector_store %arg23[%c64_174, %c128_175], %222 {strides = array<i32>} : memref<144x2560xf32, #tpu.memory_space<vmem>>, vector<16x37xf32>,
    %224 = vector.extract_strided_slice %195 {offsets = [0, 7], sizes = [16, 37], strides = [1, 1]} : vector<16x49xf32> to vector<16x37xf32>
    %c80_176 = arith.constant 80 : index
    %c128_177 = arith.constant 128 : index
    %225 = vector.load %arg23[%c80_176, %c128_177] : memref<144x2560xf32, #tpu.memory_space<vmem>>, vector<16x37xf32>
    tpu.vector_store %arg23[%c80_176, %c128_177], %224 {strides = array<i32>} : memref<144x2560xf32, #tpu.memory_space<vmem>>, vector<16x37xf32>,
    %226 = vector.extract_strided_slice %195 {offsets = [0, 10], sizes = [16, 37], strides = [1, 1]} : vector<16x49xf32> to vector<16x37xf32>
    %c96_178 = arith.constant 96 : index
    %c128_179 = arith.constant 128 : index
    %227 = vector.load %arg23[%c96_178, %c128_179] : memref<144x2560xf32, #tpu.memory_space<vmem>>, vector<16x37xf32>
    tpu.vector_store %arg23[%c96_178, %c128_179], %226 {strides = array<i32>} : memref<144x2560xf32, #tpu.memory_space<vmem>>, vector<16x37xf32>,
    %228 = vector.extract_strided_slice %195 {offsets = [0, 11], sizes = [16, 37], strides = [1, 1]} : vector<16x49xf32> to vector<16x37xf32>
    %c112_180 = arith.constant 112 : index
    %c128_181 = arith.constant 128 : index
    %229 = vector.load %arg23[%c112_180, %c128_181] : memref<144x2560xf32, #tpu.memory_space<vmem>>, vector<16x37xf32>
    tpu.vector_store %arg23[%c112_180, %c128_181], %228 {strides = array<i32>} : memref<144x2560xf32, #tpu.memory_space<vmem>>, vector<16x37xf32>,
    %230 = vector.extract_strided_slice %195 {offsets = [0, 12], sizes = [16, 37], strides = [1, 1]} : vector<16x49xf32> to vector<16x37xf32>
    %c128_182 = arith.constant 128 : index
    %c128_183 = arith.constant 128 : index
    %231 = vector.load %arg23[%c128_182, %c128_183] : memref<144x2560xf32, #tpu.memory_space<vmem>>, vector<16x37xf32>
    tpu.vector_store %arg23[%c128_182, %c128_183], %230 {strides = array<i32>} : memref<144x2560xf32, #tpu.memory_space<vmem>>, vector<16x37xf32>,
    %c0_184 = arith.constant 0 : index
    %c0_185 = arith.constant 0 : index
    %232 = vector.load %arg8[%c0_184, %c0_185] : memref<16x144xf32, #tpu.memory_space<vmem>>, vector<16x144xf32>
    %c0_186 = arith.constant 0 : index
    %c0_187 = arith.constant 0 : index
    %233 = vector.load %arg23[%c0_186, %c0_187] : memref<144x2560xf32, #tpu.memory_space<vmem>>, vector<144x165xf32>
    %cst_188 = arith.constant dense<0.000000e+00> : vector<16x165xf32>
    %234 = tpu.matmul %232, %233, %cst_188 {dimension_numbers = #tpu.dot_dimension_numbers<[1], [0], [0], [1], [0, 0, 1, 1], [], []>} : vector<16x144xf32>, vector<144x165xf32>, vector<16x165xf32> -> vector<16x165xf32>
    %c0_189 = arith.constant 0 : index
    %c0_190 = arith.constant 0 : index
    %235 = vector.load %arg9[%c0_189, %c0_190] : memref<16x1xf32, #tpu.memory_space<vmem>>, vector<16x1xf32>
    %236 = vector.broadcast %235 : vector<16x1xf32> to vector<16x165xf32>
    %237 = arith.addf %234, %236 : vector<16x165xf32>
    %cst_191 = arith.constant 0.000000e+00 : f32
    %238 = vector.broadcast %cst_191 : f32 to vector<16x165xf32>
    %239 = arith.maximumf %237, %238 : vector<16x165xf32>
    %240 = vector.extract_strided_slice %239 {offsets = [0, 0], sizes = [16, 25], strides = [1, 1]} : vector<16x165xf32> to vector<16x25xf32>
    %c0_192 = arith.constant 0 : index
    %c0_193 = arith.constant 0 : index
    %241 = vector.load %arg23[%c0_192, %c0_193] : memref<144x2560xf32, #tpu.memory_space<vmem>>, vector<16x25xf32>
    tpu.vector_store %arg23[%c0_192, %c0_193], %240 {strides = array<i32>} : memref<144x2560xf32, #tpu.memory_space<vmem>>, vector<16x25xf32>,
    %242 = vector.extract_strided_slice %239 {offsets = [0, 128], sizes = [16, 25], strides = [1, 1]} : vector<16x165xf32> to vector<16x25xf32>
    %c16_194 = arith.constant 16 : index
    %c0_195 = arith.constant 0 : index
    %243 = vector.load %arg23[%c16_194, %c0_195] : memref<144x2560xf32, #tpu.memory_space<vmem>>, vector<16x25xf32>
    tpu.vector_store %arg23[%c16_194, %c0_195], %242 {strides = array<i32>} : memref<144x2560xf32, #tpu.memory_space<vmem>>, vector<16x25xf32>,
    %c0_196 = arith.constant 0 : index
    %c0_197 = arith.constant 0 : index
    %244 = vector.load %arg23[%c0_196, %c0_197] : memref<144x2560xf32, #tpu.memory_space<vmem>>, vector<32x25xf32>
    %245 = arith.truncf %244 : vector<32x25xf32> to vector<32x25xbf16>
    %c0_198 = arith.constant 0 : index
    %c0_199 = arith.constant 0 : index
    %246 = vector.load %arg15[%c0_198, %c0_199] : memref<25x49xbf16, #tpu.memory_space<vmem>>, vector<25x49xbf16>
    %cst_200 = arith.constant dense<0.000000e+00> : vector<32x49xf32>
    %247 = tpu.matmul %245, %246, %cst_200 {dimension_numbers = #tpu.dot_dimension_numbers<[1], [0], [0], [1], [0, 0, 1, 1], [], []>} : vector<32x25xbf16>, vector<25x49xbf16>, vector<32x49xf32> -> vector<32x49xf32>
    %248 = vector.extract_strided_slice %247 {offsets = [0, 0], sizes = [16, 49], strides = [1, 1]} : vector<32x49xf32> to vector<16x49xf32>
    %249 = vector.extract_strided_slice %247 {offsets = [16, 0], sizes = [16, 49], strides = [1, 1]} : vector<32x49xf32> to vector<16x49xf32>
    %250 = vector.extract_strided_slice %248 {offsets = [0, 0], sizes = [16, 37], strides = [1, 1]} : vector<16x49xf32> to vector<16x37xf32>
    %c0_201 = arith.constant 0 : index
    %c0_202 = arith.constant 0 : index
    %251 = vector.load %arg23[%c0_201, %c0_202] : memref<144x2560xf32, #tpu.memory_space<vmem>>, vector<16x37xf32>
    tpu.vector_store %arg23[%c0_201, %c0_202], %250 {strides = array<i32>} : memref<144x2560xf32, #tpu.memory_space<vmem>>, vector<16x37xf32>,
    %252 = vector.extract_strided_slice %248 {offsets = [0, 1], sizes = [16, 37], strides = [1, 1]} : vector<16x49xf32> to vector<16x37xf32>
    %c16_203 = arith.constant 16 : index
    %c0_204 = arith.constant 0 : index
    %253 = vector.load %arg23[%c16_203, %c0_204] : memref<144x2560xf32, #tpu.memory_space<vmem>>, vector<16x37xf32>
    tpu.vector_store %arg23[%c16_203, %c0_204], %252 {strides = array<i32>} : memref<144x2560xf32, #tpu.memory_space<vmem>>, vector<16x37xf32>,
    %254 = vector.extract_strided_slice %248 {offsets = [0, 2], sizes = [16, 37], strides = [1, 1]} : vector<16x49xf32> to vector<16x37xf32>
    %c32_205 = arith.constant 32 : index
    %c0_206 = arith.constant 0 : index
    %255 = vector.load %arg23[%c32_205, %c0_206] : memref<144x2560xf32, #tpu.memory_space<vmem>>, vector<16x37xf32>
    tpu.vector_store %arg23[%c32_205, %c0_206], %254 {strides = array<i32>} : memref<144x2560xf32, #tpu.memory_space<vmem>>, vector<16x37xf32>,
    %256 = vector.extract_strided_slice %248 {offsets = [0, 5], sizes = [16, 37], strides = [1, 1]} : vector<16x49xf32> to vector<16x37xf32>
    %c48_207 = arith.constant 48 : index
    %c0_208 = arith.constant 0 : index
    %257 = vector.load %arg23[%c48_207, %c0_208] : memref<144x2560xf32, #tpu.memory_space<vmem>>, vector<16x37xf32>
    tpu.vector_store %arg23[%c48_207, %c0_208], %256 {strides = array<i32>} : memref<144x2560xf32, #tpu.memory_space<vmem>>, vector<16x37xf32>,
    %258 = vector.extract_strided_slice %248 {offsets = [0, 6], sizes = [16, 37], strides = [1, 1]} : vector<16x49xf32> to vector<16x37xf32>
    %c64_209 = arith.constant 64 : index
    %c0_210 = arith.constant 0 : index
    %259 = vector.load %arg23[%c64_209, %c0_210] : memref<144x2560xf32, #tpu.memory_space<vmem>>, vector<16x37xf32>
    tpu.vector_store %arg23[%c64_209, %c0_210], %258 {strides = array<i32>} : memref<144x2560xf32, #tpu.memory_space<vmem>>, vector<16x37xf32>,
    %260 = vector.extract_strided_slice %248 {offsets = [0, 7], sizes = [16, 37], strides = [1, 1]} : vector<16x49xf32> to vector<16x37xf32>
    %c80_211 = arith.constant 80 : index
    %c0_212 = arith.constant 0 : index
    %261 = vector.load %arg23[%c80_211, %c0_212] : memref<144x2560xf32, #tpu.memory_space<vmem>>, vector<16x37xf32>
    tpu.vector_store %arg23[%c80_211, %c0_212], %260 {strides = array<i32>} : memref<144x2560xf32, #tpu.memory_space<vmem>>, vector<16x37xf32>,
    %262 = vector.extract_strided_slice %248 {offsets = [0, 10], sizes = [16, 37], strides = [1, 1]} : vector<16x49xf32> to vector<16x37xf32>
    %c96_213 = arith.constant 96 : index
    %c0_214 = arith.constant 0 : index
    %263 = vector.load %arg23[%c96_213, %c0_214] : memref<144x2560xf32, #tpu.memory_space<vmem>>, vector<16x37xf32>
    tpu.vector_store %arg23[%c96_213, %c0_214], %262 {strides = array<i32>} : memref<144x2560xf32, #tpu.memory_space<vmem>>, vector<16x37xf32>,
    %264 = vector.extract_strided_slice %248 {offsets = [0, 11], sizes = [16, 37], strides = [1, 1]} : vector<16x49xf32> to vector<16x37xf32>
    %c112_215 = arith.constant 112 : index
    %c0_216 = arith.constant 0 : index
    %265 = vector.load %arg23[%c112_215, %c0_216] : memref<144x2560xf32, #tpu.memory_space<vmem>>, vector<16x37xf32>
    tpu.vector_store %arg23[%c112_215, %c0_216], %264 {strides = array<i32>} : memref<144x2560xf32, #tpu.memory_space<vmem>>, vector<16x37xf32>,
    %266 = vector.extract_strided_slice %248 {offsets = [0, 12], sizes = [16, 37], strides = [1, 1]} : vector<16x49xf32> to vector<16x37xf32>
    %c128_217 = arith.constant 128 : index
    %c0_218 = arith.constant 0 : index
    %267 = vector.load %arg23[%c128_217, %c0_218] : memref<144x2560xf32, #tpu.memory_space<vmem>>, vector<16x37xf32>
    tpu.vector_store %arg23[%c128_217, %c0_218], %266 {strides = array<i32>} : memref<144x2560xf32, #tpu.memory_space<vmem>>, vector<16x37xf32>,
    %268 = vector.extract_strided_slice %249 {offsets = [0, 0], sizes = [16, 37], strides = [1, 1]} : vector<16x49xf32> to vector<16x37xf32>
    %c0_219 = arith.constant 0 : index
    %c128_220 = arith.constant 128 : index
    %269 = vector.load %arg23[%c0_219, %c128_220] : memref<144x2560xf32, #tpu.memory_space<vmem>>, vector<16x37xf32>
    tpu.vector_store %arg23[%c0_219, %c128_220], %268 {strides = array<i32>} : memref<144x2560xf32, #tpu.memory_space<vmem>>, vector<16x37xf32>,
    %270 = vector.extract_strided_slice %249 {offsets = [0, 1], sizes = [16, 37], strides = [1, 1]} : vector<16x49xf32> to vector<16x37xf32>
    %c16_221 = arith.constant 16 : index
    %c128_222 = arith.constant 128 : index
    %271 = vector.load %arg23[%c16_221, %c128_222] : memref<144x2560xf32, #tpu.memory_space<vmem>>, vector<16x37xf32>
    tpu.vector_store %arg23[%c16_221, %c128_222], %270 {strides = array<i32>} : memref<144x2560xf32, #tpu.memory_space<vmem>>, vector<16x37xf32>,
    %272 = vector.extract_strided_slice %249 {offsets = [0, 2], sizes = [16, 37], strides = [1, 1]} : vector<16x49xf32> to vector<16x37xf32>
    %c32_223 = arith.constant 32 : index
    %c128_224 = arith.constant 128 : index
    %273 = vector.load %arg23[%c32_223, %c128_224] : memref<144x2560xf32, #tpu.memory_space<vmem>>, vector<16x37xf32>
    tpu.vector_store %arg23[%c32_223, %c128_224], %272 {strides = array<i32>} : memref<144x2560xf32, #tpu.memory_space<vmem>>, vector<16x37xf32>,
    %274 = vector.extract_strided_slice %249 {offsets = [0, 5], sizes = [16, 37], strides = [1, 1]} : vector<16x49xf32> to vector<16x37xf32>
    %c48_225 = arith.constant 48 : index
    %c128_226 = arith.constant 128 : index
    %275 = vector.load %arg23[%c48_225, %c128_226] : memref<144x2560xf32, #tpu.memory_space<vmem>>, vector<16x37xf32>
    tpu.vector_store %arg23[%c48_225, %c128_226], %274 {strides = array<i32>} : memref<144x2560xf32, #tpu.memory_space<vmem>>, vector<16x37xf32>,
    %276 = vector.extract_strided_slice %249 {offsets = [0, 6], sizes = [16, 37], strides = [1, 1]} : vector<16x49xf32> to vector<16x37xf32>
    %c64_227 = arith.constant 64 : index
    %c128_228 = arith.constant 128 : index
    %277 = vector.load %arg23[%c64_227, %c128_228] : memref<144x2560xf32, #tpu.memory_space<vmem>>, vector<16x37xf32>
    tpu.vector_store %arg23[%c64_227, %c128_228], %276 {strides = array<i32>} : memref<144x2560xf32, #tpu.memory_space<vmem>>, vector<16x37xf32>,
    %278 = vector.extract_strided_slice %249 {offsets = [0, 7], sizes = [16, 37], strides = [1, 1]} : vector<16x49xf32> to vector<16x37xf32>
    %c80_229 = arith.constant 80 : index
    %c128_230 = arith.constant 128 : index
    %279 = vector.load %arg23[%c80_229, %c128_230] : memref<144x2560xf32, #tpu.memory_space<vmem>>, vector<16x37xf32>
    tpu.vector_store %arg23[%c80_229, %c128_230], %278 {strides = array<i32>} : memref<144x2560xf32, #tpu.memory_space<vmem>>, vector<16x37xf32>,
    %280 = vector.extract_strided_slice %249 {offsets = [0, 10], sizes = [16, 37], strides = [1, 1]} : vector<16x49xf32> to vector<16x37xf32>
    %c96_231 = arith.constant 96 : index
    %c128_232 = arith.constant 128 : index
    %281 = vector.load %arg23[%c96_231, %c128_232] : memref<144x2560xf32, #tpu.memory_space<vmem>>, vector<16x37xf32>
    tpu.vector_store %arg23[%c96_231, %c128_232], %280 {strides = array<i32>} : memref<144x2560xf32, #tpu.memory_space<vmem>>, vector<16x37xf32>,
    %282 = vector.extract_strided_slice %249 {offsets = [0, 11], sizes = [16, 37], strides = [1, 1]} : vector<16x49xf32> to vector<16x37xf32>
    %c112_233 = arith.constant 112 : index
    %c128_234 = arith.constant 128 : index
    %283 = vector.load %arg23[%c112_233, %c128_234] : memref<144x2560xf32, #tpu.memory_space<vmem>>, vector<16x37xf32>
    tpu.vector_store %arg23[%c112_233, %c128_234], %282 {strides = array<i32>} : memref<144x2560xf32, #tpu.memory_space<vmem>>, vector<16x37xf32>,
    %284 = vector.extract_strided_slice %249 {offsets = [0, 12], sizes = [16, 37], strides = [1, 1]} : vector<16x49xf32> to vector<16x37xf32>
    %c128_235 = arith.constant 128 : index
    %c128_236 = arith.constant 128 : index
    %285 = vector.load %arg23[%c128_235, %c128_236] : memref<144x2560xf32, #tpu.memory_space<vmem>>, vector<16x37xf32>
    tpu.vector_store %arg23[%c128_235, %c128_236], %284 {strides = array<i32>} : memref<144x2560xf32, #tpu.memory_space<vmem>>, vector<16x37xf32>,
    %c0_237 = arith.constant 0 : index
    %c0_238 = arith.constant 0 : index
    %286 = vector.load %arg10[%c0_237, %c0_238] : memref<16x144xf32, #tpu.memory_space<vmem>>, vector<16x144xf32>
    %c0_239 = arith.constant 0 : index
    %c0_240 = arith.constant 0 : index
    %287 = vector.load %arg23[%c0_239, %c0_240] : memref<144x2560xf32, #tpu.memory_space<vmem>>, vector<144x165xf32>
    %cst_241 = arith.constant dense<0.000000e+00> : vector<16x165xf32>
    %288 = tpu.matmul %286, %287, %cst_241 {dimension_numbers = #tpu.dot_dimension_numbers<[1], [0], [0], [1], [0, 0, 1, 1], [], []>} : vector<16x144xf32>, vector<144x165xf32>, vector<16x165xf32> -> vector<16x165xf32>
    %c0_242 = arith.constant 0 : index
    %c0_243 = arith.constant 0 : index
    %289 = vector.load %arg11[%c0_242, %c0_243] : memref<16x1xf32, #tpu.memory_space<vmem>>, vector<16x1xf32>
    %290 = vector.broadcast %289 : vector<16x1xf32> to vector<16x165xf32>
    %291 = arith.addf %288, %290 : vector<16x165xf32>
    %cst_244 = arith.constant 0.000000e+00 : f32
    %292 = vector.broadcast %cst_244 : f32 to vector<16x165xf32>
    %293 = arith.maximumf %291, %292 : vector<16x165xf32>
    %294 = vector.extract_strided_slice %293 {offsets = [0, 0], sizes = [1, 15], strides = [1, 1]} : vector<16x165xf32> to vector<1x15xf32>
    %c0_245 = arith.constant 0 : index
    %c0_246 = arith.constant 0 : index
    %295 = vector.load %arg23[%c0_245, %c0_246] : memref<144x2560xf32, #tpu.memory_space<vmem>>, vector<1x15xf32>
    tpu.vector_store %arg23[%c0_245, %c0_246], %294 {strides = array<i32>} : memref<144x2560xf32, #tpu.memory_space<vmem>>, vector<1x15xf32>,
    %296 = vector.extract_strided_slice %293 {offsets = [1, 0], sizes = [1, 15], strides = [1, 1]} : vector<16x165xf32> to vector<1x15xf32>
    %c0_247 = arith.constant 0 : index
    %c15 = arith.constant 15 : index
    %297 = vector.load %arg23[%c0_247, %c15] : memref<144x2560xf32, #tpu.memory_space<vmem>>, vector<1x15xf32>
    tpu.vector_store %arg23[%c0_247, %c15], %296 {strides = array<i32>} : memref<144x2560xf32, #tpu.memory_space<vmem>>, vector<1x15xf32>,
    %298 = vector.extract_strided_slice %293 {offsets = [2, 0], sizes = [1, 15], strides = [1, 1]} : vector<16x165xf32> to vector<1x15xf32>
    %c0_248 = arith.constant 0 : index
    %c30 = arith.constant 30 : index
    %299 = vector.load %arg23[%c0_248, %c30] : memref<144x2560xf32, #tpu.memory_space<vmem>>, vector<1x15xf32>
    tpu.vector_store %arg23[%c0_248, %c30], %298 {strides = array<i32>} : memref<144x2560xf32, #tpu.memory_space<vmem>>, vector<1x15xf32>,
    %300 = vector.extract_strided_slice %293 {offsets = [3, 0], sizes = [1, 15], strides = [1, 1]} : vector<16x165xf32> to vector<1x15xf32>
    %c0_249 = arith.constant 0 : index
    %c45 = arith.constant 45 : index
    %301 = vector.load %arg23[%c0_249, %c45] : memref<144x2560xf32, #tpu.memory_space<vmem>>, vector<1x15xf32>
    tpu.vector_store %arg23[%c0_249, %c45], %300 {strides = array<i32>} : memref<144x2560xf32, #tpu.memory_space<vmem>>, vector<1x15xf32>,
    %302 = vector.extract_strided_slice %293 {offsets = [4, 0], sizes = [1, 15], strides = [1, 1]} : vector<16x165xf32> to vector<1x15xf32>
    %c0_250 = arith.constant 0 : index
    %c60 = arith.constant 60 : index
    %303 = vector.load %arg23[%c0_250, %c60] : memref<144x2560xf32, #tpu.memory_space<vmem>>, vector<1x15xf32>
    tpu.vector_store %arg23[%c0_250, %c60], %302 {strides = array<i32>} : memref<144x2560xf32, #tpu.memory_space<vmem>>, vector<1x15xf32>,
    %304 = vector.extract_strided_slice %293 {offsets = [5, 0], sizes = [1, 15], strides = [1, 1]} : vector<16x165xf32> to vector<1x15xf32>
    %c0_251 = arith.constant 0 : index
    %c75 = arith.constant 75 : index
    %305 = vector.load %arg23[%c0_251, %c75] : memref<144x2560xf32, #tpu.memory_space<vmem>>, vector<1x15xf32>
    tpu.vector_store %arg23[%c0_251, %c75], %304 {strides = array<i32>} : memref<144x2560xf32, #tpu.memory_space<vmem>>, vector<1x15xf32>,
    %306 = vector.extract_strided_slice %293 {offsets = [6, 0], sizes = [1, 15], strides = [1, 1]} : vector<16x165xf32> to vector<1x15xf32>
    %c0_252 = arith.constant 0 : index
    %c90 = arith.constant 90 : index
    %307 = vector.load %arg23[%c0_252, %c90] : memref<144x2560xf32, #tpu.memory_space<vmem>>, vector<1x15xf32>
    tpu.vector_store %arg23[%c0_252, %c90], %306 {strides = array<i32>} : memref<144x2560xf32, #tpu.memory_space<vmem>>, vector<1x15xf32>,
    %308 = vector.extract_strided_slice %293 {offsets = [7, 0], sizes = [1, 15], strides = [1, 1]} : vector<16x165xf32> to vector<1x15xf32>
    %c0_253 = arith.constant 0 : index
    %c105 = arith.constant 105 : index
    %309 = vector.load %arg23[%c0_253, %c105] : memref<144x2560xf32, #tpu.memory_space<vmem>>, vector<1x15xf32>
    tpu.vector_store %arg23[%c0_253, %c105], %308 {strides = array<i32>} : memref<144x2560xf32, #tpu.memory_space<vmem>>, vector<1x15xf32>,
    %310 = vector.extract_strided_slice %293 {offsets = [8, 0], sizes = [1, 15], strides = [1, 1]} : vector<16x165xf32> to vector<1x15xf32>
    %c0_254 = arith.constant 0 : index
    %c120 = arith.constant 120 : index
    %311 = vector.load %arg23[%c0_254, %c120] : memref<144x2560xf32, #tpu.memory_space<vmem>>, vector<1x15xf32>
    tpu.vector_store %arg23[%c0_254, %c120], %310 {strides = array<i32>} : memref<144x2560xf32, #tpu.memory_space<vmem>>, vector<1x15xf32>,
    %312 = vector.extract_strided_slice %293 {offsets = [9, 0], sizes = [1, 15], strides = [1, 1]} : vector<16x165xf32> to vector<1x15xf32>
    %c0_255 = arith.constant 0 : index
    %c135 = arith.constant 135 : index
    %313 = vector.load %arg23[%c0_255, %c135] : memref<144x2560xf32, #tpu.memory_space<vmem>>, vector<1x15xf32>
    tpu.vector_store %arg23[%c0_255, %c135], %312 {strides = array<i32>} : memref<144x2560xf32, #tpu.memory_space<vmem>>, vector<1x15xf32>,
    %314 = vector.extract_strided_slice %293 {offsets = [10, 0], sizes = [1, 15], strides = [1, 1]} : vector<16x165xf32> to vector<1x15xf32>
    %c0_256 = arith.constant 0 : index
    %c150 = arith.constant 150 : index
    %315 = vector.load %arg23[%c0_256, %c150] : memref<144x2560xf32, #tpu.memory_space<vmem>>, vector<1x15xf32>
    tpu.vector_store %arg23[%c0_256, %c150], %314 {strides = array<i32>} : memref<144x2560xf32, #tpu.memory_space<vmem>>, vector<1x15xf32>,
    %316 = vector.extract_strided_slice %293 {offsets = [11, 0], sizes = [1, 15], strides = [1, 1]} : vector<16x165xf32> to vector<1x15xf32>
    %c0_257 = arith.constant 0 : index
    %c165 = arith.constant 165 : index
    %317 = vector.load %arg23[%c0_257, %c165] : memref<144x2560xf32, #tpu.memory_space<vmem>>, vector<1x15xf32>
    tpu.vector_store %arg23[%c0_257, %c165], %316 {strides = array<i32>} : memref<144x2560xf32, #tpu.memory_space<vmem>>, vector<1x15xf32>,
    %318 = vector.extract_strided_slice %293 {offsets = [12, 0], sizes = [1, 15], strides = [1, 1]} : vector<16x165xf32> to vector<1x15xf32>
    %c0_258 = arith.constant 0 : index
    %c180 = arith.constant 180 : index
    %319 = vector.load %arg23[%c0_258, %c180] : memref<144x2560xf32, #tpu.memory_space<vmem>>, vector<1x15xf32>
    tpu.vector_store %arg23[%c0_258, %c180], %318 {strides = array<i32>} : memref<144x2560xf32, #tpu.memory_space<vmem>>, vector<1x15xf32>,
    %320 = vector.extract_strided_slice %293 {offsets = [13, 0], sizes = [1, 15], strides = [1, 1]} : vector<16x165xf32> to vector<1x15xf32>
    %c0_259 = arith.constant 0 : index
    %c195 = arith.constant 195 : index
    %321 = vector.load %arg23[%c0_259, %c195] : memref<144x2560xf32, #tpu.memory_space<vmem>>, vector<1x15xf32>
    tpu.vector_store %arg23[%c0_259, %c195], %320 {strides = array<i32>} : memref<144x2560xf32, #tpu.memory_space<vmem>>, vector<1x15xf32>,
    %322 = vector.extract_strided_slice %293 {offsets = [14, 0], sizes = [1, 15], strides = [1, 1]} : vector<16x165xf32> to vector<1x15xf32>
    %c0_260 = arith.constant 0 : index
    %c210 = arith.constant 210 : index
    %323 = vector.load %arg23[%c0_260, %c210] : memref<144x2560xf32, #tpu.memory_space<vmem>>, vector<1x15xf32>
    tpu.vector_store %arg23[%c0_260, %c210], %322 {strides = array<i32>} : memref<144x2560xf32, #tpu.memory_space<vmem>>, vector<1x15xf32>,
    %324 = vector.extract_strided_slice %293 {offsets = [15, 0], sizes = [1, 15], strides = [1, 1]} : vector<16x165xf32> to vector<1x15xf32>
    %c0_261 = arith.constant 0 : index
    %c225 = arith.constant 225 : index
    %325 = vector.load %arg23[%c0_261, %c225] : memref<144x2560xf32, #tpu.memory_space<vmem>>, vector<1x15xf32>
    tpu.vector_store %arg23[%c0_261, %c225], %324 {strides = array<i32>} : memref<144x2560xf32, #tpu.memory_space<vmem>>, vector<1x15xf32>,
    %326 = vector.extract_strided_slice %293 {offsets = [0, 128], sizes = [1, 15], strides = [1, 1]} : vector<16x165xf32> to vector<1x15xf32>
    %c1_262 = arith.constant 1 : index
    %c0_263 = arith.constant 0 : index
    %327 = vector.load %arg23[%c1_262, %c0_263] : memref<144x2560xf32, #tpu.memory_space<vmem>>, vector<1x15xf32>
    tpu.vector_store %arg23[%c1_262, %c0_263], %326 {strides = array<i32>} : memref<144x2560xf32, #tpu.memory_space<vmem>>, vector<1x15xf32>,
    %328 = vector.extract_strided_slice %293 {offsets = [1, 128], sizes = [1, 15], strides = [1, 1]} : vector<16x165xf32> to vector<1x15xf32>
    %c1_264 = arith.constant 1 : index
    %c15_265 = arith.constant 15 : index
    %329 = vector.load %arg23[%c1_264, %c15_265] : memref<144x2560xf32, #tpu.memory_space<vmem>>, vector<1x15xf32>
    tpu.vector_store %arg23[%c1_264, %c15_265], %328 {strides = array<i32>} : memref<144x2560xf32, #tpu.memory_space<vmem>>, vector<1x15xf32>,
    %330 = vector.extract_strided_slice %293 {offsets = [2, 128], sizes = [1, 15], strides = [1, 1]} : vector<16x165xf32> to vector<1x15xf32>
    %c1_266 = arith.constant 1 : index
    %c30_267 = arith.constant 30 : index
    %331 = vector.load %arg23[%c1_266, %c30_267] : memref<144x2560xf32, #tpu.memory_space<vmem>>, vector<1x15xf32>
    tpu.vector_store %arg23[%c1_266, %c30_267], %330 {strides = array<i32>} : memref<144x2560xf32, #tpu.memory_space<vmem>>, vector<1x15xf32>,
    %332 = vector.extract_strided_slice %293 {offsets = [3, 128], sizes = [1, 15], strides = [1, 1]} : vector<16x165xf32> to vector<1x15xf32>
    %c1_268 = arith.constant 1 : index
    %c45_269 = arith.constant 45 : index
    %333 = vector.load %arg23[%c1_268, %c45_269] : memref<144x2560xf32, #tpu.memory_space<vmem>>, vector<1x15xf32>
    tpu.vector_store %arg23[%c1_268, %c45_269], %332 {strides = array<i32>} : memref<144x2560xf32, #tpu.memory_space<vmem>>, vector<1x15xf32>,
    %334 = vector.extract_strided_slice %293 {offsets = [4, 128], sizes = [1, 15], strides = [1, 1]} : vector<16x165xf32> to vector<1x15xf32>
    %c1_270 = arith.constant 1 : index
    %c60_271 = arith.constant 60 : index
    %335 = vector.load %arg23[%c1_270, %c60_271] : memref<144x2560xf32, #tpu.memory_space<vmem>>, vector<1x15xf32>
    tpu.vector_store %arg23[%c1_270, %c60_271], %334 {strides = array<i32>} : memref<144x2560xf32, #tpu.memory_space<vmem>>, vector<1x15xf32>,
    %336 = vector.extract_strided_slice %293 {offsets = [5, 128], sizes = [1, 15], strides = [1, 1]} : vector<16x165xf32> to vector<1x15xf32>
    %c1_272 = arith.constant 1 : index
    %c75_273 = arith.constant 75 : index
    %337 = vector.load %arg23[%c1_272, %c75_273] : memref<144x2560xf32, #tpu.memory_space<vmem>>, vector<1x15xf32>
    tpu.vector_store %arg23[%c1_272, %c75_273], %336 {strides = array<i32>} : memref<144x2560xf32, #tpu.memory_space<vmem>>, vector<1x15xf32>,
    %338 = vector.extract_strided_slice %293 {offsets = [6, 128], sizes = [1, 15], strides = [1, 1]} : vector<16x165xf32> to vector<1x15xf32>
    %c1_274 = arith.constant 1 : index
    %c90_275 = arith.constant 90 : index
    %339 = vector.load %arg23[%c1_274, %c90_275] : memref<144x2560xf32, #tpu.memory_space<vmem>>, vector<1x15xf32>
    tpu.vector_store %arg23[%c1_274, %c90_275], %338 {strides = array<i32>} : memref<144x2560xf32, #tpu.memory_space<vmem>>, vector<1x15xf32>,
    %340 = vector.extract_strided_slice %293 {offsets = [7, 128], sizes = [1, 15], strides = [1, 1]} : vector<16x165xf32> to vector<1x15xf32>
    %c1_276 = arith.constant 1 : index
    %c105_277 = arith.constant 105 : index
    %341 = vector.load %arg23[%c1_276, %c105_277] : memref<144x2560xf32, #tpu.memory_space<vmem>>, vector<1x15xf32>
    tpu.vector_store %arg23[%c1_276, %c105_277], %340 {strides = array<i32>} : memref<144x2560xf32, #tpu.memory_space<vmem>>, vector<1x15xf32>,
    %342 = vector.extract_strided_slice %293 {offsets = [8, 128], sizes = [1, 15], strides = [1, 1]} : vector<16x165xf32> to vector<1x15xf32>
    %c1_278 = arith.constant 1 : index
    %c120_279 = arith.constant 120 : index
    %343 = vector.load %arg23[%c1_278, %c120_279] : memref<144x2560xf32, #tpu.memory_space<vmem>>, vector<1x15xf32>
    tpu.vector_store %arg23[%c1_278, %c120_279], %342 {strides = array<i32>} : memref<144x2560xf32, #tpu.memory_space<vmem>>, vector<1x15xf32>,
    %344 = vector.extract_strided_slice %293 {offsets = [9, 128], sizes = [1, 15], strides = [1, 1]} : vector<16x165xf32> to vector<1x15xf32>
    %c1_280 = arith.constant 1 : index
    %c135_281 = arith.constant 135 : index
    %345 = vector.load %arg23[%c1_280, %c135_281] : memref<144x2560xf32, #tpu.memory_space<vmem>>, vector<1x15xf32>
    tpu.vector_store %arg23[%c1_280, %c135_281], %344 {strides = array<i32>} : memref<144x2560xf32, #tpu.memory_space<vmem>>, vector<1x15xf32>,
    %346 = vector.extract_strided_slice %293 {offsets = [10, 128], sizes = [1, 15], strides = [1, 1]} : vector<16x165xf32> to vector<1x15xf32>
    %c1_282 = arith.constant 1 : index
    %c150_283 = arith.constant 150 : index
    %347 = vector.load %arg23[%c1_282, %c150_283] : memref<144x2560xf32, #tpu.memory_space<vmem>>, vector<1x15xf32>
    tpu.vector_store %arg23[%c1_282, %c150_283], %346 {strides = array<i32>} : memref<144x2560xf32, #tpu.memory_space<vmem>>, vector<1x15xf32>,
    %348 = vector.extract_strided_slice %293 {offsets = [11, 128], sizes = [1, 15], strides = [1, 1]} : vector<16x165xf32> to vector<1x15xf32>
    %c1_284 = arith.constant 1 : index
    %c165_285 = arith.constant 165 : index
    %349 = vector.load %arg23[%c1_284, %c165_285] : memref<144x2560xf32, #tpu.memory_space<vmem>>, vector<1x15xf32>
    tpu.vector_store %arg23[%c1_284, %c165_285], %348 {strides = array<i32>} : memref<144x2560xf32, #tpu.memory_space<vmem>>, vector<1x15xf32>,
    %350 = vector.extract_strided_slice %293 {offsets = [12, 128], sizes = [1, 15], strides = [1, 1]} : vector<16x165xf32> to vector<1x15xf32>
    %c1_286 = arith.constant 1 : index
    %c180_287 = arith.constant 180 : index
    %351 = vector.load %arg23[%c1_286, %c180_287] : memref<144x2560xf32, #tpu.memory_space<vmem>>, vector<1x15xf32>
    tpu.vector_store %arg23[%c1_286, %c180_287], %350 {strides = array<i32>} : memref<144x2560xf32, #tpu.memory_space<vmem>>, vector<1x15xf32>,
    %352 = vector.extract_strided_slice %293 {offsets = [13, 128], sizes = [1, 15], strides = [1, 1]} : vector<16x165xf32> to vector<1x15xf32>
    %c1_288 = arith.constant 1 : index
    %c195_289 = arith.constant 195 : index
    %353 = vector.load %arg23[%c1_288, %c195_289] : memref<144x2560xf32, #tpu.memory_space<vmem>>, vector<1x15xf32>
    tpu.vector_store %arg23[%c1_288, %c195_289], %352 {strides = array<i32>} : memref<144x2560xf32, #tpu.memory_space<vmem>>, vector<1x15xf32>,
    %354 = vector.extract_strided_slice %293 {offsets = [14, 128], sizes = [1, 15], strides = [1, 1]} : vector<16x165xf32> to vector<1x15xf32>
    %c1_290 = arith.constant 1 : index
    %c210_291 = arith.constant 210 : index
    %355 = vector.load %arg23[%c1_290, %c210_291] : memref<144x2560xf32, #tpu.memory_space<vmem>>, vector<1x15xf32>
    tpu.vector_store %arg23[%c1_290, %c210_291], %354 {strides = array<i32>} : memref<144x2560xf32, #tpu.memory_space<vmem>>, vector<1x15xf32>,
    %356 = vector.extract_strided_slice %293 {offsets = [15, 128], sizes = [1, 15], strides = [1, 1]} : vector<16x165xf32> to vector<1x15xf32>
    %c1_292 = arith.constant 1 : index
    %c225_293 = arith.constant 225 : index
    %357 = vector.load %arg23[%c1_292, %c225_293] : memref<144x2560xf32, #tpu.memory_space<vmem>>, vector<1x15xf32>
    tpu.vector_store %arg23[%c1_292, %c225_293], %356 {strides = array<i32>} : memref<144x2560xf32, #tpu.memory_space<vmem>>, vector<1x15xf32>,
    %c0_294 = arith.constant 0 : index
    %c0_295 = arith.constant 0 : index
    %358 = vector.load %arg23[%c0_294, %c0_295] : memref<144x2560xf32, #tpu.memory_space<vmem>>, vector<2x240xf32>
    %c0_296 = arith.constant 0 : index
    %c0_297 = arith.constant 0 : index
    %359 = vector.load %arg16[%c0_296, %c0_297] : memref<240x144xf32, #tpu.memory_space<vmem>>, vector<240x144xf32>
    %cst_298 = arith.constant dense<0.000000e+00> : vector<2x144xf32>
    %360 = tpu.matmul %358, %359, %cst_298 {dimension_numbers = #tpu.dot_dimension_numbers<[1], [0], [0], [1], [0, 0, 1, 1], [], []>} : vector<2x240xf32>, vector<240x144xf32>, vector<2x144xf32> -> vector<2x144xf32>
    %c0_299 = arith.constant 0 : index
    %c0_300 = arith.constant 0 : index
    %361 = vector.load %arg17[%c0_299, %c0_300] : memref<1x144xf32, #tpu.memory_space<vmem>>, vector<1x144xf32>
    %362 = vector.broadcast %361 : vector<1x144xf32> to vector<2x144xf32>
    %363 = arith.addf %360, %362 : vector<2x144xf32>
    %cst_301 = arith.constant 0.000000e+00 : f32
    %364 = vector.broadcast %cst_301 : f32 to vector<2x144xf32>
    %365 = arith.maximumf %363, %364 : vector<2x144xf32>
    %c0_302 = arith.constant 0 : index
    %c0_303 = arith.constant 0 : index
    %366 = vector.load %arg18[%c0_302, %c0_303] : memref<144x72xf32, #tpu.memory_space<vmem>>, vector<144x72xf32>
    %cst_304 = arith.constant dense<0.000000e+00> : vector<2x72xf32>
    %367 = tpu.matmul %365, %366, %cst_304 {dimension_numbers = #tpu.dot_dimension_numbers<[1], [0], [0], [1], [0, 0, 1, 1], [], []>} : vector<2x144xf32>, vector<144x72xf32>, vector<2x72xf32> -> vector<2x72xf32>
    %c0_305 = arith.constant 0 : index
    %c0_306 = arith.constant 0 : index
    %368 = vector.load %arg19[%c0_305, %c0_306] : memref<1x72xf32, #tpu.memory_space<vmem>>, vector<1x72xf32>
    %369 = vector.broadcast %368 : vector<1x72xf32> to vector<2x72xf32>
    %370 = arith.addf %367, %369 : vector<2x72xf32>
    %cst_307 = arith.constant 0.000000e+00 : f32
    %371 = vector.broadcast %cst_307 : f32 to vector<2x72xf32>
    %372 = arith.maximumf %370, %371 : vector<2x72xf32>
    %c0_308 = arith.constant 0 : index
    %c0_309 = arith.constant 0 : index
    %373 = vector.load %arg20[%c0_308, %c0_309] : memref<72x128xf32, #tpu.memory_space<vmem>>, vector<72x128xf32>
    %cst_310 = arith.constant dense<0.000000e+00> : vector<2x128xf32>
    %374 = tpu.matmul %372, %373, %cst_310 {dimension_numbers = #tpu.dot_dimension_numbers<[1], [0], [0], [1], [0, 0, 1, 1], [], []>} : vector<2x72xf32>, vector<72x128xf32>, vector<2x128xf32> -> vector<2x128xf32>
    %c0_311 = arith.constant 0 : index
    %c0_312 = arith.constant 0 : index
    %375 = vector.load %arg21[%c0_311, %c0_312] : memref<1x128xf32, #tpu.memory_space<vmem>>, vector<1x128xf32>
    %376 = vector.broadcast %375 : vector<1x128xf32> to vector<2x128xf32>
    %377 = arith.addf %374, %376 : vector<2x128xf32>
    %378 = vector.shape_cast %377 : vector<2x128xf32> to vector<1x2x128xf32>
    %c0_313 = arith.constant 0 : index
    %c0_314 = arith.constant 0 : index
    %c0_315 = arith.constant 0 : index
    %379 = vector.load %arg22[%c0_313, %c0_314, %c0_315] : memref<1x2x128xf32, #tpu.memory_space<vmem>>, vector<1x2x128xf32>
    tpu.vector_store %arg22[%c0_313, %c0_314, %c0_315], %378 {strides = array<i32>} : memref<1x2x128xf32, #tpu.memory_space<vmem>>, vector<1x2x128xf32>,
    return
  }
  func.func @transform_0(%arg0: i32) -> (i32, i32, i32) {
    %c0_i32 = arith.constant 0 : i32
    %c0_i32_0 = arith.constant 0 : i32
    %c0_i32_1 = arith.constant 0 : i32
    return %arg0, %c0_i32, %c0_i32_0 : i32, i32, i32
  }
  func.func @transform_1(%arg0: i32) -> (i32, i32) {
    %c0_i32 = arith.constant 0 : i32
    %c0_i32_0 = arith.constant 0 : i32
    %c0_i32_1 = arith.constant 0 : i32
    return %c0_i32, %c0_i32_0 : i32, i32
  }
  func.func @transform_2(%arg0: i32) -> (i32, i32) {
    %c0_i32 = arith.constant 0 : i32
    %c0_i32_0 = arith.constant 0 : i32
    %c0_i32_1 = arith.constant 0 : i32
    return %c0_i32, %c0_i32_0 : i32, i32
  }
  func.func @transform_3(%arg0: i32) -> (i32, i32) {
    %c0_i32 = arith.constant 0 : i32
    %c0_i32_0 = arith.constant 0 : i32
    %c0_i32_1 = arith.constant 0 : i32
    return %c0_i32, %c0_i32_0 : i32, i32
  }
  func.func @transform_4(%arg0: i32) -> (i32, i32) {
    %c0_i32 = arith.constant 0 : i32
    %c0_i32_0 = arith.constant 0 : i32
    %c0_i32_1 = arith.constant 0 : i32
    return %c0_i32, %c0_i32_0 : i32, i32
  }
  func.func @transform_5(%arg0: i32) -> (i32, i32) {
    %c0_i32 = arith.constant 0 : i32
    %c0_i32_0 = arith.constant 0 : i32
    %c0_i32_1 = arith.constant 0 : i32
    return %c0_i32, %c0_i32_0 : i32, i32
  }
  func.func @transform_6(%arg0: i32) -> (i32, i32) {
    %c0_i32 = arith.constant 0 : i32
    %c0_i32_0 = arith.constant 0 : i32
    %c0_i32_1 = arith.constant 0 : i32
    return %c0_i32, %c0_i32_0 : i32, i32
  }
  func.func @transform_7(%arg0: i32) -> (i32, i32) {
    %c0_i32 = arith.constant 0 : i32
    %c0_i32_0 = arith.constant 0 : i32
    %c0_i32_1 = arith.constant 0 : i32
    return %c0_i32, %c0_i32_0 : i32, i32
  }
  func.func @transform_8(%arg0: i32) -> (i32, i32) {
    %c0_i32 = arith.constant 0 : i32
    %c0_i32_0 = arith.constant 0 : i32
    %c0_i32_1 = arith.constant 0 : i32
    return %c0_i32, %c0_i32_0 : i32, i32
  }
  func.func @transform_9(%arg0: i32) -> (i32, i32) {
    %c0_i32 = arith.constant 0 : i32
    %c0_i32_0 = arith.constant 0 : i32
    %c0_i32_1 = arith.constant 0 : i32
    return %c0_i32, %c0_i32_0 : i32, i32
  }
  func.func @transform_10(%arg0: i32) -> (i32, i32) {
    %c0_i32 = arith.constant 0 : i32
    %c0_i32_0 = arith.constant 0 : i32
    %c0_i32_1 = arith.constant 0 : i32
    return %c0_i32, %c0_i32_0 : i32, i32
  }
  func.func @transform_11(%arg0: i32) -> (i32, i32) {
    %c0_i32 = arith.constant 0 : i32
    %c0_i32_0 = arith.constant 0 : i32
    %c0_i32_1 = arith.constant 0 : i32
    return %c0_i32, %c0_i32_0 : i32, i32
  }
  func.func @transform_12(%arg0: i32) -> (i32, i32) {
    %c0_i32 = arith.constant 0 : i32
    %c0_i32_0 = arith.constant 0 : i32
    %c0_i32_1 = arith.constant 0 : i32
    return %c0_i32, %c0_i32_0 : i32, i32
  }
  func.func @transform_13(%arg0: i32) -> (i32, i32) {
    %c0_i32 = arith.constant 0 : i32
    %c0_i32_0 = arith.constant 0 : i32
    %c0_i32_1 = arith.constant 0 : i32
    return %c0_i32, %c0_i32_0 : i32, i32
  }
  func.func @transform_14(%arg0: i32) -> (i32, i32) {
    %c0_i32 = arith.constant 0 : i32
    %c0_i32_0 = arith.constant 0 : i32
    %c0_i32_1 = arith.constant 0 : i32
    return %c0_i32, %c0_i32_0 : i32, i32
  }
  func.func @transform_15(%arg0: i32) -> (i32, i32) {
    %c0_i32 = arith.constant 0 : i32
    %c0_i32_0 = arith.constant 0 : i32
    %c0_i32_1 = arith.constant 0 : i32
    return %c0_i32, %c0_i32_0 : i32, i32
  }
  func.func @transform_16(%arg0: i32) -> (i32, i32) {
    %c0_i32 = arith.constant 0 : i32
    %c0_i32_0 = arith.constant 0 : i32
    %c0_i32_1 = arith.constant 0 : i32
    return %c0_i32, %c0_i32_0 : i32, i32
  }
  func.func @transform_17(%arg0: i32) -> (i32, i32) {
    %c0_i32 = arith.constant 0 : i32
    %c0_i32_0 = arith.constant 0 : i32
    %c0_i32_1 = arith.constant 0 : i32
    return %c0_i32, %c0_i32_0 : i32, i32
  }
  func.func @transform_18(%arg0: i32) -> (i32, i32) {
    %c0_i32 = arith.constant 0 : i32
    %c0_i32_0 = arith.constant 0 : i32
    %c0_i32_1 = arith.constant 0 : i32
    return %c0_i32, %c0_i32_0 : i32, i32
  }
  func.func @transform_19(%arg0: i32) -> (i32, i32) {
    %c0_i32 = arith.constant 0 : i32
    %c0_i32_0 = arith.constant 0 : i32
    %c0_i32_1 = arith.constant 0 : i32
    return %c0_i32, %c0_i32_0 : i32, i32
  }
  func.func @transform_20(%arg0: i32) -> (i32, i32) {
    %c0_i32 = arith.constant 0 : i32
    %c0_i32_0 = arith.constant 0 : i32
    %c0_i32_1 = arith.constant 0 : i32
    return %c0_i32, %c0_i32_0 : i32, i32
  }
  func.func @transform_21(%arg0: i32) -> (i32, i32, i32) {
    %c0_i32 = arith.constant 0 : i32
    %c0_i32_0 = arith.constant 0 : i32
    %c0_i32_1 = arith.constant 0 : i32
    return %arg0, %c0_i32, %c0_i32_0 : i32, i32, i32
  }
}

</mosaic_0001>

<llo_original>
// kernel: mymodel_forward.1
$region0: #{mymodel_forward.1}
  #allocation0 [shape = 'u32[]', space=smem, size = 0x4, offset = 0x4, fixed_abs, tag = 'smem constant byte address 0x4 - core index']
  #allocation1 [shape = 'u32[144,128]{1,0:T(1,128)}', space=vmem, size = 0x12000, scoped, tag = 'internal scratch']
  #allocation2 [shape = 'f32[144,2560]{1,0:T(8,128)}', space=vmem, size = 0x168000, scoped, tag = 'scratch operand']
  %s0 = inlined_call_operand.vmem [shape: f32[2,8,1296], index: 0, kind: input, shape index: {}]
  %s1 = inlined_call_operand.vmem [shape: f32[8,72], index: 1, kind: input, shape index: {}]
  %s2 = inlined_call_operand.vmem [shape: f32[8,1], index: 2, kind: input, shape index: {}]
  %s3 = inlined_call_operand.vmem [shape: f32[8,72], index: 3, kind: input, shape index: {}]
  %s4 = inlined_call_operand.vmem [shape: f32[8,1], index: 4, kind: input, shape index: {}]
  %s5 = inlined_call_operand.vmem [shape: f32[16,72], index: 5, kind: input, shape index: {}]
  %s6 = inlined_call_operand.vmem [shape: f32[16,1], index: 6, kind: input, shape index: {}]
  %s7 = inlined_call_operand.vmem [shape: f32[16,144], index: 7, kind: input, shape index: {}]
  %s8 = inlined_call_operand.vmem [shape: f32[16,1], index: 8, kind: input, shape index: {}]
  %s9 = inlined_call_operand.vmem [shape: f32[16,144], index: 9, kind: input, shape index: {}]
  %s10 = inlined_call_operand.vmem [shape: f32[16,1], index: 10, kind: input, shape index: {}]
  %s11 = inlined_call_operand.vmem [shape: bf16[1156,361], index: 11, kind: input, shape index: {}]
  %s12 = inlined_call_operand.vmem [shape: bf16[289,121], index: 12, kind: input, shape index: {}]
  %s13 = inlined_call_operand.vmem [shape: bf16[81,49], index: 13, kind: input, shape index: {}]
  %s14 = inlined_call_operand.vmem [shape: bf16[25,49], index: 14, kind: input, shape index: {}]
  %s15 = inlined_call_operand.vmem [shape: f32[240,144], index: 15, kind: input, shape index: {}]
  %s16 = inlined_call_operand.vmem [shape: f32[1,144], index: 16, kind: input, shape index: {}]
  %s17 = inlined_call_operand.vmem [shape: f32[144,72], index: 17, kind: input, shape index: {}]
  %s18 = inlined_call_operand.vmem [shape: f32[1,72], index: 18, kind: input, shape index: {}]
  %s19 = inlined_call_operand.vmem [shape: f32[72,128], index: 19, kind: input, shape index: {}]
  %s20 = inlined_call_operand.vmem [shape: f32[1,128], index: 20, kind: input, shape index: {}]
  %s21 = inlined_call_operand.hbm [shape: f32[1,2,128], index: 21, kind: output, shape index: {}]
  %s22 = sld [smem:[#allocation0]]
  $region94: #{mymodel_forward.1} parent=0
    _
  %s24 = ssub.s32 1, %s22
  %s25 = scalar_select 0, %s24, %s22
  $region1: #{mymodel_forward.1} parent=0
    #allocation3 [shape = 'u8[1024]{0}', space=vmem, size = 0x400, scoped, tag = 'output window, operand 0, single buffered']
    #allocation4 [shape = 's32[1]{0}', space=sflag, size = 0x4, scoped, tag = 'scoped memory for mymodel_forward.1']
    %26 = vsyncpa [#allocation4], 0
    // Predicated region
    $region2: #{mymodel_forward.1} parent=1 // pred_check
      _
    $region3: #{mymodel_forward.1} parent=1 // pred_check_branch
      %28 = sbr.rel (0) target = $region5
    $region4: #{mymodel_forward.1} parent=1 // pred_region
      _
    $region5: #{mymodel_forward.1} parent=1 // pred_fallthru
      _
    // Predicated region
    $region6: #{mymodel_forward.1} parent=1 // pred_check
      _
    $region7: #{mymodel_forward.1} parent=1 // pred_check_branch
      %30 = sbr.rel (0) target = $region9
    $region8: #{mymodel_forward.1} parent=1 // pred_region
      _
    $region9: #{mymodel_forward.1} parent=1 // pred_fallthru
      _
    // Predicated region
    $region10: #{mymodel_forward.1} parent=1 // pred_check
      _
    $region11: #{mymodel_forward.1} parent=1 // pred_check_branch
      %32 = sbr.rel (0) target = $region13
    $region12: #{mymodel_forward.1} parent=1 // pred_region
      _
    $region13: #{mymodel_forward.1} parent=1 // pred_fallthru
      _
    // Predicated region
    $region14: #{mymodel_forward.1} parent=1 // pred_check
      _
    $region15: #{mymodel_forward.1} parent=1 // pred_check_branch
      %34 = sbr.rel (0) target = $region17
    $region16: #{mymodel_forward.1} parent=1 // pred_region
      _
    $region17: #{mymodel_forward.1} parent=1 // pred_fallthru
      _
    // Predicated region
    $region18: #{mymodel_forward.1} parent=1 // pred_check
      _
    $region19: #{mymodel_forward.1} parent=1 // pred_check_branch
      %36 = sbr.rel (0) target = $region21
    $region20: #{mymodel_forward.1} parent=1 // pred_region
      _
    $region21: #{mymodel_forward.1} parent=1 // pred_fallthru
      _
    // Predicated region
    $region22: #{mymodel_forward.1} parent=1 // pred_check
      _
    $region23: #{mymodel_forward.1} parent=1 // pred_check_branch
      %38 = sbr.rel (0) target = $region25
    $region24: #{mymodel_forward.1} parent=1 // pred_region
      _
    $region25: #{mymodel_forward.1} parent=1 // pred_fallthru
      _
    // Predicated region
    $region26: #{mymodel_forward.1} parent=1 // pred_check
      _
    $region27: #{mymodel_forward.1} parent=1 // pred_check_branch
      %40 = sbr.rel (0) target = $region29
    $region28: #{mymodel_forward.1} parent=1 // pred_region
      _
    $region29: #{mymodel_forward.1} parent=1 // pred_fallthru
      _
    // Predicated region
    $region30: #{mymodel_forward.1} parent=1 // pred_check
      _
    $region31: #{mymodel_forward.1} parent=1 // pred_check_branch
      %42 = sbr.rel (0) target = $region33
    $region32: #{mymodel_forward.1} parent=1 // pred_region
      _
    $region33: #{mymodel_forward.1} parent=1 // pred_fallthru
      _
    // Predicated region
    $region34: #{mymodel_forward.1} parent=1 // pred_check
      _
    $region35: #{mymodel_forward.1} parent=1 // pred_check_branch
      %44 = sbr.rel (0) target = $region37
    $region36: #{mymodel_forward.1} parent=1 // pred_region
      _
    $region37: #{mymodel_forward.1} parent=1 // pred_fallthru
      _
    // Predicated region
    $region38: #{mymodel_forward.1} parent=1 // pred_check
      _
    $region39: #{mymodel_forward.1} parent=1 // pred_check_branch
      %46 = sbr.rel (0) target = $region41
    $region40: #{mymodel_forward.1} parent=1 // pred_region
      _
    $region41: #{mymodel_forward.1} parent=1 // pred_fallthru
      _
    // Predicated region
    $region42: #{mymodel_forward.1} parent=1 // pred_check
      _
    $region43: #{mymodel_forward.1} parent=1 // pred_check_branch
      %48 = sbr.rel (0) target = $region45
    $region44: #{mymodel_forward.1} parent=1 // pred_region
      _
    $region45: #{mymodel_forward.1} parent=1 // pred_fallthru
      _
    // Predicated region
    $region46: #{mymodel_forward.1} parent=1 // pred_check
      _
    $region47: #{mymodel_forward.1} parent=1 // pred_check_branch
      %50 = sbr.rel (0) target = $region49
    $region48: #{mymodel_forward.1} parent=1 // pred_region
      _
    $region49: #{mymodel_forward.1} parent=1 // pred_fallthru
      _
    // Predicated region
    $region50: #{mymodel_forward.1} parent=1 // pred_check
      _
    $region51: #{mymodel_forward.1} parent=1 // pred_check_branch
      %52 = sbr.rel (0) target = $region53
    $region52: #{mymodel_forward.1} parent=1 // pred_region
      _
    $region53: #{mymodel_forward.1} parent=1 // pred_fallthru
      _
    // Predicated region
    $region54: #{mymodel_forward.1} parent=1 // pred_check
      _
    $region55: #{mymodel_forward.1} parent=1 // pred_check_branch
      %54 = sbr.rel (0) target = $region57
    $region56: #{mymodel_forward.1} parent=1 // pred_region
      _
    $region57: #{mymodel_forward.1} parent=1 // pred_fallthru
      _
    // Predicated region
    $region58: #{mymodel_forward.1} parent=1 // pred_check
      _
    $region59: #{mymodel_forward.1} parent=1 // pred_check_branch
      %56 = sbr.rel (0) target = $region61
    $region60: #{mymodel_forward.1} parent=1 // pred_region
      _
    $region61: #{mymodel_forward.1} parent=1 // pred_fallthru
      _
    // Predicated region
    $region62: #{mymodel_forward.1} parent=1 // pred_check
      _
    $region63: #{mymodel_forward.1} parent=1 // pred_check_branch
      %58 = sbr.rel (0) target = $region65
    $region64: #{mymodel_forward.1} parent=1 // pred_region
      _
    $region65: #{mymodel_forward.1} parent=1 // pred_fallthru
      _
    // Predicated region
    $region66: #{mymodel_forward.1} parent=1 // pred_check
      _
    $region67: #{mymodel_forward.1} parent=1 // pred_check_branch
      %60 = sbr.rel (0) target = $region69
    $region68: #{mymodel_forward.1} parent=1 // pred_region
      _
    $region69: #{mymodel_forward.1} parent=1 // pred_fallthru
      _
    // Predicated region
    $region70: #{mymodel_forward.1} parent=1 // pred_check
      _
    $region71: #{mymodel_forward.1} parent=1 // pred_check_branch
      %62 = sbr.rel (0) target = $region73
    $region72: #{mymodel_forward.1} parent=1 // pred_region
      _
    $region73: #{mymodel_forward.1} parent=1 // pred_fallthru
      _
    // Predicated region
    $region74: #{mymodel_forward.1} parent=1 // pred_check
      _
    $region75: #{mymodel_forward.1} parent=1 // pred_check_branch
      %64 = sbr.rel (0) target = $region77
    $region76: #{mymodel_forward.1} parent=1 // pred_region
      _
    $region77: #{mymodel_forward.1} parent=1 // pred_fallthru
      _
    // Predicated region
    $region78: #{mymodel_forward.1} parent=1 // pred_check
      _
    $region79: #{mymodel_forward.1} parent=1 // pred_check_branch
      %66 = sbr.rel (0) target = $region81
    $region80: #{mymodel_forward.1} parent=1 // pred_region
      _
    $region81: #{mymodel_forward.1} parent=1 // pred_fallthru
      _
    // Predicated region
    $region82: #{mymodel_forward.1} parent=1 // pred_check
      _
    $region83: #{mymodel_forward.1} parent=1 // pred_check_branch
      %68 = sbr.rel (0) target = $region85
    $region84: #{mymodel_forward.1} parent=1 // pred_region
      _
    $region85: #{mymodel_forward.1} parent=1 // pred_fallthru
      _
    %v70 = vld [vmem:[%s0] sm:$0xff]
    %v71 = vld [vmem:[%s0 + $0x8] sm:$0xff]
    %v72 = vld [vmem:[%s0 + $0x10] sm:$0xff]
    %v73 = vld [vmem:[%s0 + $0x18] sm:$0xff]
    %v74 = vld [vmem:[%s0 + $0x20] sm:$0xff]
    %v75 = vld [vmem:[%s0 + $0x28] sm:$0xff]
    %v76 = vld [vmem:[%s0 + $0x30] sm:$0xff]
    %v77 = vld [vmem:[%s0 + $0x38] sm:$0xff]
    %v78 = vld [vmem:[%s0 + $0x40] sm:$0xff]
    %v79 = vld [vmem:[%s0 + $0x48] sm:$0xff]
    %v80 = vld [vmem:[%s0 + $0x50] sm:$0xff]
    %s81 = scalar_lea.vmem %s0, 88
    %v82 = vld [vmem:[%s81] sm:$0xff]
    %v83 = vld [vmem:[%s81 + $0x8] sm:$0xff]
    %v84 = vld [vmem:[%s81 + $0x10] sm:$0xff]
    %v85 = vld [vmem:[%s81 + $0x18] sm:$0xff]
    %v86 = vld [vmem:[%s81 + $0x20] sm:$0xff]
    %v87 = vld [vmem:[%s81 + $0x28] sm:$0xff]
    %v88 = vld [vmem:[%s81 + $0x30] sm:$0xff]
    %v89 = vld [vmem:[%s81 + $0x38] sm:$0xff]
    %v90 = vld [vmem:[%s81 + $0x40] sm:$0xff]
    %v91 = vld [vmem:[%s81 + $0x48] sm:$0xff]
    %v92 = vld [vmem:[%s81 + $0x50] sm:$0xff]
    %93 = vst [vmem:[#allocation2] sm:$0xff] %v70
    %94 = vst [vmem:[#allocation2 + $0x8] sm:$0xff] %v71
    %95 = vst [vmem:[#allocation2 + $0x10] sm:$0xff] %v72
    %96 = vst [vmem:[#allocation2 + $0x18] sm:$0xff] %v73
    %97 = vst [vmem:[#allocation2 + $0x20] sm:$0xff] %v74
    %98 = vst [vmem:[#allocation2 + $0x28] sm:$0xff] %v75
    %99 = vst [vmem:[#allocation2 + $0x30] sm:$0xff] %v76
    %100 = vst [vmem:[#allocation2 + $0x38] sm:$0xff] %v77
    %101 = vst [vmem:[#allocation2 + $0x40] sm:$0xff] %v78
    %vm102 = vcmask 605184
    %103 = vst.msk [vmem:[#allocation2 + $0x48] sm:$0xff] %vm102, %v79
    %114 = vrot.lane.b32.xlu0 %v70, 127
    %v115 = vpop.permute.xlu0 %114
    %116 = vrot.lane.b32.xlu0 %v71, 127
    %v117 = vpop.permute.xlu0 %116
    %118 = vrot.lane.b32.xlu0 %v72, 127
    %v119 = vpop.permute.xlu0 %118
    %120 = vrot.lane.b32.xlu0 %v73, 127
    %v121 = vpop.permute.xlu0 %120
    %122 = vrot.lane.b32.xlu0 %v74, 127
    %v123 = vpop.permute.xlu0 %122
    %124 = vrot.lane.b32.xlu0 %v75, 127
    %v125 = vpop.permute.xlu0 %124
    %126 = vrot.lane.b32.xlu0 %v76, 127
    %v127 = vpop.permute.xlu0 %126
    %128 = vrot.lane.b32.xlu0 %v77, 127
    %v129 = vpop.permute.xlu0 %128
    %130 = vrot.lane.b32.xlu0 %v78, 127
    %v131 = vpop.permute.xlu0 %130
    %132 = vrot.lane.b32.xlu0 %v79, 127
    %v133 = vpop.permute.xlu0 %132
    %vm134 = vcmask 1039360
    %v135 = vsel %vm134, %v115, %v117
    %v136 = vsel %vm134, %v117, %v119
    %v137 = vsel %vm134, %v119, %v121
    %v138 = vsel %vm134, %v121, %v123
    %v139 = vsel %vm134, %v123, %v125
    %v140 = vsel %vm134, %v125, %v127
    %v141 = vsel %vm134, %v127, %v129
    %v142 = vsel %vm134, %v129, %v131
    %v143 = vsel %vm134, %v131, %v133
    %154 = vst [vmem:[#allocation2 + $0xa0] sm:$0xff] %v135
    %155 = vst [vmem:[#allocation2 + $0xa8] sm:$0xff] %v136
    %156 = vst [vmem:[#allocation2 + $0xb0] sm:$0xff] %v137
    %157 = vst [vmem:[#allocation2 + $0xb8] sm:$0xff] %v138
    %158 = vst [vmem:[#allocation2 + $0xc0] sm:$0xff] %v139
    %159 = vst [vmem:[#allocation2 + $0xc8] sm:$0xff] %v140
    %160 = vst [vmem:[#allocation2 + $0xd0] sm:$0xff] %v141
    %161 = vst [vmem:[#allocation2 + $0xd8] sm:$0xff] %v142
    %162 = vst [vmem:[#allocation2 + $0xe0] sm:$0xff] %v143
    %163 = vst.msk [vmem:[#allocation2 + $0xe8] sm:$0xff] %vm102, %v133
    %164 = vrot.lane.b32.xlu0 %v70, 126
    %v165 = vpop.permute.xlu0 %164
    %166 = vrot.lane.b32.xlu0 %v71, 126
    %v167 = vpop.permute.xlu0 %166
    %168 = vrot.lane.b32.xlu0 %v72, 126
    %v169 = vpop.permute.xlu0 %168
    %170 = vrot.lane.b32.xlu0 %v73, 126
    %v171 = vpop.permute.xlu0 %170
    %172 = vrot.lane.b32.xlu0 %v74, 126
    %v173 = vpop.permute.xlu0 %172
    %174 = vrot.lane.b32.xlu0 %v75, 126
    %v175 = vpop.permute.xlu0 %174
    %176 = vrot.lane.b32.xlu0 %v76, 126
    %v177 = vpop.permute.xlu0 %176
    %178 = vrot.lane.b32.xlu0 %v77, 126
    %v179 = vpop.permute.xlu0 %178
    %180 = vrot.lane.b32.xlu0 %v78, 126
    %v181 = vpop.permute.xlu0 %180
    %182 = vrot.lane.b32.xlu0 %v79, 126
    %v183 = vpop.permute.xlu0 %182
    %vm184 = vcmask 1031168
    %v185 = vsel %vm184, %v165, %v167
    %v186 = vsel %vm184, %v167, %v169
    %v187 = vsel %vm184, %v169, %v171
    %v188 = vsel %vm184, %v171, %v173
    %v189 = vsel %vm184, %v173, %v175
    %v190 = vsel %vm184, %v175, %v177
    %v191 = vsel %vm184, %v177, %v179
    %v192 = vsel %vm184, %v179, %v181
    %v193 = vsel %vm184, %v181, %v183
    %204 = vst [vmem:[#allocation2 + $0x140] sm:$0xff] %v185
    %205 = vst [vmem:[#allocation2 + $0x148] sm:$0xff] %v186
    %206 = vst [vmem:[#allocation2 + $0x150] sm:$0xff] %v187
    %207 = vst [vmem:[#allocation2 + $0x158] sm:$0xff] %v188
    %208 = vst [vmem:[#allocation2 + $0x160] sm:$0xff] %v189
    %209 = vst [vmem:[#allocation2 + $0x168] sm:$0xff] %v190
    %210 = vst [vmem:[#allocation2 + $0x170] sm:$0xff] %v191
    %211 = vst [vmem:[#allocation2 + $0x178] sm:$0xff] %v192
    %212 = vst [vmem:[#allocation2 + $0x180] sm:$0xff] %v193
    %213 = vst.msk [vmem:[#allocation2 + $0x188] sm:$0xff] %vm102, %v183
    %214 = vrot.lane.b32.xlu0 %v70, 94
    %v215 = vpop.permute.xlu0 %214
    %216 = vrot.lane.b32.xlu0 %v71, 94
    %v217 = vpop.permute.xlu0 %216
    %218 = vrot.lane.b32.xlu0 %v72, 94
    %v219 = vpop.permute.xlu0 %218
    %220 = vrot.lane.b32.xlu0 %v73, 94
    %v221 = vpop.permute.xlu0 %220
    %222 = vrot.lane.b32.xlu0 %v74, 94
    %v223 = vpop.permute.xlu0 %222
    %224 = vrot.lane.b32.xlu0 %v75, 94
    %v225 = vpop.permute.xlu0 %224
    %226 = vrot.lane.b32.xlu0 %v76, 94
    %v227 = vpop.permute.xlu0 %226
    %228 = vrot.lane.b32.xlu0 %v77, 94
    %v229 = vpop.permute.xlu0 %228
    %230 = vrot.lane.b32.xlu0 %v78, 94
    %v231 = vpop.permute.xlu0 %230
    %232 = vrot.lane.b32.xlu0 %v79, 94
    %v233 = vpop.permute.xlu0 %232
    %vm234 = vcmask 769024
    %v235 = vsel %vm234, %v215, %v217
    %v236 = vsel %vm234, %v217, %v219
    %v237 = vsel %vm234, %v219, %v221
    %v238 = vsel %vm234, %v221, %v223
    %v239 = vsel %vm234, %v223, %v225
    %v240 = vsel %vm234, %v225, %v227
    %v241 = vsel %vm234, %v227, %v229
    %v242 = vsel %vm234, %v229, %v231
    %v243 = vsel %vm234, %v231, %v233
    %254 = vst [vmem:[#allocation2 + $0x1e0] sm:$0xff] %v235
    %255 = vst [vmem:[#allocation2 + $0x1e8] sm:$0xff] %v236
    %256 = vst [vmem:[#allocation2 + $0x1f0] sm:$0xff] %v237
    %257 = vst [vmem:[#allocation2 + $0x1f8] sm:$0xff] %v238
    %258 = vst [vmem:[#allocation2 + $0x200] sm:$0xff] %v239
    %259 = vst [vmem:[#allocation2 + $0x208] sm:$0xff] %v240
    %260 = vst [vmem:[#allocation2 + $0x210] sm:$0xff] %v241
    %261 = vst [vmem:[#allocation2 + $0x218] sm:$0xff] %v242
    %262 = vst [vmem:[#allocation2 + $0x220] sm:$0xff] %v243
    %263 = vst.msk [vmem:[#allocation2 + $0x228] sm:$0xff] %vm102, %v233
    %264 = vrot.lane.b32.xlu0 %v70, 93
    %v265 = vpop.permute.xlu0 %264
    %266 = vrot.lane.b32.xlu0 %v71, 93
    %v267 = vpop.permute.xlu0 %266
    %268 = vrot.lane.b32.xlu0 %v72, 93
    %v269 = vpop.permute.xlu0 %268
    %270 = vrot.lane.b32.xlu0 %v73, 93
    %v271 = vpop.permute.xlu0 %270
    %272 = vrot.lane.b32.xlu0 %v74, 93
    %v273 = vpop.permute.xlu0 %272
    %274 = vrot.lane.b32.xlu0 %v75, 93
    %v275 = vpop.permute.xlu0 %274
    %276 = vrot.lane.b32.xlu0 %v76, 93
    %v277 = vpop.permute.xlu0 %276
    %278 = vrot.lane.b32.xlu0 %v77, 93
    %v279 = vpop.permute.xlu0 %278
    %280 = vrot.lane.b32.xlu0 %v78, 93
    %v281 = vpop.permute.xlu0 %280
    %282 = vrot.lane.b32.xlu0 %v79, 93
    %v283 = vpop.permute.xlu0 %282
    %vm284 = vcmask 760832
    %v285 = vsel %vm284, %v265, %v267
    %v286 = vsel %vm284, %v267, %v269
    %v287 = vsel %vm284, %v269, %v271
    %v288 = vsel %vm284, %v271, %v273
    %v289 = vsel %vm284, %v273, %v275
    %v290 = vsel %vm284, %v275, %v277
    %v291 = vsel %vm284, %v277, %v279
    %v292 = vsel %vm284, %v279, %v281
    %v293 = vsel %vm284, %v281, %v283
    %304 = vst [vmem:[#allocation2 + $0x280] sm:$0xff] %v285
    %305 = vst [vmem:[#allocation2 + $0x288] sm:$0xff] %v286
    %306 = vst [vmem:[#allocation2 + $0x290] sm:$0xff] %v287
    %307 = vst [vmem:[#allocation2 + $0x298] sm:$0xff] %v288
    %308 = vst [vmem:[#allocation2 + $0x2a0] sm:$0xff] %v289
    %309 = vst [vmem:[#allocation2 + $0x2a8] sm:$0xff] %v290
    %310 = vst [vmem:[#allocation2 + $0x2b0] sm:$0xff] %v291
    %311 = vst [vmem:[#allocation2 + $0x2b8] sm:$0xff] %v292
    %312 = vst [vmem:[#allocation2 + $0x2c0] sm:$0xff] %v293
    %313 = vst.msk [vmem:[#allocation2 + $0x2c8] sm:$0xff] %vm102, %v283
    %314 = vrot.lane.b32.xlu0 %v70, 92
    %v315 = vpop.permute.xlu0 %314
    %316 = vrot.lane.b32.xlu0 %v71, 92
    %v317 = vpop.permute.xlu0 %316
    %318 = vrot.lane.b32.xlu0 %v72, 92
    %v319 = vpop.permute.xlu0 %318
    %320 = vrot.lane.b32.xlu0 %v73, 92
    %v321 = vpop.permute.xlu0 %320
    %322 = vrot.lane.b32.xlu0 %v74, 92
    %v323 = vpop.permute.xlu0 %322
    %324 = vrot.lane.b32.xlu0 %v75, 92
    %v325 = vpop.permute.xlu0 %324
    %326 = vrot.lane.b32.xlu0 %v76, 92
    %v327 = vpop.permute.xlu0 %326
    %328 = vrot.lane.b32.xlu0 %v77, 92
    %v329 = vpop.permute.xlu0 %328
    %330 = vrot.lane.b32.xlu0 %v78, 92
    %v331 = vpop.permute.xlu0 %330
    %332 = vrot.lane.b32.xlu0 %v79, 92
    %v333 = vpop.permute.xlu0 %332
    %vm334 = vcmask 752640
    %v335 = vsel %vm334, %v315, %v317
    %v336 = vsel %vm334, %v317, %v319
    %v337 = vsel %vm334, %v319, %v321
    %v338 = vsel %vm334, %v321, %v323
    %v339 = vsel %vm334, %v323, %v325
    %v340 = vsel %vm334, %v325, %v327
    %v341 = vsel %vm334, %v327, %v329
    %v342 = vsel %vm334, %v329, %v331
    %v343 = vsel %vm334, %v331, %v333
    %354 = vst [vmem:[#allocation2 + $0x320] sm:$0xff] %v335
    %355 = vst [vmem:[#allocation2 + $0x328] sm:$0xff] %v336
    %356 = vst [vmem:[#allocation2 + $0x330] sm:$0xff] %v337
    %357 = vst [vmem:[#allocation2 + $0x338] sm:$0xff] %v338
    %358 = vst [vmem:[#allocation2 + $0x340] sm:$0xff] %v339
    %359 = vst [vmem:[#allocation2 + $0x348] sm:$0xff] %v340
    %360 = vst [vmem:[#allocation2 + $0x350] sm:$0xff] %v341
    %361 = vst [vmem:[#allocation2 + $0x358] sm:$0xff] %v342
    %362 = vst [vmem:[#allocation2 + $0x360] sm:$0xff] %v343
    %363 = vst.msk [vmem:[#allocation2 + $0x368] sm:$0xff] %vm102, %v333
    %365 = vrot.lane.b32.xlu0 %v70, 60
    %v366 = vpop.permute.xlu0 %365
    %367 = vrot.lane.b32.xlu0 %v71, 60
    %v368 = vpop.permute.xlu0 %367
    %369 = vrot.lane.b32.xlu0 %v72, 60
    %v370 = vpop.permute.xlu0 %369
    %371 = vrot.lane.b32.xlu0 %v73, 60
    %v372 = vpop.permute.xlu0 %371
    %373 = vrot.lane.b32.xlu0 %v74, 60
    %v374 = vpop.permute.xlu0 %373
    %375 = vrot.lane.b32.xlu0 %v75, 60
    %v376 = vpop.permute.xlu0 %375
    %377 = vrot.lane.b32.xlu0 %v76, 60
    %v378 = vpop.permute.xlu0 %377
    %379 = vrot.lane.b32.xlu0 %v77, 60
    %v380 = vpop.permute.xlu0 %379
    %381 = vrot.lane.b32.xlu0 %v78, 60
    %v382 = vpop.permute.xlu0 %381
    %383 = vrot.lane.b32.xlu0 %v79, 60
    %v384 = vpop.permute.xlu0 %383
    %385 = vrot.lane.b32.xlu0 %v80, 60
    %v386 = vpop.permute.xlu0 %385
    %vm387 = vcmask 490496
    %v388 = vsel %vm387, %v366, %v368
    %v389 = vsel %vm387, %v368, %v370
    %v390 = vsel %vm387, %v370, %v372
    %v391 = vsel %vm387, %v372, %v374
    %v392 = vsel %vm387, %v374, %v376
    %v393 = vsel %vm387, %v376, %v378
    %v394 = vsel %vm387, %v378, %v380
    %v395 = vsel %vm387, %v380, %v382
    %v396 = vsel %vm387, %v382, %v384
    %v397 = vsel %vm387, %v384, %v386
    %408 = vst [vmem:[#allocation2 + $0x3c0] sm:$0xff] %v388
    %409 = vst [vmem:[#allocation2 + $0x3c8] sm:$0xff] %v389
    %410 = vst [vmem:[#allocation2 + $0x3d0] sm:$0xff] %v390
    %411 = vst [vmem:[#allocation2 + $0x3d8] sm:$0xff] %v391
    %412 = vst [vmem:[#allocation2 + $0x3e0] sm:$0xff] %v392
    %413 = vst [vmem:[#allocation2 + $0x3e8] sm:$0xff] %v393
    %414 = vst [vmem:[#allocation2 + $0x3f0] sm:$0xff] %v394
    %415 = vst [vmem:[#allocation2 + $0x3f8] sm:$0xff] %v395
    %416 = vst [vmem:[#allocation2 + $0x400] sm:$0xff] %v396
    %417 = vst.msk [vmem:[#allocation2 + $0x408] sm:$0xff] %vm102, %v397
    %418 = vrot.lane.b32.xlu0 %v70, 59
    %v419 = vpop.permute.xlu0 %418
    %420 = vrot.lane.b32.xlu0 %v71, 59
    %v421 = vpop.permute.xlu0 %420
    %422 = vrot.lane.b32.xlu0 %v72, 59
    %v423 = vpop.permute.xlu0 %422
    %424 = vrot.lane.b32.xlu0 %v73, 59
    %v425 = vpop.permute.xlu0 %424
    %426 = vrot.lane.b32.xlu0 %v74, 59
    %v427 = vpop.permute.xlu0 %426
    %428 = vrot.lane.b32.xlu0 %v75, 59
    %v429 = vpop.permute.xlu0 %428
    %430 = vrot.lane.b32.xlu0 %v76, 59
    %v431 = vpop.permute.xlu0 %430
    %432 = vrot.lane.b32.xlu0 %v77, 59
    %v433 = vpop.permute.xlu0 %432
    %434 = vrot.lane.b32.xlu0 %v78, 59
    %v435 = vpop.permute.xlu0 %434
    %436 = vrot.lane.b32.xlu0 %v79, 59
    %v437 = vpop.permute.xlu0 %436
    %438 = vrot.lane.b32.xlu0 %v80, 59
    %v439 = vpop.permute.xlu0 %438
    %vm440 = vcmask 482304
    %v441 = vsel %vm440, %v419, %v421
    %v442 = vsel %vm440, %v421, %v423
    %v443 = vsel %vm440, %v423, %v425
    %v444 = vsel %vm440, %v425, %v427
    %v445 = vsel %vm440, %v427, %v429
    %v446 = vsel %vm440, %v429, %v431
    %v447 = vsel %vm440, %v431, %v433
    %v448 = vsel %vm440, %v433, %v435
    %v449 = vsel %vm440, %v435, %v437
    %v450 = vsel %vm440, %v437, %v439
    %461 = vst [vmem:[#allocation2 + $0x460] sm:$0xff] %v441
    %462 = vst [vmem:[#allocation2 + $0x468] sm:$0xff] %v442
    %463 = vst [vmem:[#allocation2 + $0x470] sm:$0xff] %v443
    %464 = vst [vmem:[#allocation2 + $0x478] sm:$0xff] %v444
    %465 = vst [vmem:[#allocation2 + $0x480] sm:$0xff] %v445
    %466 = vst [vmem:[#allocation2 + $0x488] sm:$0xff] %v446
    %467 = vst [vmem:[#allocation2 + $0x490] sm:$0xff] %v447
    %468 = vst [vmem:[#allocation2 + $0x498] sm:$0xff] %v448
    %469 = vst [vmem:[#allocation2 + $0x4a0] sm:$0xff] %v449
    %470 = vst.msk [vmem:[#allocation2 + $0x4a8] sm:$0xff] %vm102, %v450
    %471 = vrot.lane.b32.xlu0 %v70, 58
    %v472 = vpop.permute.xlu0 %471
    %473 = vrot.lane.b32.xlu0 %v71, 58
    %v474 = vpop.permute.xlu0 %473
    %475 = vrot.lane.b32.xlu0 %v72, 58
    %v476 = vpop.permute.xlu0 %475
    %477 = vrot.lane.b32.xlu0 %v73, 58
    %v478 = vpop.permute.xlu0 %477
    %479 = vrot.lane.b32.xlu0 %v74, 58
    %v480 = vpop.permute.xlu0 %479
    %481 = vrot.lane.b32.xlu0 %v75, 58
    %v482 = vpop.permute.xlu0 %481
    %483 = vrot.lane.b32.xlu0 %v76, 58
    %v484 = vpop.permute.xlu0 %483
    %485 = vrot.lane.b32.xlu0 %v77, 58
    %v486 = vpop.permute.xlu0 %485
    %487 = vrot.lane.b32.xlu0 %v78, 58
    %v488 = vpop.permute.xlu0 %487
    %489 = vrot.lane.b32.xlu0 %v79, 58
    %v490 = vpop.permute.xlu0 %489
    %491 = vrot.lane.b32.xlu0 %v80, 58
    %v492 = vpop.permute.xlu0 %491
    %vm493 = vcmask 474112
    %v494 = vsel %vm493, %v472, %v474
    %v495 = vsel %vm493, %v474, %v476
    %v496 = vsel %vm493, %v476, %v478
    %v497 = vsel %vm493, %v478, %v480
    %v498 = vsel %vm493, %v480, %v482
    %v499 = vsel %vm493, %v482, %v484
    %v500 = vsel %vm493, %v484, %v486
    %v501 = vsel %vm493, %v486, %v488
    %v502 = vsel %vm493, %v488, %v490
    %v503 = vsel %vm493, %v490, %v492
    %514 = vst [vmem:[#allocation2 + $0x500] sm:$0xff] %v494
    %515 = vst [vmem:[#allocation2 + $0x508] sm:$0xff] %v495
    %516 = vst [vmem:[#allocation2 + $0x510] sm:$0xff] %v496
    %517 = vst [vmem:[#allocation2 + $0x518] sm:$0xff] %v497
    %518 = vst [vmem:[#allocation2 + $0x520] sm:$0xff] %v498
    %519 = vst [vmem:[#allocation2 + $0x528] sm:$0xff] %v499
    %520 = vst [vmem:[#allocation2 + $0x530] sm:$0xff] %v500
    %521 = vst [vmem:[#allocation2 + $0x538] sm:$0xff] %v501
    %522 = vst [vmem:[#allocation2 + $0x540] sm:$0xff] %v502
    %523 = vst.msk [vmem:[#allocation2 + $0x548] sm:$0xff] %vm102, %v503
    %524 = vst [vmem:[#allocation2 + $0x50] sm:$0xff] %v82
    %525 = vst [vmem:[#allocation2 + $0x58] sm:$0xff] %v83
    %526 = vst [vmem:[#allocation2 + $0x60] sm:$0xff] %v84
    %527 = vst [vmem:[#allocation2 + $0x68] sm:$0xff] %v85
    %528 = vst [vmem:[#allocation2 + $0x70] sm:$0xff] %v86
    %529 = vst [vmem:[#allocation2 + $0x78] sm:$0xff] %v87
    %530 = vst [vmem:[#allocation2 + $0x80] sm:$0xff] %v88
    %531 = vst [vmem:[#allocation2 + $0x88] sm:$0xff] %v89
    %532 = vst [vmem:[#allocation2 + $0x90] sm:$0xff] %v90
    %533 = vst.msk [vmem:[#allocation2 + $0x98] sm:$0xff] %vm102, %v91
    %544 = vrot.lane.b32.xlu0 %v82, 127
    %v545 = vpop.permute.xlu0 %544
    %546 = vrot.lane.b32.xlu0 %v83, 127
    %v547 = vpop.permute.xlu0 %546
    %548 = vrot.lane.b32.xlu0 %v84, 127
    %v549 = vpop.permute.xlu0 %548
    %550 = vrot.lane.b32.xlu0 %v85, 127
    %v551 = vpop.permute.xlu0 %550
    %552 = vrot.lane.b32.xlu0 %v86, 127
    %v553 = vpop.permute.xlu0 %552
    %554 = vrot.lane.b32.xlu0 %v87, 127
    %v555 = vpop.permute.xlu0 %554
    %556 = vrot.lane.b32.xlu0 %v88, 127
    %v557 = vpop.permute.xlu0 %556
    %558 = vrot.lane.b32.xlu0 %v89, 127
    %v559 = vpop.permute.xlu0 %558
    %560 = vrot.lane.b32.xlu0 %v90, 127
    %v561 = vpop.permute.xlu0 %560
    %562 = vrot.lane.b32.xlu0 %v91, 127
    %v563 = vpop.permute.xlu0 %562
    %v564 = vsel %vm134, %v545, %v547
    %v565 = vsel %vm134, %v547, %v549
    %v566 = vsel %vm134, %v549, %v551
    %v567 = vsel %vm134, %v551, %v553
    %v568 = vsel %vm134, %v553, %v555
    %v569 = vsel %vm134, %v555, %v557
    %v570 = vsel %vm134, %v557, %v559
    %v571 = vsel %vm134, %v559, %v561
    %v572 = vsel %vm134, %v561, %v563
    %583 = vst [vmem:[#allocation2 + $0xf0] sm:$0xff] %v564
    %584 = vst [vmem:[#allocation2 + $0xf8] sm:$0xff] %v565
    %585 = vst [vmem:[#allocation2 + $0x100] sm:$0xff] %v566
    %586 = vst [vmem:[#allocation2 + $0x108] sm:$0xff] %v567
    %587 = vst [vmem:[#allocation2 + $0x110] sm:$0xff] %v568
    %588 = vst [vmem:[#allocation2 + $0x118] sm:$0xff] %v569
    %589 = vst [vmem:[#allocation2 + $0x120] sm:$0xff] %v570
    %590 = vst [vmem:[#allocation2 + $0x128] sm:$0xff] %v571
    %591 = vst [vmem:[#allocation2 + $0x130] sm:$0xff] %v572
    %592 = vst.msk [vmem:[#allocation2 + $0x138] sm:$0xff] %vm102, %v563
    %593 = vrot.lane.b32.xlu0 %v82, 126
    %v594 = vpop.permute.xlu0 %593
    %595 = vrot.lane.b32.xlu0 %v83, 126
    %v596 = vpop.permute.xlu0 %595
    %597 = vrot.lane.b32.xlu0 %v84, 126
    %v598 = vpop.permute.xlu0 %597
    %599 = vrot.lane.b32.xlu0 %v85, 126
    %v600 = vpop.permute.xlu0 %599
    %601 = vrot.lane.b32.xlu0 %v86, 126
    %v602 = vpop.permute.xlu0 %601
    %603 = vrot.lane.b32.xlu0 %v87, 126
    %v604 = vpop.permute.xlu0 %603
    %605 = vrot.lane.b32.xlu0 %v88, 126
    %v606 = vpop.permute.xlu0 %605
    %607 = vrot.lane.b32.xlu0 %v89, 126
    %v608 = vpop.permute.xlu0 %607
    %609 = vrot.lane.b32.xlu0 %v90, 126
    %v610 = vpop.permute.xlu0 %609
    %611 = vrot.lane.b32.xlu0 %v91, 126
    %v612 = vpop.permute.xlu0 %611
    %v613 = vsel %vm184, %v594, %v596
    %v614 = vsel %vm184, %v596, %v598
    %v615 = vsel %vm184, %v598, %v600
    %v616 = vsel %vm184, %v600, %v602
    %v617 = vsel %vm184, %v602, %v604
    %v618 = vsel %vm184, %v604, %v606
    %v619 = vsel %vm184, %v606, %v608
    %v620 = vsel %vm184, %v608, %v610
    %v621 = vsel %vm184, %v610, %v612
    %632 = vst [vmem:[#allocation2 + $0x190] sm:$0xff] %v613
    %633 = vst [vmem:[#allocation2 + $0x198] sm:$0xff] %v614
    %634 = vst [vmem:[#allocation2 + $0x1a0] sm:$0xff] %v615
    %635 = vst [vmem:[#allocation2 + $0x1a8] sm:$0xff] %v616
    %636 = vst [vmem:[#allocation2 + $0x1b0] sm:$0xff] %v617
    %637 = vst [vmem:[#allocation2 + $0x1b8] sm:$0xff] %v618
    %638 = vst [vmem:[#allocation2 + $0x1c0] sm:$0xff] %v619
    %639 = vst [vmem:[#allocation2 + $0x1c8] sm:$0xff] %v620
    %640 = vst [vmem:[#allocation2 + $0x1d0] sm:$0xff] %v621
    %641 = vst.msk [vmem:[#allocation2 + $0x1d8] sm:$0xff] %vm102, %v612
    %642 = vrot.lane.b32.xlu0 %v82, 94
    %v643 = vpop.permute.xlu0 %642
    %644 = vrot.lane.b32.xlu0 %v83, 94
    %v645 = vpop.permute.xlu0 %644
    %646 = vrot.lane.b32.xlu0 %v84, 94
    %v647 = vpop.permute.xlu0 %646
    %648 = vrot.lane.b32.xlu0 %v85, 94
    %v649 = vpop.permute.xlu0 %648
    %650 = vrot.lane.b32.xlu0 %v86, 94
    %v651 = vpop.permute.xlu0 %650
    %652 = vrot.lane.b32.xlu0 %v87, 94
    %v653 = vpop.permute.xlu0 %652
    %654 = vrot.lane.b32.xlu0 %v88, 94
    %v655 = vpop.permute.xlu0 %654
    %656 = vrot.lane.b32.xlu0 %v89, 94
    %v657 = vpop.permute.xlu0 %656
    %658 = vrot.lane.b32.xlu0 %v90, 94
    %v659 = vpop.permute.xlu0 %658
    %660 = vrot.lane.b32.xlu0 %v91, 94
    %v661 = vpop.permute.xlu0 %660
    %v662 = vsel %vm234, %v643, %v645
    %v663 = vsel %vm234, %v645, %v647
    %v664 = vsel %vm234, %v647, %v649
    %v665 = vsel %vm234, %v649, %v651
    %v666 = vsel %vm234, %v651, %v653
    %v667 = vsel %vm234, %v653, %v655
    %v668 = vsel %vm234, %v655, %v657
    %v669 = vsel %vm234, %v657, %v659
    %v670 = vsel %vm234, %v659, %v661
    %681 = vst [vmem:[#allocation2 + $0x230] sm:$0xff] %v662
    %682 = vst [vmem:[#allocation2 + $0x238] sm:$0xff] %v663
    %683 = vst [vmem:[#allocation2 + $0x240] sm:$0xff] %v664
    %684 = vst [vmem:[#allocation2 + $0x248] sm:$0xff] %v665
    %685 = vst [vmem:[#allocation2 + $0x250] sm:$0xff] %v666
    %686 = vst [vmem:[#allocation2 + $0x258] sm:$0xff] %v667
    %687 = vst [vmem:[#allocation2 + $0x260] sm:$0xff] %v668
    %688 = vst [vmem:[#allocation2 + $0x268] sm:$0xff] %v669
    %689 = vst [vmem:[#allocation2 + $0x270] sm:$0xff] %v670
    %690 = vst.msk [vmem:[#allocation2 + $0x278] sm:$0xff] %vm102, %v661
    %691 = vrot.lane.b32.xlu0 %v82, 93
    %v692 = vpop.permute.xlu0 %691
    %693 = vrot.lane.b32.xlu0 %v83, 93
    %v694 = vpop.permute.xlu0 %693
    %695 = vrot.lane.b32.xlu0 %v84, 93
    %v696 = vpop.permute.xlu0 %695
    %697 = vrot.lane.b32.xlu0 %v85, 93
    %v698 = vpop.permute.xlu0 %697
    %699 = vrot.lane.b32.xlu0 %v86, 93
    %v700 = vpop.permute.xlu0 %699
    %701 = vrot.lane.b32.xlu0 %v87, 93
    %v702 = vpop.permute.xlu0 %701
    %703 = vrot.lane.b32.xlu0 %v88, 93
    %v704 = vpop.permute.xlu0 %703
    %705 = vrot.lane.b32.xlu0 %v89, 93
    %v706 = vpop.permute.xlu0 %705
    %707 = vrot.lane.b32.xlu0 %v90, 93
    %v708 = vpop.permute.xlu0 %707
    %709 = vrot.lane.b32.xlu0 %v91, 93
    %v710 = vpop.permute.xlu0 %709
    %v711 = vsel %vm284, %v692, %v694
    %v712 = vsel %vm284, %v694, %v696
    %v713 = vsel %vm284, %v696, %v698
    %v714 = vsel %vm284, %v698, %v700
    %v715 = vsel %vm284, %v700, %v702
    %v716 = vsel %vm284, %v702, %v704
    %v717 = vsel %vm284, %v704, %v706
    %v718 = vsel %vm284, %v706, %v708
    %v719 = vsel %vm284, %v708, %v710
    %730 = vst [vmem:[#allocation2 + $0x2d0] sm:$0xff] %v711
    %731 = vst [vmem:[#allocation2 + $0x2d8] sm:$0xff] %v712
    %732 = vst [vmem:[#allocation2 + $0x2e0] sm:$0xff] %v713
    %733 = vst [vmem:[#allocation2 + $0x2e8] sm:$0xff] %v714
    %734 = vst [vmem:[#allocation2 + $0x2f0] sm:$0xff] %v715
    %735 = vst [vmem:[#allocation2 + $0x2f8] sm:$0xff] %v716
    %736 = vst [vmem:[#allocation2 + $0x300] sm:$0xff] %v717
    %737 = vst [vmem:[#allocation2 + $0x308] sm:$0xff] %v718
    %738 = vst [vmem:[#allocation2 + $0x310] sm:$0xff] %v719
    %739 = vst.msk [vmem:[#allocation2 + $0x318] sm:$0xff] %vm102, %v710
    %740 = vrot.lane.b32.xlu0 %v82, 92
    %v741 = vpop.permute.xlu0 %740
    %742 = vrot.lane.b32.xlu0 %v83, 92
    %v743 = vpop.permute.xlu0 %742
    %744 = vrot.lane.b32.xlu0 %v84, 92
    %v745 = vpop.permute.xlu0 %744
    %746 = vrot.lane.b32.xlu0 %v85, 92
    %v747 = vpop.permute.xlu0 %746
    %748 = vrot.lane.b32.xlu0 %v86, 92
    %v749 = vpop.permute.xlu0 %748
    %750 = vrot.lane.b32.xlu0 %v87, 92
    %v751 = vpop.permute.xlu0 %750
    %752 = vrot.lane.b32.xlu0 %v88, 92
    %v753 = vpop.permute.xlu0 %752
    %754 = vrot.lane.b32.xlu0 %v89, 92
    %v755 = vpop.permute.xlu0 %754
    %756 = vrot.lane.b32.xlu0 %v90, 92
    %v757 = vpop.permute.xlu0 %756
    %758 = vrot.lane.b32.xlu0 %v91, 92
    %v759 = vpop.permute.xlu0 %758
    %v760 = vsel %vm334, %v741, %v743
    %v761 = vsel %vm334, %v743, %v745
    %v762 = vsel %vm334, %v745, %v747
    %v763 = vsel %vm334, %v747, %v749
    %v764 = vsel %vm334, %v749, %v751
    %v765 = vsel %vm334, %v751, %v753
    %v766 = vsel %vm334, %v753, %v755
    %v767 = vsel %vm334, %v755, %v757
    %v768 = vsel %vm334, %v757, %v759
    %779 = vst [vmem:[#allocation2 + $0x370] sm:$0xff] %v760
    %780 = vst [vmem:[#allocation2 + $0x378] sm:$0xff] %v761
    %781 = vst [vmem:[#allocation2 + $0x380] sm:$0xff] %v762
    %782 = vst [vmem:[#allocation2 + $0x388] sm:$0xff] %v763
    %783 = vst [vmem:[#allocation2 + $0x390] sm:$0xff] %v764
    %784 = vst [vmem:[#allocation2 + $0x398] sm:$0xff] %v765
    %785 = vst [vmem:[#allocation2 + $0x3a0] sm:$0xff] %v766
    %786 = vst [vmem:[#allocation2 + $0x3a8] sm:$0xff] %v767
    %787 = vst [vmem:[#allocation2 + $0x3b0] sm:$0xff] %v768
    %788 = vst.msk [vmem:[#allocation2 + $0x3b8] sm:$0xff] %vm102, %v759
    %790 = vrot.lane.b32.xlu0 %v82, 60
    %v791 = vpop.permute.xlu0 %790
    %792 = vrot.lane.b32.xlu0 %v83, 60
    %v793 = vpop.permute.xlu0 %792
    %794 = vrot.lane.b32.xlu0 %v84, 60
    %v795 = vpop.permute.xlu0 %794
    %796 = vrot.lane.b32.xlu0 %v85, 60
    %v797 = vpop.permute.xlu0 %796
    %798 = vrot.lane.b32.xlu0 %v86, 60
    %v799 = vpop.permute.xlu0 %798
    %800 = vrot.lane.b32.xlu0 %v87, 60
    %v801 = vpop.permute.xlu0 %800
    %802 = vrot.lane.b32.xlu0 %v88, 60
    %v803 = vpop.permute.xlu0 %802
    %804 = vrot.lane.b32.xlu0 %v89, 60
    %v805 = vpop.permute.xlu0 %804
    %806 = vrot.lane.b32.xlu0 %v90, 60
    %v807 = vpop.permute.xlu0 %806
    %808 = vrot.lane.b32.xlu0 %v91, 60
    %v809 = vpop.permute.xlu0 %808
    %810 = vrot.lane.b32.xlu0 %v92, 60
    %v811 = vpop.permute.xlu0 %810
    %v812 = vsel %vm387, %v791, %v793
    %v813 = vsel %vm387, %v793, %v795
    %v814 = vsel %vm387, %v795, %v797
    %v815 = vsel %vm387, %v797, %v799
    %v816 = vsel %vm387, %v799, %v801
    %v817 = vsel %vm387, %v801, %v803
    %v818 = vsel %vm387, %v803, %v805
    %v819 = vsel %vm387, %v805, %v807
    %v820 = vsel %vm387, %v807, %v809
    %v821 = vsel %vm387, %v809, %v811
    %832 = vst [vmem:[#allocation2 + $0x410] sm:$0xff] %v812
    %833 = vst [vmem:[#allocation2 + $0x418] sm:$0xff] %v813
    %834 = vst [vmem:[#allocation2 + $0x420] sm:$0xff] %v814
    %835 = vst [vmem:[#allocation2 + $0x428] sm:$0xff] %v815
    %836 = vst [vmem:[#allocation2 + $0x430] sm:$0xff] %v816
    %837 = vst [vmem:[#allocation2 + $0x438] sm:$0xff] %v817
    %838 = vst [vmem:[#allocation2 + $0x440] sm:$0xff] %v818
    %839 = vst [vmem:[#allocation2 + $0x448] sm:$0xff] %v819
    %840 = vst [vmem:[#allocation2 + $0x450] sm:$0xff] %v820
    %841 = vst.msk [vmem:[#allocation2 + $0x458] sm:$0xff] %vm102, %v821
    %842 = vrot.lane.b32.xlu0 %v82, 59
    %v843 = vpop.permute.xlu0 %842
    %844 = vrot.lane.b32.xlu0 %v83, 59
    %v845 = vpop.permute.xlu0 %844
    %846 = vrot.lane.b32.xlu0 %v84, 59
    %v847 = vpop.permute.xlu0 %846
    %848 = vrot.lane.b32.xlu0 %v85, 59
    %v849 = vpop.permute.xlu0 %848
    %850 = vrot.lane.b32.xlu0 %v86, 59
    %v851 = vpop.permute.xlu0 %850
    %852 = vrot.lane.b32.xlu0 %v87, 59
    %v853 = vpop.permute.xlu0 %852
    %854 = vrot.lane.b32.xlu0 %v88, 59
    %v855 = vpop.permute.xlu0 %854
    %856 = vrot.lane.b32.xlu0 %v89, 59
    %v857 = vpop.permute.xlu0 %856
    %858 = vrot.lane.b32.xlu0 %v90, 59
    %v859 = vpop.permute.xlu0 %858
    %860 = vrot.lane.b32.xlu0 %v91, 59
    %v861 = vpop.permute.xlu0 %860
    %862 = vrot.lane.b32.xlu0 %v92, 59
    %v863 = vpop.permute.xlu0 %862
    %v864 = vsel %vm440, %v843, %v845
    %v865 = vsel %vm440, %v845, %v847
    %v866 = vsel %vm440, %v847, %v849
    %v867 = vsel %vm440, %v849, %v851
    %v868 = vsel %vm440, %v851, %v853
    %v869 = vsel %vm440, %v853, %v855
    %v870 = vsel %vm440, %v855, %v857
    %v871 = vsel %vm440, %v857, %v859
    %v872 = vsel %vm440, %v859, %v861
    %v873 = vsel %vm440, %v861, %v863
    %884 = vst [vmem:[#allocation2 + $0x4b0] sm:$0xff] %v864
    %885 = vst [vmem:[#allocation2 + $0x4b8] sm:$0xff] %v865
    %886 = vst [vmem:[#allocation2 + $0x4c0] sm:$0xff] %v866
    %887 = vst [vmem:[#allocation2 + $0x4c8] sm:$0xff] %v867
    %888 = vst [vmem:[#allocation2 + $0x4d0] sm:$0xff] %v868
    %889 = vst [vmem:[#allocation2 + $0x4d8] sm:$0xff] %v869
    %890 = vst [vmem:[#allocation2 + $0x4e0] sm:$0xff] %v870
    %891 = vst [vmem:[#allocation2 + $0x4e8] sm:$0xff] %v871
    %892 = vst [vmem:[#allocation2 + $0x4f0] sm:$0xff] %v872
    %893 = vst.msk [vmem:[#allocation2 + $0x4f8] sm:$0xff] %vm102, %v873
    %894 = vrot.lane.b32.xlu0 %v82, 58
    %v895 = vpop.permute.xlu0 %894
    %896 = vrot.lane.b32.xlu0 %v83, 58
    %v897 = vpop.permute.xlu0 %896
    %898 = vrot.lane.b32.xlu0 %v84, 58
    %v899 = vpop.permute.xlu0 %898
    %900 = vrot.lane.b32.xlu0 %v85, 58
    %v901 = vpop.permute.xlu0 %900
    %902 = vrot.lane.b32.xlu0 %v86, 58
    %v903 = vpop.permute.xlu0 %902
    %904 = vrot.lane.b32.xlu0 %v87, 58
    %v905 = vpop.permute.xlu0 %904
    %906 = vrot.lane.b32.xlu0 %v88, 58
    %v907 = vpop.permute.xlu0 %906
    %908 = vrot.lane.b32.xlu0 %v89, 58
    %v909 = vpop.permute.xlu0 %908
    %910 = vrot.lane.b32.xlu0 %v90, 58
    %v911 = vpop.permute.xlu0 %910
    %912 = vrot.lane.b32.xlu0 %v91, 58
    %v913 = vpop.permute.xlu0 %912
    %914 = vrot.lane.b32.xlu0 %v92, 58
    %v915 = vpop.permute.xlu0 %914
    %v916 = vsel %vm493, %v895, %v897
    %v917 = vsel %vm493, %v897, %v899
    %v918 = vsel %vm493, %v899, %v901
    %v919 = vsel %vm493, %v901, %v903
    %v920 = vsel %vm493, %v903, %v905
    %v921 = vsel %vm493, %v905, %v907
    %v922 = vsel %vm493, %v907, %v909
    %v923 = vsel %vm493, %v909, %v911
    %v924 = vsel %vm493, %v911, %v913
    %v925 = vsel %vm493, %v913, %v915
    %936 = vst [vmem:[#allocation2 + $0x550] sm:$0xff] %v916
    %937 = vst [vmem:[#allocation2 + $0x558] sm:$0xff] %v917
    %938 = vst [vmem:[#allocation2 + $0x560] sm:$0xff] %v918
    %939 = vst [vmem:[#allocation2 + $0x568] sm:$0xff] %v919
    %940 = vst [vmem:[#allocation2 + $0x570] sm:$0xff] %v920
    %941 = vst [vmem:[#allocation2 + $0x578] sm:$0xff] %v921
    %942 = vst [vmem:[#allocation2 + $0x580] sm:$0xff] %v922
    %943 = vst [vmem:[#allocation2 + $0x588] sm:$0xff] %v923
    %944 = vst [vmem:[#allocation2 + $0x590] sm:$0xff] %v924
    %945 = vst.msk [vmem:[#allocation2 + $0x598] sm:$0xff] %vm102, %v925
    %v946 = vld [vmem:[%s1] sm:$0xff]
    %v947 = vld [vmem:[#allocation2] sm:$0xff]
    %v948 = vld [vmem:[#allocation2 + $0x8] sm:$0xff]
    %v949 = vld [vmem:[#allocation2 + $0x10] sm:$0xff]
    %v950 = vld [vmem:[#allocation2 + $0x18] sm:$0xff]
    %v951 = vld [vmem:[#allocation2 + $0x20] sm:$0xff]
    %v952 = vld [vmem:[#allocation2 + $0x28] sm:$0xff]
    %v953 = vld [vmem:[#allocation2 + $0x30] sm:$0xff]
    %v954 = vld [vmem:[#allocation2 + $0x38] sm:$0xff]
    %v955 = vld [vmem:[#allocation2 + $0x40] sm:$0xff]
    %v956 = vld [vmem:[#allocation2 + $0x48] sm:$0xff]
    %v957 = vld [vmem:[#allocation2 + $0x50] sm:$0xff]
    %v958 = vld [vmem:[#allocation2 + $0x58] sm:$0xff]
    %v959 = vld [vmem:[#allocation2 + $0x60] sm:$0xff]
    %v960 = vld [vmem:[#allocation2 + $0x68] sm:$0xff]
    %v961 = vld [vmem:[#allocation2 + $0x70] sm:$0xff]
    %v962 = vld [vmem:[#allocation2 + $0x78] sm:$0xff]
    %v963 = vld [vmem:[#allocation2 + $0x80] sm:$0xff]
    %v964 = vld [vmem:[#allocation2 + $0x88] sm:$0xff]
    %v965 = vld [vmem:[#allocation2 + $0x90] sm:$0xff]
    %v966 = vld [vmem:[#allocation2 + $0x98] sm:$0xff]
    %v967 = vld [vmem:[#allocation2 + $0xa0] sm:$0xff]
    %v968 = vld [vmem:[#allocation2 + $0xa8] sm:$0xff]
    %v969 = vld [vmem:[#allocation2 + $0xb0] sm:$0xff]
    %v970 = vld [vmem:[#allocation2 + $0xb8] sm:$0xff]
    %v971 = vld [vmem:[#allocation2 + $0xc0] sm:$0xff]
    %v972 = vld [vmem:[#allocation2 + $0xc8] sm:$0xff]
    %v973 = vld [vmem:[#allocation2 + $0xd0] sm:$0xff]
    %v974 = vld [vmem:[#allocation2 + $0xd8] sm:$0xff]
    %v975 = vld [vmem:[#allocation2 + $0xe0] sm:$0xff]
    %v976 = vld [vmem:[#allocation2 + $0xe8] sm:$0xff]
    %v977 = vld [vmem:[#allocation2 + $0xf0] sm:$0xff]
    %v978 = vld [vmem:[#allocation2 + $0xf8] sm:$0xff]
    %v979 = vld [vmem:[#allocation2 + $0x100] sm:$0xff]
    %v980 = vld [vmem:[#allocation2 + $0x108] sm:$0xff]
    %v981 = vld [vmem:[#allocation2 + $0x110] sm:$0xff]
    %v982 = vld [vmem:[#allocation2 + $0x118] sm:$0xff]
    %v983 = vld [vmem:[#allocation2 + $0x120] sm:$0xff]
    %v984 = vld [vmem:[#allocation2 + $0x128] sm:$0xff]
    %v985 = vld [vmem:[#allocation2 + $0x130] sm:$0xff]
    %v986 = vld [vmem:[#allocation2 + $0x138] sm:$0xff]
    %v987 = vld [vmem:[#allocation2 + $0x140] sm:$0xff]
    %v988 = vld [vmem:[#allocation2 + $0x148] sm:$0xff]
    %v989 = vld [vmem:[#allocation2 + $0x150] sm:$0xff]
    %v990 = vld [vmem:[#allocation2 + $0x158] sm:$0xff]
    %v991 = vld [vmem:[#allocation2 + $0x160] sm:$0xff]
    %v992 = vld [vmem:[#allocation2 + $0x168] sm:$0xff]
    %v993 = vld [vmem:[#allocation2 + $0x170] sm:$0xff]
    %v994 = vld [vmem:[#allocation2 + $0x178] sm:$0xff]
    %v995 = vld [vmem:[#allocation2 + $0x180] sm:$0xff]
    %v996 = vld [vmem:[#allocation2 + $0x188] sm:$0xff]
    %v997 = vld [vmem:[#allocation2 + $0x190] sm:$0xff]
    %v998 = vld [vmem:[#allocation2 + $0x198] sm:$0xff]
    %v999 = vld [vmem:[#allocation2 + $0x1a0] sm:$0xff]
    %v1000 = vld [vmem:[#allocation2 + $0x1a8] sm:$0xff]
    %v1001 = vld [vmem:[#allocation2 + $0x1b0] sm:$0xff]
    %v1002 = vld [vmem:[#allocation2 + $0x1b8] sm:$0xff]
    %v1003 = vld [vmem:[#allocation2 + $0x1c0] sm:$0xff]
    %v1004 = vld [vmem:[#allocation2 + $0x1c8] sm:$0xff]
    %v1005 = vld [vmem:[#allocation2 + $0x1d0] sm:$0xff]
    %v1006 = vld [vmem:[#allocation2 + $0x1d8] sm:$0xff]
    %v1007 = vld [vmem:[#allocation2 + $0x1e0] sm:$0xff]
    %v1008 = vld [vmem:[#allocation2 + $0x1e8] sm:$0xff]
    %v1009 = vld [vmem:[#allocation2 + $0x1f0] sm:$0xff]
    %v1010 = vld [vmem:[#allocation2 + $0x1f8] sm:$0xff]
    %v1011 = vld [vmem:[#allocation2 + $0x200] sm:$0xff]
    %v1012 = vld [vmem:[#allocation2 + $0x208] sm:$0xff]
    %v1013 = vld [vmem:[#allocation2 + $0x210] sm:$0xff]
    %v1014 = vld [vmem:[#allocation2 + $0x218] sm:$0xff]
    %v1015 = vld [vmem:[#allocation2 + $0x220] sm:$0xff]
    %v1016 = vld [vmem:[#allocation2 + $0x228] sm:$0xff]
    %v1017 = vld [vmem:[#allocation2 + $0x230] sm:$0xff]
    %v1018 = vld [vmem:[#allocation2 + $0x238] sm:$0xff]
    %v1019 = vld [vmem:[#allocation2 + $0x240] sm:$0xff]
    %v1020 = vld [vmem:[#allocation2 + $0x248] sm:$0xff]
    %v1021 = vld [vmem:[#allocation2 + $0x250] sm:$0xff]
    %v1022 = vld [vmem:[#allocation2 + $0x258] sm:$0xff]
    %v1023 = vld [vmem:[#allocation2 + $0x260] sm:$0xff]
    %v1024 = vld [vmem:[#allocation2 + $0x268] sm:$0xff]
    %v1025 = vld [vmem:[#allocation2 + $0x270] sm:$0xff]
    %v1026 = vld [vmem:[#allocation2 + $0x278] sm:$0xff]
    %v1027 = vld [vmem:[#allocation2 + $0x280] sm:$0xff]
    %v1028 = vld [vmem:[#allocation2 + $0x288] sm:$0xff]
    %v1029 = vld [vmem:[#allocation2 + $0x290] sm:$0xff]
    %v1030 = vld [vmem:[#allocation2 + $0x298] sm:$0xff]
    %v1031 = vld [vmem:[#allocation2 + $0x2a0] sm:$0xff]
    %v1032 = vld [vmem:[#allocation2 + $0x2a8] sm:$0xff]
    %v1033 = vld [vmem:[#allocation2 + $0x2b0] sm:$0xff]
    %v1034 = vld [vmem:[#allocation2 + $0x2b8] sm:$0xff]
    %v1035 = vld [vmem:[#allocation2 + $0x2c0] sm:$0xff]
    %v1036 = vld [vmem:[#allocation2 + $0x2c8] sm:$0xff]
    %v1037 = vld [vmem:[#allocation2 + $0x2d0] sm:$0xff]
    %v1038 = vld [vmem:[#allocation2 + $0x2d8] sm:$0xff]
    %v1039 = vld [vmem:[#allocation2 + $0x2e0] sm:$0xff]
    %v1040 = vld [vmem:[#allocation2 + $0x2e8] sm:$0xff]
    %v1041 = vld [vmem:[#allocation2 + $0x2f0] sm:$0xff]
    %v1042 = vld [vmem:[#allocation2 + $0x2f8] sm:$0xff]
    %v1043 = vld [vmem:[#allocation2 + $0x300] sm:$0xff]
    %v1044 = vld [vmem:[#allocation2 + $0x308] sm:$0xff]
    %v1045 = vld [vmem:[#allocation2 + $0x310] sm:$0xff]
    %v1046 = vld [vmem:[#allocation2 + $0x318] sm:$0xff]
    %v1047 = vld [vmem:[#allocation2 + $0x320] sm:$0xff]
    %v1048 = vld [vmem:[#allocation2 + $0x328] sm:$0xff]
    %v1049 = vld [vmem:[#allocation2 + $0x330] sm:$0xff]
    %v1050 = vld [vmem:[#allocation2 + $0x338] sm:$0xff]
    %v1051 = vld [vmem:[#allocation2 + $0x340] sm:$0xff]
    %v1052 = vld [vmem:[#allocation2 + $0x348] sm:$0xff]
    %v1053 = vld [vmem:[#allocation2 + $0x350] sm:$0xff]
    %v1054 = vld [vmem:[#allocation2 + $0x358] sm:$0xff]
    %v1055 = vld [vmem:[#allocation2 + $0x360] sm:$0xff]
    %v1056 = vld [vmem:[#allocation2 + $0x368] sm:$0xff]
    %v1057 = vld [vmem:[#allocation2 + $0x370] sm:$0xff]
    %v1058 = vld [vmem:[#allocation2 + $0x378] sm:$0xff]
    %v1059 = vld [vmem:[#allocation2 + $0x380] sm:$0xff]
    %v1060 = vld [vmem:[#allocation2 + $0x388] sm:$0xff]
    %v1061 = vld [vmem:[#allocation2 + $0x390] sm:$0xff]
    %v1062 = vld [vmem:[#allocation2 + $0x398] sm:$0xff]
    %v1063 = vld [vmem:[#allocation2 + $0x3a0] sm:$0xff]
    %v1064 = vld [vmem:[#allocation2 + $0x3a8] sm:$0xff]
    %v1065 = vld [vmem:[#allocation2 + $0x3b0] sm:$0xff]
    %v1066 = vld [vmem:[#allocation2 + $0x3b8] sm:$0xff]
    %v1067 = vld [vmem:[#allocation2 + $0x3c0] sm:$0xff]
    %v1068 = vld [vmem:[#allocation2 + $0x3c8] sm:$0xff]
    %v1069 = vld [vmem:[#allocation2 + $0x3d0] sm:$0xff]
    %v1070 = vld [vmem:[#allocation2 + $0x3d8] sm:$0xff]
    %v1071 = vld [vmem:[#allocation2 + $0x3e0] sm:$0xff]
    %v1072 = vld [vmem:[#allocation2 + $0x3e8] sm:$0xff]
    %v1073 = vld [vmem:[#allocation2 + $0x3f0] sm:$0xff]
    %v1074 = vld [vmem:[#allocation2 + $0x3f8] sm:$0xff]
    %v1075 = vld [vmem:[#allocation2 + $0x400] sm:$0xff]
    %v1076 = vld [vmem:[#allocation2 + $0x408] sm:$0xff]
    %v1077 = vld [vmem:[#allocation2 + $0x410] sm:$0xff]
    %v1078 = vld [vmem:[#allocation2 + $0x418] sm:$0xff]
    %v1079 = vld [vmem:[#allocation2 + $0x420] sm:$0xff]
    %v1080 = vld [vmem:[#allocation2 + $0x428] sm:$0xff]
    %v1081 = vld [vmem:[#allocation2 + $0x430] sm:$0xff]
    %v1082 = vld [vmem:[#allocation2 + $0x438] sm:$0xff]
    %v1083 = vld [vmem:[#allocation2 + $0x440] sm:$0xff]
    %v1084 = vld [vmem:[#allocation2 + $0x448] sm:$0xff]
    %v1085 = vld [vmem:[#allocation2 + $0x450] sm:$0xff]
    %v1086 = vld [vmem:[#allocation2 + $0x458] sm:$0xff]
    %v1087 = vld [vmem:[#allocation2 + $0x460] sm:$0xff]
    %v1088 = vld [vmem:[#allocation2 + $0x468] sm:$0xff]
    %v1089 = vld [vmem:[#allocation2 + $0x470] sm:$0xff]
    %v1090 = vld [vmem:[#allocation2 + $0x478] sm:$0xff]
    %v1091 = vld [vmem:[#allocation2 + $0x480] sm:$0xff]
    %v1092 = vld [vmem:[#allocation2 + $0x488] sm:$0xff]
    %v1093 = vld [vmem:[#allocation2 + $0x490] sm:$0xff]
    %v1094 = vld [vmem:[#allocation2 + $0x498] sm:$0xff]
    %v1095 = vld [vmem:[#allocation2 + $0x4a0] sm:$0xff]
    %v1096 = vld [vmem:[#allocation2 + $0x4a8] sm:$0xff]
    %v1097 = vld [vmem:[#allocation2 + $0x4b0] sm:$0xff]
    %v1098 = vld [vmem:[#allocation2 + $0x4b8] sm:$0xff]
    %v1099 = vld [vmem:[#allocation2 + $0x4c0] sm:$0xff]
    %v1100 = vld [vmem:[#allocation2 + $0x4c8] sm:$0xff]
    %v1101 = vld [vmem:[#allocation2 + $0x4d0] sm:$0xff]
    %v1102 = vld [vmem:[#allocation2 + $0x4d8] sm:$0xff]
    %v1103 = vld [vmem:[#allocation2 + $0x4e0] sm:$0xff]
    %v1104 = vld [vmem:[#allocation2 + $0x4e8] sm:$0xff]
    %v1105 = vld [vmem:[#allocation2 + $0x4f0] sm:$0xff]
    %v1106 = vld [vmem:[#allocation2 + $0x4f8] sm:$0xff]
    %v1107 = vld [vmem:[#allocation2 + $0x500] sm:$0xff]
    %v1108 = vld [vmem:[#allocation2 + $0x508] sm:$0xff]
    %v1109 = vld [vmem:[#allocation2 + $0x510] sm:$0xff]
    %v1110 = vld [vmem:[#allocation2 + $0x518] sm:$0xff]
    %v1111 = vld [vmem:[#allocation2 + $0x520] sm:$0xff]
    %v1112 = vld [vmem:[#allocation2 + $0x528] sm:$0xff]
    %v1113 = vld [vmem:[#allocation2 + $0x530] sm:$0xff]
    %v1114 = vld [vmem:[#allocation2 + $0x538] sm:$0xff]
    %v1115 = vld [vmem:[#allocation2 + $0x540] sm:$0xff]
    %v1116 = vld [vmem:[#allocation2 + $0x548] sm:$0xff]
    %v1117 = vld [vmem:[#allocation2 + $0x550] sm:$0xff]
    %v1118 = vld [vmem:[#allocation2 + $0x558] sm:$0xff]
    %v1119 = vld [vmem:[#allocation2 + $0x560] sm:$0xff]
    %v1120 = vld [vmem:[#allocation2 + $0x568] sm:$0xff]
    %v1121 = vld [vmem:[#allocation2 + $0x570] sm:$0xff]
    %v1122 = vld [vmem:[#allocation2 + $0x578] sm:$0xff]
    %v1123 = vld [vmem:[#allocation2 + $0x580] sm:$0xff]
    %v1124 = vld [vmem:[#allocation2 + $0x588] sm:$0xff]
    %v1125 = vld [vmem:[#allocation2 + $0x590] sm:$0xff]
    %v1126 = vld [vmem:[#allocation2 + $0x598] sm:$0xff]
    %v1127 = vld [vmem:[%s2] sm:$0xff]
    %1129 = vset.pattern.permute.xlu0 0
    %1130 = vperm.xlu0 %1129, %v1127
    %v1131 = vpop.permute.xlu0 %1130
    %vm1133 = vcmask 588800
    %v1135 = vsel %vm1133, %v946, 0
    %1137 = vmatprep.subr.mxu0 0.0
    %1138 = vmatpush1.msra.mxu0 0.0
    %1139 = vmatprep.subr.mxu0 0.0
    %1140 = vmatpush1.msra.mxu0 0.0
    %1141 = vmatprep.subr.mxu0 0.0
    %1142 = vmatpush1.msra.mxu0 0.0
    %1143 = vmatprep.subr.mxu0 0.0
    %1144 = vmatpush1.msra.mxu0 0.0
    %1145 = vmatprep.subr.mxu0 0.0
    %1146 = vmatpush1.msra.mxu0 0.0
    %1147 = vmatprep.subr.mxu0 0.0
    %1148 = vmatpush1.msra.mxu0 0.0
    %1149 = vmatprep.subr.mxu0 0.0
    %1150 = vmatpush1.msra.mxu0 0.0
    %1151 = vmatprep.subr.mxu0 %v1108
    %1152 = vmatpush1.msra.mxu0 %v1107
    %1153 = vmatprep.subr.mxu0 %v1088
    %1154 = vmatpush1.msra.mxu0 %v1087
    %1155 = vmatprep.subr.mxu0 %v1068
    %1156 = vmatpush1.msra.mxu0 %v1067
    %1157 = vmatprep.subr.mxu0 %v1048
    %1158 = vmatpush1.msra.mxu0 %v1047
    %1159 = vmatprep.subr.mxu0 %v1028
    %1160 = vmatpush1.msra.mxu0 %v1027
    %1161 = vmatprep.subr.mxu0 %v1008
    %1162 = vmatpush1.msra.mxu0 %v1007
    %1163 = vmatprep.subr.mxu0 %v988
    %1164 = vmatpush1.msra.mxu0 %v987
    %1165 = vmatprep.subr.mxu0 %v968
    %1166 = vmatpush1.msra.mxu0 %v967
    %1167 = vmatprep.subr.mxu0 %v948
    %1168 = vmatpush1.msra.mxu0 %v947
    %1169 = vmatprep.subr.mxu0 0.0
    %1170 = vmatpush2.msra.mxu0 0.0
    %1171 = vmatprep.subr.mxu0 0.0
    %1172 = vmatpush2.msra.mxu0 0.0
    %1173 = vmatprep.subr.mxu0 0.0
    %1174 = vmatpush2.msra.mxu0 0.0
    %1175 = vmatprep.subr.mxu0 0.0
    %1176 = vmatpush2.msra.mxu0 0.0
    %1177 = vmatprep.subr.mxu0 0.0
    %1178 = vmatpush2.msra.mxu0 0.0
    %1179 = vmatprep.subr.mxu0 0.0
    %1180 = vmatpush2.msra.mxu0 0.0
    %1181 = vmatprep.subr.mxu0 0.0
    %1182 = vmatpush2.msra.mxu0 0.0
    %1183 = vmatprep.subr.mxu0 0.0
    %1184 = vmatpush2.msra.mxu0 0.0
    %1185 = vmatprep.subr.mxu0 0.0
    %1186 = vmatpush2.msra.mxu0 0.0
    %1187 = vmatprep.subr.mxu0 0.0
    %1188 = vmatpush2.msra.mxu0 0.0
    %1189 = vmatprep.subr.mxu0 0.0
    %1190 = vmatpush2.msra.mxu0 0.0
    %1191 = vmatprep.subr.mxu0 0.0
    %1192 = vmatpush2.msra.mxu0 0.0
    %1193 = vmatprep.subr.mxu0 0.0
    %1194 = vmatpush2.msra.mxu0 0.0
    %1195 = vmatprep.subr.mxu0 0.0
    %1196 = vmatpush2.msra.mxu0 0.0
    %1197 = vmatprep.subr.mxu0 0.0
    %1198 = vmatpush2.msra.mxu0 0.0
    %1199 = vmatprep.subr.mxu0 0.0
    %1200 = vmatpush2.msra.mxu0 0.0
    %1201 = vmatprep.mubr.f32.mxu0 0.0
    %1202 = vmatmul.mubr.f32.gmra.mxu0 %v1135
    %v1203 = vpop.f32.mrf.mxu0
    %v1204 = vadd.f32 %v1131, %v1203
    %v1205 = vpop.f32.mrf.mxu0
    %v1206 = vadd.f32 %v1131, %v1205
    %1207 = vdwg.mxu0
    %1208 = vmatprep.subr.mxu0 0.0
    %1209 = vmatpush1.msra.mxu0 0.0
    %1210 = vmatprep.subr.mxu0 0.0
    %1211 = vmatpush1.msra.mxu0 0.0
    %1212 = vmatprep.subr.mxu0 0.0
    %1213 = vmatpush1.msra.mxu0 0.0
    %1214 = vmatprep.subr.mxu0 0.0
    %1215 = vmatpush1.msra.mxu0 0.0
    %1216 = vmatprep.subr.mxu0 0.0
    %1217 = vmatpush1.msra.mxu0 0.0
    %1218 = vmatprep.subr.mxu0 0.0
    %1219 = vmatpush1.msra.mxu0 0.0
    %1220 = vmatprep.subr.mxu0 0.0
    %1221 = vmatpush1.msra.mxu0 0.0
    %1222 = vmatprep.subr.mxu0 %v1110
    %1223 = vmatpush1.msra.mxu0 %v1109
    %1224 = vmatprep.subr.mxu0 %v1090
    %1225 = vmatpush1.msra.mxu0 %v1089
    %1226 = vmatprep.subr.mxu0 %v1070
    %1227 = vmatpush1.msra.mxu0 %v1069
    %1228 = vmatprep.subr.mxu0 %v1050
    %1229 = vmatpush1.msra.mxu0 %v1049
    %1230 = vmatprep.subr.mxu0 %v1030
    %1231 = vmatpush1.msra.mxu0 %v1029
    %1232 = vmatprep.subr.mxu0 %v1010
    %1233 = vmatpush1.msra.mxu0 %v1009
    %1234 = vmatprep.subr.mxu0 %v990
    %1235 = vmatpush1.msra.mxu0 %v989
    %1236 = vmatprep.subr.mxu0 %v970
    %1237 = vmatpush1.msra.mxu0 %v969
    %1238 = vmatprep.subr.mxu0 %v950
    %1239 = vmatpush1.msra.mxu0 %v949
    %1240 = vmatprep.subr.mxu0 0.0
    %1241 = vmatpush2.msra.mxu0 0.0
    %1242 = vmatprep.subr.mxu0 0.0
    %1243 = vmatpush2.msra.mxu0 0.0
    %1244 = vmatprep.subr.mxu0 0.0
    %1245 = vmatpush2.msra.mxu0 0.0
    %1246 = vmatprep.subr.mxu0 0.0
    %1247 = vmatpush2.msra.mxu0 0.0
    %1248 = vmatprep.subr.mxu0 0.0
    %1249 = vmatpush2.msra.mxu0 0.0
    %1250 = vmatprep.subr.mxu0 0.0
    %1251 = vmatpush2.msra.mxu0 0.0
    %1252 = vmatprep.subr.mxu0 0.0
    %1253 = vmatpush2.msra.mxu0 0.0
    %1254 = vmatprep.subr.mxu0 0.0
    %1255 = vmatpush2.msra.mxu0 0.0
    %1256 = vmatprep.subr.mxu0 0.0
    %1257 = vmatpush2.msra.mxu0 0.0
    %1258 = vmatprep.subr.mxu0 0.0
    %1259 = vmatpush2.msra.mxu0 0.0
    %1260 = vmatprep.subr.mxu0 0.0
    %1261 = vmatpush2.msra.mxu0 0.0
    %1262 = vmatprep.subr.mxu0 0.0
    %1263 = vmatpush2.msra.mxu0 0.0
    %1264 = vmatprep.subr.mxu0 0.0
    %1265 = vmatpush2.msra.mxu0 0.0
    %1266 = vmatprep.subr.mxu0 0.0
    %1267 = vmatpush2.msra.mxu0 0.0
    %1268 = vmatprep.subr.mxu0 0.0
    %1269 = vmatpush2.msra.mxu0 0.0
    %1270 = vmatprep.subr.mxu0 0.0
    %1271 = vmatpush2.msra.mxu0 0.0
    %1272 = vmatprep.mubr.f32.mxu0 0.0
    %1273 = vmatmul.mubr.f32.gmra.mxu0 %v1135
    %v1274 = vpop.f32.mrf.mxu0
    %v1275 = vadd.f32 %v1131, %v1274
    %v1276 = vpop.f32.mrf.mxu0
    %v1277 = vadd.f32 %v1131, %v1276
    %1278 = vdwg.mxu0
    %1279 = vmatprep.subr.mxu0 0.0
    %1280 = vmatpush1.msra.mxu0 0.0
    %1281 = vmatprep.subr.mxu0 0.0
    %1282 = vmatpush1.msra.mxu0 0.0
    %1283 = vmatprep.subr.mxu0 0.0
    %1284 = vmatpush1.msra.mxu0 0.0
    %1285 = vmatprep.subr.mxu0 0.0
    %1286 = vmatpush1.msra.mxu0 0.0
    %1287 = vmatprep.subr.mxu0 0.0
    %1288 = vmatpush1.msra.mxu0 0.0
    %1289 = vmatprep.subr.mxu0 0.0
    %1290 = vmatpush1.msra.mxu0 0.0
    %1291 = vmatprep.subr.mxu0 0.0
    %1292 = vmatpush1.msra.mxu0 0.0
    %1293 = vmatprep.subr.mxu0 %v1112
    %1294 = vmatpush1.msra.mxu0 %v1111
    %1295 = vmatprep.subr.mxu0 %v1092
    %1296 = vmatpush1.msra.mxu0 %v1091
    %1297 = vmatprep.subr.mxu0 %v1072
    %1298 = vmatpush1.msra.mxu0 %v1071
    %1299 = vmatprep.subr.mxu0 %v1052
    %1300 = vmatpush1.msra.mxu0 %v1051
    %1301 = vmatprep.subr.mxu0 %v1032
    %1302 = vmatpush1.msra.mxu0 %v1031
    %1303 = vmatprep.subr.mxu0 %v1012
    %1304 = vmatpush1.msra.mxu0 %v1011
    %1305 = vmatprep.subr.mxu0 %v992
    %1306 = vmatpush1.msra.mxu0 %v991
    %1307 = vmatprep.subr.mxu0 %v972
    %1308 = vmatpush1.msra.mxu0 %v971
    %1309 = vmatprep.subr.mxu0 %v952
    %1310 = vmatpush1.msra.mxu0 %v951
    %1311 = vmatprep.subr.mxu0 0.0
    %1312 = vmatpush2.msra.mxu0 0.0
    %1313 = vmatprep.subr.mxu0 0.0
    %1314 = vmatpush2.msra.mxu0 0.0
    %1315 = vmatprep.subr.mxu0 0.0
    %1316 = vmatpush2.msra.mxu0 0.0
    %1317 = vmatprep.subr.mxu0 0.0
    %1318 = vmatpush2.msra.mxu0 0.0
    %1319 = vmatprep.subr.mxu0 0.0
    %1320 = vmatpush2.msra.mxu0 0.0
    %1321 = vmatprep.subr.mxu0 0.0
    %1322 = vmatpush2.msra.mxu0 0.0
    %1323 = vmatprep.subr.mxu0 0.0
    %1324 = vmatpush2.msra.mxu0 0.0
    %1325 = vmatprep.subr.mxu0 0.0
    %1326 = vmatpush2.msra.mxu0 0.0
    %1327 = vmatprep.subr.mxu0 0.0
    %1328 = vmatpush2.msra.mxu0 0.0
    %1329 = vmatprep.subr.mxu0 0.0
    %1330 = vmatpush2.msra.mxu0 0.0
    %1331 = vmatprep.subr.mxu0 0.0
    %1332 = vmatpush2.msra.mxu0 0.0
    %1333 = vmatprep.subr.mxu0 0.0
    %1334 = vmatpush2.msra.mxu0 0.0
    %1335 = vmatprep.subr.mxu0 0.0
    %1336 = vmatpush2.msra.mxu0 0.0
    %1337 = vmatprep.subr.mxu0 0.0
    %1338 = vmatpush2.msra.mxu0 0.0
    %1339 = vmatprep.subr.mxu0 0.0
    %1340 = vmatpush2.msra.mxu0 0.0
    %1341 = vmatprep.subr.mxu0 0.0
    %1342 = vmatpush2.msra.mxu0 0.0
    %1343 = vmatprep.mubr.f32.mxu0 0.0
    %1344 = vmatmul.mubr.f32.gmra.mxu0 %v1135
    %v1345 = vpop.f32.mrf.mxu0
    %v1346 = vadd.f32 %v1131, %v1345
    %v1347 = vpop.f32.mrf.mxu0
    %v1348 = vadd.f32 %v1131, %v1347
    %1349 = vdwg.mxu0
    %1350 = vmatprep.subr.mxu0 0.0
    %1351 = vmatpush1.msra.mxu0 0.0
    %1352 = vmatprep.subr.mxu0 0.0
    %1353 = vmatpush1.msra.mxu0 0.0
    %1354 = vmatprep.subr.mxu0 0.0
    %1355 = vmatpush1.msra.mxu0 0.0
    %1356 = vmatprep.subr.mxu0 0.0
    %1357 = vmatpush1.msra.mxu0 0.0
    %1358 = vmatprep.subr.mxu0 0.0
    %1359 = vmatpush1.msra.mxu0 0.0
    %1360 = vmatprep.subr.mxu0 0.0
    %1361 = vmatpush1.msra.mxu0 0.0
    %1362 = vmatprep.subr.mxu0 0.0
    %1363 = vmatpush1.msra.mxu0 0.0
    %1364 = vmatprep.subr.mxu0 %v1114
    %1365 = vmatpush1.msra.mxu0 %v1113
    %1366 = vmatprep.subr.mxu0 %v1094
    %1367 = vmatpush1.msra.mxu0 %v1093
    %1368 = vmatprep.subr.mxu0 %v1074
    %1369 = vmatpush1.msra.mxu0 %v1073
    %1370 = vmatprep.subr.mxu0 %v1054
    %1371 = vmatpush1.msra.mxu0 %v1053
    %1372 = vmatprep.subr.mxu0 %v1034
    %1373 = vmatpush1.msra.mxu0 %v1033
    %1374 = vmatprep.subr.mxu0 %v1014
    %1375 = vmatpush1.msra.mxu0 %v1013
    %1376 = vmatprep.subr.mxu0 %v994
    %1377 = vmatpush1.msra.mxu0 %v993
    %1378 = vmatprep.subr.mxu0 %v974
    %1379 = vmatpush1.msra.mxu0 %v973
    %1380 = vmatprep.subr.mxu0 %v954
    %1381 = vmatpush1.msra.mxu0 %v953
    %1382 = vmatprep.subr.mxu0 0.0
    %1383 = vmatpush2.msra.mxu0 0.0
    %1384 = vmatprep.subr.mxu0 0.0
    %1385 = vmatpush2.msra.mxu0 0.0
    %1386 = vmatprep.subr.mxu0 0.0
    %1387 = vmatpush2.msra.mxu0 0.0
    %1388 = vmatprep.subr.mxu0 0.0
    %1389 = vmatpush2.msra.mxu0 0.0
    %1390 = vmatprep.subr.mxu0 0.0
    %1391 = vmatpush2.msra.mxu0 0.0
    %1392 = vmatprep.subr.mxu0 0.0
    %1393 = vmatpush2.msra.mxu0 0.0
    %1394 = vmatprep.subr.mxu0 0.0
    %1395 = vmatpush2.msra.mxu0 0.0
    %1396 = vmatprep.subr.mxu0 0.0
    %1397 = vmatpush2.msra.mxu0 0.0
    %1398 = vmatprep.subr.mxu0 0.0
    %1399 = vmatpush2.msra.mxu0 0.0
    %1400 = vmatprep.subr.mxu0 0.0
    %1401 = vmatpush2.msra.mxu0 0.0
    %1402 = vmatprep.subr.mxu0 0.0
    %1403 = vmatpush2.msra.mxu0 0.0
    %1404 = vmatprep.subr.mxu0 0.0
    %1405 = vmatpush2.msra.mxu0 0.0
    %1406 = vmatprep.subr.mxu0 0.0
    %1407 = vmatpush2.msra.mxu0 0.0
    %1408 = vmatprep.subr.mxu0 0.0
    %1409 = vmatpush2.msra.mxu0 0.0
    %1410 = vmatprep.subr.mxu0 0.0
    %1411 = vmatpush2.msra.mxu0 0.0
    %1412 = vmatprep.subr.mxu0 0.0
    %1413 = vmatpush2.msra.mxu0 0.0
    %1414 = vmatprep.mubr.f32.mxu0 0.0
    %1415 = vmatmul.mubr.f32.gmra.mxu0 %v1135
    %v1416 = vpop.f32.mrf.mxu0
    %v1417 = vadd.f32 %v1131, %v1416
    %v1418 = vpop.f32.mrf.mxu0
    %v1419 = vadd.f32 %v1131, %v1418
    %1420 = vdwg.mxu0
    %1421 = vmatprep.subr.mxu0 0.0
    %1422 = vmatpush1.msra.mxu0 0.0
    %1423 = vmatprep.subr.mxu0 0.0
    %1424 = vmatpush1.msra.mxu0 0.0
    %1425 = vmatprep.subr.mxu0 0.0
    %1426 = vmatpush1.msra.mxu0 0.0
    %1427 = vmatprep.subr.mxu0 0.0
    %1428 = vmatpush1.msra.mxu0 0.0
    %1429 = vmatprep.subr.mxu0 0.0
    %1430 = vmatpush1.msra.mxu0 0.0
    %1431 = vmatprep.subr.mxu0 0.0
    %1432 = vmatpush1.msra.mxu0 0.0
    %1433 = vmatprep.subr.mxu0 0.0
    %1434 = vmatpush1.msra.mxu0 0.0
    %1435 = vmatprep.subr.mxu0 %v1116
    %1436 = vmatpush1.msra.mxu0 %v1115
    %1437 = vmatprep.subr.mxu0 %v1096
    %1438 = vmatpush1.msra.mxu0 %v1095
    %1439 = vmatprep.subr.mxu0 %v1076
    %1440 = vmatpush1.msra.mxu0 %v1075
    %1441 = vmatprep.subr.mxu0 %v1056
    %1442 = vmatpush1.msra.mxu0 %v1055
    %1443 = vmatprep.subr.mxu0 %v1036
    %1444 = vmatpush1.msra.mxu0 %v1035
    %1445 = vmatprep.subr.mxu0 %v1016
    %1446 = vmatpush1.msra.mxu0 %v1015
    %1447 = vmatprep.subr.mxu0 %v996
    %1448 = vmatpush1.msra.mxu0 %v995
    %1449 = vmatprep.subr.mxu0 %v976
    %1450 = vmatpush1.msra.mxu0 %v975
    %1451 = vmatprep.subr.mxu0 %v956
    %1452 = vmatpush1.msra.mxu0 %v955
    %1453 = vmatprep.subr.mxu0 0.0
    %1454 = vmatpush2.msra.mxu0 0.0
    %1455 = vmatprep.subr.mxu0 0.0
    %1456 = vmatpush2.msra.mxu0 0.0
    %1457 = vmatprep.subr.mxu0 0.0
    %1458 = vmatpush2.msra.mxu0 0.0
    %1459 = vmatprep.subr.mxu0 0.0
    %1460 = vmatpush2.msra.mxu0 0.0
    %1461 = vmatprep.subr.mxu0 0.0
    %1462 = vmatpush2.msra.mxu0 0.0
    %1463 = vmatprep.subr.mxu0 0.0
    %1464 = vmatpush2.msra.mxu0 0.0
    %1465 = vmatprep.subr.mxu0 0.0
    %1466 = vmatpush2.msra.mxu0 0.0
    %1467 = vmatprep.subr.mxu0 0.0
    %1468 = vmatpush2.msra.mxu0 0.0
    %1469 = vmatprep.subr.mxu0 0.0
    %1470 = vmatpush2.msra.mxu0 0.0
    %1471 = vmatprep.subr.mxu0 0.0
    %1472 = vmatpush2.msra.mxu0 0.0
    %1473 = vmatprep.subr.mxu0 0.0
    %1474 = vmatpush2.msra.mxu0 0.0
    %1475 = vmatprep.subr.mxu0 0.0
    %1476 = vmatpush2.msra.mxu0 0.0
    %1477 = vmatprep.subr.mxu0 0.0
    %1478 = vmatpush2.msra.mxu0 0.0
    %1479 = vmatprep.subr.mxu0 0.0
    %1480 = vmatpush2.msra.mxu0 0.0
    %1481 = vmatprep.subr.mxu0 0.0
    %1482 = vmatpush2.msra.mxu0 0.0
    %1483 = vmatprep.subr.mxu0 0.0
    %1484 = vmatpush2.msra.mxu0 0.0
    %1485 = vmatprep.mubr.f32.mxu0 0.0
    %1486 = vmatmul.mubr.f32.gmra.mxu0 %v1135
    %v1487 = vpop.f32.mrf.mxu0
    %v1488 = vadd.f32 %v1131, %v1487
    %v1489 = vpop.f32.mrf.mxu0
    %v1490 = vadd.f32 %v1131, %v1489
    %1491 = vdwg.mxu0
    %1492 = vmatprep.subr.mxu0 0.0
    %1493 = vmatpush1.msra.mxu0 0.0
    %1494 = vmatprep.subr.mxu0 0.0
    %1495 = vmatpush1.msra.mxu0 0.0
    %1496 = vmatprep.subr.mxu0 0.0
    %1497 = vmatpush1.msra.mxu0 0.0
    %1498 = vmatprep.subr.mxu0 0.0
    %1499 = vmatpush1.msra.mxu0 0.0
    %1500 = vmatprep.subr.mxu0 0.0
    %1501 = vmatpush1.msra.mxu0 0.0
    %1502 = vmatprep.subr.mxu0 0.0
    %1503 = vmatpush1.msra.mxu0 0.0
    %1504 = vmatprep.subr.mxu0 0.0
    %1505 = vmatpush1.msra.mxu0 0.0
    %1506 = vmatprep.subr.mxu0 %v1118
    %1507 = vmatpush1.msra.mxu0 %v1117
    %1508 = vmatprep.subr.mxu0 %v1098
    %1509 = vmatpush1.msra.mxu0 %v1097
    %1510 = vmatprep.subr.mxu0 %v1078
    %1511 = vmatpush1.msra.mxu0 %v1077
    %1512 = vmatprep.subr.mxu0 %v1058
    %1513 = vmatpush1.msra.mxu0 %v1057
    %1514 = vmatprep.subr.mxu0 %v1038
    %1515 = vmatpush1.msra.mxu0 %v1037
    %1516 = vmatprep.subr.mxu0 %v1018
    %1517 = vmatpush1.msra.mxu0 %v1017
    %1518 = vmatprep.subr.mxu0 %v998
    %1519 = vmatpush1.msra.mxu0 %v997
    %1520 = vmatprep.subr.mxu0 %v978
    %1521 = vmatpush1.msra.mxu0 %v977
    %1522 = vmatprep.subr.mxu0 %v958
    %1523 = vmatpush1.msra.mxu0 %v957
    %1524 = vmatprep.subr.mxu0 0.0
    %1525 = vmatpush2.msra.mxu0 0.0
    %1526 = vmatprep.subr.mxu0 0.0
    %1527 = vmatpush2.msra.mxu0 0.0
    %1528 = vmatprep.subr.mxu0 0.0
    %1529 = vmatpush2.msra.mxu0 0.0
    %1530 = vmatprep.subr.mxu0 0.0
    %1531 = vmatpush2.msra.mxu0 0.0
    %1532 = vmatprep.subr.mxu0 0.0
    %1533 = vmatpush2.msra.mxu0 0.0
    %1534 = vmatprep.subr.mxu0 0.0
    %1535 = vmatpush2.msra.mxu0 0.0
    %1536 = vmatprep.subr.mxu0 0.0
    %1537 = vmatpush2.msra.mxu0 0.0
    %1538 = vmatprep.subr.mxu0 0.0
    %1539 = vmatpush2.msra.mxu0 0.0
    %1540 = vmatprep.subr.mxu0 0.0
    %1541 = vmatpush2.msra.mxu0 0.0
    %1542 = vmatprep.subr.mxu0 0.0
    %1543 = vmatpush2.msra.mxu0 0.0
    %1544 = vmatprep.subr.mxu0 0.0
    %1545 = vmatpush2.msra.mxu0 0.0
    %1546 = vmatprep.subr.mxu0 0.0
    %1547 = vmatpush2.msra.mxu0 0.0
    %1548 = vmatprep.subr.mxu0 0.0
    %1549 = vmatpush2.msra.mxu0 0.0
    %1550 = vmatprep.subr.mxu0 0.0
    %1551 = vmatpush2.msra.mxu0 0.0
    %1552 = vmatprep.subr.mxu0 0.0
    %1553 = vmatpush2.msra.mxu0 0.0
    %1554 = vmatprep.subr.mxu0 0.0
    %1555 = vmatpush2.msra.mxu0 0.0
    %1556 = vmatprep.mubr.f32.mxu0 0.0
    %1557 = vmatmul.mubr.f32.gmra.mxu0 %v1135
    %v1558 = vpop.f32.mrf.mxu0
    %v1559 = vadd.f32 %v1131, %v1558
    %v1560 = vpop.f32.mrf.mxu0
    %v1561 = vadd.f32 %v1131, %v1560
    %1562 = vdwg.mxu0
    %1563 = vmatprep.subr.mxu0 0.0
    %1564 = vmatpush1.msra.mxu0 0.0
    %1565 = vmatprep.subr.mxu0 0.0
    %1566 = vmatpush1.msra.mxu0 0.0
    %1567 = vmatprep.subr.mxu0 0.0
    %1568 = vmatpush1.msra.mxu0 0.0
    %1569 = vmatprep.subr.mxu0 0.0
    %1570 = vmatpush1.msra.mxu0 0.0
    %1571 = vmatprep.subr.mxu0 0.0
    %1572 = vmatpush1.msra.mxu0 0.0
    %1573 = vmatprep.subr.mxu0 0.0
    %1574 = vmatpush1.msra.mxu0 0.0
    %1575 = vmatprep.subr.mxu0 0.0
    %1576 = vmatpush1.msra.mxu0 0.0
    %1577 = vmatprep.subr.mxu0 %v1120
    %1578 = vmatpush1.msra.mxu0 %v1119
    %1579 = vmatprep.subr.mxu0 %v1100
    %1580 = vmatpush1.msra.mxu0 %v1099
    %1581 = vmatprep.subr.mxu0 %v1080
    %1582 = vmatpush1.msra.mxu0 %v1079
    %1583 = vmatprep.subr.mxu0 %v1060
    %1584 = vmatpush1.msra.mxu0 %v1059
    %1585 = vmatprep.subr.mxu0 %v1040
    %1586 = vmatpush1.msra.mxu0 %v1039
    %1587 = vmatprep.subr.mxu0 %v1020
    %1588 = vmatpush1.msra.mxu0 %v1019
    %1589 = vmatprep.subr.mxu0 %v1000
    %1590 = vmatpush1.msra.mxu0 %v999
    %1591 = vmatprep.subr.mxu0 %v980
    %1592 = vmatpush1.msra.mxu0 %v979
    %1593 = vmatprep.subr.mxu0 %v960
    %1594 = vmatpush1.msra.mxu0 %v959
    %1595 = vmatprep.subr.mxu0 0.0
    %1596 = vmatpush2.msra.mxu0 0.0
    %1597 = vmatprep.subr.mxu0 0.0
    %1598 = vmatpush2.msra.mxu0 0.0
    %1599 = vmatprep.subr.mxu0 0.0
    %1600 = vmatpush2.msra.mxu0 0.0
    %1601 = vmatprep.subr.mxu0 0.0
    %1602 = vmatpush2.msra.mxu0 0.0
    %1603 = vmatprep.subr.mxu0 0.0
    %1604 = vmatpush2.msra.mxu0 0.0
    %1605 = vmatprep.subr.mxu0 0.0
    %1606 = vmatpush2.msra.mxu0 0.0
    %1607 = vmatprep.subr.mxu0 0.0
    %1608 = vmatpush2.msra.mxu0 0.0
    %1609 = vmatprep.subr.mxu0 0.0
    %1610 = vmatpush2.msra.mxu0 0.0
    %1611 = vmatprep.subr.mxu0 0.0
    %1612 = vmatpush2.msra.mxu0 0.0
    %1613 = vmatprep.subr.mxu0 0.0
    %1614 = vmatpush2.msra.mxu0 0.0
    %1615 = vmatprep.subr.mxu0 0.0
    %1616 = vmatpush2.msra.mxu0 0.0
    %1617 = vmatprep.subr.mxu0 0.0
    %1618 = vmatpush2.msra.mxu0 0.0
    %1619 = vmatprep.subr.mxu0 0.0
    %1620 = vmatpush2.msra.mxu0 0.0
    %1621 = vmatprep.subr.mxu0 0.0
    %1622 = vmatpush2.msra.mxu0 0.0
    %1623 = vmatprep.subr.mxu0 0.0
    %1624 = vmatpush2.msra.mxu0 0.0
    %1625 = vmatprep.subr.mxu0 0.0
    %1626 = vmatpush2.msra.mxu0 0.0
    %1627 = vmatprep.mubr.f32.mxu0 0.0
    %1628 = vmatmul.mubr.f32.gmra.mxu0 %v1135
    %v1629 = vpop.f32.mrf.mxu0
    %v1630 = vadd.f32 %v1131, %v1629
    %v1631 = vpop.f32.mrf.mxu0
    %v1632 = vadd.f32 %v1131, %v1631
    %1633 = vdwg.mxu0
    %1634 = vmatprep.subr.mxu0 0.0
    %1635 = vmatpush1.msra.mxu0 0.0
    %1636 = vmatprep.subr.mxu0 0.0
    %1637 = vmatpush1.msra.mxu0 0.0
    %1638 = vmatprep.subr.mxu0 0.0
    %1639 = vmatpush1.msra.mxu0 0.0
    %1640 = vmatprep.subr.mxu0 0.0
    %1641 = vmatpush1.msra.mxu0 0.0
    %1642 = vmatprep.subr.mxu0 0.0
    %1643 = vmatpush1.msra.mxu0 0.0
    %1644 = vmatprep.subr.mxu0 0.0
    %1645 = vmatpush1.msra.mxu0 0.0
    %1646 = vmatprep.subr.mxu0 0.0
    %1647 = vmatpush1.msra.mxu0 0.0
    %1648 = vmatprep.subr.mxu0 %v1122
    %1649 = vmatpush1.msra.mxu0 %v1121
    %1650 = vmatprep.subr.mxu0 %v1102
    %1651 = vmatpush1.msra.mxu0 %v1101
    %1652 = vmatprep.subr.mxu0 %v1082
    %1653 = vmatpush1.msra.mxu0 %v1081
    %1654 = vmatprep.subr.mxu0 %v1062
    %1655 = vmatpush1.msra.mxu0 %v1061
    %1656 = vmatprep.subr.mxu0 %v1042
    %1657 = vmatpush1.msra.mxu0 %v1041
    %1658 = vmatprep.subr.mxu0 %v1022
    %1659 = vmatpush1.msra.mxu0 %v1021
    %1660 = vmatprep.subr.mxu0 %v1002
    %1661 = vmatpush1.msra.mxu0 %v1001
    %1662 = vmatprep.subr.mxu0 %v982
    %1663 = vmatpush1.msra.mxu0 %v981
    %1664 = vmatprep.subr.mxu0 %v962
    %1665 = vmatpush1.msra.mxu0 %v961
    %1666 = vmatprep.subr.mxu0 0.0
    %1667 = vmatpush2.msra.mxu0 0.0
    %1668 = vmatprep.subr.mxu0 0.0
    %1669 = vmatpush2.msra.mxu0 0.0
    %1670 = vmatprep.subr.mxu0 0.0
    %1671 = vmatpush2.msra.mxu0 0.0
    %1672 = vmatprep.subr.mxu0 0.0
    %1673 = vmatpush2.msra.mxu0 0.0
    %1674 = vmatprep.subr.mxu0 0.0
    %1675 = vmatpush2.msra.mxu0 0.0
    %1676 = vmatprep.subr.mxu0 0.0
    %1677 = vmatpush2.msra.mxu0 0.0
    %1678 = vmatprep.subr.mxu0 0.0
    %1679 = vmatpush2.msra.mxu0 0.0
    %1680 = vmatprep.subr.mxu0 0.0
    %1681 = vmatpush2.msra.mxu0 0.0
    %1682 = vmatprep.subr.mxu0 0.0
    %1683 = vmatpush2.msra.mxu0 0.0
    %1684 = vmatprep.subr.mxu0 0.0
    %1685 = vmatpush2.msra.mxu0 0.0
    %1686 = vmatprep.subr.mxu0 0.0
    %1687 = vmatpush2.msra.mxu0 0.0
    %1688 = vmatprep.subr.mxu0 0.0
    %1689 = vmatpush2.msra.mxu0 0.0
    %1690 = vmatprep.subr.mxu0 0.0
    %1691 = vmatpush2.msra.mxu0 0.0
    %1692 = vmatprep.subr.mxu0 0.0
    %1693 = vmatpush2.msra.mxu0 0.0
    %1694 = vmatprep.subr.mxu0 0.0
    %1695 = vmatpush2.msra.mxu0 0.0
    %1696 = vmatprep.subr.mxu0 0.0
    %1697 = vmatpush2.msra.mxu0 0.0
    %1698 = vmatprep.mubr.f32.mxu0 0.0
    %1699 = vmatmul.mubr.f32.gmra.mxu0 %v1135
    %v1700 = vpop.f32.mrf.mxu0
    %v1701 = vadd.f32 %v1131, %v1700
    %v1702 = vpop.f32.mrf.mxu0
    %v1703 = vadd.f32 %v1131, %v1702
    %1704 = vdwg.mxu0
    %1705 = vmatprep.subr.mxu0 0.0
    %1706 = vmatpush1.msra.mxu0 0.0
    %1707 = vmatprep.subr.mxu0 0.0
    %1708 = vmatpush1.msra.mxu0 0.0
    %1709 = vmatprep.subr.mxu0 0.0
    %1710 = vmatpush1.msra.mxu0 0.0
    %1711 = vmatprep.subr.mxu0 0.0
    %1712 = vmatpush1.msra.mxu0 0.0
    %1713 = vmatprep.subr.mxu0 0.0
    %1714 = vmatpush1.msra.mxu0 0.0
    %1715 = vmatprep.subr.mxu0 0.0
    %1716 = vmatpush1.msra.mxu0 0.0
    %1717 = vmatprep.subr.mxu0 0.0
    %1718 = vmatpush1.msra.mxu0 0.0
    %1719 = vmatprep.subr.mxu0 %v1124
    %1720 = vmatpush1.msra.mxu0 %v1123
    %1721 = vmatprep.subr.mxu0 %v1104
    %1722 = vmatpush1.msra.mxu0 %v1103
    %1723 = vmatprep.subr.mxu0 %v1084
    %1724 = vmatpush1.msra.mxu0 %v1083
    %1725 = vmatprep.subr.mxu0 %v1064
    %1726 = vmatpush1.msra.mxu0 %v1063
    %1727 = vmatprep.subr.mxu0 %v1044
    %1728 = vmatpush1.msra.mxu0 %v1043
    %1729 = vmatprep.subr.mxu0 %v1024
    %1730 = vmatpush1.msra.mxu0 %v1023
    %1731 = vmatprep.subr.mxu0 %v1004
    %1732 = vmatpush1.msra.mxu0 %v1003
    %1733 = vmatprep.subr.mxu0 %v984
    %1734 = vmatpush1.msra.mxu0 %v983
    %1735 = vmatprep.subr.mxu0 %v964
    %1736 = vmatpush1.msra.mxu0 %v963
    %1737 = vmatprep.subr.mxu0 0.0
    %1738 = vmatpush2.msra.mxu0 0.0
    %1739 = vmatprep.subr.mxu0 0.0
    %1740 = vmatpush2.msra.mxu0 0.0
    %1741 = vmatprep.subr.mxu0 0.0
    %1742 = vmatpush2.msra.mxu0 0.0
    %1743 = vmatprep.subr.mxu0 0.0
    %1744 = vmatpush2.msra.mxu0 0.0
    %1745 = vmatprep.subr.mxu0 0.0
    %1746 = vmatpush2.msra.mxu0 0.0
    %1747 = vmatprep.subr.mxu0 0.0
    %1748 = vmatpush2.msra.mxu0 0.0
    %1749 = vmatprep.subr.mxu0 0.0
    %1750 = vmatpush2.msra.mxu0 0.0
    %1751 = vmatprep.subr.mxu0 0.0
    %1752 = vmatpush2.msra.mxu0 0.0
    %1753 = vmatprep.subr.mxu0 0.0
    %1754 = vmatpush2.msra.mxu0 0.0
    %1755 = vmatprep.subr.mxu0 0.0
    %1756 = vmatpush2.msra.mxu0 0.0
    %1757 = vmatprep.subr.mxu0 0.0
    %1758 = vmatpush2.msra.mxu0 0.0
    %1759 = vmatprep.subr.mxu0 0.0
    %1760 = vmatpush2.msra.mxu0 0.0
    %1761 = vmatprep.subr.mxu0 0.0
    %1762 = vmatpush2.msra.mxu0 0.0
    %1763 = vmatprep.subr.mxu0 0.0
    %1764 = vmatpush2.msra.mxu0 0.0
    %1765 = vmatprep.subr.mxu0 0.0
    %1766 = vmatpush2.msra.mxu0 0.0
    %1767 = vmatprep.subr.mxu0 0.0
    %1768 = vmatpush2.msra.mxu0 0.0
    %1769 = vmatprep.mubr.f32.mxu0 0.0
    %1770 = vmatmul.mubr.f32.gmra.mxu0 %v1135
    %v1771 = vpop.f32.mrf.mxu0
    %v1772 = vadd.f32 %v1131, %v1771
    %v1773 = vpop.f32.mrf.mxu0
    %v1774 = vadd.f32 %v1131, %v1773
    %1775 = vdwg.mxu0
    %1776 = vmatprep.subr.mxu0 0.0
    %1777 = vmatpush1.msra.mxu0 0.0
    %1778 = vmatprep.subr.mxu0 0.0
    %1779 = vmatpush1.msra.mxu0 0.0
    %1780 = vmatprep.subr.mxu0 0.0
    %1781 = vmatpush1.msra.mxu0 0.0
    %1782 = vmatprep.subr.mxu0 0.0
    %1783 = vmatpush1.msra.mxu0 0.0
    %1784 = vmatprep.subr.mxu0 0.0
    %1785 = vmatpush1.msra.mxu0 0.0
    %1786 = vmatprep.subr.mxu0 0.0
    %1787 = vmatpush1.msra.mxu0 0.0
    %1788 = vmatprep.subr.mxu0 0.0
    %1789 = vmatpush1.msra.mxu0 0.0
    %1790 = vmatprep.subr.mxu0 %v1126
    %1791 = vmatpush1.msra.mxu0 %v1125
    %1792 = vmatprep.subr.mxu0 %v1106
    %1793 = vmatpush1.msra.mxu0 %v1105
    %1794 = vmatprep.subr.mxu0 %v1086
    %1795 = vmatpush1.msra.mxu0 %v1085
    %1796 = vmatprep.subr.mxu0 %v1066
    %1797 = vmatpush1.msra.mxu0 %v1065
    %1798 = vmatprep.subr.mxu0 %v1046
    %1799 = vmatpush1.msra.mxu0 %v1045
    %1800 = vmatprep.subr.mxu0 %v1026
    %1801 = vmatpush1.msra.mxu0 %v1025
    %1802 = vmatprep.subr.mxu0 %v1006
    %1803 = vmatpush1.msra.mxu0 %v1005
    %1804 = vmatprep.subr.mxu0 %v986
    %1805 = vmatpush1.msra.mxu0 %v985
    %1806 = vmatprep.subr.mxu0 %v966
    %1807 = vmatpush1.msra.mxu0 %v965
    %1808 = vmatprep.subr.mxu0 0.0
    %1809 = vmatpush2.msra.mxu0 0.0
    %1810 = vmatprep.subr.mxu0 0.0
    %1811 = vmatpush2.msra.mxu0 0.0
    %1812 = vmatprep.subr.mxu0 0.0
    %1813 = vmatpush2.msra.mxu0 0.0
    %1814 = vmatprep.subr.mxu0 0.0
    %1815 = vmatpush2.msra.mxu0 0.0
    %1816 = vmatprep.subr.mxu0 0.0
    %1817 = vmatpush2.msra.mxu0 0.0
    %1818 = vmatprep.subr.mxu0 0.0
    %1819 = vmatpush2.msra.mxu0 0.0
    %1820 = vmatprep.subr.mxu0 0.0
    %1821 = vmatpush2.msra.mxu0 0.0
    %1822 = vmatprep.subr.mxu0 0.0
    %1823 = vmatpush2.msra.mxu0 0.0
    %1824 = vmatprep.subr.mxu0 0.0
    %1825 = vmatpush2.msra.mxu0 0.0
    %1826 = vmatprep.subr.mxu0 0.0
    %1827 = vmatpush2.msra.mxu0 0.0
    %1828 = vmatprep.subr.mxu0 0.0
    %1829 = vmatpush2.msra.mxu0 0.0
    %1830 = vmatprep.subr.mxu0 0.0
    %1831 = vmatpush2.msra.mxu0 0.0
    %1832 = vmatprep.subr.mxu0 0.0
    %1833 = vmatpush2.msra.mxu0 0.0
    %1834 = vmatprep.subr.mxu0 0.0
    %1835 = vmatpush2.msra.mxu0 0.0
    %1836 = vmatprep.subr.mxu0 0.0
    %1837 = vmatpush2.msra.mxu0 0.0
    %1838 = vmatprep.subr.mxu0 0.0
    %1839 = vmatpush2.msra.mxu0 0.0
    %1840 = vmatprep.mubr.f32.mxu0 0.0
    %1841 = vmatmul.mubr.f32.gmra.mxu0 %v1135
    %v1842 = vpop.f32.mrf.mxu0
    %v1843 = vadd.f32 %v1131, %v1842
    %v1844 = vpop.f32.mrf.mxu0
    %v1845 = vadd.f32 %v1131, %v1844
    %1846 = vdwg.mxu0
    %v1847 = vmax.f32 %v1204, 0.0
    %v1848 = vmax.f32 %v1206, 0.0
    %v1849 = vmax.f32 %v1275, 0.0
    %v1850 = vmax.f32 %v1277, 0.0
    %v1851 = vmax.f32 %v1346, 0.0
    %v1852 = vmax.f32 %v1348, 0.0
    %v1853 = vmax.f32 %v1417, 0.0
    %v1854 = vmax.f32 %v1419, 0.0
    %v1855 = vmax.f32 %v1488, 0.0
    %v1856 = vmax.f32 %v1490, 0.0
    %v1857 = vmax.f32 %v1559, 0.0
    %v1858 = vmax.f32 %v1561, 0.0
    %v1859 = vmax.f32 %v1630, 0.0
    %v1860 = vmax.f32 %v1632, 0.0
    %v1861 = vmax.f32 %v1701, 0.0
    %v1862 = vmax.f32 %v1703, 0.0
    %v1863 = vmax.f32 %v1772, 0.0
    %v1864 = vmax.f32 %v1774, 0.0
    %v1865 = vmax.f32 %v1843, 0.0
    %v1866 = vmax.f32 %v1845, 0.0
    %1887 = vrot.lane.b32.xlu0 %v1847, 127
    %v1888 = vpop.permute.xlu0 %1887
    %1889 = vrot.lane.b32.xlu0 %v1848, 127
    %v1890 = vpop.permute.xlu0 %1889
    %1891 = vrot.lane.b32.xlu0 %v1849, 127
    %v1892 = vpop.permute.xlu0 %1891
    %1893 = vrot.lane.b32.xlu0 %v1850, 127
    %v1894 = vpop.permute.xlu0 %1893
    %1895 = vrot.lane.b32.xlu0 %v1851, 127
    %v1896 = vpop.permute.xlu0 %1895
    %1897 = vrot.lane.b32.xlu0 %v1852, 127
    %v1898 = vpop.permute.xlu0 %1897
    %1899 = vrot.lane.b32.xlu0 %v1853, 127
    %v1900 = vpop.permute.xlu0 %1899
    %1901 = vrot.lane.b32.xlu0 %v1854, 127
    %v1902 = vpop.permute.xlu0 %1901
    %1903 = vrot.lane.b32.xlu0 %v1855, 127
    %v1904 = vpop.permute.xlu0 %1903
    %1905 = vrot.lane.b32.xlu0 %v1856, 127
    %v1906 = vpop.permute.xlu0 %1905
    %1907 = vrot.lane.b32.xlu0 %v1857, 127
    %v1908 = vpop.permute.xlu0 %1907
    %1909 = vrot.lane.b32.xlu0 %v1858, 127
    %v1910 = vpop.permute.xlu0 %1909
    %1911 = vrot.lane.b32.xlu0 %v1859, 127
    %v1912 = vpop.permute.xlu0 %1911
    %1913 = vrot.lane.b32.xlu0 %v1860, 127
    %v1914 = vpop.permute.xlu0 %1913
    %1915 = vrot.lane.b32.xlu0 %v1861, 127
    %v1916 = vpop.permute.xlu0 %1915
    %1917 = vrot.lane.b32.xlu0 %v1862, 127
    %v1918 = vpop.permute.xlu0 %1917
    %1919 = vrot.lane.b32.xlu0 %v1863, 127
    %v1920 = vpop.permute.xlu0 %1919
    %1921 = vrot.lane.b32.xlu0 %v1864, 127
    %v1922 = vpop.permute.xlu0 %1921
    %1923 = vrot.lane.b32.xlu0 %v1865, 127
    %v1924 = vpop.permute.xlu0 %1923
    %1925 = vrot.lane.b32.xlu0 %v1866, 127
    %v1926 = vpop.permute.xlu0 %1925
    %v1927 = vsel %vm134, %v1888, %v1890
    %v1928 = vsel %vm134, %v1890, %v1892
    %v1929 = vsel %vm134, %v1892, %v1894
    %v1930 = vsel %vm134, %v1894, %v1896
    %v1931 = vsel %vm134, %v1896, %v1898
    %v1932 = vsel %vm134, %v1898, %v1900
    %v1933 = vsel %vm134, %v1900, %v1902
    %v1934 = vsel %vm134, %v1902, %v1904
    %v1935 = vsel %vm134, %v1904, %v1906
    %v1936 = vsel %vm134, %v1906, %v1908
    %v1937 = vsel %vm134, %v1908, %v1910
    %v1938 = vsel %vm134, %v1910, %v1912
    %v1939 = vsel %vm134, %v1912, %v1914
    %v1940 = vsel %vm134, %v1914, %v1916
    %v1941 = vsel %vm134, %v1916, %v1918
    %v1942 = vsel %vm134, %v1918, %v1920
    %v1943 = vsel %vm134, %v1920, %v1922
    %v1944 = vsel %vm134, %v1922, %v1924
    %v1945 = vsel %vm134, %v1924, %v1926
    %v1966 = vmax.f32 %v1847, %v1927
    %v1967 = vmax.f32 %v1848, %v1928
    %v1968 = vmax.f32 %v1849, %v1929
    %v1969 = vmax.f32 %v1850, %v1930
    %v1970 = vmax.f32 %v1851, %v1931
    %v1971 = vmax.f32 %v1852, %v1932
    %v1972 = vmax.f32 %v1853, %v1933
    %v1973 = vmax.f32 %v1854, %v1934
    %v1974 = vmax.f32 %v1855, %v1935
    %v1975 = vmax.f32 %v1856, %v1936
    %v1976 = vmax.f32 %v1857, %v1937
    %v1977 = vmax.f32 %v1858, %v1938
    %v1978 = vmax.f32 %v1859, %v1939
    %v1979 = vmax.f32 %v1860, %v1940
    %v1980 = vmax.f32 %v1861, %v1941
    %v1981 = vmax.f32 %v1862, %v1942
    %v1982 = vmax.f32 %v1863, %v1943
    %v1983 = vmax.f32 %v1864, %v1944
    %v1984 = vmax.f32 %v1865, %v1945
    %v1985 = vmax.f32 %v1866, %v1926
    %1986 = vrot.lane.b32.xlu0 %v1847, 126
    %v1987 = vpop.permute.xlu0 %1986
    %1988 = vrot.lane.b32.xlu0 %v1848, 126
    %v1989 = vpop.permute.xlu0 %1988
    %1990 = vrot.lane.b32.xlu0 %v1849, 126
    %v1991 = vpop.permute.xlu0 %1990
    %1992 = vrot.lane.b32.xlu0 %v1850, 126
    %v1993 = vpop.permute.xlu0 %1992
    %1994 = vrot.lane.b32.xlu0 %v1851, 126
    %v1995 = vpop.permute.xlu0 %1994
    %1996 = vrot.lane.b32.xlu0 %v1852, 126
    %v1997 = vpop.permute.xlu0 %1996
    %1998 = vrot.lane.b32.xlu0 %v1853, 126
    %v1999 = vpop.permute.xlu0 %1998
    %2000 = vrot.lane.b32.xlu0 %v1854, 126
    %v2001 = vpop.permute.xlu0 %2000
    %2002 = vrot.lane.b32.xlu0 %v1855, 126
    %v2003 = vpop.permute.xlu0 %2002
    %2004 = vrot.lane.b32.xlu0 %v1856, 126
    %v2005 = vpop.permute.xlu0 %2004
    %2006 = vrot.lane.b32.xlu0 %v1857, 126
    %v2007 = vpop.permute.xlu0 %2006
    %2008 = vrot.lane.b32.xlu0 %v1858, 126
    %v2009 = vpop.permute.xlu0 %2008
    %2010 = vrot.lane.b32.xlu0 %v1859, 126
    %v2011 = vpop.permute.xlu0 %2010
    %2012 = vrot.lane.b32.xlu0 %v1860, 126
    %v2013 = vpop.permute.xlu0 %2012
    %2014 = vrot.lane.b32.xlu0 %v1861, 126
    %v2015 = vpop.permute.xlu0 %2014
    %2016 = vrot.lane.b32.xlu0 %v1862, 126
    %v2017 = vpop.permute.xlu0 %2016
    %2018 = vrot.lane.b32.xlu0 %v1863, 126
    %v2019 = vpop.permute.xlu0 %2018
    %2020 = vrot.lane.b32.xlu0 %v1864, 126
    %v2021 = vpop.permute.xlu0 %2020
    %2022 = vrot.lane.b32.xlu0 %v1865, 126
    %v2023 = vpop.permute.xlu0 %2022
    %2024 = vrot.lane.b32.xlu0 %v1866, 126
    %v2025 = vpop.permute.xlu0 %2024
    %v2026 = vsel %vm184, %v1987, %v1989
    %v2027 = vsel %vm184, %v1989, %v1991
    %v2028 = vsel %vm184, %v1991, %v1993
    %v2029 = vsel %vm184, %v1993, %v1995
    %v2030 = vsel %vm184, %v1995, %v1997
    %v2031 = vsel %vm184, %v1997, %v1999
    %v2032 = vsel %vm184, %v1999, %v2001
    %v2033 = vsel %vm184, %v2001, %v2003
    %v2034 = vsel %vm184, %v2003, %v2005
    %v2035 = vsel %vm184, %v2005, %v2007
    %v2036 = vsel %vm184, %v2007, %v2009
    %v2037 = vsel %vm184, %v2009, %v2011
    %v2038 = vsel %vm184, %v2011, %v2013
    %v2039 = vsel %vm184, %v2013, %v2015
    %v2040 = vsel %vm184, %v2015, %v2017
    %v2041 = vsel %vm184, %v2017, %v2019
    %v2042 = vsel %vm184, %v2019, %v2021
    %v2043 = vsel %vm184, %v2021, %v2023
    %v2044 = vsel %vm184, %v2023, %v2025
    %v2065 = vmax.f32 %v1966, %v2026
    %v2066 = vmax.f32 %v1967, %v2027
    %v2067 = vmax.f32 %v1968, %v2028
    %v2068 = vmax.f32 %v1969, %v2029
    %v2069 = vmax.f32 %v1970, %v2030
    %v2070 = vmax.f32 %v1971, %v2031
    %v2071 = vmax.f32 %v1972, %v2032
    %v2072 = vmax.f32 %v1973, %v2033
    %v2073 = vmax.f32 %v1974, %v2034
    %v2074 = vmax.f32 %v1975, %v2035
    %v2075 = vmax.f32 %v1976, %v2036
    %v2076 = vmax.f32 %v1977, %v2037
    %v2077 = vmax.f32 %v1978, %v2038
    %v2078 = vmax.f32 %v1979, %v2039
    %v2079 = vmax.f32 %v1980, %v2040
    %v2080 = vmax.f32 %v1981, %v2041
    %v2081 = vmax.f32 %v1982, %v2042
    %v2082 = vmax.f32 %v1983, %v2043
    %v2083 = vmax.f32 %v1984, %v2044
    %v2084 = vmax.f32 %v1985, %v2025
    %2105 = vrot.lane.b32.xlu0 %v2065, 94
    %v2106 = vpop.permute.xlu0 %2105
    %2107 = vrot.lane.b32.xlu0 %v2066, 94
    %v2108 = vpop.permute.xlu0 %2107
    %2109 = vrot.lane.b32.xlu0 %v2067, 94
    %v2110 = vpop.permute.xlu0 %2109
    %2111 = vrot.lane.b32.xlu0 %v2068, 94
    %v2112 = vpop.permute.xlu0 %2111
    %2113 = vrot.lane.b32.xlu0 %v2069, 94
    %v2114 = vpop.permute.xlu0 %2113
    %2115 = vrot.lane.b32.xlu0 %v2070, 94
    %v2116 = vpop.permute.xlu0 %2115
    %2117 = vrot.lane.b32.xlu0 %v2071, 94
    %v2118 = vpop.permute.xlu0 %2117
    %2119 = vrot.lane.b32.xlu0 %v2072, 94
    %v2120 = vpop.permute.xlu0 %2119
    %2121 = vrot.lane.b32.xlu0 %v2073, 94
    %v2122 = vpop.permute.xlu0 %2121
    %2123 = vrot.lane.b32.xlu0 %v2074, 94
    %v2124 = vpop.permute.xlu0 %2123
    %2125 = vrot.lane.b32.xlu0 %v2075, 94
    %v2126 = vpop.permute.xlu0 %2125
    %2127 = vrot.lane.b32.xlu0 %v2076, 94
    %v2128 = vpop.permute.xlu0 %2127
    %2129 = vrot.lane.b32.xlu0 %v2077, 94
    %v2130 = vpop.permute.xlu0 %2129
    %2131 = vrot.lane.b32.xlu0 %v2078, 94
    %v2132 = vpop.permute.xlu0 %2131
    %2133 = vrot.lane.b32.xlu0 %v2079, 94
    %v2134 = vpop.permute.xlu0 %2133
    %2135 = vrot.lane.b32.xlu0 %v2080, 94
    %v2136 = vpop.permute.xlu0 %2135
    %2137 = vrot.lane.b32.xlu0 %v2081, 94
    %v2138 = vpop.permute.xlu0 %2137
    %2139 = vrot.lane.b32.xlu0 %v2082, 94
    %v2140 = vpop.permute.xlu0 %2139
    %2141 = vrot.lane.b32.xlu0 %v2083, 94
    %v2142 = vpop.permute.xlu0 %2141
    %2143 = vrot.lane.b32.xlu0 %v2084, 94
    %v2144 = vpop.permute.xlu0 %2143
    %v2145 = vsel %vm234, %v2106, %v2108
    %v2146 = vsel %vm234, %v2108, %v2110
    %v2147 = vsel %vm234, %v2110, %v2112
    %v2148 = vsel %vm234, %v2112, %v2114
    %v2149 = vsel %vm234, %v2114, %v2116
    %v2150 = vsel %vm234, %v2116, %v2118
    %v2151 = vsel %vm234, %v2118, %v2120
    %v2152 = vsel %vm234, %v2120, %v2122
    %v2153 = vsel %vm234, %v2122, %v2124
    %v2154 = vsel %vm234, %v2124, %v2126
    %v2155 = vsel %vm234, %v2126, %v2128
    %v2156 = vsel %vm234, %v2128, %v2130
    %v2157 = vsel %vm234, %v2130, %v2132
    %v2158 = vsel %vm234, %v2132, %v2134
    %v2159 = vsel %vm234, %v2134, %v2136
    %v2160 = vsel %vm234, %v2136, %v2138
    %v2161 = vsel %vm234, %v2138, %v2140
    %v2162 = vsel %vm234, %v2140, %v2142
    %v2163 = vsel %vm234, %v2142, %v2144
    %v2184 = vmax.f32 %v2065, %v2145
    %v2185 = vmax.f32 %v2066, %v2146
    %v2186 = vmax.f32 %v2067, %v2147
    %v2187 = vmax.f32 %v2068, %v2148
    %v2188 = vmax.f32 %v2069, %v2149
    %v2189 = vmax.f32 %v2070, %v2150
    %v2190 = vmax.f32 %v2071, %v2151
    %v2191 = vmax.f32 %v2072, %v2152
    %v2192 = vmax.f32 %v2073, %v2153
    %v2193 = vmax.f32 %v2074, %v2154
    %v2194 = vmax.f32 %v2075, %v2155
    %v2195 = vmax.f32 %v2076, %v2156
    %v2196 = vmax.f32 %v2077, %v2157
    %v2197 = vmax.f32 %v2078, %v2158
    %v2198 = vmax.f32 %v2079, %v2159
    %v2199 = vmax.f32 %v2080, %v2160
    %v2200 = vmax.f32 %v2081, %v2161
    %v2201 = vmax.f32 %v2082, %v2162
    %v2202 = vmax.f32 %v2083, %v2163
    %v2203 = vmax.f32 %v2084, %v2144
    %2204 = vrot.lane.b32.xlu0 %v2065, 60
    %v2205 = vpop.permute.xlu0 %2204
    %2206 = vrot.lane.b32.xlu0 %v2066, 60
    %v2207 = vpop.permute.xlu0 %2206
    %2208 = vrot.lane.b32.xlu0 %v2067, 60
    %v2209 = vpop.permute.xlu0 %2208
    %2210 = vrot.lane.b32.xlu0 %v2068, 60
    %v2211 = vpop.permute.xlu0 %2210
    %2212 = vrot.lane.b32.xlu0 %v2069, 60
    %v2213 = vpop.permute.xlu0 %2212
    %2214 = vrot.lane.b32.xlu0 %v2070, 60
    %v2215 = vpop.permute.xlu0 %2214
    %2216 = vrot.lane.b32.xlu0 %v2071, 60
    %v2217 = vpop.permute.xlu0 %2216
    %2218 = vrot.lane.b32.xlu0 %v2072, 60
    %v2219 = vpop.permute.xlu0 %2218
    %2220 = vrot.lane.b32.xlu0 %v2073, 60
    %v2221 = vpop.permute.xlu0 %2220
    %2222 = vrot.lane.b32.xlu0 %v2074, 60
    %v2223 = vpop.permute.xlu0 %2222
    %2224 = vrot.lane.b32.xlu0 %v2075, 60
    %v2225 = vpop.permute.xlu0 %2224
    %2226 = vrot.lane.b32.xlu0 %v2076, 60
    %v2227 = vpop.permute.xlu0 %2226
    %2228 = vrot.lane.b32.xlu0 %v2077, 60
    %v2229 = vpop.permute.xlu0 %2228
    %2230 = vrot.lane.b32.xlu0 %v2078, 60
    %v2231 = vpop.permute.xlu0 %2230
    %2232 = vrot.lane.b32.xlu0 %v2079, 60
    %v2233 = vpop.permute.xlu0 %2232
    %2234 = vrot.lane.b32.xlu0 %v2080, 60
    %v2235 = vpop.permute.xlu0 %2234
    %2236 = vrot.lane.b32.xlu0 %v2081, 60
    %v2237 = vpop.permute.xlu0 %2236
    %2238 = vrot.lane.b32.xlu0 %v2082, 60
    %v2239 = vpop.permute.xlu0 %2238
    %2240 = vrot.lane.b32.xlu0 %v2083, 60
    %v2241 = vpop.permute.xlu0 %2240
    %2242 = vrot.lane.b32.xlu0 %v2084, 60
    %v2243 = vpop.permute.xlu0 %2242
    %v2244 = vsel %vm387, %v2205, %v2207
    %v2245 = vsel %vm387, %v2207, %v2209
    %v2246 = vsel %vm387, %v2209, %v2211
    %v2247 = vsel %vm387, %v2211, %v2213
    %v2248 = vsel %vm387, %v2213, %v2215
    %v2249 = vsel %vm387, %v2215, %v2217
    %v2250 = vsel %vm387, %v2217, %v2219
    %v2251 = vsel %vm387, %v2219, %v2221
    %v2252 = vsel %vm387, %v2221, %v2223
    %v2253 = vsel %vm387, %v2223, %v2225
    %v2254 = vsel %vm387, %v2225, %v2227
    %v2255 = vsel %vm387, %v2227, %v2229
    %v2256 = vsel %vm387, %v2229, %v2231
    %v2257 = vsel %vm387, %v2231, %v2233
    %v2258 = vsel %vm387, %v2233, %v2235
    %v2259 = vsel %vm387, %v2235, %v2237
    %v2260 = vsel %vm387, %v2237, %v2239
    %v2261 = vsel %vm387, %v2239, %v2241
    %v2262 = vsel %vm387, %v2241, %v2243
    %v2283 = vmax.f32 %v2184, %v2244
    %v2284 = vmax.f32 %v2185, %v2245
    %v2285 = vmax.f32 %v2186, %v2246
    %v2286 = vmax.f32 %v2187, %v2247
    %v2287 = vmax.f32 %v2188, %v2248
    %v2288 = vmax.f32 %v2189, %v2249
    %v2289 = vmax.f32 %v2190, %v2250
    %v2290 = vmax.f32 %v2191, %v2251
    %v2291 = vmax.f32 %v2192, %v2252
    %v2292 = vmax.f32 %v2193, %v2253
    %v2293 = vmax.f32 %v2194, %v2254
    %v2294 = vmax.f32 %v2195, %v2255
    %v2295 = vmax.f32 %v2196, %v2256
    %v2296 = vmax.f32 %v2197, %v2257
    %v2297 = vmax.f32 %v2198, %v2258
    %v2298 = vmax.f32 %v2199, %v2259
    %v2299 = vmax.f32 %v2200, %v2260
    %v2300 = vmax.f32 %v2201, %v2261
    %v2301 = vmax.f32 %v2202, %v2262
    %v2302 = vmax.f32 %v2203, %v2243
    %2303 = vst [vmem:[#allocation2] sm:$0xff] %v2283
    %2304 = vst [vmem:[#allocation2 + $0x8] sm:$0xff] %v2284
    %2305 = vst [vmem:[#allocation2 + $0x10] sm:$0xff] %v2285
    %2306 = vst [vmem:[#allocation2 + $0x18] sm:$0xff] %v2286
    %2307 = vst [vmem:[#allocation2 + $0x20] sm:$0xff] %v2287
    %2308 = vst [vmem:[#allocation2 + $0x28] sm:$0xff] %v2288
    %2309 = vst [vmem:[#allocation2 + $0x30] sm:$0xff] %v2289
    %2310 = vst [vmem:[#allocation2 + $0x38] sm:$0xff] %v2290
    %2311 = vst [vmem:[#allocation2 + $0x40] sm:$0xff] %v2291
    %vm2312 = vcmask 31744
    %2313 = vst.msk [vmem:[#allocation2 + $0x48] sm:$0xff] %vm2312, %v2292
    %2314 = vst [vmem:[#allocation2 + $0xa0] sm:$0xff] %v2293
    %2315 = vst [vmem:[#allocation2 + $0xa8] sm:$0xff] %v2294
    %2316 = vst [vmem:[#allocation2 + $0xb0] sm:$0xff] %v2295
    %2317 = vst [vmem:[#allocation2 + $0xb8] sm:$0xff] %v2296
    %2318 = vst [vmem:[#allocation2 + $0xc0] sm:$0xff] %v2297
    %2319 = vst [vmem:[#allocation2 + $0xc8] sm:$0xff] %v2298
    %2320 = vst [vmem:[#allocation2 + $0xd0] sm:$0xff] %v2299
    %2321 = vst [vmem:[#allocation2 + $0xd8] sm:$0xff] %v2300
    %2322 = vst [vmem:[#allocation2 + $0xe0] sm:$0xff] %v2301
    %2323 = vst.msk [vmem:[#allocation2 + $0xe8] sm:$0xff] %vm2312, %v2302
    %v2324 = vld [vmem:[#allocation2] sm:$0xff]
    %v2325 = vld [vmem:[#allocation2 + $0x8] sm:$0xff]
    %v2326 = vld [vmem:[#allocation2 + $0x10] sm:$0xff]
    %v2327 = vld [vmem:[#allocation2 + $0x18] sm:$0xff]
    %v2328 = vld [vmem:[#allocation2 + $0x20] sm:$0xff]
    %v2329 = vld [vmem:[#allocation2 + $0x28] sm:$0xff]
    %v2330 = vld [vmem:[#allocation2 + $0x30] sm:$0xff]
    %v2331 = vld [vmem:[#allocation2 + $0x38] sm:$0xff]
    %v2332 = vld [vmem:[#allocation2 + $0x40] sm:$0xff]
    %v2333 = vld [vmem:[#allocation2 + $0x48] sm:$0xff]
    %v2334 = vld [vmem:[#allocation2 + $0xa0] sm:$0xff]
    %v2335 = vld [vmem:[#allocation2 + $0xa8] sm:$0xff]
    %v2336 = vld [vmem:[#allocation2 + $0xb0] sm:$0xff]
    %v2337 = vld [vmem:[#allocation2 + $0xb8] sm:$0xff]
    %v2338 = vld [vmem:[#allocation2 + $0xc0] sm:$0xff]
    %v2339 = vld [vmem:[#allocation2 + $0xc8] sm:$0xff]
    %v2340 = vld [vmem:[#allocation2 + $0xd0] sm:$0xff]
    %v2341 = vld [vmem:[#allocation2 + $0xd8] sm:$0xff]
    %v2342 = vld [vmem:[#allocation2 + $0xe0] sm:$0xff]
    %v2343 = vld [vmem:[#allocation2 + $0xe8] sm:$0xff]
    %v2344 = vpack.c.bf16 %v2334, %v2324
    %v2345 = vpack.c.bf16 %v2335, %v2325
    %v2346 = vpack.c.bf16 %v2336, %v2326
    %v2347 = vpack.c.bf16 %v2337, %v2327
    %v2348 = vpack.c.bf16 %v2338, %v2328
    %v2349 = vpack.c.bf16 %v2339, %v2329
    %v2350 = vpack.c.bf16 %v2340, %v2330
    %v2351 = vpack.c.bf16 %v2341, %v2331
    %v2352 = vpack.c.bf16 %v2342, %v2332
    %v2353 = vpack.c.bf16 %v2343, %v2333
    %v2354 = vld [vmem:[%s11] sm:$0xff]
    %v2355 = vld [vmem:[%s11 + $0x8] sm:$0xf]
    %v2356 = vld [vmem:[%s11 + $0xc] sm:$0xff]
    %v2357 = vld [vmem:[%s11 + $0x14] sm:$0xf]
    %v2358 = vld [vmem:[%s11 + $0x18] sm:$0xff]
    %v2359 = vld [vmem:[%s11 + $0x20] sm:$0xf]
    %v2360 = vld [vmem:[%s11 + $0x24] sm:$0xff]
    %v2361 = vld [vmem:[%s11 + $0x2c] sm:$0xf]
    %v2362 = vld [vmem:[%s11 + $0x30] sm:$0xff]
    %v2363 = vld [vmem:[%s11 + $0x38] sm:$0xf]
    %v2364 = vld [vmem:[%s11 + $0x3c] sm:$0xff]
    %v2365 = vld [vmem:[%s11 + $0x44] sm:$0xf]
    %v2366 = vld [vmem:[%s11 + $0x48] sm:$0xff]
    %v2367 = vld [vmem:[%s11 + $0x50] sm:$0xf]
    %v2368 = vld [vmem:[%s11 + $0x54] sm:$0xff]
    %v2369 = vld [vmem:[%s11 + $0x5c] sm:$0xf]
    %v2370 = vld [vmem:[%s11 + $0x60] sm:$0xff]
    %v2371 = vld [vmem:[%s11 + $0x68] sm:$0xf]
    %v2372 = vld [vmem:[%s11 + $0x6c] sm:$0xff]
    %v2373 = vld [vmem:[%s11 + $0x74] sm:$0xf]
    %v2374 = vld [vmem:[%s11 + $0x78] sm:$0xff]
    %v2375 = vld [vmem:[%s11 + $0x80] sm:$0xf]
    %v2376 = vld [vmem:[%s11 + $0x84] sm:$0xff]
    %v2377 = vld [vmem:[%s11 + $0x8c] sm:$0xf]
    %v2378 = vld [vmem:[%s11 + $0x90] sm:$0xff]
    %v2379 = vld [vmem:[%s11 + $0x98] sm:$0xf]
    %v2380 = vld [vmem:[%s11 + $0x9c] sm:$0xff]
    %v2381 = vld [vmem:[%s11 + $0xa4] sm:$0xf]
    %v2382 = vld [vmem:[%s11 + $0xa8] sm:$0xff]
    %v2383 = vld [vmem:[%s11 + $0xb0] sm:$0xf]
    %v2384 = vld [vmem:[%s11 + $0xb4] sm:$0xff]
    %v2385 = vld [vmem:[%s11 + $0xbc] sm:$0xf]
    %v2386 = vld [vmem:[%s11 + $0xc0] sm:$0xff]
    %v2387 = vld [vmem:[%s11 + $0xc8] sm:$0xf]
    %v2388 = vld [vmem:[%s11 + $0xcc] sm:$0xff]
    %v2389 = vld [vmem:[%s11 + $0xd4] sm:$0xf]
    %v2390 = vld [vmem:[%s11 + $0xd8] sm:$0xff]
    %v2391 = vld [vmem:[%s11 + $0xe0] sm:$0xf]
    %v2392 = vld [vmem:[%s11 + $0xe4] sm:$0xff]
    %v2393 = vld [vmem:[%s11 + $0xec] sm:$0xf]
    %v2394 = vld [vmem:[%s11 + $0xf0] sm:$0xff]
    %v2395 = vld [vmem:[%s11 + $0xf8] sm:$0xf]
    %v2396 = vld [vmem:[%s11 + $0xfc] sm:$0xff]
    %v2397 = vld [vmem:[%s11 + $0x104] sm:$0xf]
    %v2398 = vld [vmem:[%s11 + $0x108] sm:$0xff]
    %v2399 = vld [vmem:[%s11 + $0x110] sm:$0xf]
    %v2400 = vld [vmem:[%s11 + $0x114] sm:$0xff]
    %v2401 = vld [vmem:[%s11 + $0x11c] sm:$0xf]
    %v2402 = vld [vmem:[%s11 + $0x120] sm:$0xff]
    %v2403 = vld [vmem:[%s11 + $0x128] sm:$0xf]
    %v2404 = vld [vmem:[%s11 + $0x12c] sm:$0xff]
    %v2405 = vld [vmem:[%s11 + $0x134] sm:$0xf]
    %v2406 = vld [vmem:[%s11 + $0x138] sm:$0xff]
    %v2407 = vld [vmem:[%s11 + $0x140] sm:$0xf]
    %v2408 = vld [vmem:[%s11 + $0x144] sm:$0xff]
    %v2409 = vld [vmem:[%s11 + $0x14c] sm:$0xf]
    %v2410 = vld [vmem:[%s11 + $0x150] sm:$0xff]
    %v2411 = vld [vmem:[%s11 + $0x158] sm:$0xf]
    %v2412 = vld [vmem:[%s11 + $0x15c] sm:$0xff]
    %v2413 = vld [vmem:[%s11 + $0x164] sm:$0xf]
    %v2414 = vld [vmem:[%s11 + $0x168] sm:$0xff]
    %v2415 = vld [vmem:[%s11 + $0x170] sm:$0xf]
    %v2416 = vld [vmem:[%s11 + $0x174] sm:$0xff]
    %v2417 = vld [vmem:[%s11 + $0x17c] sm:$0xf]
    %v2418 = vld [vmem:[%s11 + $0x180] sm:$0xff]
    %v2419 = vld [vmem:[%s11 + $0x188] sm:$0xf]
    %v2420 = vld [vmem:[%s11 + $0x18c] sm:$0xff]
    %v2421 = vld [vmem:[%s11 + $0x194] sm:$0xf]
    %v2422 = vld [vmem:[%s11 + $0x198] sm:$0xff]
    %v2423 = vld [vmem:[%s11 + $0x1a0] sm:$0xf]
    %v2424 = vld [vmem:[%s11 + $0x1a4] sm:$0xff]
    %v2425 = vld [vmem:[%s11 + $0x1ac] sm:$0xf]
    %v2426 = vld [vmem:[%s11 + $0x1b0] sm:$0xff]
    %v2427 = vld [vmem:[%s11 + $0x1b8] sm:$0xf]
    %v2428 = vld [vmem:[%s11 + $0x1bc] sm:$0xff]
    %v2429 = vld [vmem:[%s11 + $0x1c4] sm:$0xf]
    %v2430 = vld [vmem:[%s11 + $0x1c8] sm:$0xff]
    %v2431 = vld [vmem:[%s11 + $0x1d0] sm:$0xf]
    %v2432 = vld [vmem:[%s11 + $0x1d4] sm:$0xff]
    %v2433 = vld [vmem:[%s11 + $0x1dc] sm:$0xf]
    %v2434 = vld [vmem:[%s11 + $0x1e0] sm:$0xff]
    %v2435 = vld [vmem:[%s11 + $0x1e8] sm:$0xf]
    %v2436 = vld [vmem:[%s11 + $0x1ec] sm:$0xff]
    %v2437 = vld [vmem:[%s11 + $0x1f4] sm:$0xf]
    %v2438 = vld [vmem:[%s11 + $0x1f8] sm:$0xff]
    %v2439 = vld [vmem:[%s11 + $0x200] sm:$0xf]
    %v2440 = vld [vmem:[%s11 + $0x204] sm:$0xff]
    %v2441 = vld [vmem:[%s11 + $0x20c] sm:$0xf]
    %v2442 = vld [vmem:[%s11 + $0x210] sm:$0xff]
    %v2443 = vld [vmem:[%s11 + $0x218] sm:$0xf]
    %v2444 = vld [vmem:[%s11 + $0x21c] sm:$0xff]
    %v2445 = vld [vmem:[%s11 + $0x224] sm:$0xf]
    %v2446 = vld [vmem:[%s11 + $0x228] sm:$0xff]
    %v2447 = vld [vmem:[%s11 + $0x230] sm:$0xf]
    %v2448 = vld [vmem:[%s11 + $0x234] sm:$0xff]
    %v2449 = vld [vmem:[%s11 + $0x23c] sm:$0xf]
    %v2450 = vld [vmem:[%s11 + $0x240] sm:$0xff]
    %v2451 = vld [vmem:[%s11 + $0x248] sm:$0xf]
    %v2452 = vld [vmem:[%s11 + $0x24c] sm:$0xff]
    %v2453 = vld [vmem:[%s11 + $0x254] sm:$0xf]
    %v2454 = vld [vmem:[%s11 + $0x258] sm:$0xff]
    %v2455 = vld [vmem:[%s11 + $0x260] sm:$0xf]
    %v2456 = vld [vmem:[%s11 + $0x264] sm:$0xff]
    %v2457 = vld [vmem:[%s11 + $0x26c] sm:$0xf]
    %v2458 = vld [vmem:[%s11 + $0x270] sm:$0xff]
    %v2459 = vld [vmem:[%s11 + $0x278] sm:$0xf]
    %v2460 = vld [vmem:[%s11 + $0x27c] sm:$0xff]
    %v2461 = vld [vmem:[%s11 + $0x284] sm:$0xf]
    %v2462 = vld [vmem:[%s11 + $0x288] sm:$0xff]
    %v2463 = vld [vmem:[%s11 + $0x290] sm:$0xf]
    %v2464 = vld [vmem:[%s11 + $0x294] sm:$0xff]
    %v2465 = vld [vmem:[%s11 + $0x29c] sm:$0xf]
    %v2466 = vld [vmem:[%s11 + $0x2a0] sm:$0xff]
    %v2467 = vld [vmem:[%s11 + $0x2a8] sm:$0xf]
    %v2468 = vld [vmem:[%s11 + $0x2ac] sm:$0xff]
    %v2469 = vld [vmem:[%s11 + $0x2b4] sm:$0xf]
    %v2470 = vld [vmem:[%s11 + $0x2b8] sm:$0xff]
    %v2471 = vld [vmem:[%s11 + $0x2c0] sm:$0xf]
    %v2472 = vld [vmem:[%s11 + $0x2c4] sm:$0xff]
    %v2473 = vld [vmem:[%s11 + $0x2cc] sm:$0xf]
    %v2474 = vld [vmem:[%s11 + $0x2d0] sm:$0xff]
    %v2475 = vld [vmem:[%s11 + $0x2d8] sm:$0xf]
    %v2476 = vld [vmem:[%s11 + $0x2dc] sm:$0xff]
    %v2477 = vld [vmem:[%s11 + $0x2e4] sm:$0xf]
    %v2478 = vld [vmem:[%s11 + $0x2e8] sm:$0xff]
    %v2479 = vld [vmem:[%s11 + $0x2f0] sm:$0xf]
    %v2480 = vld [vmem:[%s11 + $0x2f4] sm:$0xff]
    %v2481 = vld [vmem:[%s11 + $0x2fc] sm:$0xf]
    %v2482 = vld [vmem:[%s11 + $0x300] sm:$0xff]
    %v2483 = vld [vmem:[%s11 + $0x308] sm:$0xf]
    %v2484 = vld [vmem:[%s11 + $0x30c] sm:$0xff]
    %v2485 = vld [vmem:[%s11 + $0x314] sm:$0xf]
    %v2486 = vld [vmem:[%s11 + $0x318] sm:$0xff]
    %v2487 = vld [vmem:[%s11 + $0x320] sm:$0xf]
    %v2488 = vld [vmem:[%s11 + $0x324] sm:$0xff]
    %v2489 = vld [vmem:[%s11 + $0x32c] sm:$0xf]
    %v2490 = vld [vmem:[%s11 + $0x330] sm:$0xff]
    %v2491 = vld [vmem:[%s11 + $0x338] sm:$0xf]
    %v2492 = vld [vmem:[%s11 + $0x33c] sm:$0xff]
    %v2493 = vld [vmem:[%s11 + $0x344] sm:$0xf]
    %v2494 = vld [vmem:[%s11 + $0x348] sm:$0xff]
    %v2495 = vld [vmem:[%s11 + $0x350] sm:$0xf]
    %v2496 = vld [vmem:[%s11 + $0x354] sm:$0xff]
    %v2497 = vld [vmem:[%s11 + $0x35c] sm:$0xf]
    %v2498 = vld [vmem:[%s11 + $0x360] sm:$0xff]
    %v2499 = vld [vmem:[%s11 + $0x368] sm:$0xf]
    %v2500 = vld [vmem:[%s11 + $0x36c] sm:$0xff]
    %v2501 = vld [vmem:[%s11 + $0x374] sm:$0xf]
    %v2502 = vld [vmem:[%s11 + $0x378] sm:$0xff]
    %v2503 = vld [vmem:[%s11 + $0x380] sm:$0xf]
    %v2504 = vld [vmem:[%s11 + $0x384] sm:$0xff]
    %v2505 = vld [vmem:[%s11 + $0x38c] sm:$0xf]
    %v2506 = vld [vmem:[%s11 + $0x390] sm:$0xff]
    %v2507 = vld [vmem:[%s11 + $0x398] sm:$0xf]
    %v2508 = vld [vmem:[%s11 + $0x39c] sm:$0xff]
    %v2509 = vld [vmem:[%s11 + $0x3a4] sm:$0xf]
    %v2510 = vld [vmem:[%s11 + $0x3a8] sm:$0xff]
    %v2511 = vld [vmem:[%s11 + $0x3b0] sm:$0xf]
    %v2512 = vld [vmem:[%s11 + $0x3b4] sm:$0xff]
    %v2513 = vld [vmem:[%s11 + $0x3bc] sm:$0xf]
    %v2514 = vld [vmem:[%s11 + $0x3c0] sm:$0xff]
    %v2515 = vld [vmem:[%s11 + $0x3c8] sm:$0xf]
    %v2516 = vld [vmem:[%s11 + $0x3cc] sm:$0xff]
    %v2517 = vld [vmem:[%s11 + $0x3d4] sm:$0xf]
    %v2518 = vld [vmem:[%s11 + $0x3d8] sm:$0xff]
    %v2519 = vld [vmem:[%s11 + $0x3e0] sm:$0xf]
    %v2520 = vld [vmem:[%s11 + $0x3e4] sm:$0xff]
    %v2521 = vld [vmem:[%s11 + $0x3ec] sm:$0xf]
    %v2522 = vld [vmem:[%s11 + $0x3f0] sm:$0xff]
    %v2523 = vld [vmem:[%s11 + $0x3f8] sm:$0xf]
    %v2524 = vld [vmem:[%s11 + $0x3fc] sm:$0xff]
    %v2525 = vld [vmem:[%s11 + $0x404] sm:$0xf]
    %v2526 = vld [vmem:[%s11 + $0x408] sm:$0xff]
    %v2527 = vld [vmem:[%s11 + $0x410] sm:$0xf]
    %v2528 = vld [vmem:[%s11 + $0x414] sm:$0xff]
    %v2529 = vld [vmem:[%s11 + $0x41c] sm:$0xf]
    %v2530 = vld [vmem:[%s11 + $0x420] sm:$0xff]
    %v2531 = vld [vmem:[%s11 + $0x428] sm:$0xf]
    %v2532 = vld [vmem:[%s11 + $0x42c] sm:$0xff]
    %v2533 = vld [vmem:[%s11 + $0x434] sm:$0xf]
    %v2534 = vld [vmem:[%s11 + $0x438] sm:$0xff]
    %v2535 = vld [vmem:[%s11 + $0x440] sm:$0xf]
    %v2536 = vld [vmem:[%s11 + $0x444] sm:$0xff]
    %v2537 = vld [vmem:[%s11 + $0x44c] sm:$0xf]
    %v2538 = vld [vmem:[%s11 + $0x450] sm:$0xff]
    %v2539 = vld [vmem:[%s11 + $0x458] sm:$0xf]
    %v2540 = vld [vmem:[%s11 + $0x45c] sm:$0xff]
    %v2541 = vld [vmem:[%s11 + $0x464] sm:$0xf]
    %v2542 = vld [vmem:[%s11 + $0x468] sm:$0xff]
    %v2543 = vld [vmem:[%s11 + $0x470] sm:$0xf]
    %v2544 = vld [vmem:[%s11 + $0x474] sm:$0xff]
    %v2545 = vld [vmem:[%s11 + $0x47c] sm:$0xf]
    %v2546 = vld [vmem:[%s11 + $0x480] sm:$0xff]
    %v2547 = vld [vmem:[%s11 + $0x488] sm:$0xf]
    %v2548 = vld [vmem:[%s11 + $0x48c] sm:$0xff]
    %v2549 = vld [vmem:[%s11 + $0x494] sm:$0xf]
    %v2550 = vld [vmem:[%s11 + $0x498] sm:$0xff]
    %v2551 = vld [vmem:[%s11 + $0x4a0] sm:$0xf]
    %v2552 = vld [vmem:[%s11 + $0x4a4] sm:$0xff]
    %v2553 = vld [vmem:[%s11 + $0x4ac] sm:$0xf]
    %v2554 = vld [vmem:[%s11 + $0x4b0] sm:$0xff]
    %v2555 = vld [vmem:[%s11 + $0x4b8] sm:$0xf]
    %v2556 = vld [vmem:[%s11 + $0x4bc] sm:$0xff]
    %v2557 = vld [vmem:[%s11 + $0x4c4] sm:$0xf]
    %v2558 = vld [vmem:[%s11 + $0x4c8] sm:$0xff]
    %v2559 = vld [vmem:[%s11 + $0x4d0] sm:$0xf]
    %v2560 = vld [vmem:[%s11 + $0x4d4] sm:$0xff]
    %v2561 = vld [vmem:[%s11 + $0x4dc] sm:$0xf]
    %v2562 = vld [vmem:[%s11 + $0x4e0] sm:$0xff]
    %v2563 = vld [vmem:[%s11 + $0x4e8] sm:$0xf]
    %v2564 = vld [vmem:[%s11 + $0x4ec] sm:$0xff]
    %v2565 = vld [vmem:[%s11 + $0x4f4] sm:$0xf]
    %v2566 = vld [vmem:[%s11 + $0x4f8] sm:$0xff]
    %v2567 = vld [vmem:[%s11 + $0x500] sm:$0xf]
    %v2568 = vld [vmem:[%s11 + $0x504] sm:$0xff]
    %v2569 = vld [vmem:[%s11 + $0x50c] sm:$0xf]
    %v2570 = vld [vmem:[%s11 + $0x510] sm:$0xff]
    %v2571 = vld [vmem:[%s11 + $0x518] sm:$0xf]
    %v2572 = vld [vmem:[%s11 + $0x51c] sm:$0xff]
    %v2573 = vld [vmem:[%s11 + $0x524] sm:$0xf]
    %v2574 = vld [vmem:[%s11 + $0x528] sm:$0xff]
    %v2575 = vld [vmem:[%s11 + $0x530] sm:$0xf]
    %v2576 = vld [vmem:[%s11 + $0x534] sm:$0xff]
    %v2577 = vld [vmem:[%s11 + $0x53c] sm:$0xf]
    %v2578 = vld [vmem:[%s11 + $0x540] sm:$0xff]
    %v2579 = vld [vmem:[%s11 + $0x548] sm:$0xf]
    %v2580 = vld [vmem:[%s11 + $0x54c] sm:$0xff]
    %v2581 = vld [vmem:[%s11 + $0x554] sm:$0xf]
    %v2582 = vld [vmem:[%s11 + $0x558] sm:$0xff]
    %v2583 = vld [vmem:[%s11 + $0x560] sm:$0xf]
    %v2584 = vld [vmem:[%s11 + $0x564] sm:$0xff]
    %v2585 = vld [vmem:[%s11 + $0x56c] sm:$0xf]
    %v2586 = vld [vmem:[%s11 + $0x570] sm:$0xff]
    %v2587 = vld [vmem:[%s11 + $0x578] sm:$0xf]
    %v2588 = vld [vmem:[%s11 + $0x57c] sm:$0xff]
    %v2589 = vld [vmem:[%s11 + $0x584] sm:$0xf]
    %v2590 = vld [vmem:[%s11 + $0x588] sm:$0xff]
    %v2591 = vld [vmem:[%s11 + $0x590] sm:$0xf]
    %v2592 = vld [vmem:[%s11 + $0x594] sm:$0xff]
    %v2593 = vld [vmem:[%s11 + $0x59c] sm:$0xf]
    %v2594 = vld [vmem:[%s11 + $0x5a0] sm:$0xff]
    %v2595 = vld [vmem:[%s11 + $0x5a8] sm:$0xf]
    %v2596 = vld [vmem:[%s11 + $0x5ac] sm:$0xff]
    %v2597 = vld [vmem:[%s11 + $0x5b4] sm:$0xf]
    %v2598 = vld [vmem:[%s11 + $0x5b8] sm:$0xff]
    %v2599 = vld [vmem:[%s11 + $0x5c0] sm:$0xf]
    %v2600 = vld [vmem:[%s11 + $0x5c4] sm:$0xff]
    %v2601 = vld [vmem:[%s11 + $0x5cc] sm:$0xf]
    %v2602 = vld [vmem:[%s11 + $0x5d0] sm:$0xff]
    %v2603 = vld [vmem:[%s11 + $0x5d8] sm:$0xf]
    %v2604 = vld [vmem:[%s11 + $0x5dc] sm:$0xff]
    %v2605 = vld [vmem:[%s11 + $0x5e4] sm:$0xf]
    %v2606 = vld [vmem:[%s11 + $0x5e8] sm:$0xff]
    %v2607 = vld [vmem:[%s11 + $0x5f0] sm:$0xf]
    %v2608 = vld [vmem:[%s11 + $0x5f4] sm:$0xff]
    %v2609 = vld [vmem:[%s11 + $0x5fc] sm:$0xf]
    %v2610 = vld [vmem:[%s11 + $0x600] sm:$0xff]
    %v2611 = vld [vmem:[%s11 + $0x608] sm:$0xf]
    %v2612 = vld [vmem:[%s11 + $0x60c] sm:$0xff]
    %v2613 = vld [vmem:[%s11 + $0x614] sm:$0xf]
    %v2614 = vld [vmem:[%s11 + $0x618] sm:$0xff]
    %v2615 = vld [vmem:[%s11 + $0x620] sm:$0xf]
    %v2616 = vld [vmem:[%s11 + $0x624] sm:$0xff]
    %v2617 = vld [vmem:[%s11 + $0x62c] sm:$0xf]
    %v2618 = vld [vmem:[%s11 + $0x630] sm:$0xff]
    %v2619 = vld [vmem:[%s11 + $0x638] sm:$0xf]
    %v2620 = vld [vmem:[%s11 + $0x63c] sm:$0xff]
    %v2621 = vld [vmem:[%s11 + $0x644] sm:$0xf]
    %v2622 = vld [vmem:[%s11 + $0x648] sm:$0xff]
    %v2623 = vld [vmem:[%s11 + $0x650] sm:$0xf]
    %v2624 = vld [vmem:[%s11 + $0x654] sm:$0xff]
    %v2625 = vld [vmem:[%s11 + $0x65c] sm:$0xf]
    %v2626 = vld [vmem:[%s11 + $0x660] sm:$0xff]
    %v2627 = vld [vmem:[%s11 + $0x668] sm:$0xf]
    %v2628 = vld [vmem:[%s11 + $0x66c] sm:$0xff]
    %v2629 = vld [vmem:[%s11 + $0x674] sm:$0xf]
    %v2630 = vld [vmem:[%s11 + $0x678] sm:$0xff]
    %v2631 = vld [vmem:[%s11 + $0x680] sm:$0xf]
    %v2632 = vld [vmem:[%s11 + $0x684] sm:$0xff]
    %v2633 = vld [vmem:[%s11 + $0x68c] sm:$0xf]
    %v2634 = vld [vmem:[%s11 + $0x690] sm:$0xff]
    %v2635 = vld [vmem:[%s11 + $0x698] sm:$0xf]
    %v2636 = vld [vmem:[%s11 + $0x69c] sm:$0xff]
    %v2637 = vld [vmem:[%s11 + $0x6a4] sm:$0xf]
    %v2638 = vld [vmem:[%s11 + $0x6a8] sm:$0xff]
    %v2639 = vld [vmem:[%s11 + $0x6b0] sm:$0xf]
    %v2640 = vld [vmem:[%s11 + $0x6b4] sm:$0xff]
    %v2641 = vld [vmem:[%s11 + $0x6bc] sm:$0xf]
    %v2642 = vld [vmem:[%s11 + $0x6c0] sm:$0x33]
    %v2643 = vld [vmem:[%s11 + $0x6c8] sm:$0x3]
    %v2934 = vunpack.c.l.b16 %v2354
    %v2935 = vunpack.c.h.b16 %v2354
    %v2936 = vunpack.c.l.b16 %v2355
    %v2937 = vunpack.c.l.b16 %v2356
    %v2938 = vunpack.c.h.b16 %v2356
    %v2939 = vunpack.c.l.b16 %v2357
    %v2940 = vunpack.c.l.b16 %v2358
    %v2941 = vunpack.c.h.b16 %v2358
    %v2942 = vunpack.c.l.b16 %v2359
    %v2943 = vunpack.c.l.b16 %v2360
    %v2944 = vunpack.c.h.b16 %v2360
    %v2945 = vunpack.c.l.b16 %v2361
    %v2946 = vunpack.c.l.b16 %v2362
    %v2947 = vunpack.c.h.b16 %v2362
    %v2948 = vunpack.c.l.b16 %v2363
    %v2949 = vunpack.c.l.b16 %v2364
    %v2950 = vunpack.c.h.b16 %v2364
    %v2951 = vunpack.c.l.b16 %v2365
    %v2952 = vunpack.c.l.b16 %v2366
    %v2953 = vunpack.c.h.b16 %v2366
    %v2954 = vunpack.c.l.b16 %v2367
    %v2955 = vunpack.c.l.b16 %v2368
    %v2956 = vunpack.c.h.b16 %v2368
    %v2957 = vunpack.c.l.b16 %v2369
    %v2958 = vunpack.c.l.b16 %v2370
    %v2959 = vunpack.c.h.b16 %v2370
    %v2960 = vunpack.c.l.b16 %v2371
    %v2961 = vunpack.c.l.b16 %v2372
    %v2962 = vunpack.c.h.b16 %v2372
    %v2963 = vunpack.c.l.b16 %v2373
    %v2964 = vunpack.c.l.b16 %v2374
    %v2965 = vunpack.c.h.b16 %v2374
    %v2966 = vunpack.c.l.b16 %v2375
    %v2967 = vunpack.c.l.b16 %v2376
    %v2968 = vunpack.c.h.b16 %v2376
    %v2969 = vunpack.c.l.b16 %v2377
    %v2970 = vunpack.c.l.b16 %v2378
    %v2971 = vunpack.c.h.b16 %v2378
    %v2972 = vunpack.c.l.b16 %v2379
    %v2973 = vunpack.c.l.b16 %v2380
    %v2974 = vunpack.c.h.b16 %v2380
    %v2975 = vunpack.c.l.b16 %v2381
    %v2976 = vunpack.c.l.b16 %v2382
    %v2977 = vunpack.c.h.b16 %v2382
    %v2978 = vunpack.c.l.b16 %v2383
    %v2979 = vunpack.c.l.b16 %v2384
    %v2980 = vunpack.c.h.b16 %v2384
    %v2981 = vunpack.c.l.b16 %v2385
    %v2982 = vunpack.c.l.b16 %v2386
    %v2983 = vunpack.c.h.b16 %v2386
    %v2984 = vunpack.c.l.b16 %v2387
    %v2985 = vunpack.c.l.b16 %v2388
    %v2986 = vunpack.c.h.b16 %v2388
    %v2987 = vunpack.c.l.b16 %v2389
    %v2988 = vunpack.c.l.b16 %v2390
    %v2989 = vunpack.c.h.b16 %v2390
    %v2990 = vunpack.c.l.b16 %v2391
    %v2991 = vunpack.c.l.b16 %v2392
    %v2992 = vunpack.c.h.b16 %v2392
    %v2993 = vunpack.c.l.b16 %v2393
    %v2994 = vunpack.c.l.b16 %v2394
    %v2995 = vunpack.c.h.b16 %v2394
    %v2996 = vunpack.c.l.b16 %v2395
    %v2997 = vunpack.c.l.b16 %v2396
    %v2998 = vunpack.c.h.b16 %v2396
    %v2999 = vunpack.c.l.b16 %v2397
    %v3000 = vunpack.c.l.b16 %v2398
    %v3001 = vunpack.c.h.b16 %v2398
    %v3002 = vunpack.c.l.b16 %v2399
    %v3003 = vunpack.c.l.b16 %v2400
    %v3004 = vunpack.c.h.b16 %v2400
    %v3005 = vunpack.c.l.b16 %v2401
    %v3006 = vunpack.c.l.b16 %v2402
    %v3007 = vunpack.c.h.b16 %v2402
    %v3008 = vunpack.c.l.b16 %v2403
    %v3009 = vunpack.c.l.b16 %v2404
    %v3010 = vunpack.c.h.b16 %v2404
    %v3011 = vunpack.c.l.b16 %v2405
    %v3012 = vunpack.c.l.b16 %v2406
    %v3013 = vunpack.c.h.b16 %v2406
    %v3014 = vunpack.c.l.b16 %v2407
    %v3015 = vunpack.c.l.b16 %v2408
    %v3016 = vunpack.c.h.b16 %v2408
    %v3017 = vunpack.c.l.b16 %v2409
    %v3018 = vunpack.c.l.b16 %v2410
    %v3019 = vunpack.c.h.b16 %v2410
    %v3020 = vunpack.c.l.b16 %v2411
    %v3021 = vunpack.c.l.b16 %v2412
    %v3022 = vunpack.c.h.b16 %v2412
    %v3023 = vunpack.c.l.b16 %v2413
    %v3024 = vunpack.c.l.b16 %v2414
    %v3025 = vunpack.c.h.b16 %v2414
    %v3026 = vunpack.c.l.b16 %v2415
    %v3027 = vunpack.c.l.b16 %v2416
    %v3028 = vunpack.c.h.b16 %v2416
    %v3029 = vunpack.c.l.b16 %v2417
    %v3030 = vunpack.c.l.b16 %v2418
    %v3031 = vunpack.c.h.b16 %v2418
    %v3032 = vunpack.c.l.b16 %v2419
    %v3033 = vunpack.c.l.b16 %v2420
    %v3034 = vunpack.c.h.b16 %v2420
    %v3035 = vunpack.c.l.b16 %v2421
    %v3036 = vunpack.c.l.b16 %v2422
    %v3037 = vunpack.c.h.b16 %v2422
    %v3038 = vunpack.c.l.b16 %v2423
    %v3039 = vunpack.c.l.b16 %v2424
    %v3040 = vunpack.c.h.b16 %v2424
    %v3041 = vunpack.c.l.b16 %v2425
    %v3042 = vunpack.c.l.b16 %v2426
    %v3043 = vunpack.c.h.b16 %v2426
    %v3044 = vunpack.c.l.b16 %v2427
    %v3045 = vunpack.c.l.b16 %v2428
    %v3046 = vunpack.c.h.b16 %v2428
    %v3047 = vunpack.c.l.b16 %v2429
    %v3048 = vunpack.c.l.b16 %v2430
    %v3049 = vunpack.c.h.b16 %v2430
    %v3050 = vunpack.c.l.b16 %v2431
    %v3051 = vunpack.c.l.b16 %v2432
    %v3052 = vunpack.c.h.b16 %v2432
    %v3053 = vunpack.c.l.b16 %v2433
    %v3054 = vunpack.c.l.b16 %v2434
    %v3055 = vunpack.c.h.b16 %v2434
    %v3056 = vunpack.c.l.b16 %v2435
    %v3057 = vunpack.c.l.b16 %v2436
    %v3058 = vunpack.c.h.b16 %v2436
    %v3059 = vunpack.c.l.b16 %v2437
    %v3060 = vunpack.c.l.b16 %v2438
    %v3061 = vunpack.c.h.b16 %v2438
    %v3062 = vunpack.c.l.b16 %v2439
    %v3063 = vunpack.c.l.b16 %v2440
    %v3064 = vunpack.c.h.b16 %v2440
    %v3065 = vunpack.c.l.b16 %v2441
    %v3066 = vunpack.c.l.b16 %v2442
    %v3067 = vunpack.c.h.b16 %v2442
    %v3068 = vunpack.c.l.b16 %v2443
    %v3069 = vunpack.c.l.b16 %v2444
    %v3070 = vunpack.c.h.b16 %v2444
    %v3071 = vunpack.c.l.b16 %v2445
    %v3072 = vunpack.c.l.b16 %v2446
    %v3073 = vunpack.c.h.b16 %v2446
    %v3074 = vunpack.c.l.b16 %v2447
    %v3075 = vunpack.c.l.b16 %v2448
    %v3076 = vunpack.c.h.b16 %v2448
    %v3077 = vunpack.c.l.b16 %v2449
    %v3078 = vunpack.c.l.b16 %v2450
    %v3079 = vunpack.c.h.b16 %v2450
    %v3080 = vunpack.c.l.b16 %v2451
    %v3081 = vunpack.c.l.b16 %v2452
    %v3082 = vunpack.c.h.b16 %v2452
    %v3083 = vunpack.c.l.b16 %v2453
    %v3084 = vunpack.c.l.b16 %v2454
    %v3085 = vunpack.c.h.b16 %v2454
    %v3086 = vunpack.c.l.b16 %v2455
    %v3087 = vunpack.c.l.b16 %v2456
    %v3088 = vunpack.c.h.b16 %v2456
    %v3089 = vunpack.c.l.b16 %v2457
    %v3090 = vunpack.c.l.b16 %v2458
    %v3091 = vunpack.c.h.b16 %v2458
    %v3092 = vunpack.c.l.b16 %v2459
    %v3093 = vunpack.c.l.b16 %v2460
    %v3094 = vunpack.c.h.b16 %v2460
    %v3095 = vunpack.c.l.b16 %v2461
    %v3096 = vunpack.c.l.b16 %v2462
    %v3097 = vunpack.c.h.b16 %v2462
    %v3098 = vunpack.c.l.b16 %v2463
    %v3099 = vunpack.c.l.b16 %v2464
    %v3100 = vunpack.c.h.b16 %v2464
    %v3101 = vunpack.c.l.b16 %v2465
    %v3102 = vunpack.c.l.b16 %v2466
    %v3103 = vunpack.c.h.b16 %v2466
    %v3104 = vunpack.c.l.b16 %v2467
    %v3105 = vunpack.c.l.b16 %v2468
    %v3106 = vunpack.c.h.b16 %v2468
    %v3107 = vunpack.c.l.b16 %v2469
    %v3108 = vunpack.c.l.b16 %v2470
    %v3109 = vunpack.c.h.b16 %v2470
    %v3110 = vunpack.c.l.b16 %v2471
    %v3111 = vunpack.c.l.b16 %v2472
    %v3112 = vunpack.c.h.b16 %v2472
    %v3113 = vunpack.c.l.b16 %v2473
    %v3114 = vunpack.c.l.b16 %v2474
    %v3115 = vunpack.c.h.b16 %v2474
    %v3116 = vunpack.c.l.b16 %v2475
    %v3117 = vunpack.c.l.b16 %v2476
    %v3118 = vunpack.c.h.b16 %v2476
    %v3119 = vunpack.c.l.b16 %v2477
    %v3120 = vunpack.c.l.b16 %v2478
    %v3121 = vunpack.c.h.b16 %v2478
    %v3122 = vunpack.c.l.b16 %v2479
    %v3123 = vunpack.c.l.b16 %v2480
    %v3124 = vunpack.c.h.b16 %v2480
    %v3125 = vunpack.c.l.b16 %v2481
    %v3126 = vunpack.c.l.b16 %v2482
    %v3127 = vunpack.c.h.b16 %v2482
    %v3128 = vunpack.c.l.b16 %v2483
    %v3129 = vunpack.c.l.b16 %v2484
    %v3130 = vunpack.c.h.b16 %v2484
    %v3131 = vunpack.c.l.b16 %v2485
    %v3132 = vunpack.c.l.b16 %v2486
    %v3133 = vunpack.c.h.b16 %v2486
    %v3134 = vunpack.c.l.b16 %v2487
    %v3135 = vunpack.c.l.b16 %v2488
    %v3136 = vunpack.c.h.b16 %v2488
    %v3137 = vunpack.c.l.b16 %v2489
    %v3138 = vunpack.c.l.b16 %v2490
    %v3139 = vunpack.c.h.b16 %v2490
    %v3140 = vunpack.c.l.b16 %v2491
    %v3141 = vunpack.c.l.b16 %v2492
    %v3142 = vunpack.c.h.b16 %v2492
    %v3143 = vunpack.c.l.b16 %v2493
    %v3144 = vunpack.c.l.b16 %v2494
    %v3145 = vunpack.c.h.b16 %v2494
    %v3146 = vunpack.c.l.b16 %v2495
    %v3147 = vunpack.c.l.b16 %v2496
    %v3148 = vunpack.c.h.b16 %v2496
    %v3149 = vunpack.c.l.b16 %v2497
    %v3150 = vunpack.c.l.b16 %v2498
    %v3151 = vunpack.c.h.b16 %v2498
    %v3152 = vunpack.c.l.b16 %v2499
    %v3153 = vunpack.c.l.b16 %v2500
    %v3154 = vunpack.c.h.b16 %v2500
    %v3155 = vunpack.c.l.b16 %v2501
    %v3156 = vunpack.c.l.b16 %v2502
    %v3157 = vunpack.c.h.b16 %v2502
    %v3158 = vunpack.c.l.b16 %v2503
    %v3159 = vunpack.c.l.b16 %v2504
    %v3160 = vunpack.c.h.b16 %v2504
    %v3161 = vunpack.c.l.b16 %v2505
    %v3162 = vunpack.c.l.b16 %v2506
    %v3163 = vunpack.c.h.b16 %v2506
    %v3164 = vunpack.c.l.b16 %v2507
    %v3165 = vunpack.c.l.b16 %v2508
    %v3166 = vunpack.c.h.b16 %v2508
    %v3167 = vunpack.c.l.b16 %v2509
    %v3168 = vunpack.c.l.b16 %v2510
    %v3169 = vunpack.c.h.b16 %v2510
    %v3170 = vunpack.c.l.b16 %v2511
    %v3171 = vunpack.c.l.b16 %v2512
    %v3172 = vunpack.c.h.b16 %v2512
    %v3173 = vunpack.c.l.b16 %v2513
    %v3174 = vunpack.c.l.b16 %v2514
    %v3175 = vunpack.c.h.b16 %v2514
    %v3176 = vunpack.c.l.b16 %v2515
    %v3177 = vunpack.c.l.b16 %v2516
    %v3178 = vunpack.c.h.b16 %v2516
    %v3179 = vunpack.c.l.b16 %v2517
    %v3180 = vunpack.c.l.b16 %v2518
    %v3181 = vunpack.c.h.b16 %v2518
    %v3182 = vunpack.c.l.b16 %v2519
    %v3183 = vunpack.c.l.b16 %v2520
    %v3184 = vunpack.c.h.b16 %v2520
    %v3185 = vunpack.c.l.b16 %v2521
    %v3186 = vunpack.c.l.b16 %v2522
    %v3187 = vunpack.c.h.b16 %v2522
    %v3188 = vunpack.c.l.b16 %v2523
    %v3189 = vunpack.c.l.b16 %v2524
    %v3190 = vunpack.c.h.b16 %v2524
    %v3191 = vunpack.c.l.b16 %v2525
    %v3192 = vunpack.c.l.b16 %v2526
    %v3193 = vunpack.c.h.b16 %v2526
    %v3194 = vunpack.c.l.b16 %v2527
    %v3195 = vunpack.c.l.b16 %v2528
    %v3196 = vunpack.c.h.b16 %v2528
    %v3197 = vunpack.c.l.b16 %v2529
    %v3198 = vunpack.c.l.b16 %v2530
    %v3199 = vunpack.c.h.b16 %v2530
    %v3200 = vunpack.c.l.b16 %v2531
    %v3201 = vunpack.c.l.b16 %v2532
    %v3202 = vunpack.c.h.b16 %v2532
    %v3203 = vunpack.c.l.b16 %v2533
    %v3204 = vunpack.c.l.b16 %v2534
    %v3205 = vunpack.c.h.b16 %v2534
    %v3206 = vunpack.c.l.b16 %v2535
    %v3207 = vunpack.c.l.b16 %v2536
    %v3208 = vunpack.c.h.b16 %v2536
    %v3209 = vunpack.c.l.b16 %v2537
    %v3210 = vunpack.c.l.b16 %v2538
    %v3211 = vunpack.c.h.b16 %v2538
    %v3212 = vunpack.c.l.b16 %v2539
    %v3213 = vunpack.c.l.b16 %v2540
    %v3214 = vunpack.c.h.b16 %v2540
    %v3215 = vunpack.c.l.b16 %v2541
    %v3216 = vunpack.c.l.b16 %v2542
    %v3217 = vunpack.c.h.b16 %v2542
    %v3218 = vunpack.c.l.b16 %v2543
    %v3219 = vunpack.c.l.b16 %v2544
    %v3220 = vunpack.c.h.b16 %v2544
    %v3221 = vunpack.c.l.b16 %v2545
    %v3222 = vunpack.c.l.b16 %v2546
    %v3223 = vunpack.c.h.b16 %v2546
    %v3224 = vunpack.c.l.b16 %v2547
    %v3225 = vunpack.c.l.b16 %v2548
    %v3226 = vunpack.c.h.b16 %v2548
    %v3227 = vunpack.c.l.b16 %v2549
    %v3228 = vunpack.c.l.b16 %v2550
    %v3229 = vunpack.c.h.b16 %v2550
    %v3230 = vunpack.c.l.b16 %v2551
    %v3231 = vunpack.c.l.b16 %v2552
    %v3232 = vunpack.c.h.b16 %v2552
    %v3233 = vunpack.c.l.b16 %v2553
    %v3234 = vunpack.c.l.b16 %v2554
    %v3235 = vunpack.c.h.b16 %v2554
    %v3236 = vunpack.c.l.b16 %v2555
    %v3237 = vunpack.c.l.b16 %v2556
    %v3238 = vunpack.c.h.b16 %v2556
    %v3239 = vunpack.c.l.b16 %v2557
    %v3240 = vunpack.c.l.b16 %v2558
    %v3241 = vunpack.c.h.b16 %v2558
    %v3242 = vunpack.c.l.b16 %v2559
    %v3243 = vunpack.c.l.b16 %v2560
    %v3244 = vunpack.c.h.b16 %v2560
    %v3245 = vunpack.c.l.b16 %v2561
    %v3246 = vunpack.c.l.b16 %v2562
    %v3247 = vunpack.c.h.b16 %v2562
    %v3248 = vunpack.c.l.b16 %v2563
    %v3249 = vunpack.c.l.b16 %v2564
    %v3250 = vunpack.c.h.b16 %v2564
    %v3251 = vunpack.c.l.b16 %v2565
    %v3252 = vunpack.c.l.b16 %v2566
    %v3253 = vunpack.c.h.b16 %v2566
    %v3254 = vunpack.c.l.b16 %v2567
    %v3255 = vunpack.c.l.b16 %v2568
    %v3256 = vunpack.c.h.b16 %v2568
    %v3257 = vunpack.c.l.b16 %v2569
    %v3258 = vunpack.c.l.b16 %v2570
    %v3259 = vunpack.c.h.b16 %v2570
    %v3260 = vunpack.c.l.b16 %v2571
    %v3261 = vunpack.c.l.b16 %v2572
    %v3262 = vunpack.c.h.b16 %v2572
    %v3263 = vunpack.c.l.b16 %v2573
    %v3264 = vunpack.c.l.b16 %v2574
    %v3265 = vunpack.c.h.b16 %v2574
    %v3266 = vunpack.c.l.b16 %v2575
    %v3267 = vunpack.c.l.b16 %v2576
    %v3268 = vunpack.c.h.b16 %v2576
    %v3269 = vunpack.c.l.b16 %v2577
    %v3270 = vunpack.c.l.b16 %v2578
    %v3271 = vunpack.c.h.b16 %v2578
    %v3272 = vunpack.c.l.b16 %v2579
    %v3273 = vunpack.c.l.b16 %v2580
    %v3274 = vunpack.c.h.b16 %v2580
    %v3275 = vunpack.c.l.b16 %v2581
    %v3276 = vunpack.c.l.b16 %v2582
    %v3277 = vunpack.c.h.b16 %v2582
    %v3278 = vunpack.c.l.b16 %v2583
    %v3279 = vunpack.c.l.b16 %v2584
    %v3280 = vunpack.c.h.b16 %v2584
    %v3281 = vunpack.c.l.b16 %v2585
    %v3282 = vunpack.c.l.b16 %v2586
    %v3283 = vunpack.c.h.b16 %v2586
    %v3284 = vunpack.c.l.b16 %v2587
    %v3285 = vunpack.c.l.b16 %v2588
    %v3286 = vunpack.c.h.b16 %v2588
    %v3287 = vunpack.c.l.b16 %v2589
    %v3288 = vunpack.c.l.b16 %v2590
    %v3289 = vunpack.c.h.b16 %v2590
    %v3290 = vunpack.c.l.b16 %v2591
    %v3291 = vunpack.c.l.b16 %v2592
    %v3292 = vunpack.c.h.b16 %v2592
    %v3293 = vunpack.c.l.b16 %v2593
    %v3294 = vunpack.c.l.b16 %v2594
    %v3295 = vunpack.c.h.b16 %v2594
    %v3296 = vunpack.c.l.b16 %v2595
    %v3297 = vunpack.c.l.b16 %v2596
    %v3298 = vunpack.c.h.b16 %v2596
    %v3299 = vunpack.c.l.b16 %v2597
    %v3300 = vunpack.c.l.b16 %v2598
    %v3301 = vunpack.c.h.b16 %v2598
    %v3302 = vunpack.c.l.b16 %v2599
    %v3303 = vunpack.c.l.b16 %v2600
    %v3304 = vunpack.c.h.b16 %v2600
    %v3305 = vunpack.c.l.b16 %v2601
    %v3306 = vunpack.c.l.b16 %v2602
    %v3307 = vunpack.c.h.b16 %v2602
    %v3308 = vunpack.c.l.b16 %v2603
    %v3309 = vunpack.c.l.b16 %v2604
    %v3310 = vunpack.c.h.b16 %v2604
    %v3311 = vunpack.c.l.b16 %v2605
    %v3312 = vunpack.c.l.b16 %v2606
    %v3313 = vunpack.c.h.b16 %v2606
    %v3314 = vunpack.c.l.b16 %v2607
    %v3315 = vunpack.c.l.b16 %v2608
    %v3316 = vunpack.c.h.b16 %v2608
    %v3317 = vunpack.c.l.b16 %v2609
    %v3318 = vunpack.c.l.b16 %v2610
    %v3319 = vunpack.c.h.b16 %v2610
    %v3320 = vunpack.c.l.b16 %v2611
    %v3321 = vunpack.c.l.b16 %v2612
    %v3322 = vunpack.c.h.b16 %v2612
    %v3323 = vunpack.c.l.b16 %v2613
    %v3324 = vunpack.c.l.b16 %v2614
    %v3325 = vunpack.c.h.b16 %v2614
    %v3326 = vunpack.c.l.b16 %v2615
    %v3327 = vunpack.c.l.b16 %v2616
    %v3328 = vunpack.c.h.b16 %v2616
    %v3329 = vunpack.c.l.b16 %v2617
    %v3330 = vunpack.c.l.b16 %v2618
    %v3331 = vunpack.c.h.b16 %v2618
    %v3332 = vunpack.c.l.b16 %v2619
    %v3333 = vunpack.c.l.b16 %v2620
    %v3334 = vunpack.c.h.b16 %v2620
    %v3335 = vunpack.c.l.b16 %v2621
    %v3336 = vunpack.c.l.b16 %v2622
    %v3337 = vunpack.c.h.b16 %v2622
    %v3338 = vunpack.c.l.b16 %v2623
    %v3339 = vunpack.c.l.b16 %v2624
    %v3340 = vunpack.c.h.b16 %v2624
    %v3341 = vunpack.c.l.b16 %v2625
    %v3342 = vunpack.c.l.b16 %v2626
    %v3343 = vunpack.c.h.b16 %v2626
    %v3344 = vunpack.c.l.b16 %v2627
    %v3345 = vunpack.c.l.b16 %v2628
    %v3346 = vunpack.c.h.b16 %v2628
    %v3347 = vunpack.c.l.b16 %v2629
    %v3348 = vunpack.c.l.b16 %v2630
    %v3349 = vunpack.c.h.b16 %v2630
    %v3350 = vunpack.c.l.b16 %v2631
    %v3351 = vunpack.c.l.b16 %v2632
    %v3352 = vunpack.c.h.b16 %v2632
    %v3353 = vunpack.c.l.b16 %v2633
    %v3354 = vunpack.c.l.b16 %v2634
    %v3355 = vunpack.c.h.b16 %v2634
    %v3356 = vunpack.c.l.b16 %v2635
    %v3357 = vunpack.c.l.b16 %v2636
    %v3358 = vunpack.c.h.b16 %v2636
    %v3359 = vunpack.c.l.b16 %v2637
    %v3360 = vunpack.c.l.b16 %v2638
    %v3361 = vunpack.c.h.b16 %v2638
    %v3362 = vunpack.c.l.b16 %v2639
    %v3363 = vunpack.c.l.b16 %v2640
    %v3364 = vunpack.c.h.b16 %v2640
    %v3365 = vunpack.c.l.b16 %v2641
    %v3366 = vunpack.c.l.b16 %v2642
    %v3367 = vunpack.c.h.b16 %v2642
    %v3368 = vunpack.c.l.b16 %v2643
    %v3369 = vpack.c.b16 %v2937, %v2934
    %v3370 = vpack.c.b16 %v2938, %v2935
    %v3371 = vpack.c.b16 %v2939, %v2936
    %v3372 = vpack.c.b16 %v2943, %v2940
    %v3373 = vpack.c.b16 %v2944, %v2941
    %v3374 = vpack.c.b16 %v2945, %v2942
    %v3375 = vpack.c.b16 %v2949, %v2946
    %v3376 = vpack.c.b16 %v2950, %v2947
    %v3377 = vpack.c.b16 %v2951, %v2948
    %v3378 = vpack.c.b16 %v2955, %v2952
    %v3379 = vpack.c.b16 %v2956, %v2953
    %v3380 = vpack.c.b16 %v2957, %v2954
    %v3381 = vpack.c.b16 %v2961, %v2958
    %v3382 = vpack.c.b16 %v2962, %v2959
    %v3383 = vpack.c.b16 %v2963, %v2960
    %v3384 = vpack.c.b16 %v2967, %v2964
    %v3385 = vpack.c.b16 %v2968, %v2965
    %v3386 = vpack.c.b16 %v2969, %v2966
    %v3387 = vpack.c.b16 %v2973, %v2970
    %v3388 = vpack.c.b16 %v2974, %v2971
    %v3389 = vpack.c.b16 %v2975, %v2972
    %v3390 = vpack.c.b16 %v2979, %v2976
    %v3391 = vpack.c.b16 %v2980, %v2977
    %v3392 = vpack.c.b16 %v2981, %v2978
    %v3393 = vpack.c.b16 %v2985, %v2982
    %v3394 = vpack.c.b16 %v2986, %v2983
    %v3395 = vpack.c.b16 %v2987, %v2984
    %v3396 = vpack.c.b16 %v2991, %v2988
    %v3397 = vpack.c.b16 %v2992, %v2989
    %v3398 = vpack.c.b16 %v2993, %v2990
    %v3399 = vpack.c.b16 %v2997, %v2994
    %v3400 = vpack.c.b16 %v2998, %v2995
    %v3401 = vpack.c.b16 %v2999, %v2996
    %v3402 = vpack.c.b16 %v3003, %v3000
    %v3403 = vpack.c.b16 %v3004, %v3001
    %v3404 = vpack.c.b16 %v3005, %v3002
    %v3405 = vpack.c.b16 %v3009, %v3006
    %v3406 = vpack.c.b16 %v3010, %v3007
    %v3407 = vpack.c.b16 %v3011, %v3008
    %v3408 = vpack.c.b16 %v3015, %v3012
    %v3409 = vpack.c.b16 %v3016, %v3013
    %v3410 = vpack.c.b16 %v3017, %v3014
    %v3411 = vpack.c.b16 %v3021, %v3018
    %v3412 = vpack.c.b16 %v3022, %v3019
    %v3413 = vpack.c.b16 %v3023, %v3020
    %v3414 = vpack.c.b16 %v3027, %v3024
    %v3415 = vpack.c.b16 %v3028, %v3025
    %v3416 = vpack.c.b16 %v3029, %v3026
    %v3417 = vpack.c.b16 %v3033, %v3030
    %v3418 = vpack.c.b16 %v3034, %v3031
    %v3419 = vpack.c.b16 %v3035, %v3032
    %v3420 = vpack.c.b16 %v3039, %v3036
    %v3421 = vpack.c.b16 %v3040, %v3037
    %v3422 = vpack.c.b16 %v3041, %v3038
    %v3423 = vpack.c.b16 %v3045, %v3042
    %v3424 = vpack.c.b16 %v3046, %v3043
    %v3425 = vpack.c.b16 %v3047, %v3044
    %v3426 = vpack.c.b16 %v3051, %v3048
    %v3427 = vpack.c.b16 %v3052, %v3049
    %v3428 = vpack.c.b16 %v3053, %v3050
    %v3429 = vpack.c.b16 %v3057, %v3054
    %v3430 = vpack.c.b16 %v3058, %v3055
    %v3431 = vpack.c.b16 %v3059, %v3056
    %v3432 = vpack.c.b16 %v3063, %v3060
    %v3433 = vpack.c.b16 %v3064, %v3061
    %v3434 = vpack.c.b16 %v3065, %v3062
    %v3435 = vpack.c.b16 %v3069, %v3066
    %v3436 = vpack.c.b16 %v3070, %v3067
    %v3437 = vpack.c.b16 %v3071, %v3068
    %v3438 = vpack.c.b16 %v3075, %v3072
    %v3439 = vpack.c.b16 %v3076, %v3073
    %v3440 = vpack.c.b16 %v3077, %v3074
    %v3441 = vpack.c.b16 %v3081, %v3078
    %v3442 = vpack.c.b16 %v3082, %v3079
    %v3443 = vpack.c.b16 %v3083, %v3080
    %v3444 = vpack.c.b16 %v3087, %v3084
    %v3445 = vpack.c.b16 %v3088, %v3085
    %v3446 = vpack.c.b16 %v3089, %v3086
    %v3447 = vpack.c.b16 %v3093, %v3090
    %v3448 = vpack.c.b16 %v3094, %v3091
    %v3449 = vpack.c.b16 %v3095, %v3092
    %v3450 = vpack.c.b16 %v3099, %v3096
    %v3451 = vpack.c.b16 %v3100, %v3097
    %v3452 = vpack.c.b16 %v3101, %v3098
    %v3453 = vpack.c.b16 %v3105, %v3102
    %v3454 = vpack.c.b16 %v3106, %v3103
    %v3455 = vpack.c.b16 %v3107, %v3104
    %v3456 = vpack.c.b16 %v3111, %v3108
    %v3457 = vpack.c.b16 %v3112, %v3109
    %v3458 = vpack.c.b16 %v3113, %v3110
    %v3459 = vpack.c.b16 %v3117, %v3114
    %v3460 = vpack.c.b16 %v3118, %v3115
    %v3461 = vpack.c.b16 %v3119, %v3116
    %v3462 = vpack.c.b16 %v3123, %v3120
    %v3463 = vpack.c.b16 %v3124, %v3121
    %v3464 = vpack.c.b16 %v3125, %v3122
    %v3465 = vpack.c.b16 %v3129, %v3126
    %v3466 = vpack.c.b16 %v3130, %v3127
    %v3467 = vpack.c.b16 %v3131, %v3128
    %v3468 = vpack.c.b16 %v3135, %v3132
    %v3469 = vpack.c.b16 %v3136, %v3133
    %v3470 = vpack.c.b16 %v3137, %v3134
    %v3471 = vpack.c.b16 %v3141, %v3138
    %v3472 = vpack.c.b16 %v3142, %v3139
    %v3473 = vpack.c.b16 %v3143, %v3140
    %v3474 = vpack.c.b16 %v3147, %v3144
    %v3475 = vpack.c.b16 %v3148, %v3145
    %v3476 = vpack.c.b16 %v3149, %v3146
    %v3477 = vpack.c.b16 %v3153, %v3150
    %v3478 = vpack.c.b16 %v3154, %v3151
    %v3479 = vpack.c.b16 %v3155, %v3152
    %v3480 = vpack.c.b16 %v3159, %v3156
    %v3481 = vpack.c.b16 %v3160, %v3157
    %v3482 = vpack.c.b16 %v3161, %v3158
    %v3483 = vpack.c.b16 %v3165, %v3162
    %v3484 = vpack.c.b16 %v3166, %v3163
    %v3485 = vpack.c.b16 %v3167, %v3164
    %v3486 = vpack.c.b16 %v3171, %v3168
    %v3487 = vpack.c.b16 %v3172, %v3169
    %v3488 = vpack.c.b16 %v3173, %v3170
    %v3489 = vpack.c.b16 %v3177, %v3174
    %v3490 = vpack.c.b16 %v3178, %v3175
    %v3491 = vpack.c.b16 %v3179, %v3176
    %v3492 = vpack.c.b16 %v3183, %v3180
    %v3493 = vpack.c.b16 %v3184, %v3181
    %v3494 = vpack.c.b16 %v3185, %v3182
    %v3495 = vpack.c.b16 %v3189, %v3186
    %v3496 = vpack.c.b16 %v3190, %v3187
    %v3497 = vpack.c.b16 %v3191, %v3188
    %v3498 = vpack.c.b16 %v3195, %v3192
    %v3499 = vpack.c.b16 %v3196, %v3193
    %v3500 = vpack.c.b16 %v3197, %v3194
    %v3501 = vpack.c.b16 %v3201, %v3198
    %v3502 = vpack.c.b16 %v3202, %v3199
    %v3503 = vpack.c.b16 %v3203, %v3200
    %v3504 = vpack.c.b16 %v3207, %v3204
    %v3505 = vpack.c.b16 %v3208, %v3205
    %v3506 = vpack.c.b16 %v3209, %v3206
    %v3507 = vpack.c.b16 %v3213, %v3210
    %v3508 = vpack.c.b16 %v3214, %v3211
    %v3509 = vpack.c.b16 %v3215, %v3212
    %v3510 = vpack.c.b16 %v3219, %v3216
    %v3511 = vpack.c.b16 %v3220, %v3217
    %v3512 = vpack.c.b16 %v3221, %v3218
    %v3513 = vpack.c.b16 %v3225, %v3222
    %v3514 = vpack.c.b16 %v3226, %v3223
    %v3515 = vpack.c.b16 %v3227, %v3224
    %v3516 = vpack.c.b16 %v3231, %v3228
    %v3517 = vpack.c.b16 %v3232, %v3229
    %v3518 = vpack.c.b16 %v3233, %v3230
    %v3519 = vpack.c.b16 %v3237, %v3234
    %v3520 = vpack.c.b16 %v3238, %v3235
    %v3521 = vpack.c.b16 %v3239, %v3236
    %v3522 = vpack.c.b16 %v3243, %v3240
    %v3523 = vpack.c.b16 %v3244, %v3241
    %v3524 = vpack.c.b16 %v3245, %v3242
    %v3525 = vpack.c.b16 %v3249, %v3246
    %v3526 = vpack.c.b16 %v3250, %v3247
    %v3527 = vpack.c.b16 %v3251, %v3248
    %v3528 = vpack.c.b16 %v3255, %v3252
    %v3529 = vpack.c.b16 %v3256, %v3253
    %v3530 = vpack.c.b16 %v3257, %v3254
    %v3531 = vpack.c.b16 %v3261, %v3258
    %v3532 = vpack.c.b16 %v3262, %v3259
    %v3533 = vpack.c.b16 %v3263, %v3260
    %v3534 = vpack.c.b16 %v3267, %v3264
    %v3535 = vpack.c.b16 %v3268, %v3265
    %v3536 = vpack.c.b16 %v3269, %v3266
    %v3537 = vpack.c.b16 %v3273, %v3270
    %v3538 = vpack.c.b16 %v3274, %v3271
    %v3539 = vpack.c.b16 %v3275, %v3272
    %v3540 = vpack.c.b16 %v3279, %v3276
    %v3541 = vpack.c.b16 %v3280, %v3277
    %v3542 = vpack.c.b16 %v3281, %v3278
    %v3543 = vpack.c.b16 %v3285, %v3282
    %v3544 = vpack.c.b16 %v3286, %v3283
    %v3545 = vpack.c.b16 %v3287, %v3284
    %v3546 = vpack.c.b16 %v3291, %v3288
    %v3547 = vpack.c.b16 %v3292, %v3289
    %v3548 = vpack.c.b16 %v3293, %v3290
    %v3549 = vpack.c.b16 %v3297, %v3294
    %v3550 = vpack.c.b16 %v3298, %v3295
    %v3551 = vpack.c.b16 %v3299, %v3296
    %v3552 = vpack.c.b16 %v3303, %v3300
    %v3553 = vpack.c.b16 %v3304, %v3301
    %v3554 = vpack.c.b16 %v3305, %v3302
    %v3555 = vpack.c.b16 %v3309, %v3306
    %v3556 = vpack.c.b16 %v3310, %v3307
    %v3557 = vpack.c.b16 %v3311, %v3308
    %v3558 = vpack.c.b16 %v3315, %v3312
    %v3559 = vpack.c.b16 %v3316, %v3313
    %v3560 = vpack.c.b16 %v3317, %v3314
    %v3561 = vpack.c.b16 %v3321, %v3318
    %v3562 = vpack.c.b16 %v3322, %v3319
    %v3563 = vpack.c.b16 %v3323, %v3320
    %v3564 = vpack.c.b16 %v3327, %v3324
    %v3565 = vpack.c.b16 %v3328, %v3325
    %v3566 = vpack.c.b16 %v3329, %v3326
    %v3567 = vpack.c.b16 %v3333, %v3330
    %v3568 = vpack.c.b16 %v3334, %v3331
    %v3569 = vpack.c.b16 %v3335, %v3332
    %v3570 = vpack.c.b16 %v3339, %v3336
    %v3571 = vpack.c.b16 %v3340, %v3337
    %v3572 = vpack.c.b16 %v3341, %v3338
    %v3573 = vpack.c.b16 %v3345, %v3342
    %v3574 = vpack.c.b16 %v3346, %v3343
    %v3575 = vpack.c.b16 %v3347, %v3344
    %v3576 = vpack.c.b16 %v3351, %v3348
    %v3577 = vpack.c.b16 %v3352, %v3349
    %v3578 = vpack.c.b16 %v3353, %v3350
    %v3579 = vpack.c.b16 %v3357, %v3354
    %v3580 = vpack.c.b16 %v3358, %v3355
    %v3581 = vpack.c.b16 %v3359, %v3356
    %v3582 = vpack.c.b16 %v3363, %v3360
    %v3583 = vpack.c.b16 %v3364, %v3361
    %v3584 = vpack.c.b16 %v3365, %v3362
    %v3585 = vpack.c.b16 %v3366, %v3366
    %v3586 = vpack.c.b16 %v3367, %v3367
    %v3587 = vpack.c.b16 %v3368, %v3368
    %v3805 = vsel %vm2312, %v2353, 0
    %vm3807 = vcmask 1041408
    %v3809 = vsel %vm3807, %v3585, 0
    %v3812 = vsel %vm3807, %v3586, 0
    %v3815 = vsel %vm3807, %v3587, 0
    %3817 = vmatprep.subr.bf16.mxu0 %v3391
    %3818 = vmatpush1.bf16.msra.mxu0 %v3390
    %3819 = vmatprep.subr.bf16.mxu0 %v3388
    %3820 = vmatpush1.bf16.msra.mxu0 %v3387
    %3821 = vmatprep.subr.bf16.mxu0 %v3385
    %3822 = vmatpush1.bf16.msra.mxu0 %v3384
    %3823 = vmatprep.subr.bf16.mxu0 %v3382
    %3824 = vmatpush1.bf16.msra.mxu0 %v3381
    %3825 = vmatprep.subr.bf16.mxu0 %v3379
    %3826 = vmatpush1.bf16.msra.mxu0 %v3378
    %3827 = vmatprep.subr.bf16.mxu0 %v3376
    %3828 = vmatpush1.bf16.msra.mxu0 %v3375
    %3829 = vmatprep.subr.bf16.mxu0 %v3373
    %3830 = vmatpush1.bf16.msra.mxu0 %v3372
    %3831 = vmatprep.subr.bf16.mxu0 %v3370
    %3832 = vmatpush1.bf16.msra.mxu0 %v3369
    %3833 = vmatprep.subr.bf16.mxu0 %v3415
    %3834 = vmatpush2.bf16.msra.mxu0 %v3414
    %3835 = vmatprep.subr.bf16.mxu0 %v3412
    %3836 = vmatpush2.bf16.msra.mxu0 %v3411
    %3837 = vmatprep.subr.bf16.mxu0 %v3409
    %3838 = vmatpush2.bf16.msra.mxu0 %v3408
    %3839 = vmatprep.subr.bf16.mxu0 %v3406
    %3840 = vmatpush2.bf16.msra.mxu0 %v3405
    %3841 = vmatprep.subr.bf16.mxu0 %v3403
    %3842 = vmatpush2.bf16.msra.mxu0 %v3402
    %3843 = vmatprep.subr.bf16.mxu0 %v3400
    %3844 = vmatpush2.bf16.msra.mxu0 %v3399
    %3845 = vmatprep.subr.bf16.mxu0 %v3397
    %3846 = vmatpush2.bf16.msra.mxu0 %v3396
    %3847 = vmatprep.subr.bf16.mxu0 %v3394
    %3848 = vmatpush2.bf16.msra.mxu0 %v3393
    %3849 = vmatprep.mubr.bf16.mxu0 %v2345
    %3850 = vmatmul.mubr.bf16.gmra.mxu0 %v2344
    %v3851 = vpop.f32.mrf.mxu0
    %v3852 = vadd.f32 0.0, %v3851
    %v3853 = vpop.f32.mrf.mxu0
    %v3854 = vadd.f32 0.0, %v3853
    %v3855 = vpop.f32.mrf.mxu0
    %v3856 = vadd.f32 0.0, %v3855
    %v3857 = vpop.f32.mrf.mxu0
    %v3858 = vadd.f32 0.0, %v3857
    %3859 = vdwg.mxu0
    %3860 = vmatprep.subr.bf16.mxu0 %v3439
    %3861 = vmatpush1.bf16.msra.mxu0 %v3438
    %3862 = vmatprep.subr.bf16.mxu0 %v3436
    %3863 = vmatpush1.bf16.msra.mxu0 %v3435
    %3864 = vmatprep.subr.bf16.mxu0 %v3433
    %3865 = vmatpush1.bf16.msra.mxu0 %v3432
    %3866 = vmatprep.subr.bf16.mxu0 %v3430
    %3867 = vmatpush1.bf16.msra.mxu0 %v3429
    %3868 = vmatprep.subr.bf16.mxu0 %v3427
    %3869 = vmatpush1.bf16.msra.mxu0 %v3426
    %3870 = vmatprep.subr.bf16.mxu0 %v3424
    %3871 = vmatpush1.bf16.msra.mxu0 %v3423
    %3872 = vmatprep.subr.bf16.mxu0 %v3421
    %3873 = vmatpush1.bf16.msra.mxu0 %v3420
    %3874 = vmatprep.subr.bf16.mxu0 %v3418
    %3875 = vmatpush1.bf16.msra.mxu0 %v3417
    %3876 = vmatprep.subr.bf16.mxu0 %v3463
    %3877 = vmatpush2.bf16.msra.mxu0 %v3462
    %3878 = vmatprep.subr.bf16.mxu0 %v3460
    %3879 = vmatpush2.bf16.msra.mxu0 %v3459
    %3880 = vmatprep.subr.bf16.mxu0 %v3457
    %3881 = vmatpush2.bf16.msra.mxu0 %v3456
    %3882 = vmatprep.subr.bf16.mxu0 %v3454
    %3883 = vmatpush2.bf16.msra.mxu0 %v3453
    %3884 = vmatprep.subr.bf16.mxu0 %v3451
    %3885 = vmatpush2.bf16.msra.mxu0 %v3450
    %3886 = vmatprep.subr.bf16.mxu0 %v3448
    %3887 = vmatpush2.bf16.msra.mxu0 %v3447
    %3888 = vmatprep.subr.bf16.mxu0 %v3445
    %3889 = vmatpush2.bf16.msra.mxu0 %v3444
    %3890 = vmatprep.subr.bf16.mxu0 %v3442
    %3891 = vmatpush2.bf16.msra.mxu0 %v3441
    %3892 = vmatprep.mubr.bf16.mxu0 %v2347
    %3893 = vmatmul.mubr.bf16.gmra.mxu0 %v2346
    %v3894 = vpop.f32.mrf.mxu0
    %v3895 = vadd.f32 %v3852, %v3894
    %v3896 = vpop.f32.mrf.mxu0
    %v3897 = vadd.f32 %v3854, %v3896
    %v3898 = vpop.f32.mrf.mxu0
    %v3899 = vadd.f32 %v3856, %v3898
    %v3900 = vpop.f32.mrf.mxu0
    %v3901 = vadd.f32 %v3858, %v3900
    %3902 = vdwg.mxu0
    %3903 = vmatprep.subr.bf16.mxu0 %v3487
    %3904 = vmatpush1.bf16.msra.mxu0 %v3486
    %3905 = vmatprep.subr.bf16.mxu0 %v3484
    %3906 = vmatpush1.bf16.msra.mxu0 %v3483
    %3907 = vmatprep.subr.bf16.mxu0 %v3481
    %3908 = vmatpush1.bf16.msra.mxu0 %v3480
    %3909 = vmatprep.subr.bf16.mxu0 %v3478
    %3910 = vmatpush1.bf16.msra.mxu0 %v3477
    %3911 = vmatprep.subr.bf16.mxu0 %v3475
    %3912 = vmatpush1.bf16.msra.mxu0 %v3474
    %3913 = vmatprep.subr.bf16.mxu0 %v3472
    %3914 = vmatpush1.bf16.msra.mxu0 %v3471
    %3915 = vmatprep.subr.bf16.mxu0 %v3469
    %3916 = vmatpush1.bf16.msra.mxu0 %v3468
    %3917 = vmatprep.subr.bf16.mxu0 %v3466
    %3918 = vmatpush1.bf16.msra.mxu0 %v3465
    %3919 = vmatprep.subr.bf16.mxu0 %v3511
    %3920 = vmatpush2.bf16.msra.mxu0 %v3510
    %3921 = vmatprep.subr.bf16.mxu0 %v3508
    %3922 = vmatpush2.bf16.msra.mxu0 %v3507
    %3923 = vmatprep.subr.bf16.mxu0 %v3505
    %3924 = vmatpush2.bf16.msra.mxu0 %v3504
    %3925 = vmatprep.subr.bf16.mxu0 %v3502
    %3926 = vmatpush2.bf16.msra.mxu0 %v3501
    %3927 = vmatprep.subr.bf16.mxu0 %v3499
    %3928 = vmatpush2.bf16.msra.mxu0 %v3498
    %3929 = vmatprep.subr.bf16.mxu0 %v3496
    %3930 = vmatpush2.bf16.msra.mxu0 %v3495
    %3931 = vmatprep.subr.bf16.mxu0 %v3493
    %3932 = vmatpush2.bf16.msra.mxu0 %v3492
    %3933 = vmatprep.subr.bf16.mxu0 %v3490
    %3934 = vmatpush2.bf16.msra.mxu0 %v3489
    %3935 = vmatprep.mubr.bf16.mxu0 %v2349
    %3936 = vmatmul.mubr.bf16.gmra.mxu0 %v2348
    %v3937 = vpop.f32.mrf.mxu0
    %v3938 = vadd.f32 %v3895, %v3937
    %v3939 = vpop.f32.mrf.mxu0
    %v3940 = vadd.f32 %v3897, %v3939
    %v3941 = vpop.f32.mrf.mxu0
    %v3942 = vadd.f32 %v3899, %v3941
    %v3943 = vpop.f32.mrf.mxu0
    %v3944 = vadd.f32 %v3901, %v3943
    %3945 = vdwg.mxu0
    %3946 = vmatprep.subr.bf16.mxu0 %v3535
    %3947 = vmatpush1.bf16.msra.mxu0 %v3534
    %3948 = vmatprep.subr.bf16.mxu0 %v3532
    %3949 = vmatpush1.bf16.msra.mxu0 %v3531
    %3950 = vmatprep.subr.bf16.mxu0 %v3529
    %3951 = vmatpush1.bf16.msra.mxu0 %v3528
    %3952 = vmatprep.subr.bf16.mxu0 %v3526
    %3953 = vmatpush1.bf16.msra.mxu0 %v3525
    %3954 = vmatprep.subr.bf16.mxu0 %v3523
    %3955 = vmatpush1.bf16.msra.mxu0 %v3522
    %3956 = vmatprep.subr.bf16.mxu0 %v3520
    %3957 = vmatpush1.bf16.msra.mxu0 %v3519
    %3958 = vmatprep.subr.bf16.mxu0 %v3517
    %3959 = vmatpush1.bf16.msra.mxu0 %v3516
    %3960 = vmatprep.subr.bf16.mxu0 %v3514
    %3961 = vmatpush1.bf16.msra.mxu0 %v3513
    %3962 = vmatprep.subr.bf16.mxu0 %v3559
    %3963 = vmatpush2.bf16.msra.mxu0 %v3558
    %3964 = vmatprep.subr.bf16.mxu0 %v3556
    %3965 = vmatpush2.bf16.msra.mxu0 %v3555
    %3966 = vmatprep.subr.bf16.mxu0 %v3553
    %3967 = vmatpush2.bf16.msra.mxu0 %v3552
    %3968 = vmatprep.subr.bf16.mxu0 %v3550
    %3969 = vmatpush2.bf16.msra.mxu0 %v3549
    %3970 = vmatprep.subr.bf16.mxu0 %v3547
    %3971 = vmatpush2.bf16.msra.mxu0 %v3546
    %3972 = vmatprep.subr.bf16.mxu0 %v3544
    %3973 = vmatpush2.bf16.msra.mxu0 %v3543
    %3974 = vmatprep.subr.bf16.mxu0 %v3541
    %3975 = vmatpush2.bf16.msra.mxu0 %v3540
    %3976 = vmatprep.subr.bf16.mxu0 %v3538
    %3977 = vmatpush2.bf16.msra.mxu0 %v3537
    %3978 = vmatprep.mubr.bf16.mxu0 %v2351
    %3979 = vmatmul.mubr.bf16.gmra.mxu0 %v2350
    %v3980 = vpop.f32.mrf.mxu0
    %v3981 = vadd.f32 %v3938, %v3980
    %v3982 = vpop.f32.mrf.mxu0
    %v3983 = vadd.f32 %v3940, %v3982
    %v3984 = vpop.f32.mrf.mxu0
    %v3985 = vadd.f32 %v3942, %v3984
    %v3986 = vpop.f32.mrf.mxu0
    %v3987 = vadd.f32 %v3944, %v3986
    %3988 = vdwg.mxu0
    %3989 = vmatprep.subr.bf16.mxu0 %v3583
    %3990 = vmatpush1.bf16.msra.mxu0 %v3582
    %3991 = vmatprep.subr.bf16.mxu0 %v3580
    %3992 = vmatpush1.bf16.msra.mxu0 %v3579
    %3993 = vmatprep.subr.bf16.mxu0 %v3577
    %3994 = vmatpush1.bf16.msra.mxu0 %v3576
    %3995 = vmatprep.subr.bf16.mxu0 %v3574
    %3996 = vmatpush1.bf16.msra.mxu0 %v3573
    %3997 = vmatprep.subr.bf16.mxu0 %v3571
    %3998 = vmatpush1.bf16.msra.mxu0 %v3570
    %3999 = vmatprep.subr.bf16.mxu0 %v3568
    %4000 = vmatpush1.bf16.msra.mxu0 %v3567
    %4001 = vmatprep.subr.bf16.mxu0 %v3565
    %4002 = vmatpush1.bf16.msra.mxu0 %v3564
    %4003 = vmatprep.subr.bf16.mxu0 %v3562
    %4004 = vmatpush1.bf16.msra.mxu0 %v3561
    %4005 = vmatprep.subr.bf16.mxu0 0
    %4006 = vmatpush2.bf16.msra.mxu0 0
    %4007 = vmatprep.subr.bf16.mxu0 0
    %4008 = vmatpush2.bf16.msra.mxu0 0
    %4009 = vmatprep.subr.bf16.mxu0 0
    %4010 = vmatpush2.bf16.msra.mxu0 0
    %4011 = vmatprep.subr.bf16.mxu0 0
    %4012 = vmatpush2.bf16.msra.mxu0 0
    %4013 = vmatprep.subr.bf16.mxu0 0
    %4014 = vmatpush2.bf16.msra.mxu0 0
    %4015 = vmatprep.subr.bf16.mxu0 0
    %4016 = vmatpush2.bf16.msra.mxu0 0
    %4017 = vmatprep.subr.bf16.mxu0 0
    %4018 = vmatpush2.bf16.msra.mxu0 0
    %4019 = vmatprep.subr.bf16.mxu0 %v3812
    %4020 = vmatpush2.bf16.msra.mxu0 %v3809
    %4021 = vmatprep.mubr.bf16.mxu0 %v3805
    %4022 = vmatmul.mubr.bf16.gmra.mxu0 %v2352
    %v4023 = vpop.f32.mrf.mxu0
    %v4024 = vadd.f32 %v3981, %v4023
    %v4025 = vpop.f32.mrf.mxu0
    %v4026 = vadd.f32 %v3983, %v4025
    %v4027 = vpop.f32.mrf.mxu0
    %v4028 = vadd.f32 %v3985, %v4027
    %v4029 = vpop.f32.mrf.mxu0
    %v4030 = vadd.f32 %v3987, %v4029
    %4031 = vdwg.mxu0
    %4032 = vmatprep.subr.bf16.mxu0 0
    %4033 = vmatpush1.bf16.msra.mxu0 %v3392
    %4034 = vmatprep.subr.bf16.mxu0 0
    %4035 = vmatpush1.bf16.msra.mxu0 %v3389
    %4036 = vmatprep.subr.bf16.mxu0 0
    %4037 = vmatpush1.bf16.msra.mxu0 %v3386
    %4038 = vmatprep.subr.bf16.mxu0 0
    %4039 = vmatpush1.bf16.msra.mxu0 %v3383
    %4040 = vmatprep.subr.bf16.mxu0 0
    %4041 = vmatpush1.bf16.msra.mxu0 %v3380
    %4042 = vmatprep.subr.bf16.mxu0 0
    %4043 = vmatpush1.bf16.msra.mxu0 %v3377
    %4044 = vmatprep.subr.bf16.mxu0 0
    %4045 = vmatpush1.bf16.msra.mxu0 %v3374
    %4046 = vmatprep.subr.bf16.mxu0 0
    %4047 = vmatpush1.bf16.msra.mxu0 %v3371
    %4048 = vmatprep.subr.bf16.mxu0 0
    %4049 = vmatpush2.bf16.msra.mxu0 %v3416
    %4050 = vmatprep.subr.bf16.mxu0 0
    %4051 = vmatpush2.bf16.msra.mxu0 %v3413
    %4052 = vmatprep.subr.bf16.mxu0 0
    %4053 = vmatpush2.bf16.msra.mxu0 %v3410
    %4054 = vmatprep.subr.bf16.mxu0 0
    %4055 = vmatpush2.bf16.msra.mxu0 %v3407
    %4056 = vmatprep.subr.bf16.mxu0 0
    %4057 = vmatpush2.bf16.msra.mxu0 %v3404
    %4058 = vmatprep.subr.bf16.mxu0 0
    %4059 = vmatpush2.bf16.msra.mxu0 %v3401
    %4060 = vmatprep.subr.bf16.mxu0 0
    %4061 = vmatpush2.bf16.msra.mxu0 %v3398
    %4062 = vmatprep.subr.bf16.mxu0 0
    %4063 = vmatpush2.bf16.msra.mxu0 %v3395
    %4064 = vmatprep.mubr.bf16.mxu0 %v2345
    %4065 = vmatmul.mubr.bf16.gmra.mxu0 %v2344
    %v4066 = vpop.f32.mrf.mxu0
    %v4067 = vadd.f32 0.0, %v4066
    %v4068 = vpop.f32.mrf.mxu0
    %v4069 = vpop.f32.mrf.mxu0
    %v4070 = vadd.f32 0.0, %v4069
    %v4071 = vpop.f32.mrf.mxu0
    %4072 = vdwg.mxu0
    %4073 = vmatprep.subr.bf16.mxu0 0
    %4074 = vmatpush1.bf16.msra.mxu0 %v3440
    %4075 = vmatprep.subr.bf16.mxu0 0
    %4076 = vmatpush1.bf16.msra.mxu0 %v3437
    %4077 = vmatprep.subr.bf16.mxu0 0
    %4078 = vmatpush1.bf16.msra.mxu0 %v3434
    %4079 = vmatprep.subr.bf16.mxu0 0
    %4080 = vmatpush1.bf16.msra.mxu0 %v3431
    %4081 = vmatprep.subr.bf16.mxu0 0
    %4082 = vmatpush1.bf16.msra.mxu0 %v3428
    %4083 = vmatprep.subr.bf16.mxu0 0
    %4084 = vmatpush1.bf16.msra.mxu0 %v3425
    %4085 = vmatprep.subr.bf16.mxu0 0
    %4086 = vmatpush1.bf16.msra.mxu0 %v3422
    %4087 = vmatprep.subr.bf16.mxu0 0
    %4088 = vmatpush1.bf16.msra.mxu0 %v3419
    %4089 = vmatprep.subr.bf16.mxu0 0
    %4090 = vmatpush2.bf16.msra.mxu0 %v3464
    %4091 = vmatprep.subr.bf16.mxu0 0
    %4092 = vmatpush2.bf16.msra.mxu0 %v3461
    %4093 = vmatprep.subr.bf16.mxu0 0
    %4094 = vmatpush2.bf16.msra.mxu0 %v3458
    %4095 = vmatprep.subr.bf16.mxu0 0
    %4096 = vmatpush2.bf16.msra.mxu0 %v3455
    %4097 = vmatprep.subr.bf16.mxu0 0
    %4098 = vmatpush2.bf16.msra.mxu0 %v3452
    %4099 = vmatprep.subr.bf16.mxu0 0
    %4100 = vmatpush2.bf16.msra.mxu0 %v3449
    %4101 = vmatprep.subr.bf16.mxu0 0
    %4102 = vmatpush2.bf16.msra.mxu0 %v3446
    %4103 = vmatprep.subr.bf16.mxu0 0
    %4104 = vmatpush2.bf16.msra.mxu0 %v3443
    %4105 = vmatprep.mubr.bf16.mxu0 %v2347
    %4106 = vmatmul.mubr.bf16.gmra.mxu0 %v2346
    %v4107 = vpop.f32.mrf.mxu0
    %v4108 = vadd.f32 %v4067, %v4107
    %v4109 = vpop.f32.mrf.mxu0
    %v4110 = vpop.f32.mrf.mxu0
    %v4111 = vadd.f32 %v4070, %v4110
    %v4112 = vpop.f32.mrf.mxu0
    %4113 = vdwg.mxu0
    %4114 = vmatprep.subr.bf16.mxu0 0
    %4115 = vmatpush1.bf16.msra.mxu0 %v3488
    %4116 = vmatprep.subr.bf16.mxu0 0
    %4117 = vmatpush1.bf16.msra.mxu0 %v3485
    %4118 = vmatprep.subr.bf16.mxu0 0
    %4119 = vmatpush1.bf16.msra.mxu0 %v3482
    %4120 = vmatprep.subr.bf16.mxu0 0
    %4121 = vmatpush1.bf16.msra.mxu0 %v3479
    %4122 = vmatprep.subr.bf16.mxu0 0
    %4123 = vmatpush1.bf16.msra.mxu0 %v3476
    %4124 = vmatprep.subr.bf16.mxu0 0
    %4125 = vmatpush1.bf16.msra.mxu0 %v3473
    %4126 = vmatprep.subr.bf16.mxu0 0
    %4127 = vmatpush1.bf16.msra.mxu0 %v3470
    %4128 = vmatprep.subr.bf16.mxu0 0
    %4129 = vmatpush1.bf16.msra.mxu0 %v3467
    %4130 = vmatprep.subr.bf16.mxu0 0
    %4131 = vmatpush2.bf16.msra.mxu0 %v3512
    %4132 = vmatprep.subr.bf16.mxu0 0
    %4133 = vmatpush2.bf16.msra.mxu0 %v3509
    %4134 = vmatprep.subr.bf16.mxu0 0
    %4135 = vmatpush2.bf16.msra.mxu0 %v3506
    %4136 = vmatprep.subr.bf16.mxu0 0
    %4137 = vmatpush2.bf16.msra.mxu0 %v3503
    %4138 = vmatprep.subr.bf16.mxu0 0
    %4139 = vmatpush2.bf16.msra.mxu0 %v3500
    %4140 = vmatprep.subr.bf16.mxu0 0
    %4141 = vmatpush2.bf16.msra.mxu0 %v3497
    %4142 = vmatprep.subr.bf16.mxu0 0
    %4143 = vmatpush2.bf16.msra.mxu0 %v3494
    %4144 = vmatprep.subr.bf16.mxu0 0
    %4145 = vmatpush2.bf16.msra.mxu0 %v3491
    %4146 = vmatprep.mubr.bf16.mxu0 %v2349
    %4147 = vmatmul.mubr.bf16.gmra.mxu0 %v2348
    %v4148 = vpop.f32.mrf.mxu0
    %v4149 = vadd.f32 %v4108, %v4148
    %v4150 = vpop.f32.mrf.mxu0
    %v4151 = vpop.f32.mrf.mxu0
    %v4152 = vadd.f32 %v4111, %v4151
    %v4153 = vpop.f32.mrf.mxu0
    %4154 = vdwg.mxu0
    %4155 = vmatprep.subr.bf16.mxu0 0
    %4156 = vmatpush1.bf16.msra.mxu0 %v3536
    %4157 = vmatprep.subr.bf16.mxu0 0
    %4158 = vmatpush1.bf16.msra.mxu0 %v3533
    %4159 = vmatprep.subr.bf16.mxu0 0
    %4160 = vmatpush1.bf16.msra.mxu0 %v3530
    %4161 = vmatprep.subr.bf16.mxu0 0
    %4162 = vmatpush1.bf16.msra.mxu0 %v3527
    %4163 = vmatprep.subr.bf16.mxu0 0
    %4164 = vmatpush1.bf16.msra.mxu0 %v3524
    %4165 = vmatprep.subr.bf16.mxu0 0
    %4166 = vmatpush1.bf16.msra.mxu0 %v3521
    %4167 = vmatprep.subr.bf16.mxu0 0
    %4168 = vmatpush1.bf16.msra.mxu0 %v3518
    %4169 = vmatprep.subr.bf16.mxu0 0
    %4170 = vmatpush1.bf16.msra.mxu0 %v3515
    %4171 = vmatprep.subr.bf16.mxu0 0
    %4172 = vmatpush2.bf16.msra.mxu0 %v3560
    %4173 = vmatprep.subr.bf16.mxu0 0
    %4174 = vmatpush2.bf16.msra.mxu0 %v3557
    %4175 = vmatprep.subr.bf16.mxu0 0
    %4176 = vmatpush2.bf16.msra.mxu0 %v3554
    %4177 = vmatprep.subr.bf16.mxu0 0
    %4178 = vmatpush2.bf16.msra.mxu0 %v3551
    %4179 = vmatprep.subr.bf16.mxu0 0
    %4180 = vmatpush2.bf16.msra.mxu0 %v3548
    %4181 = vmatprep.subr.bf16.mxu0 0
    %4182 = vmatpush2.bf16.msra.mxu0 %v3545
    %4183 = vmatprep.subr.bf16.mxu0 0
    %4184 = vmatpush2.bf16.msra.mxu0 %v3542
    %4185 = vmatprep.subr.bf16.mxu0 0
    %4186 = vmatpush2.bf16.msra.mxu0 %v3539
    %4187 = vmatprep.mubr.bf16.mxu0 %v2351
    %4188 = vmatmul.mubr.bf16.gmra.mxu0 %v2350
    %v4189 = vpop.f32.mrf.mxu0
    %v4190 = vadd.f32 %v4149, %v4189
    %v4191 = vpop.f32.mrf.mxu0
    %v4192 = vpop.f32.mrf.mxu0
    %v4193 = vadd.f32 %v4152, %v4192
    %v4194 = vpop.f32.mrf.mxu0
    %4195 = vdwg.mxu0
    %4196 = vmatprep.subr.bf16.mxu0 0
    %4197 = vmatpush1.bf16.msra.mxu0 %v3584
    %4198 = vmatprep.subr.bf16.mxu0 0
    %4199 = vmatpush1.bf16.msra.mxu0 %v3581
    %4200 = vmatprep.subr.bf16.mxu0 0
    %4201 = vmatpush1.bf16.msra.mxu0 %v3578
    %4202 = vmatprep.subr.bf16.mxu0 0
    %4203 = vmatpush1.bf16.msra.mxu0 %v3575
    %4204 = vmatprep.subr.bf16.mxu0 0
    %4205 = vmatpush1.bf16.msra.mxu0 %v3572
    %4206 = vmatprep.subr.bf16.mxu0 0
    %4207 = vmatpush1.bf16.msra.mxu0 %v3569
    %4208 = vmatprep.subr.bf16.mxu0 0
    %4209 = vmatpush1.bf16.msra.mxu0 %v3566
    %4210 = vmatprep.subr.bf16.mxu0 0
    %4211 = vmatpush1.bf16.msra.mxu0 %v3563
    %4212 = vmatprep.subr.bf16.mxu0 0
    %4213 = vmatpush2.bf16.msra.mxu0 0
    %4214 = vmatprep.subr.bf16.mxu0 0
    %4215 = vmatpush2.bf16.msra.mxu0 0
    %4216 = vmatprep.subr.bf16.mxu0 0
    %4217 = vmatpush2.bf16.msra.mxu0 0
    %4218 = vmatprep.subr.bf16.mxu0 0
    %4219 = vmatpush2.bf16.msra.mxu0 0
    %4220 = vmatprep.subr.bf16.mxu0 0
    %4221 = vmatpush2.bf16.msra.mxu0 0
    %4222 = vmatprep.subr.bf16.mxu0 0
    %4223 = vmatpush2.bf16.msra.mxu0 0
    %4224 = vmatprep.subr.bf16.mxu0 0
    %4225 = vmatpush2.bf16.msra.mxu0 0
    %4226 = vmatprep.subr.bf16.mxu0 0
    %4227 = vmatpush2.bf16.msra.mxu0 %v3815
    %4228 = vmatprep.mubr.bf16.mxu0 %v3805
    %4229 = vmatmul.mubr.bf16.gmra.mxu0 %v2352
    %v4230 = vpop.f32.mrf.mxu0
    %v4231 = vadd.f32 %v4190, %v4230
    %v4232 = vpop.f32.mrf.mxu0
    %v4233 = vpop.f32.mrf.mxu0
    %v4234 = vadd.f32 %v4193, %v4233
    %v4235 = vpop.f32.mrf.mxu0
    %4236 = vdwg.mxu0
    %4237 = vst [vmem:[#allocation2] sm:$0xff] %v4024
    %4238 = vst [vmem:[#allocation2 + $0x8] sm:$0xff] %v4026
    %vm4239 = vcmask 564224
    %4240 = vst.msk [vmem:[#allocation2 + $0x10] sm:$0xff] %vm4239, %v4231
    %4244 = vrot.lane.b32.xlu0 %v4024, 127
    %v4245 = vpop.permute.xlu0 %4244
    %4246 = vrot.lane.b32.xlu0 %v4026, 127
    %v4247 = vpop.permute.xlu0 %4246
    %4248 = vrot.lane.b32.xlu0 %v4231, 127
    %v4249 = vpop.permute.xlu0 %4248
    %v4250 = vsel %vm134, %v4245, %v4247
    %v4251 = vsel %vm134, %v4247, %v4249
    %4255 = vst [vmem:[#allocation2 + $0xa0] sm:$0xff] %v4250
    %4256 = vst [vmem:[#allocation2 + $0xa8] sm:$0xff] %v4251
    %4257 = vst.msk [vmem:[#allocation2 + $0xb0] sm:$0xff] %vm4239, %v4249
    %4258 = vrot.lane.b32.xlu0 %v4024, 126
    %v4259 = vpop.permute.xlu0 %4258
    %4260 = vrot.lane.b32.xlu0 %v4026, 126
    %v4261 = vpop.permute.xlu0 %4260
    %4262 = vrot.lane.b32.xlu0 %v4231, 126
    %v4263 = vpop.permute.xlu0 %4262
    %v4264 = vsel %vm184, %v4259, %v4261
    %v4265 = vsel %vm184, %v4261, %v4263
    %4269 = vst [vmem:[#allocation2 + $0x140] sm:$0xff] %v4264
    %4270 = vst [vmem:[#allocation2 + $0x148] sm:$0xff] %v4265
    %4271 = vst.msk [vmem:[#allocation2 + $0x150] sm:$0xff] %vm4239, %v4263
    %4272 = vrot.lane.b32.xlu0 %v4024, 111
    %v4273 = vpop.permute.xlu0 %4272
    %4274 = vrot.lane.b32.xlu0 %v4026, 111
    %v4275 = vpop.permute.xlu0 %4274
    %4276 = vrot.lane.b32.xlu0 %v4231, 111
    %v4277 = vpop.permute.xlu0 %4276
    %vm4278 = vcmask 908288
    %v4279 = vsel %vm4278, %v4273, %v4275
    %v4280 = vsel %vm4278, %v4275, %v4277
    %4284 = vst [vmem:[#allocation2 + $0x1e0] sm:$0xff] %v4279
    %4285 = vst [vmem:[#allocation2 + $0x1e8] sm:$0xff] %v4280
    %4286 = vst.msk [vmem:[#allocation2 + $0x1f0] sm:$0xff] %vm4239, %v4277
    %4287 = vrot.lane.b32.xlu0 %v4024, 110
    %v4288 = vpop.permute.xlu0 %4287
    %4289 = vrot.lane.b32.xlu0 %v4026, 110
    %v4290 = vpop.permute.xlu0 %4289
    %4291 = vrot.lane.b32.xlu0 %v4231, 110
    %v4292 = vpop.permute.xlu0 %4291
    %vm4293 = vcmask 900096
    %v4294 = vsel %vm4293, %v4288, %v4290
    %v4295 = vsel %vm4293, %v4290, %v4292
    %4299 = vst [vmem:[#allocation2 + $0x280] sm:$0xff] %v4294
    %4300 = vst [vmem:[#allocation2 + $0x288] sm:$0xff] %v4295
    %4301 = vst.msk [vmem:[#allocation2 + $0x290] sm:$0xff] %vm4239, %v4292
    %4302 = vrot.lane.b32.xlu0 %v4024, 109
    %v4303 = vpop.permute.xlu0 %4302
    %4304 = vrot.lane.b32.xlu0 %v4026, 109
    %v4305 = vpop.permute.xlu0 %4304
    %4306 = vrot.lane.b32.xlu0 %v4231, 109
    %v4307 = vpop.permute.xlu0 %4306
    %vm4308 = vcmask 891904
    %v4309 = vsel %vm4308, %v4303, %v4305
    %v4310 = vsel %vm4308, %v4305, %v4307
    %4314 = vst [vmem:[#allocation2 + $0x320] sm:$0xff] %v4309
    %4315 = vst [vmem:[#allocation2 + $0x328] sm:$0xff] %v4310
    %4316 = vst.msk [vmem:[#allocation2 + $0x330] sm:$0xff] %vm4239, %v4307
    %4317 = vrot.lane.b32.xlu0 %v4024, 94
    %v4318 = vpop.permute.xlu0 %4317
    %4319 = vrot.lane.b32.xlu0 %v4026, 94
    %v4320 = vpop.permute.xlu0 %4319
    %4321 = vrot.lane.b32.xlu0 %v4231, 94
    %v4322 = vpop.permute.xlu0 %4321
    %v4323 = vsel %vm234, %v4318, %v4320
    %v4324 = vsel %vm234, %v4320, %v4322
    %4328 = vst [vmem:[#allocation2 + $0x3c0] sm:$0xff] %v4323
    %4329 = vst [vmem:[#allocation2 + $0x3c8] sm:$0xff] %v4324
    %4330 = vst.msk [vmem:[#allocation2 + $0x3d0] sm:$0xff] %vm4239, %v4322
    %4331 = vrot.lane.b32.xlu0 %v4024, 93
    %v4332 = vpop.permute.xlu0 %4331
    %4333 = vrot.lane.b32.xlu0 %v4026, 93
    %v4334 = vpop.permute.xlu0 %4333
    %4335 = vrot.lane.b32.xlu0 %v4231, 93
    %v4336 = vpop.permute.xlu0 %4335
    %v4337 = vsel %vm284, %v4332, %v4334
    %v4338 = vsel %vm284, %v4334, %v4336
    %4342 = vst [vmem:[#allocation2 + $0x460] sm:$0xff] %v4337
    %4343 = vst [vmem:[#allocation2 + $0x468] sm:$0xff] %v4338
    %4344 = vst.msk [vmem:[#allocation2 + $0x470] sm:$0xff] %vm4239, %v4336
    %4345 = vrot.lane.b32.xlu0 %v4024, 92
    %v4346 = vpop.permute.xlu0 %4345
    %4347 = vrot.lane.b32.xlu0 %v4026, 92
    %v4348 = vpop.permute.xlu0 %4347
    %4349 = vrot.lane.b32.xlu0 %v4231, 92
    %v4350 = vpop.permute.xlu0 %4349
    %v4351 = vsel %vm334, %v4346, %v4348
    %v4352 = vsel %vm334, %v4348, %v4350
    %4356 = vst [vmem:[#allocation2 + $0x500] sm:$0xff] %v4351
    %4357 = vst [vmem:[#allocation2 + $0x508] sm:$0xff] %v4352
    %4358 = vst.msk [vmem:[#allocation2 + $0x510] sm:$0xff] %vm4239, %v4350
    %4359 = vst [vmem:[#allocation2 + $0x18] sm:$0xff] %v4028
    %4360 = vst [vmem:[#allocation2 + $0x20] sm:$0xff] %v4030
    %4361 = vst.msk [vmem:[#allocation2 + $0x28] sm:$0xff] %vm4239, %v4234
    %4365 = vrot.lane.b32.xlu0 %v4028, 127
    %v4366 = vpop.permute.xlu0 %4365
    %4367 = vrot.lane.b32.xlu0 %v4030, 127
    %v4368 = vpop.permute.xlu0 %4367
    %4369 = vrot.lane.b32.xlu0 %v4234, 127
    %v4370 = vpop.permute.xlu0 %4369
    %v4371 = vsel %vm134, %v4366, %v4368
    %v4372 = vsel %vm134, %v4368, %v4370
    %4376 = vst [vmem:[#allocation2 + $0xb8] sm:$0xff] %v4371
    %4377 = vst [vmem:[#allocation2 + $0xc0] sm:$0xff] %v4372
    %4378 = vst.msk [vmem:[#allocation2 + $0xc8] sm:$0xff] %vm4239, %v4370
    %4379 = vrot.lane.b32.xlu0 %v4028, 126
    %v4380 = vpop.permute.xlu0 %4379
    %4381 = vrot.lane.b32.xlu0 %v4030, 126
    %v4382 = vpop.permute.xlu0 %4381
    %4383 = vrot.lane.b32.xlu0 %v4234, 126
    %v4384 = vpop.permute.xlu0 %4383
    %v4385 = vsel %vm184, %v4380, %v4382
    %v4386 = vsel %vm184, %v4382, %v4384
    %4390 = vst [vmem:[#allocation2 + $0x158] sm:$0xff] %v4385
    %4391 = vst [vmem:[#allocation2 + $0x160] sm:$0xff] %v4386
    %4392 = vst.msk [vmem:[#allocation2 + $0x168] sm:$0xff] %vm4239, %v4384
    %4393 = vrot.lane.b32.xlu0 %v4028, 111
    %v4394 = vpop.permute.xlu0 %4393
    %4395 = vrot.lane.b32.xlu0 %v4030, 111
    %v4396 = vpop.permute.xlu0 %4395
    %4397 = vrot.lane.b32.xlu0 %v4234, 111
    %v4398 = vpop.permute.xlu0 %4397
    %v4399 = vsel %vm4278, %v4394, %v4396
    %v4400 = vsel %vm4278, %v4396, %v4398
    %4404 = vst [vmem:[#allocation2 + $0x1f8] sm:$0xff] %v4399
    %4405 = vst [vmem:[#allocation2 + $0x200] sm:$0xff] %v4400
    %4406 = vst.msk [vmem:[#allocation2 + $0x208] sm:$0xff] %vm4239, %v4398
    %4407 = vrot.lane.b32.xlu0 %v4028, 110
    %v4408 = vpop.permute.xlu0 %4407
    %4409 = vrot.lane.b32.xlu0 %v4030, 110
    %v4410 = vpop.permute.xlu0 %4409
    %4411 = vrot.lane.b32.xlu0 %v4234, 110
    %v4412 = vpop.permute.xlu0 %4411
    %v4413 = vsel %vm4293, %v4408, %v4410
    %v4414 = vsel %vm4293, %v4410, %v4412
    %4418 = vst [vmem:[#allocation2 + $0x298] sm:$0xff] %v4413
    %4419 = vst [vmem:[#allocation2 + $0x2a0] sm:$0xff] %v4414
    %4420 = vst.msk [vmem:[#allocation2 + $0x2a8] sm:$0xff] %vm4239, %v4412
    %4421 = vrot.lane.b32.xlu0 %v4028, 109
    %v4422 = vpop.permute.xlu0 %4421
    %4423 = vrot.lane.b32.xlu0 %v4030, 109
    %v4424 = vpop.permute.xlu0 %4423
    %4425 = vrot.lane.b32.xlu0 %v4234, 109
    %v4426 = vpop.permute.xlu0 %4425
    %v4427 = vsel %vm4308, %v4422, %v4424
    %v4428 = vsel %vm4308, %v4424, %v4426
    %4432 = vst [vmem:[#allocation2 + $0x338] sm:$0xff] %v4427
    %4433 = vst [vmem:[#allocation2 + $0x340] sm:$0xff] %v4428
    %4434 = vst.msk [vmem:[#allocation2 + $0x348] sm:$0xff] %vm4239, %v4426
    %4435 = vrot.lane.b32.xlu0 %v4028, 94
    %v4436 = vpop.permute.xlu0 %4435
    %4437 = vrot.lane.b32.xlu0 %v4030, 94
    %v4438 = vpop.permute.xlu0 %4437
    %4439 = vrot.lane.b32.xlu0 %v4234, 94
    %v4440 = vpop.permute.xlu0 %4439
    %v4441 = vsel %vm234, %v4436, %v4438
    %v4442 = vsel %vm234, %v4438, %v4440
    %4446 = vst [vmem:[#allocation2 + $0x3d8] sm:$0xff] %v4441
    %4447 = vst [vmem:[#allocation2 + $0x3e0] sm:$0xff] %v4442
    %4448 = vst.msk [vmem:[#allocation2 + $0x3e8] sm:$0xff] %vm4239, %v4440
    %4449 = vrot.lane.b32.xlu0 %v4028, 93
    %v4450 = vpop.permute.xlu0 %4449
    %4451 = vrot.lane.b32.xlu0 %v4030, 93
    %v4452 = vpop.permute.xlu0 %4451
    %4453 = vrot.lane.b32.xlu0 %v4234, 93
    %v4454 = vpop.permute.xlu0 %4453
    %v4455 = vsel %vm284, %v4450, %v4452
    %v4456 = vsel %vm284, %v4452, %v4454
    %4460 = vst [vmem:[#allocation2 + $0x478] sm:$0xff] %v4455
    %4461 = vst [vmem:[#allocation2 + $0x480] sm:$0xff] %v4456
    %4462 = vst.msk [vmem:[#allocation2 + $0x488] sm:$0xff] %vm4239, %v4454
    %4463 = vrot.lane.b32.xlu0 %v4028, 92
    %v4464 = vpop.permute.xlu0 %4463
    %4465 = vrot.lane.b32.xlu0 %v4030, 92
    %v4466 = vpop.permute.xlu0 %4465
    %4467 = vrot.lane.b32.xlu0 %v4234, 92
    %v4468 = vpop.permute.xlu0 %4467
    %v4469 = vsel %vm334, %v4464, %v4466
    %v4470 = vsel %vm334, %v4466, %v4468
    %4474 = vst [vmem:[#allocation2 + $0x518] sm:$0xff] %v4469
    %4475 = vst [vmem:[#allocation2 + $0x520] sm:$0xff] %v4470
    %4476 = vst.msk [vmem:[#allocation2 + $0x528] sm:$0xff] %vm4239, %v4468
    %v4477 = vld [vmem:[%s3] sm:$0xff]
    %v4478 = vld [vmem:[#allocation2] sm:$0xff]
    %v4479 = vld [vmem:[#allocation2 + $0x8] sm:$0xff]
    %v4480 = vld [vmem:[#allocation2 + $0x10] sm:$0xff]
    %v4481 = vld [vmem:[#allocation2 + $0x18] sm:$0xff]
    %v4482 = vld [vmem:[#allocation2 + $0x20] sm:$0xff]
    %v4483 = vld [vmem:[#allocation2 + $0x28] sm:$0xff]
    %v4484 = vld [vmem:[#allocation2 + $0xa0] sm:$0xff]
    %v4485 = vld [vmem:[#allocation2 + $0xa8] sm:$0xff]
    %v4486 = vld [vmem:[#allocation2 + $0xb0] sm:$0xff]
    %v4487 = vld [vmem:[#allocation2 + $0xb8] sm:$0xff]
    %v4488 = vld [vmem:[#allocation2 + $0xc0] sm:$0xff]
    %v4489 = vld [vmem:[#allocation2 + $0xc8] sm:$0xff]
    %v4490 = vld [vmem:[#allocation2 + $0x140] sm:$0xff]
    %v4491 = vld [vmem:[#allocation2 + $0x148] sm:$0xff]
    %v4492 = vld [vmem:[#allocation2 + $0x150] sm:$0xff]
    %v4493 = vld [vmem:[#allocation2 + $0x158] sm:$0xff]
    %v4494 = vld [vmem:[#allocation2 + $0x160] sm:$0xff]
    %v4495 = vld [vmem:[#allocation2 + $0x168] sm:$0xff]
    %v4496 = vld [vmem:[#allocation2 + $0x1e0] sm:$0xff]
    %v4497 = vld [vmem:[#allocation2 + $0x1e8] sm:$0xff]
    %v4498 = vld [vmem:[#allocation2 + $0x1f0] sm:$0xff]
    %v4499 = vld [vmem:[#allocation2 + $0x1f8] sm:$0xff]
    %v4500 = vld [vmem:[#allocation2 + $0x200] sm:$0xff]
    %v4501 = vld [vmem:[#allocation2 + $0x208] sm:$0xff]
    %v4502 = vld [vmem:[#allocation2 + $0x280] sm:$0xff]
    %v4503 = vld [vmem:[#allocation2 + $0x288] sm:$0xff]
    %v4504 = vld [vmem:[#allocation2 + $0x290] sm:$0xff]
    %v4505 = vld [vmem:[#allocation2 + $0x298] sm:$0xff]
    %v4506 = vld [vmem:[#allocation2 + $0x2a0] sm:$0xff]
    %v4507 = vld [vmem:[#allocation2 + $0x2a8] sm:$0xff]
    %v4508 = vld [vmem:[#allocation2 + $0x320] sm:$0xff]
    %v4509 = vld [vmem:[#allocation2 + $0x328] sm:$0xff]
    %v4510 = vld [vmem:[#allocation2 + $0x330] sm:$0xff]
    %v4511 = vld [vmem:[#allocation2 + $0x338] sm:$0xff]
    %v4512 = vld [vmem:[#allocation2 + $0x340] sm:$0xff]
    %v4513 = vld [vmem:[#allocation2 + $0x348] sm:$0xff]
    %v4514 = vld [vmem:[#allocation2 + $0x3c0] sm:$0xff]
    %v4515 = vld [vmem:[#allocation2 + $0x3c8] sm:$0xff]
    %v4516 = vld [vmem:[#allocation2 + $0x3d0] sm:$0xff]
    %v4517 = vld [vmem:[#allocation2 + $0x3d8] sm:$0xff]
    %v4518 = vld [vmem:[#allocation2 + $0x3e0] sm:$0xff]
    %v4519 = vld [vmem:[#allocation2 + $0x3e8] sm:$0xff]
    %v4520 = vld [vmem:[#allocation2 + $0x460] sm:$0xff]
    %v4521 = vld [vmem:[#allocation2 + $0x468] sm:$0xff]
    %v4522 = vld [vmem:[#allocation2 + $0x470] sm:$0xff]
    %v4523 = vld [vmem:[#allocation2 + $0x478] sm:$0xff]
    %v4524 = vld [vmem:[#allocation2 + $0x480] sm:$0xff]
    %v4525 = vld [vmem:[#allocation2 + $0x488] sm:$0xff]
    %v4526 = vld [vmem:[#allocation2 + $0x500] sm:$0xff]
    %v4527 = vld [vmem:[#allocation2 + $0x508] sm:$0xff]
    %v4528 = vld [vmem:[#allocation2 + $0x510] sm:$0xff]
    %v4529 = vld [vmem:[#allocation2 + $0x518] sm:$0xff]
    %v4530 = vld [vmem:[#allocation2 + $0x520] sm:$0xff]
    %v4531 = vld [vmem:[#allocation2 + $0x528] sm:$0xff]
    %v4532 = vld [vmem:[%s4] sm:$0xff]
    %4534 = vset.pattern.permute.xlu0 0
    %4535 = vperm.xlu0 %4534, %v4532
    %v4536 = vpop.permute.xlu0 %4535
    %v4539 = vsel %vm1133, %v4477, 0
    %4541 = vmatprep.subr.mxu0 0.0
    %4542 = vmatpush1.msra.mxu0 0.0
    %4543 = vmatprep.subr.mxu0 0.0
    %4544 = vmatpush1.msra.mxu0 0.0
    %4545 = vmatprep.subr.mxu0 0.0
    %4546 = vmatpush1.msra.mxu0 0.0
    %4547 = vmatprep.subr.mxu0 0.0
    %4548 = vmatpush1.msra.mxu0 0.0
    %4549 = vmatprep.subr.mxu0 0.0
    %4550 = vmatpush1.msra.mxu0 0.0
    %4551 = vmatprep.subr.mxu0 0.0
    %4552 = vmatpush1.msra.mxu0 0.0
    %4553 = vmatprep.subr.mxu0 0.0
    %4554 = vmatpush1.msra.mxu0 0.0
    %4555 = vmatprep.subr.mxu0 %v4527
    %4556 = vmatpush1.msra.mxu0 %v4526
    %4557 = vmatprep.subr.mxu0 %v4521
    %4558 = vmatpush1.msra.mxu0 %v4520
    %4559 = vmatprep.subr.mxu0 %v4515
    %4560 = vmatpush1.msra.mxu0 %v4514
    %4561 = vmatprep.subr.mxu0 %v4509
    %4562 = vmatpush1.msra.mxu0 %v4508
    %4563 = vmatprep.subr.mxu0 %v4503
    %4564 = vmatpush1.msra.mxu0 %v4502
    %4565 = vmatprep.subr.mxu0 %v4497
    %4566 = vmatpush1.msra.mxu0 %v4496
    %4567 = vmatprep.subr.mxu0 %v4491
    %4568 = vmatpush1.msra.mxu0 %v4490
    %4569 = vmatprep.subr.mxu0 %v4485
    %4570 = vmatpush1.msra.mxu0 %v4484
    %4571 = vmatprep.subr.mxu0 %v4479
    %4572 = vmatpush1.msra.mxu0 %v4478
    %4573 = vmatprep.subr.mxu0 0.0
    %4574 = vmatpush2.msra.mxu0 0.0
    %4575 = vmatprep.subr.mxu0 0.0
    %4576 = vmatpush2.msra.mxu0 0.0
    %4577 = vmatprep.subr.mxu0 0.0
    %4578 = vmatpush2.msra.mxu0 0.0
    %4579 = vmatprep.subr.mxu0 0.0
    %4580 = vmatpush2.msra.mxu0 0.0
    %4581 = vmatprep.subr.mxu0 0.0
    %4582 = vmatpush2.msra.mxu0 0.0
    %4583 = vmatprep.subr.mxu0 0.0
    %4584 = vmatpush2.msra.mxu0 0.0
    %4585 = vmatprep.subr.mxu0 0.0
    %4586 = vmatpush2.msra.mxu0 0.0
    %4587 = vmatprep.subr.mxu0 0.0
    %4588 = vmatpush2.msra.mxu0 0.0
    %4589 = vmatprep.subr.mxu0 0.0
    %4590 = vmatpush2.msra.mxu0 0.0
    %4591 = vmatprep.subr.mxu0 0.0
    %4592 = vmatpush2.msra.mxu0 0.0
    %4593 = vmatprep.subr.mxu0 0.0
    %4594 = vmatpush2.msra.mxu0 0.0
    %4595 = vmatprep.subr.mxu0 0.0
    %4596 = vmatpush2.msra.mxu0 0.0
    %4597 = vmatprep.subr.mxu0 0.0
    %4598 = vmatpush2.msra.mxu0 0.0
    %4599 = vmatprep.subr.mxu0 0.0
    %4600 = vmatpush2.msra.mxu0 0.0
    %4601 = vmatprep.subr.mxu0 0.0
    %4602 = vmatpush2.msra.mxu0 0.0
    %4603 = vmatprep.subr.mxu0 0.0
    %4604 = vmatpush2.msra.mxu0 0.0
    %4605 = vmatprep.mubr.f32.mxu0 0.0
    %4606 = vmatmul.mubr.f32.gmra.mxu0 %v4539
    %v4607 = vpop.f32.mrf.mxu0
    %v4608 = vadd.f32 %v4536, %v4607
    %v4609 = vpop.f32.mrf.mxu0
    %v4610 = vadd.f32 %v4536, %v4609
    %4611 = vdwg.mxu0
    %4612 = vmatprep.subr.mxu0 0.0
    %4613 = vmatpush1.msra.mxu0 0.0
    %4614 = vmatprep.subr.mxu0 0.0
    %4615 = vmatpush1.msra.mxu0 0.0
    %4616 = vmatprep.subr.mxu0 0.0
    %4617 = vmatpush1.msra.mxu0 0.0
    %4618 = vmatprep.subr.mxu0 0.0
    %4619 = vmatpush1.msra.mxu0 0.0
    %4620 = vmatprep.subr.mxu0 0.0
    %4621 = vmatpush1.msra.mxu0 0.0
    %4622 = vmatprep.subr.mxu0 0.0
    %4623 = vmatpush1.msra.mxu0 0.0
    %4624 = vmatprep.subr.mxu0 0.0
    %4625 = vmatpush1.msra.mxu0 0.0
    %4626 = vmatprep.subr.mxu0 %v4529
    %4627 = vmatpush1.msra.mxu0 %v4528
    %4628 = vmatprep.subr.mxu0 %v4523
    %4629 = vmatpush1.msra.mxu0 %v4522
    %4630 = vmatprep.subr.mxu0 %v4517
    %4631 = vmatpush1.msra.mxu0 %v4516
    %4632 = vmatprep.subr.mxu0 %v4511
    %4633 = vmatpush1.msra.mxu0 %v4510
    %4634 = vmatprep.subr.mxu0 %v4505
    %4635 = vmatpush1.msra.mxu0 %v4504
    %4636 = vmatprep.subr.mxu0 %v4499
    %4637 = vmatpush1.msra.mxu0 %v4498
    %4638 = vmatprep.subr.mxu0 %v4493
    %4639 = vmatpush1.msra.mxu0 %v4492
    %4640 = vmatprep.subr.mxu0 %v4487
    %4641 = vmatpush1.msra.mxu0 %v4486
    %4642 = vmatprep.subr.mxu0 %v4481
    %4643 = vmatpush1.msra.mxu0 %v4480
    %4644 = vmatprep.subr.mxu0 0.0
    %4645 = vmatpush2.msra.mxu0 0.0
    %4646 = vmatprep.subr.mxu0 0.0
    %4647 = vmatpush2.msra.mxu0 0.0
    %4648 = vmatprep.subr.mxu0 0.0
    %4649 = vmatpush2.msra.mxu0 0.0
    %4650 = vmatprep.subr.mxu0 0.0
    %4651 = vmatpush2.msra.mxu0 0.0
    %4652 = vmatprep.subr.mxu0 0.0
    %4653 = vmatpush2.msra.mxu0 0.0
    %4654 = vmatprep.subr.mxu0 0.0
    %4655 = vmatpush2.msra.mxu0 0.0
    %4656 = vmatprep.subr.mxu0 0.0
    %4657 = vmatpush2.msra.mxu0 0.0
    %4658 = vmatprep.subr.mxu0 0.0
    %4659 = vmatpush2.msra.mxu0 0.0
    %4660 = vmatprep.subr.mxu0 0.0
    %4661 = vmatpush2.msra.mxu0 0.0
    %4662 = vmatprep.subr.mxu0 0.0
    %4663 = vmatpush2.msra.mxu0 0.0
    %4664 = vmatprep.subr.mxu0 0.0
    %4665 = vmatpush2.msra.mxu0 0.0
    %4666 = vmatprep.subr.mxu0 0.0
    %4667 = vmatpush2.msra.mxu0 0.0
    %4668 = vmatprep.subr.mxu0 0.0
    %4669 = vmatpush2.msra.mxu0 0.0
    %4670 = vmatprep.subr.mxu0 0.0
    %4671 = vmatpush2.msra.mxu0 0.0
    %4672 = vmatprep.subr.mxu0 0.0
    %4673 = vmatpush2.msra.mxu0 0.0
    %4674 = vmatprep.subr.mxu0 0.0
    %4675 = vmatpush2.msra.mxu0 0.0
    %4676 = vmatprep.mubr.f32.mxu0 0.0
    %4677 = vmatmul.mubr.f32.gmra.mxu0 %v4539
    %v4678 = vpop.f32.mrf.mxu0
    %v4679 = vadd.f32 %v4536, %v4678
    %v4680 = vpop.f32.mrf.mxu0
    %v4681 = vadd.f32 %v4536, %v4680
    %4682 = vdwg.mxu0
    %4683 = vmatprep.subr.mxu0 0.0
    %4684 = vmatpush1.msra.mxu0 0.0
    %4685 = vmatprep.subr.mxu0 0.0
    %4686 = vmatpush1.msra.mxu0 0.0
    %4687 = vmatprep.subr.mxu0 0.0
    %4688 = vmatpush1.msra.mxu0 0.0
    %4689 = vmatprep.subr.mxu0 0.0
    %4690 = vmatpush1.msra.mxu0 0.0
    %4691 = vmatprep.subr.mxu0 0.0
    %4692 = vmatpush1.msra.mxu0 0.0
    %4693 = vmatprep.subr.mxu0 0.0
    %4694 = vmatpush1.msra.mxu0 0.0
    %4695 = vmatprep.subr.mxu0 0.0
    %4696 = vmatpush1.msra.mxu0 0.0
    %4697 = vmatprep.subr.mxu0 %v4531
    %4698 = vmatpush1.msra.mxu0 %v4530
    %4699 = vmatprep.subr.mxu0 %v4525
    %4700 = vmatpush1.msra.mxu0 %v4524
    %4701 = vmatprep.subr.mxu0 %v4519
    %4702 = vmatpush1.msra.mxu0 %v4518
    %4703 = vmatprep.subr.mxu0 %v4513
    %4704 = vmatpush1.msra.mxu0 %v4512
    %4705 = vmatprep.subr.mxu0 %v4507
    %4706 = vmatpush1.msra.mxu0 %v4506
    %4707 = vmatprep.subr.mxu0 %v4501
    %4708 = vmatpush1.msra.mxu0 %v4500
    %4709 = vmatprep.subr.mxu0 %v4495
    %4710 = vmatpush1.msra.mxu0 %v4494
    %4711 = vmatprep.subr.mxu0 %v4489
    %4712 = vmatpush1.msra.mxu0 %v4488
    %4713 = vmatprep.subr.mxu0 %v4483
    %4714 = vmatpush1.msra.mxu0 %v4482
    %4715 = vmatprep.subr.mxu0 0.0
    %4716 = vmatpush2.msra.mxu0 0.0
    %4717 = vmatprep.subr.mxu0 0.0
    %4718 = vmatpush2.msra.mxu0 0.0
    %4719 = vmatprep.subr.mxu0 0.0
    %4720 = vmatpush2.msra.mxu0 0.0
    %4721 = vmatprep.subr.mxu0 0.0
    %4722 = vmatpush2.msra.mxu0 0.0
    %4723 = vmatprep.subr.mxu0 0.0
    %4724 = vmatpush2.msra.mxu0 0.0
    %4725 = vmatprep.subr.mxu0 0.0
    %4726 = vmatpush2.msra.mxu0 0.0
    %4727 = vmatprep.subr.mxu0 0.0
    %4728 = vmatpush2.msra.mxu0 0.0
    %4729 = vmatprep.subr.mxu0 0.0
    %4730 = vmatpush2.msra.mxu0 0.0
    %4731 = vmatprep.subr.mxu0 0.0
    %4732 = vmatpush2.msra.mxu0 0.0
    %4733 = vmatprep.subr.mxu0 0.0
    %4734 = vmatpush2.msra.mxu0 0.0
    %4735 = vmatprep.subr.mxu0 0.0
    %4736 = vmatpush2.msra.mxu0 0.0
    %4737 = vmatprep.subr.mxu0 0.0
    %4738 = vmatpush2.msra.mxu0 0.0
    %4739 = vmatprep.subr.mxu0 0.0
    %4740 = vmatpush2.msra.mxu0 0.0
    %4741 = vmatprep.subr.mxu0 0.0
    %4742 = vmatpush2.msra.mxu0 0.0
    %4743 = vmatprep.subr.mxu0 0.0
    %4744 = vmatpush2.msra.mxu0 0.0
    %4745 = vmatprep.subr.mxu0 0.0
    %4746 = vmatpush2.msra.mxu0 0.0
    %4747 = vmatprep.mubr.f32.mxu0 0.0
    %4748 = vmatmul.mubr.f32.gmra.mxu0 %v4539
    %v4749 = vpop.f32.mrf.mxu0
    %v4750 = vadd.f32 %v4536, %v4749
    %v4751 = vpop.f32.mrf.mxu0
    %v4752 = vadd.f32 %v4536, %v4751
    %4753 = vdwg.mxu0
    %v4754 = vmax.f32 %v4608, 0.0
    %v4755 = vmax.f32 %v4610, 0.0
    %v4756 = vmax.f32 %v4679, 0.0
    %v4757 = vmax.f32 %v4681, 0.0
    %v4758 = vmax.f32 %v4750, 0.0
    %v4759 = vmax.f32 %v4752, 0.0
    %4766 = vrot.lane.b32.xlu0 %v4754, 127
    %v4767 = vpop.permute.xlu0 %4766
    %4768 = vrot.lane.b32.xlu0 %v4755, 127
    %v4769 = vpop.permute.xlu0 %4768
    %4770 = vrot.lane.b32.xlu0 %v4756, 127
    %v4771 = vpop.permute.xlu0 %4770
    %4772 = vrot.lane.b32.xlu0 %v4757, 127
    %v4773 = vpop.permute.xlu0 %4772
    %4774 = vrot.lane.b32.xlu0 %v4758, 127
    %v4775 = vpop.permute.xlu0 %4774
    %4776 = vrot.lane.b32.xlu0 %v4759, 127
    %v4777 = vpop.permute.xlu0 %4776
    %v4778 = vsel %vm134, %v4767, %v4769
    %v4779 = vsel %vm134, %v4769, %v4771
    %v4780 = vsel %vm134, %v4771, %v4773
    %v4781 = vsel %vm134, %v4773, %v4775
    %v4782 = vsel %vm134, %v4775, %v4777
    %v4789 = vmax.f32 %v4754, %v4778
    %v4790 = vmax.f32 %v4755, %v4779
    %v4791 = vmax.f32 %v4756, %v4780
    %v4792 = vmax.f32 %v4757, %v4781
    %v4793 = vmax.f32 %v4758, %v4782
    %v4794 = vmax.f32 %v4759, %v4777
    %4795 = vrot.lane.b32.xlu0 %v4754, 126
    %v4796 = vpop.permute.xlu0 %4795
    %4797 = vrot.lane.b32.xlu0 %v4755, 126
    %v4798 = vpop.permute.xlu0 %4797
    %4799 = vrot.lane.b32.xlu0 %v4756, 126
    %v4800 = vpop.permute.xlu0 %4799
    %4801 = vrot.lane.b32.xlu0 %v4757, 126
    %v4802 = vpop.permute.xlu0 %4801
    %4803 = vrot.lane.b32.xlu0 %v4758, 126
    %v4804 = vpop.permute.xlu0 %4803
    %4805 = vrot.lane.b32.xlu0 %v4759, 126
    %v4806 = vpop.permute.xlu0 %4805
    %v4807 = vsel %vm184, %v4796, %v4798
    %v4808 = vsel %vm184, %v4798, %v4800
    %v4809 = vsel %vm184, %v4800, %v4802
    %v4810 = vsel %vm184, %v4802, %v4804
    %v4811 = vsel %vm184, %v4804, %v4806
    %v4818 = vmax.f32 %v4789, %v4807
    %v4819 = vmax.f32 %v4790, %v4808
    %v4820 = vmax.f32 %v4791, %v4809
    %v4821 = vmax.f32 %v4792, %v4810
    %v4822 = vmax.f32 %v4793, %v4811
    %v4823 = vmax.f32 %v4794, %v4806
    %4830 = vrot.lane.b32.xlu0 %v4818, 111
    %v4831 = vpop.permute.xlu0 %4830
    %4832 = vrot.lane.b32.xlu0 %v4819, 111
    %v4833 = vpop.permute.xlu0 %4832
    %4834 = vrot.lane.b32.xlu0 %v4820, 111
    %v4835 = vpop.permute.xlu0 %4834
    %4836 = vrot.lane.b32.xlu0 %v4821, 111
    %v4837 = vpop.permute.xlu0 %4836
    %4838 = vrot.lane.b32.xlu0 %v4822, 111
    %v4839 = vpop.permute.xlu0 %4838
    %4840 = vrot.lane.b32.xlu0 %v4823, 111
    %v4841 = vpop.permute.xlu0 %4840
    %v4842 = vsel %vm4278, %v4831, %v4833
    %v4843 = vsel %vm4278, %v4833, %v4835
    %v4844 = vsel %vm4278, %v4835, %v4837
    %v4845 = vsel %vm4278, %v4837, %v4839
    %v4846 = vsel %vm4278, %v4839, %v4841
    %v4853 = vmax.f32 %v4818, %v4842
    %v4854 = vmax.f32 %v4819, %v4843
    %v4855 = vmax.f32 %v4820, %v4844
    %v4856 = vmax.f32 %v4821, %v4845
    %v4857 = vmax.f32 %v4822, %v4846
    %v4858 = vmax.f32 %v4823, %v4841
    %4859 = vrot.lane.b32.xlu0 %v4818, 94
    %v4860 = vpop.permute.xlu0 %4859
    %4861 = vrot.lane.b32.xlu0 %v4819, 94
    %v4862 = vpop.permute.xlu0 %4861
    %4863 = vrot.lane.b32.xlu0 %v4820, 94
    %v4864 = vpop.permute.xlu0 %4863
    %4865 = vrot.lane.b32.xlu0 %v4821, 94
    %v4866 = vpop.permute.xlu0 %4865
    %4867 = vrot.lane.b32.xlu0 %v4822, 94
    %v4868 = vpop.permute.xlu0 %4867
    %4869 = vrot.lane.b32.xlu0 %v4823, 94
    %v4870 = vpop.permute.xlu0 %4869
    %v4871 = vsel %vm234, %v4860, %v4862
    %v4872 = vsel %vm234, %v4862, %v4864
    %v4873 = vsel %vm234, %v4864, %v4866
    %v4874 = vsel %vm234, %v4866, %v4868
    %v4875 = vsel %vm234, %v4868, %v4870
    %v4882 = vmax.f32 %v4853, %v4871
    %v4883 = vmax.f32 %v4854, %v4872
    %v4884 = vmax.f32 %v4855, %v4873
    %v4885 = vmax.f32 %v4856, %v4874
    %v4886 = vmax.f32 %v4857, %v4875
    %v4887 = vmax.f32 %v4858, %v4870
    %4888 = vst [vmem:[#allocation2] sm:$0xff] %v4882
    %4889 = vst [vmem:[#allocation2 + $0x8] sm:$0xff] %v4883
    %vm4890 = vcmask 269312
    %4891 = vst.msk [vmem:[#allocation2 + $0x10] sm:$0xff] %vm4890, %v4884
    %4892 = vst [vmem:[#allocation2 + $0xa0] sm:$0xff] %v4885
    %4893 = vst [vmem:[#allocation2 + $0xa8] sm:$0xff] %v4886
    %4894 = vst.msk [vmem:[#allocation2 + $0xb0] sm:$0xff] %vm4890, %v4887
    %v4895 = vld [vmem:[#allocation2] sm:$0xff]
    %v4896 = vld [vmem:[#allocation2 + $0x8] sm:$0xff]
    %v4897 = vld [vmem:[#allocation2 + $0x10] sm:$0xff]
    %v4898 = vld [vmem:[#allocation2 + $0xa0] sm:$0xff]
    %v4899 = vld [vmem:[#allocation2 + $0xa8] sm:$0xff]
    %v4900 = vld [vmem:[#allocation2 + $0xb0] sm:$0xff]
    %v4901 = vpack.c.bf16 %v4898, %v4895
    %v4902 = vpack.c.bf16 %v4899, %v4896
    %v4903 = vpack.c.bf16 %v4900, %v4897
    %v4904 = vld [vmem:[%s12] sm:$0xf]
    %v4905 = vld [vmem:[%s12 + $0x4] sm:$0xf]
    %v4906 = vld [vmem:[%s12 + $0x8] sm:$0xf]
    %v4907 = vld [vmem:[%s12 + $0xc] sm:$0xf]
    %v4908 = vld [vmem:[%s12 + $0x10] sm:$0xf]
    %v4909 = vld [vmem:[%s12 + $0x14] sm:$0xf]
    %v4910 = vld [vmem:[%s12 + $0x18] sm:$0xf]
    %v4911 = vld [vmem:[%s12 + $0x1c] sm:$0xf]
    %v4912 = vld [vmem:[%s12 + $0x20] sm:$0xf]
    %v4913 = vld [vmem:[%s12 + $0x24] sm:$0xf]
    %v4914 = vld [vmem:[%s12 + $0x28] sm:$0xf]
    %v4915 = vld [vmem:[%s12 + $0x2c] sm:$0xf]
    %v4916 = vld [vmem:[%s12 + $0x30] sm:$0xf]
    %v4917 = vld [vmem:[%s12 + $0x34] sm:$0xf]
    %v4918 = vld [vmem:[%s12 + $0x38] sm:$0xf]
    %v4919 = vld [vmem:[%s12 + $0x3c] sm:$0xf]
    %v4920 = vld [vmem:[%s12 + $0x40] sm:$0xf]
    %v4921 = vld [vmem:[%s12 + $0x44] sm:$0xf]
    %v4922 = vld [vmem:[%s12 + $0x48] sm:$0xf]
    %v4923 = vld [vmem:[%s12 + $0x4c] sm:$0xf]
    %v4924 = vld [vmem:[%s12 + $0x50] sm:$0xf]
    %v4925 = vld [vmem:[%s12 + $0x54] sm:$0xf]
    %v4926 = vld [vmem:[%s12 + $0x58] sm:$0xf]
    %v4927 = vld [vmem:[%s12 + $0x5c] sm:$0xf]
    %v4928 = vld [vmem:[%s12 + $0x60] sm:$0xf]
    %v4929 = vld [vmem:[%s12 + $0x64] sm:$0xf]
    %v4930 = vld [vmem:[%s12 + $0x68] sm:$0xf]
    %v4931 = vld [vmem:[%s12 + $0x6c] sm:$0xf]
    %v4932 = vld [vmem:[%s12 + $0x70] sm:$0xf]
    %v4933 = vld [vmem:[%s12 + $0x74] sm:$0xf]
    %v4934 = vld [vmem:[%s12 + $0x78] sm:$0xf]
    %v4935 = vld [vmem:[%s12 + $0x7c] sm:$0xf]
    %v4936 = vld [vmem:[%s12 + $0x80] sm:$0xf]
    %v4937 = vld [vmem:[%s12 + $0x84] sm:$0xf]
    %v4938 = vld [vmem:[%s12 + $0x88] sm:$0xf]
    %v4939 = vld [vmem:[%s12 + $0x8c] sm:$0xf]
    %v4940 = vld [vmem:[%s12 + $0x90] sm:$0x1]
    %v4978 = vunpack.c.l.b16 %v4904
    %v4979 = vunpack.c.l.b16 %v4905
    %v4980 = vunpack.c.l.b16 %v4906
    %v4981 = vunpack.c.l.b16 %v4907
    %v4982 = vunpack.c.l.b16 %v4908
    %v4983 = vunpack.c.l.b16 %v4909
    %v4984 = vunpack.c.l.b16 %v4910
    %v4985 = vunpack.c.l.b16 %v4911
    %v4986 = vunpack.c.l.b16 %v4912
    %v4987 = vunpack.c.l.b16 %v4913
    %v4988 = vunpack.c.l.b16 %v4914
    %v4989 = vunpack.c.l.b16 %v4915
    %v4990 = vunpack.c.l.b16 %v4916
    %v4991 = vunpack.c.l.b16 %v4917
    %v4992 = vunpack.c.l.b16 %v4918
    %v4993 = vunpack.c.l.b16 %v4919
    %v4994 = vunpack.c.l.b16 %v4920
    %v4995 = vunpack.c.l.b16 %v4921
    %v4996 = vunpack.c.l.b16 %v4922
    %v4997 = vunpack.c.l.b16 %v4923
    %v4998 = vunpack.c.l.b16 %v4924
    %v4999 = vunpack.c.l.b16 %v4925
    %v5000 = vunpack.c.l.b16 %v4926
    %v5001 = vunpack.c.l.b16 %v4927
    %v5002 = vunpack.c.l.b16 %v4928
    %v5003 = vunpack.c.l.b16 %v4929
    %v5004 = vunpack.c.l.b16 %v4930
    %v5005 = vunpack.c.l.b16 %v4931
    %v5006 = vunpack.c.l.b16 %v4932
    %v5007 = vunpack.c.l.b16 %v4933
    %v5008 = vunpack.c.l.b16 %v4934
    %v5009 = vunpack.c.l.b16 %v4935
    %v5010 = vunpack.c.l.b16 %v4936
    %v5011 = vunpack.c.l.b16 %v4937
    %v5012 = vunpack.c.l.b16 %v4938
    %v5013 = vunpack.c.l.b16 %v4939
    %v5014 = vunpack.c.l.b16 %v4940
    %v5015 = vpack.c.b16 %v4979, %v4978
    %v5016 = vpack.c.b16 %v4981, %v4980
    %v5017 = vpack.c.b16 %v4983, %v4982
    %v5018 = vpack.c.b16 %v4985, %v4984
    %v5019 = vpack.c.b16 %v4987, %v4986
    %v5020 = vpack.c.b16 %v4989, %v4988
    %v5021 = vpack.c.b16 %v4991, %v4990
    %v5022 = vpack.c.b16 %v4993, %v4992
    %v5023 = vpack.c.b16 %v4995, %v4994
    %v5024 = vpack.c.b16 %v4997, %v4996
    %v5025 = vpack.c.b16 %v4999, %v4998
    %v5026 = vpack.c.b16 %v5001, %v5000
    %v5027 = vpack.c.b16 %v5003, %v5002
    %v5028 = vpack.c.b16 %v5005, %v5004
    %v5029 = vpack.c.b16 %v5007, %v5006
    %v5030 = vpack.c.b16 %v5009, %v5008
    %v5031 = vpack.c.b16 %v5011, %v5010
    %v5032 = vpack.c.b16 %v5013, %v5012
    %v5033 = vpack.c.b16 %v5014, %v5014
    %v5053 = vsel %vm4890, %v4903, 0
    %vm5055 = vcmask 1040384
    %v5056 = vsel 0, 4294967295, 65535
    %v5057 = vsel %vm5055, %v5056, 0
    %v5059 = vand.u32 %v5033, %v5057
    %5061 = vmatprep.subr.bf16.mxu0 0
    %5062 = vmatpush1.bf16.msra.mxu0 %v5022
    %5063 = vmatprep.subr.bf16.mxu0 0
    %5064 = vmatpush1.bf16.msra.mxu0 %v5021
    %5065 = vmatprep.subr.bf16.mxu0 0
    %5066 = vmatpush1.bf16.msra.mxu0 %v5020
    %5067 = vmatprep.subr.bf16.mxu0 0
    %5068 = vmatpush1.bf16.msra.mxu0 %v5019
    %5069 = vmatprep.subr.bf16.mxu0 0
    %5070 = vmatpush1.bf16.msra.mxu0 %v5018
    %5071 = vmatprep.subr.bf16.mxu0 0
    %5072 = vmatpush1.bf16.msra.mxu0 %v5017
    %5073 = vmatprep.subr.bf16.mxu0 0
    %5074 = vmatpush1.bf16.msra.mxu0 %v5016
    %5075 = vmatprep.subr.bf16.mxu0 0
    %5076 = vmatpush1.bf16.msra.mxu0 %v5015
    %5077 = vmatprep.subr.bf16.mxu0 0
    %5078 = vmatpush2.bf16.msra.mxu0 %v5030
    %5079 = vmatprep.subr.bf16.mxu0 0
    %5080 = vmatpush2.bf16.msra.mxu0 %v5029
    %5081 = vmatprep.subr.bf16.mxu0 0
    %5082 = vmatpush2.bf16.msra.mxu0 %v5028
    %5083 = vmatprep.subr.bf16.mxu0 0
    %5084 = vmatpush2.bf16.msra.mxu0 %v5027
    %5085 = vmatprep.subr.bf16.mxu0 0
    %5086 = vmatpush2.bf16.msra.mxu0 %v5026
    %5087 = vmatprep.subr.bf16.mxu0 0
    %5088 = vmatpush2.bf16.msra.mxu0 %v5025
    %5089 = vmatprep.subr.bf16.mxu0 0
    %5090 = vmatpush2.bf16.msra.mxu0 %v5024
    %5091 = vmatprep.subr.bf16.mxu0 0
    %5092 = vmatpush2.bf16.msra.mxu0 %v5023
    %5093 = vmatprep.mubr.bf16.mxu0 %v4902
    %5094 = vmatmul.mubr.bf16.gmra.mxu0 %v4901
    %v5095 = vpop.f32.mrf.mxu0
    %v5096 = vadd.f32 0.0, %v5095
    %v5097 = vpop.f32.mrf.mxu0
    %v5098 = vpop.f32.mrf.mxu0
    %v5099 = vadd.f32 0.0, %v5098
    %v5100 = vpop.f32.mrf.mxu0
    %5101 = vdwg.mxu0
    %5102 = vmatprep.subr.bf16.mxu0 0
    %5103 = vmatpush1.bf16.msra.mxu0 0
    %5104 = vmatprep.subr.bf16.mxu0 0
    %5105 = vmatpush1.bf16.msra.mxu0 0
    %5106 = vmatprep.subr.bf16.mxu0 0
    %5107 = vmatpush1.bf16.msra.mxu0 0
    %5108 = vmatprep.subr.bf16.mxu0 0
    %5109 = vmatpush1.bf16.msra.mxu0 0
    %5110 = vmatprep.subr.bf16.mxu0 0
    %5111 = vmatpush1.bf16.msra.mxu0 0
    %5112 = vmatprep.subr.bf16.mxu0 0
    %5113 = vmatpush1.bf16.msra.mxu0 %v5059
    %5114 = vmatprep.subr.bf16.mxu0 0
    %5115 = vmatpush1.bf16.msra.mxu0 %v5032
    %5116 = vmatprep.subr.bf16.mxu0 0
    %5117 = vmatpush1.bf16.msra.mxu0 %v5031
    %5118 = vmatprep.subr.bf16.mxu0 0
    %5119 = vmatpush2.bf16.msra.mxu0 0
    %5120 = vmatprep.subr.bf16.mxu0 0
    %5121 = vmatpush2.bf16.msra.mxu0 0
    %5122 = vmatprep.subr.bf16.mxu0 0
    %5123 = vmatpush2.bf16.msra.mxu0 0
    %5124 = vmatprep.subr.bf16.mxu0 0
    %5125 = vmatpush2.bf16.msra.mxu0 0
    %5126 = vmatprep.subr.bf16.mxu0 0
    %5127 = vmatpush2.bf16.msra.mxu0 0
    %5128 = vmatprep.subr.bf16.mxu0 0
    %5129 = vmatpush2.bf16.msra.mxu0 0
    %5130 = vmatprep.subr.bf16.mxu0 0
    %5131 = vmatpush2.bf16.msra.mxu0 0
    %5132 = vmatprep.subr.bf16.mxu0 0
    %5133 = vmatpush2.bf16.msra.mxu0 0
    %5134 = vmatprep.mubr.bf16.mxu0 0
    %5135 = vmatmul.mubr.bf16.gmra.mxu0 %v5053
    %v5136 = vpop.f32.mrf.mxu0
    %v5137 = vadd.f32 %v5096, %v5136
    %v5138 = vpop.f32.mrf.mxu0
    %v5139 = vpop.f32.mrf.mxu0
    %v5140 = vadd.f32 %v5099, %v5139
    %v5141 = vpop.f32.mrf.mxu0
    %5142 = vdwg.mxu0
    %vm5143 = vcmask 826368
    %5144 = vst.msk [vmem:[#allocation2] sm:$0xff] %vm5143, %v5137
    %5146 = vrot.lane.b32.xlu0 %v5137, 127
    %v5147 = vpop.permute.xlu0 %5146
    %5149 = vst.msk [vmem:[#allocation2 + $0xa0] sm:$0xff] %vm5143, %v5147
    %5150 = vrot.lane.b32.xlu0 %v5137, 126
    %v5151 = vpop.permute.xlu0 %5150
    %5153 = vst.msk [vmem:[#allocation2 + $0x140] sm:$0xff] %vm5143, %v5151
    %5154 = vrot.lane.b32.xlu0 %v5137, 119
    %v5155 = vpop.permute.xlu0 %5154
    %5157 = vst.msk [vmem:[#allocation2 + $0x1e0] sm:$0xff] %vm5143, %v5155
    %5158 = vrot.lane.b32.xlu0 %v5137, 118
    %v5159 = vpop.permute.xlu0 %5158
    %5161 = vst.msk [vmem:[#allocation2 + $0x280] sm:$0xff] %vm5143, %v5159
    %5162 = vrot.lane.b32.xlu0 %v5137, 117
    %v5163 = vpop.permute.xlu0 %5162
    %5165 = vst.msk [vmem:[#allocation2 + $0x320] sm:$0xff] %vm5143, %v5163
    %5166 = vrot.lane.b32.xlu0 %v5137, 110
    %v5167 = vpop.permute.xlu0 %5166
    %5169 = vst.msk [vmem:[#allocation2 + $0x3c0] sm:$0xff] %vm5143, %v5167
    %5170 = vrot.lane.b32.xlu0 %v5137, 109
    %v5171 = vpop.permute.xlu0 %5170
    %5173 = vst.msk [vmem:[#allocation2 + $0x460] sm:$0xff] %vm5143, %v5171
    %5174 = vrot.lane.b32.xlu0 %v5137, 108
    %v5175 = vpop.permute.xlu0 %5174
    %5177 = vst.msk [vmem:[#allocation2 + $0x500] sm:$0xff] %vm5143, %v5175
    %5178 = vst.msk [vmem:[#allocation2 + $0x8] sm:$0xff] %vm5143, %v5140
    %5180 = vrot.lane.b32.xlu0 %v5140, 127
    %v5181 = vpop.permute.xlu0 %5180
    %5183 = vst.msk [vmem:[#allocation2 + $0xa8] sm:$0xff] %vm5143, %v5181
    %5184 = vrot.lane.b32.xlu0 %v5140, 126
    %v5185 = vpop.permute.xlu0 %5184
    %5187 = vst.msk [vmem:[#allocation2 + $0x148] sm:$0xff] %vm5143, %v5185
    %5188 = vrot.lane.b32.xlu0 %v5140, 119
    %v5189 = vpop.permute.xlu0 %5188
    %5191 = vst.msk [vmem:[#allocation2 + $0x1e8] sm:$0xff] %vm5143, %v5189
    %5192 = vrot.lane.b32.xlu0 %v5140, 118
    %v5193 = vpop.permute.xlu0 %5192
    %5195 = vst.msk [vmem:[#allocation2 + $0x288] sm:$0xff] %vm5143, %v5193
    %5196 = vrot.lane.b32.xlu0 %v5140, 117
    %v5197 = vpop.permute.xlu0 %5196
    %5199 = vst.msk [vmem:[#allocation2 + $0x328] sm:$0xff] %vm5143, %v5197
    %5200 = vrot.lane.b32.xlu0 %v5140, 110
    %v5201 = vpop.permute.xlu0 %5200
    %5203 = vst.msk [vmem:[#allocation2 + $0x3c8] sm:$0xff] %vm5143, %v5201
    %5204 = vrot.lane.b32.xlu0 %v5140, 109
    %v5205 = vpop.permute.xlu0 %5204
    %5207 = vst.msk [vmem:[#allocation2 + $0x468] sm:$0xff] %vm5143, %v5205
    %5208 = vrot.lane.b32.xlu0 %v5140, 108
    %v5209 = vpop.permute.xlu0 %5208
    %5211 = vst.msk [vmem:[#allocation2 + $0x508] sm:$0xff] %vm5143, %v5209
    %v5212 = vld [vmem:[%s5] sm:$0xff]
    %v5213 = vld [vmem:[%s5 + $0x8] sm:$0xff]
    %v5214 = vld [vmem:[#allocation2] sm:$0xff]
    %v5215 = vld [vmem:[#allocation2 + $0x8] sm:$0xff]
    %v5216 = vld [vmem:[#allocation2 + $0xa0] sm:$0xff]
    %v5217 = vld [vmem:[#allocation2 + $0xa8] sm:$0xff]
    %v5218 = vld [vmem:[#allocation2 + $0x140] sm:$0xff]
    %v5219 = vld [vmem:[#allocation2 + $0x148] sm:$0xff]
    %v5220 = vld [vmem:[#allocation2 + $0x1e0] sm:$0xff]
    %v5221 = vld [vmem:[#allocation2 + $0x1e8] sm:$0xff]
    %v5222 = vld [vmem:[#allocation2 + $0x280] sm:$0xff]
    %v5223 = vld [vmem:[#allocation2 + $0x288] sm:$0xff]
    %v5224 = vld [vmem:[#allocation2 + $0x320] sm:$0xff]
    %v5225 = vld [vmem:[#allocation2 + $0x328] sm:$0xff]
    %v5226 = vld [vmem:[#allocation2 + $0x3c0] sm:$0xff]
    %v5227 = vld [vmem:[#allocation2 + $0x3c8] sm:$0xff]
    %v5228 = vld [vmem:[#allocation2 + $0x460] sm:$0xff]
    %v5229 = vld [vmem:[#allocation2 + $0x468] sm:$0xff]
    %v5230 = vld [vmem:[#allocation2 + $0x500] sm:$0xff]
    %v5231 = vld [vmem:[#allocation2 + $0x508] sm:$0xff]
    %v5232 = vld [vmem:[%s6] sm:$0xff]
    %v5233 = vld [vmem:[%s6 + $0x8] sm:$0xff]
    %5235 = vset.pattern.permute.xlu0 0
    %5236 = vperm.xlu0 %5235, %v5232
    %v5237 = vpop.permute.xlu0 %5236
    %5240 = vset.pattern.permute.xlu0 0
    %5241 = vperm.xlu0 %5240, %v5233
    %v5242 = vpop.permute.xlu0 %5241
    %v5245 = vsel %vm1133, %v5212, 0
    %v5248 = vsel %vm1133, %v5213, 0
    %5250 = vmatprep.subr.mxu0 0.0
    %5251 = vmatpush1.msra.mxu0 0.0
    %5252 = vmatprep.subr.mxu0 0.0
    %5253 = vmatpush1.msra.mxu0 0.0
    %5254 = vmatprep.subr.mxu0 0.0
    %5255 = vmatpush1.msra.mxu0 0.0
    %5256 = vmatprep.subr.mxu0 0.0
    %5257 = vmatpush1.msra.mxu0 0.0
    %5258 = vmatprep.subr.mxu0 0.0
    %5259 = vmatpush1.msra.mxu0 0.0
    %5260 = vmatprep.subr.mxu0 0.0
    %5261 = vmatpush1.msra.mxu0 0.0
    %5262 = vmatprep.subr.mxu0 0.0
    %5263 = vmatpush1.msra.mxu0 0.0
    %5264 = vmatprep.subr.mxu0 %v5231
    %5265 = vmatpush1.msra.mxu0 %v5230
    %5266 = vmatprep.subr.mxu0 %v5229
    %5267 = vmatpush1.msra.mxu0 %v5228
    %5268 = vmatprep.subr.mxu0 %v5227
    %5269 = vmatpush1.msra.mxu0 %v5226
    %5270 = vmatprep.subr.mxu0 %v5225
    %5271 = vmatpush1.msra.mxu0 %v5224
    %5272 = vmatprep.subr.mxu0 %v5223
    %5273 = vmatpush1.msra.mxu0 %v5222
    %5274 = vmatprep.subr.mxu0 %v5221
    %5275 = vmatpush1.msra.mxu0 %v5220
    %5276 = vmatprep.subr.mxu0 %v5219
    %5277 = vmatpush1.msra.mxu0 %v5218
    %5278 = vmatprep.subr.mxu0 %v5217
    %5279 = vmatpush1.msra.mxu0 %v5216
    %5280 = vmatprep.subr.mxu0 %v5215
    %5281 = vmatpush1.msra.mxu0 %v5214
    %5282 = vmatprep.subr.mxu0 0.0
    %5283 = vmatpush2.msra.mxu0 0.0
    %5284 = vmatprep.subr.mxu0 0.0
    %5285 = vmatpush2.msra.mxu0 0.0
    %5286 = vmatprep.subr.mxu0 0.0
    %5287 = vmatpush2.msra.mxu0 0.0
    %5288 = vmatprep.subr.mxu0 0.0
    %5289 = vmatpush2.msra.mxu0 0.0
    %5290 = vmatprep.subr.mxu0 0.0
    %5291 = vmatpush2.msra.mxu0 0.0
    %5292 = vmatprep.subr.mxu0 0.0
    %5293 = vmatpush2.msra.mxu0 0.0
    %5294 = vmatprep.subr.mxu0 0.0
    %5295 = vmatpush2.msra.mxu0 0.0
    %5296 = vmatprep.subr.mxu0 0.0
    %5297 = vmatpush2.msra.mxu0 0.0
    %5298 = vmatprep.subr.mxu0 0.0
    %5299 = vmatpush2.msra.mxu0 0.0
    %5300 = vmatprep.subr.mxu0 0.0
    %5301 = vmatpush2.msra.mxu0 0.0
    %5302 = vmatprep.subr.mxu0 0.0
    %5303 = vmatpush2.msra.mxu0 0.0
    %5304 = vmatprep.subr.mxu0 0.0
    %5305 = vmatpush2.msra.mxu0 0.0
    %5306 = vmatprep.subr.mxu0 0.0
    %5307 = vmatpush2.msra.mxu0 0.0
    %5308 = vmatprep.subr.mxu0 0.0
    %5309 = vmatpush2.msra.mxu0 0.0
    %5310 = vmatprep.subr.mxu0 0.0
    %5311 = vmatpush2.msra.mxu0 0.0
    %5312 = vmatprep.subr.mxu0 0.0
    %5313 = vmatpush2.msra.mxu0 0.0
    %5314 = vmatprep.mubr.f32.mxu0 0.0
    %5315 = vmatmul.mubr.f32.gmra.mxu0 %v5245
    %v5316 = vpop.f32.mrf.mxu0
    %v5317 = vadd.f32 %v5237, %v5316
    %v5318 = vpop.f32.mrf.mxu0
    %v5319 = vadd.f32 %v5237, %v5318
    %5320 = vmatprep.mubr.f32.mxu0 0.0
    %5321 = vmatmul.mubr.f32.gmra.mxu0 %v5248
    %v5322 = vpop.f32.mrf.mxu0
    %v5323 = vadd.f32 %v5242, %v5322
    %v5324 = vpop.f32.mrf.mxu0
    %v5325 = vadd.f32 %v5242, %v5324
    %5326 = vdwg.mxu0
    %v5327 = vmax.f32 %v5317, 0.0
    %v5328 = vmax.f32 %v5319, 0.0
    %v5329 = vmax.f32 %v5323, 0.0
    %v5330 = vmax.f32 %v5325, 0.0
    %5335 = vrot.lane.b32.xlu0 %v5327, 127
    %v5336 = vpop.permute.xlu0 %5335
    %5337 = vrot.lane.b32.xlu0 %v5328, 127
    %v5338 = vpop.permute.xlu0 %5337
    %5339 = vrot.lane.b32.xlu0 %v5329, 127
    %v5340 = vpop.permute.xlu0 %5339
    %5341 = vrot.lane.b32.xlu0 %v5330, 127
    %v5342 = vpop.permute.xlu0 %5341
    %v5343 = vsel %vm134, %v5336, %v5338
    %v5344 = vsel %vm134, %v5340, %v5342
    %v5349 = vmax.f32 %v5327, %v5343
    %v5350 = vmax.f32 %v5328, %v5338
    %v5351 = vmax.f32 %v5329, %v5344
    %v5352 = vmax.f32 %v5330, %v5342
    %5353 = vrot.lane.b32.xlu0 %v5327, 126
    %v5354 = vpop.permute.xlu0 %5353
    %5355 = vrot.lane.b32.xlu0 %v5328, 126
    %v5356 = vpop.permute.xlu0 %5355
    %5357 = vrot.lane.b32.xlu0 %v5329, 126
    %v5358 = vpop.permute.xlu0 %5357
    %5359 = vrot.lane.b32.xlu0 %v5330, 126
    %v5360 = vpop.permute.xlu0 %5359
    %v5361 = vsel %vm184, %v5354, %v5356
    %v5362 = vsel %vm184, %v5358, %v5360
    %v5367 = vmax.f32 %v5349, %v5361
    %v5368 = vmax.f32 %v5350, %v5356
    %v5369 = vmax.f32 %v5351, %v5362
    %v5370 = vmax.f32 %v5352, %v5360
    %5375 = vrot.lane.b32.xlu0 %v5367, 119
    %v5376 = vpop.permute.xlu0 %5375
    %5377 = vrot.lane.b32.xlu0 %v5368, 119
    %v5378 = vpop.permute.xlu0 %5377
    %5379 = vrot.lane.b32.xlu0 %v5369, 119
    %v5380 = vpop.permute.xlu0 %5379
    %5381 = vrot.lane.b32.xlu0 %v5370, 119
    %v5382 = vpop.permute.xlu0 %5381
    %vm5383 = vcmask 973824
    %v5384 = vsel %vm5383, %v5376, %v5378
    %v5385 = vsel %vm5383, %v5380, %v5382
    %v5390 = vmax.f32 %v5367, %v5384
    %v5391 = vmax.f32 %v5368, %v5378
    %v5392 = vmax.f32 %v5369, %v5385
    %v5393 = vmax.f32 %v5370, %v5382
    %5394 = vrot.lane.b32.xlu0 %v5367, 110
    %v5395 = vpop.permute.xlu0 %5394
    %5396 = vrot.lane.b32.xlu0 %v5368, 110
    %v5397 = vpop.permute.xlu0 %5396
    %5398 = vrot.lane.b32.xlu0 %v5369, 110
    %v5399 = vpop.permute.xlu0 %5398
    %5400 = vrot.lane.b32.xlu0 %v5370, 110
    %v5401 = vpop.permute.xlu0 %5400
    %v5402 = vsel %vm4293, %v5395, %v5397
    %v5403 = vsel %vm4293, %v5399, %v5401
    %v5408 = vmax.f32 %v5390, %v5402
    %v5409 = vmax.f32 %v5391, %v5397
    %v5410 = vmax.f32 %v5392, %v5403
    %v5411 = vmax.f32 %v5393, %v5401
    %vm5412 = vcmask 662528
    %5413 = vst.msk [vmem:[#allocation2] sm:$0xff] %vm5412, %v5408
    %5414 = vst.msk [vmem:[#allocation2 + $0xa0] sm:$0xff] %vm5412, %v5410
    %5415 = vst.msk [vmem:[#allocation2 + $0x140] sm:$0xff] %vm5412, %v5409
    %5416 = vst.msk [vmem:[#allocation2 + $0x1e0] sm:$0xff] %vm5412, %v5411
    %v5417 = vld [vmem:[#allocation2] sm:$0xff]
    %v5418 = vld [vmem:[#allocation2 + $0xa0] sm:$0xff]
    %v5419 = vld [vmem:[#allocation2 + $0x140] sm:$0xff]
    %v5420 = vld [vmem:[#allocation2 + $0x1e0] sm:$0xff]
    %v5421 = vpack.c.bf16 %v5418, %v5417
    %v5422 = vpack.c.bf16 %v5420, %v5419
    %v5423 = vld [vmem:[%s13] sm:$0xf]
    %v5424 = vld [vmem:[%s13 + $0x4] sm:$0xf]
    %v5425 = vld [vmem:[%s13 + $0x8] sm:$0xf]
    %v5426 = vld [vmem:[%s13 + $0xc] sm:$0xf]
    %v5427 = vld [vmem:[%s13 + $0x10] sm:$0xf]
    %v5428 = vld [vmem:[%s13 + $0x14] sm:$0xf]
    %v5429 = vld [vmem:[%s13 + $0x18] sm:$0xf]
    %v5430 = vld [vmem:[%s13 + $0x1c] sm:$0xf]
    %v5431 = vld [vmem:[%s13 + $0x20] sm:$0xf]
    %v5432 = vld [vmem:[%s13 + $0x24] sm:$0xf]
    %v5433 = vld [vmem:[%s13 + $0x28] sm:$0x1]
    %v5445 = vunpack.c.l.b16 %v5423
    %v5446 = vunpack.c.l.b16 %v5424
    %v5447 = vunpack.c.l.b16 %v5425
    %v5448 = vunpack.c.l.b16 %v5426
    %v5449 = vunpack.c.l.b16 %v5427
    %v5450 = vunpack.c.l.b16 %v5428
    %v5451 = vunpack.c.l.b16 %v5429
    %v5452 = vunpack.c.l.b16 %v5430
    %v5453 = vunpack.c.l.b16 %v5431
    %v5454 = vunpack.c.l.b16 %v5432
    %v5455 = vunpack.c.l.b16 %v5433
    %v5456 = vpack.c.b16 %v5446, %v5445
    %v5457 = vpack.c.b16 %v5448, %v5447
    %v5458 = vpack.c.b16 %v5450, %v5449
    %v5459 = vpack.c.b16 %v5452, %v5451
    %v5460 = vpack.c.b16 %v5454, %v5453
    %v5461 = vpack.c.b16 %v5455, %v5455
    %v5468 = vsel %vm5412, %v5421, 0
    %v5471 = vsel %vm5412, %v5422, 0
    %v5474 = vand.u32 %v5461, %v5057
    %5476 = vmatprep.subr.bf16.mxu0 0
    %5477 = vmatpush1.bf16.msra.mxu0 0
    %5478 = vmatprep.subr.bf16.mxu0 0
    %5479 = vmatpush1.bf16.msra.mxu0 0
    %5480 = vmatprep.subr.bf16.mxu0 0
    %5481 = vmatpush1.bf16.msra.mxu0 %v5474
    %5482 = vmatprep.subr.bf16.mxu0 0
    %5483 = vmatpush1.bf16.msra.mxu0 %v5460
    %5484 = vmatprep.subr.bf16.mxu0 0
    %5485 = vmatpush1.bf16.msra.mxu0 %v5459
    %5486 = vmatprep.subr.bf16.mxu0 0
    %5487 = vmatpush1.bf16.msra.mxu0 %v5458
    %5488 = vmatprep.subr.bf16.mxu0 0
    %5489 = vmatpush1.bf16.msra.mxu0 %v5457
    %5490 = vmatprep.subr.bf16.mxu0 0
    %5491 = vmatpush1.bf16.msra.mxu0 %v5456
    %5492 = vmatprep.subr.bf16.mxu0 0
    %5493 = vmatpush2.bf16.msra.mxu0 0
    %5494 = vmatprep.subr.bf16.mxu0 0
    %5495 = vmatpush2.bf16.msra.mxu0 0
    %5496 = vmatprep.subr.bf16.mxu0 0
    %5497 = vmatpush2.bf16.msra.mxu0 0
    %5498 = vmatprep.subr.bf16.mxu0 0
    %5499 = vmatpush2.bf16.msra.mxu0 0
    %5500 = vmatprep.subr.bf16.mxu0 0
    %5501 = vmatpush2.bf16.msra.mxu0 0
    %5502 = vmatprep.subr.bf16.mxu0 0
    %5503 = vmatpush2.bf16.msra.mxu0 0
    %5504 = vmatprep.subr.bf16.mxu0 0
    %5505 = vmatpush2.bf16.msra.mxu0 0
    %5506 = vmatprep.subr.bf16.mxu0 0
    %5507 = vmatpush2.bf16.msra.mxu0 0
    %5508 = vmatprep.mubr.bf16.mxu0 0
    %5509 = vmatmul.mubr.bf16.gmra.mxu0 %v5468
    %v5510 = vpop.f32.mrf.mxu0
    %v5511 = vadd.f32 0.0, %v5510
    %v5512 = vpop.f32.mrf.mxu0
    %v5513 = vpop.f32.mrf.mxu0
    %v5514 = vadd.f32 0.0, %v5513
    %v5515 = vpop.f32.mrf.mxu0
    %5516 = vmatprep.mubr.bf16.mxu0 0
    %5517 = vmatmul.mubr.bf16.gmra.mxu0 %v5471
    %v5518 = vpop.f32.mrf.mxu0
    %v5519 = vadd.f32 0.0, %v5518
    %v5520 = vpop.f32.mrf.mxu0
    %v5521 = vpop.f32.mrf.mxu0
    %v5522 = vadd.f32 0.0, %v5521
    %v5523 = vpop.f32.mrf.mxu0
    %5524 = vdwg.mxu0
    %vm5525 = vcmask 302080
    %5526 = vst.msk [vmem:[#allocation2] sm:$0xff] %vm5525, %v5511
    %5527 = vst.msk [vmem:[#allocation2 + $0xa0] sm:$0xff] %vm5525, %v5514
    %5530 = vrot.lane.b32.xlu0 %v5511, 127
    %v5531 = vpop.permute.xlu0 %5530
    %5532 = vrot.lane.b32.xlu0 %v5514, 127
    %v5533 = vpop.permute.xlu0 %5532
    %5536 = vst.msk [vmem:[#allocation2 + $0x140] sm:$0xff] %vm5525, %v5531
    %5537 = vst.msk [vmem:[#allocation2 + $0x1e0] sm:$0xff] %vm5525, %v5533
    %5538 = vrot.lane.b32.xlu0 %v5511, 126
    %v5539 = vpop.permute.xlu0 %5538
    %5540 = vrot.lane.b32.xlu0 %v5514, 126
    %v5541 = vpop.permute.xlu0 %5540
    %5544 = vst.msk [vmem:[#allocation2 + $0x280] sm:$0xff] %vm5525, %v5539
    %5545 = vst.msk [vmem:[#allocation2 + $0x320] sm:$0xff] %vm5525, %v5541
    %5546 = vrot.lane.b32.xlu0 %v5511, 123
    %v5547 = vpop.permute.xlu0 %5546
    %5548 = vrot.lane.b32.xlu0 %v5514, 123
    %v5549 = vpop.permute.xlu0 %5548
    %5552 = vst.msk [vmem:[#allocation2 + $0x3c0] sm:$0xff] %vm5525, %v5547
    %5553 = vst.msk [vmem:[#allocation2 + $0x460] sm:$0xff] %vm5525, %v5549
    %5554 = vrot.lane.b32.xlu0 %v5511, 122
    %v5555 = vpop.permute.xlu0 %5554
    %5556 = vrot.lane.b32.xlu0 %v5514, 122
    %v5557 = vpop.permute.xlu0 %5556
    %5560 = vst.msk [vmem:[#allocation2 + $0x500] sm:$0xff] %vm5525, %v5555
    %5561 = vst.msk [vmem:[#allocation2 + $0x5a0] sm:$0xff] %vm5525, %v5557
    %5562 = vrot.lane.b32.xlu0 %v5511, 121
    %v5563 = vpop.permute.xlu0 %5562
    %5564 = vrot.lane.b32.xlu0 %v5514, 121
    %v5565 = vpop.permute.xlu0 %5564
    %5568 = vst.msk [vmem:[#allocation2 + $0x640] sm:$0xff] %vm5525, %v5563
    %5569 = vst.msk [vmem:[#allocation2 + $0x6e0] sm:$0xff] %vm5525, %v5565
    %5570 = vrot.lane.b32.xlu0 %v5511, 118
    %v5571 = vpop.permute.xlu0 %5570
    %5572 = vrot.lane.b32.xlu0 %v5514, 118
    %v5573 = vpop.permute.xlu0 %5572
    %5576 = vst.msk [vmem:[#allocation2 + $0x780] sm:$0xff] %vm5525, %v5571
    %5577 = vst.msk [vmem:[#allocation2 + $0x820] sm:$0xff] %vm5525, %v5573
    %5578 = vrot.lane.b32.xlu0 %v5511, 117
    %v5579 = vpop.permute.xlu0 %5578
    %5580 = vrot.lane.b32.xlu0 %v5514, 117
    %v5581 = vpop.permute.xlu0 %5580
    %5584 = vst.msk [vmem:[#allocation2 + $0x8c0] sm:$0xff] %vm5525, %v5579
    %5585 = vst.msk [vmem:[#allocation2 + $0x960] sm:$0xff] %vm5525, %v5581
    %5586 = vrot.lane.b32.xlu0 %v5511, 116
    %v5587 = vpop.permute.xlu0 %5586
    %5588 = vrot.lane.b32.xlu0 %v5514, 116
    %v5589 = vpop.permute.xlu0 %5588
    %5592 = vst.msk [vmem:[#allocation2 + $0xa00] sm:$0xff] %vm5525, %v5587
    %5593 = vst.msk [vmem:[#allocation2 + $0xaa0] sm:$0xff] %vm5525, %v5589
    %5594 = vst.msk [vmem:[#allocation2 + $0x8] sm:$0xff] %vm5525, %v5519
    %5595 = vst.msk [vmem:[#allocation2 + $0xa8] sm:$0xff] %vm5525, %v5522
    %5598 = vrot.lane.b32.xlu0 %v5519, 127
    %v5599 = vpop.permute.xlu0 %5598
    %5600 = vrot.lane.b32.xlu0 %v5522, 127
    %v5601 = vpop.permute.xlu0 %5600
    %5604 = vst.msk [vmem:[#allocation2 + $0x148] sm:$0xff] %vm5525, %v5599
    %5605 = vst.msk [vmem:[#allocation2 + $0x1e8] sm:$0xff] %vm5525, %v5601
    %5606 = vrot.lane.b32.xlu0 %v5519, 126
    %v5607 = vpop.permute.xlu0 %5606
    %5608 = vrot.lane.b32.xlu0 %v5522, 126
    %v5609 = vpop.permute.xlu0 %5608
    %5612 = vst.msk [vmem:[#allocation2 + $0x288] sm:$0xff] %vm5525, %v5607
    %5613 = vst.msk [vmem:[#allocation2 + $0x328] sm:$0xff] %vm5525, %v5609
    %5614 = vrot.lane.b32.xlu0 %v5519, 123
    %v5615 = vpop.permute.xlu0 %5614
    %5616 = vrot.lane.b32.xlu0 %v5522, 123
    %v5617 = vpop.permute.xlu0 %5616
    %5620 = vst.msk [vmem:[#allocation2 + $0x3c8] sm:$0xff] %vm5525, %v5615
    %5621 = vst.msk [vmem:[#allocation2 + $0x468] sm:$0xff] %vm5525, %v5617
    %5622 = vrot.lane.b32.xlu0 %v5519, 122
    %v5623 = vpop.permute.xlu0 %5622
    %5624 = vrot.lane.b32.xlu0 %v5522, 122
    %v5625 = vpop.permute.xlu0 %5624
    %5628 = vst.msk [vmem:[#allocation2 + $0x508] sm:$0xff] %vm5525, %v5623
    %5629 = vst.msk [vmem:[#allocation2 + $0x5a8] sm:$0xff] %vm5525, %v5625
    %5630 = vrot.lane.b32.xlu0 %v5519, 121
    %v5631 = vpop.permute.xlu0 %5630
    %5632 = vrot.lane.b32.xlu0 %v5522, 121
    %v5633 = vpop.permute.xlu0 %5632
    %5636 = vst.msk [vmem:[#allocation2 + $0x648] sm:$0xff] %vm5525, %v5631
    %5637 = vst.msk [vmem:[#allocation2 + $0x6e8] sm:$0xff] %vm5525, %v5633
    %5638 = vrot.lane.b32.xlu0 %v5519, 118
    %v5639 = vpop.permute.xlu0 %5638
    %5640 = vrot.lane.b32.xlu0 %v5522, 118
    %v5641 = vpop.permute.xlu0 %5640
    %5644 = vst.msk [vmem:[#allocation2 + $0x788] sm:$0xff] %vm5525, %v5639
    %5645 = vst.msk [vmem:[#allocation2 + $0x828] sm:$0xff] %vm5525, %v5641
    %5646 = vrot.lane.b32.xlu0 %v5519, 117
    %v5647 = vpop.permute.xlu0 %5646
    %5648 = vrot.lane.b32.xlu0 %v5522, 117
    %v5649 = vpop.permute.xlu0 %5648
    %5652 = vst.msk [vmem:[#allocation2 + $0x8c8] sm:$0xff] %vm5525, %v5647
    %5653 = vst.msk [vmem:[#allocation2 + $0x968] sm:$0xff] %vm5525, %v5649
    %5654 = vrot.lane.b32.xlu0 %v5519, 116
    %v5655 = vpop.permute.xlu0 %5654
    %5656 = vrot.lane.b32.xlu0 %v5522, 116
    %v5657 = vpop.permute.xlu0 %5656
    %5660 = vst.msk [vmem:[#allocation2 + $0xa08] sm:$0xff] %vm5525, %v5655
    %5661 = vst.msk [vmem:[#allocation2 + $0xaa8] sm:$0xff] %vm5525, %v5657
    %v5662 = vld [vmem:[%s7] sm:$0xff]
    %v5663 = vld [vmem:[%s7 + $0x8] sm:$0xff]
    %v5664 = vld [vmem:[%s7 + $0x10] sm:$0xff]
    %v5665 = vld [vmem:[%s7 + $0x18] sm:$0xff]
    %v5666 = vld [vmem:[#allocation2] sm:$0xff]
    %v5667 = vld [vmem:[#allocation2 + $0x8] sm:$0xff]
    %v5668 = vld [vmem:[#allocation2 + $0xa0] sm:$0xff]
    %v5669 = vld [vmem:[#allocation2 + $0xa8] sm:$0xff]
    %v5670 = vld [vmem:[#allocation2 + $0x140] sm:$0xff]
    %v5671 = vld [vmem:[#allocation2 + $0x148] sm:$0xff]
    %v5672 = vld [vmem:[#allocation2 + $0x1e0] sm:$0xff]
    %v5673 = vld [vmem:[#allocation2 + $0x1e8] sm:$0xff]
    %v5674 = vld [vmem:[#allocation2 + $0x280] sm:$0xff]
    %v5675 = vld [vmem:[#allocation2 + $0x288] sm:$0xff]
    %v5676 = vld [vmem:[#allocation2 + $0x320] sm:$0xff]
    %v5677 = vld [vmem:[#allocation2 + $0x328] sm:$0xff]
    %v5678 = vld [vmem:[#allocation2 + $0x3c0] sm:$0xff]
    %v5679 = vld [vmem:[#allocation2 + $0x3c8] sm:$0xff]
    %v5680 = vld [vmem:[#allocation2 + $0x460] sm:$0xff]
    %v5681 = vld [vmem:[#allocation2 + $0x468] sm:$0xff]
    %v5682 = vld [vmem:[#allocation2 + $0x500] sm:$0xff]
    %v5683 = vld [vmem:[#allocation2 + $0x508] sm:$0xff]
    %v5684 = vld [vmem:[#allocation2 + $0x5a0] sm:$0xff]
    %v5685 = vld [vmem:[#allocation2 + $0x5a8] sm:$0xff]
    %v5686 = vld [vmem:[#allocation2 + $0x640] sm:$0xff]
    %v5687 = vld [vmem:[#allocation2 + $0x648] sm:$0xff]
    %v5688 = vld [vmem:[#allocation2 + $0x6e0] sm:$0xff]
    %v5689 = vld [vmem:[#allocation2 + $0x6e8] sm:$0xff]
    %v5690 = vld [vmem:[#allocation2 + $0x780] sm:$0xff]
    %v5691 = vld [vmem:[#allocation2 + $0x788] sm:$0xff]
    %v5692 = vld [vmem:[#allocation2 + $0x820] sm:$0xff]
    %v5693 = vld [vmem:[#allocation2 + $0x828] sm:$0xff]
    %v5694 = vld [vmem:[#allocation2 + $0x8c0] sm:$0xff]
    %v5695 = vld [vmem:[#allocation2 + $0x8c8] sm:$0xff]
    %v5696 = vld [vmem:[#allocation2 + $0x960] sm:$0xff]
    %v5697 = vld [vmem:[#allocation2 + $0x968] sm:$0xff]
    %v5698 = vld [vmem:[#allocation2 + $0xa00] sm:$0xff]
    %v5699 = vld [vmem:[#allocation2 + $0xa08] sm:$0xff]
    %v5700 = vld [vmem:[#allocation2 + $0xaa0] sm:$0xff]
    %v5701 = vld [vmem:[#allocation2 + $0xaa8] sm:$0xff]
    %v5702 = vld [vmem:[%s8] sm:$0xff]
    %v5703 = vld [vmem:[%s8 + $0x8] sm:$0xff]
    %5705 = vset.pattern.permute.xlu0 0
    %5706 = vperm.xlu0 %5705, %v5702
    %v5707 = vpop.permute.xlu0 %5706
    %5710 = vset.pattern.permute.xlu0 0
    %5711 = vperm.xlu0 %5710, %v5703
    %v5712 = vpop.permute.xlu0 %5711
    %vm5714 = vcmask 130048
    %v5716 = vsel %vm5714, %v5663, 0
    %v5719 = vsel %vm5714, %v5665, 0
    %5721 = vmatprep.subr.mxu0 %v5697
    %5722 = vmatpush1.msra.mxu0 %v5696
    %5723 = vmatprep.subr.mxu0 %v5695
    %5724 = vmatpush1.msra.mxu0 %v5694
    %5725 = vmatprep.subr.mxu0 %v5693
    %5726 = vmatpush1.msra.mxu0 %v5692
    %5727 = vmatprep.subr.mxu0 %v5691
    %5728 = vmatpush1.msra.mxu0 %v5690
    %5729 = vmatprep.subr.mxu0 %v5689
    %5730 = vmatpush1.msra.mxu0 %v5688
    %5731 = vmatprep.subr.mxu0 %v5687
    %5732 = vmatpush1.msra.mxu0 %v5686
    %5733 = vmatprep.subr.mxu0 %v5685
    %5734 = vmatpush1.msra.mxu0 %v5684
    %5735 = vmatprep.subr.mxu0 %v5683
    %5736 = vmatpush1.msra.mxu0 %v5682
    %5737 = vmatprep.subr.mxu0 %v5681
    %5738 = vmatpush1.msra.mxu0 %v5680
    %5739 = vmatprep.subr.mxu0 %v5679
    %5740 = vmatpush1.msra.mxu0 %v5678
    %5741 = vmatprep.subr.mxu0 %v5677
    %5742 = vmatpush1.msra.mxu0 %v5676
    %5743 = vmatprep.subr.mxu0 %v5675
    %5744 = vmatpush1.msra.mxu0 %v5674
    %5745 = vmatprep.subr.mxu0 %v5673
    %5746 = vmatpush1.msra.mxu0 %v5672
    %5747 = vmatprep.subr.mxu0 %v5671
    %5748 = vmatpush1.msra.mxu0 %v5670
    %5749 = vmatprep.subr.mxu0 %v5669
    %5750 = vmatpush1.msra.mxu0 %v5668
    %5751 = vmatprep.subr.mxu0 %v5667
    %5752 = vmatpush1.msra.mxu0 %v5666
    %5753 = vmatprep.subr.mxu0 0.0
    %5754 = vmatpush2.msra.mxu0 0.0
    %5755 = vmatprep.subr.mxu0 0.0
    %5756 = vmatpush2.msra.mxu0 0.0
    %5757 = vmatprep.subr.mxu0 0.0
    %5758 = vmatpush2.msra.mxu0 0.0
    %5759 = vmatprep.subr.mxu0 0.0
    %5760 = vmatpush2.msra.mxu0 0.0
    %5761 = vmatprep.subr.mxu0 0.0
    %5762 = vmatpush2.msra.mxu0 0.0
    %5763 = vmatprep.subr.mxu0 0.0
    %5764 = vmatpush2.msra.mxu0 0.0
    %5765 = vmatprep.subr.mxu0 0.0
    %5766 = vmatpush2.msra.mxu0 0.0
    %5767 = vmatprep.subr.mxu0 0.0
    %5768 = vmatpush2.msra.mxu0 0.0
    %5769 = vmatprep.subr.mxu0 0.0
    %5770 = vmatpush2.msra.mxu0 0.0
    %5771 = vmatprep.subr.mxu0 0.0
    %5772 = vmatpush2.msra.mxu0 0.0
    %5773 = vmatprep.subr.mxu0 0.0
    %5774 = vmatpush2.msra.mxu0 0.0
    %5775 = vmatprep.subr.mxu0 0.0
    %5776 = vmatpush2.msra.mxu0 0.0
    %5777 = vmatprep.subr.mxu0 0.0
    %5778 = vmatpush2.msra.mxu0 0.0
    %5779 = vmatprep.subr.mxu0 0.0
    %5780 = vmatpush2.msra.mxu0 0.0
    %5781 = vmatprep.subr.mxu0 %v5701
    %5782 = vmatpush2.msra.mxu0 %v5700
    %5783 = vmatprep.subr.mxu0 %v5699
    %5784 = vmatpush2.msra.mxu0 %v5698
    %5785 = vmatprep.mubr.f32.mxu0 %v5716
    %5786 = vmatmul.mubr.f32.gmra.mxu0 %v5662
    %v5787 = vpop.f32.mrf.mxu0
    %v5788 = vadd.f32 %v5707, %v5787
    %v5789 = vpop.f32.mrf.mxu0
    %v5790 = vadd.f32 %v5707, %v5789
    %5791 = vmatprep.mubr.f32.mxu0 %v5719
    %5792 = vmatmul.mubr.f32.gmra.mxu0 %v5664
    %v5793 = vpop.f32.mrf.mxu0
    %v5794 = vadd.f32 %v5712, %v5793
    %v5795 = vpop.f32.mrf.mxu0
    %v5796 = vadd.f32 %v5712, %v5795
    %5797 = vdwg.mxu0
    %v5798 = vmax.f32 %v5788, 0.0
    %v5799 = vmax.f32 %v5790, 0.0
    %v5800 = vmax.f32 %v5794, 0.0
    %v5801 = vmax.f32 %v5796, 0.0
    %vm5802 = vcmask 203776
    %5803 = vst.msk [vmem:[#allocation2] sm:$0xff] %vm5802, %v5798
    %5804 = vst.msk [vmem:[#allocation2 + $0xa0] sm:$0xff] %vm5802, %v5800
    %5805 = vst.msk [vmem:[#allocation2 + $0x140] sm:$0xff] %vm5802, %v5799
    %5806 = vst.msk [vmem:[#allocation2 + $0x1e0] sm:$0xff] %vm5802, %v5801
    %v5807 = vld [vmem:[#allocation2] sm:$0xff]
    %v5808 = vld [vmem:[#allocation2 + $0xa0] sm:$0xff]
    %v5809 = vld [vmem:[#allocation2 + $0x140] sm:$0xff]
    %v5810 = vld [vmem:[#allocation2 + $0x1e0] sm:$0xff]
    %v5811 = vpack.c.bf16 %v5808, %v5807
    %v5812 = vpack.c.bf16 %v5810, %v5809
    %v5813 = vld [vmem:[%s14] sm:$0xf]
    %v5814 = vld [vmem:[%s14 + $0x4] sm:$0xf]
    %v5815 = vld [vmem:[%s14 + $0x8] sm:$0xf]
    %v5816 = vld [vmem:[%s14 + $0xc] sm:$0x1]
    %v5821 = vunpack.c.l.b16 %v5813
    %v5822 = vunpack.c.l.b16 %v5814
    %v5823 = vunpack.c.l.b16 %v5815
    %v5824 = vunpack.c.l.b16 %v5816
    %v5825 = vpack.c.b16 %v5822, %v5821
    %v5826 = vpack.c.b16 %v5824, %v5823
    %v5829 = vsel %vm5802, %v5811, 0
    %v5832 = vsel %vm5802, %v5812, 0
    %vm5834 = vcmask 1043456
    %vm5835 = vcmask 1044480
    %v5836 = vsel %vm5834, 4294967295, 65535
    %v5837 = vsel %vm5835, %v5836, 0
    %v5839 = vand.u32 %v5826, %v5837
    %5841 = vmatprep.subr.bf16.mxu0 0
    %5842 = vmatpush1.bf16.msra.mxu0 0
    %5843 = vmatprep.subr.bf16.mxu0 0
    %5844 = vmatpush1.bf16.msra.mxu0 0
    %5845 = vmatprep.subr.bf16.mxu0 0
    %5846 = vmatpush1.bf16.msra.mxu0 0
    %5847 = vmatprep.subr.bf16.mxu0 0
    %5848 = vmatpush1.bf16.msra.mxu0 0
    %5849 = vmatprep.subr.bf16.mxu0 0
    %5850 = vmatpush1.bf16.msra.mxu0 0
    %5851 = vmatprep.subr.bf16.mxu0 0
    %5852 = vmatpush1.bf16.msra.mxu0 0
    %5853 = vmatprep.subr.bf16.mxu0 0
    %5854 = vmatpush1.bf16.msra.mxu0 %v5839
    %5855 = vmatprep.subr.bf16.mxu0 0
    %5856 = vmatpush1.bf16.msra.mxu0 %v5825
    %5857 = vmatprep.subr.bf16.mxu0 0
    %5858 = vmatpush2.bf16.msra.mxu0 0
    %5859 = vmatprep.subr.bf16.mxu0 0
    %5860 = vmatpush2.bf16.msra.mxu0 0
    %5861 = vmatprep.subr.bf16.mxu0 0
    %5862 = vmatpush2.bf16.msra.mxu0 0
    %5863 = vmatprep.subr.bf16.mxu0 0
    %5864 = vmatpush2.bf16.msra.mxu0 0
    %5865 = vmatprep.subr.bf16.mxu0 0
    %5866 = vmatpush2.bf16.msra.mxu0 0
    %5867 = vmatprep.subr.bf16.mxu0 0
    %5868 = vmatpush2.bf16.msra.mxu0 0
    %5869 = vmatprep.subr.bf16.mxu0 0
    %5870 = vmatpush2.bf16.msra.mxu0 0
    %5871 = vmatprep.subr.bf16.mxu0 0
    %5872 = vmatpush2.bf16.msra.mxu0 0
    %5873 = vmatprep.mubr.bf16.mxu0 0
    %5874 = vmatmul.mubr.bf16.gmra.mxu0 %v5829
    %v5875 = vpop.f32.mrf.mxu0
    %v5876 = vadd.f32 0.0, %v5875
    %v5877 = vpop.f32.mrf.mxu0
    %v5878 = vpop.f32.mrf.mxu0
    %v5879 = vadd.f32 0.0, %v5878
    %v5880 = vpop.f32.mrf.mxu0
    %5881 = vmatprep.mubr.bf16.mxu0 0
    %5882 = vmatmul.mubr.bf16.gmra.mxu0 %v5832
    %v5883 = vpop.f32.mrf.mxu0
    %v5884 = vadd.f32 0.0, %v5883
    %v5885 = vpop.f32.mrf.mxu0
    %v5886 = vpop.f32.mrf.mxu0
    %v5887 = vadd.f32 0.0, %v5886
    %v5888 = vpop.f32.mrf.mxu0
    %5889 = vdwg.mxu0
    %5890 = vst.msk [vmem:[#allocation2] sm:$0xff] %vm5525, %v5876
    %5891 = vst.msk [vmem:[#allocation2 + $0xa0] sm:$0xff] %vm5525, %v5879
    %5894 = vrot.lane.b32.xlu0 %v5876, 127
    %v5895 = vpop.permute.xlu0 %5894
    %5896 = vrot.lane.b32.xlu0 %v5879, 127
    %v5897 = vpop.permute.xlu0 %5896
    %5900 = vst.msk [vmem:[#allocation2 + $0x140] sm:$0xff] %vm5525, %v5895
    %5901 = vst.msk [vmem:[#allocation2 + $0x1e0] sm:$0xff] %vm5525, %v5897
    %5902 = vrot.lane.b32.xlu0 %v5876, 126
    %v5903 = vpop.permute.xlu0 %5902
    %5904 = vrot.lane.b32.xlu0 %v5879, 126
    %v5905 = vpop.permute.xlu0 %5904
    %5908 = vst.msk [vmem:[#allocation2 + $0x280] sm:$0xff] %vm5525, %v5903
    %5909 = vst.msk [vmem:[#allocation2 + $0x320] sm:$0xff] %vm5525, %v5905
    %5910 = vrot.lane.b32.xlu0 %v5876, 123
    %v5911 = vpop.permute.xlu0 %5910
    %5912 = vrot.lane.b32.xlu0 %v5879, 123
    %v5913 = vpop.permute.xlu0 %5912
    %5916 = vst.msk [vmem:[#allocation2 + $0x3c0] sm:$0xff] %vm5525, %v5911
    %5917 = vst.msk [vmem:[#allocation2 + $0x460] sm:$0xff] %vm5525, %v5913
    %5918 = vrot.lane.b32.xlu0 %v5876, 122
    %v5919 = vpop.permute.xlu0 %5918
    %5920 = vrot.lane.b32.xlu0 %v5879, 122
    %v5921 = vpop.permute.xlu0 %5920
    %5924 = vst.msk [vmem:[#allocation2 + $0x500] sm:$0xff] %vm5525, %v5919
    %5925 = vst.msk [vmem:[#allocation2 + $0x5a0] sm:$0xff] %vm5525, %v5921
    %5926 = vrot.lane.b32.xlu0 %v5876, 121
    %v5927 = vpop.permute.xlu0 %5926
    %5928 = vrot.lane.b32.xlu0 %v5879, 121
    %v5929 = vpop.permute.xlu0 %5928
    %5932 = vst.msk [vmem:[#allocation2 + $0x640] sm:$0xff] %vm5525, %v5927
    %5933 = vst.msk [vmem:[#allocation2 + $0x6e0] sm:$0xff] %vm5525, %v5929
    %5934 = vrot.lane.b32.xlu0 %v5876, 118
    %v5935 = vpop.permute.xlu0 %5934
    %5936 = vrot.lane.b32.xlu0 %v5879, 118
    %v5937 = vpop.permute.xlu0 %5936
    %5940 = vst.msk [vmem:[#allocation2 + $0x780] sm:$0xff] %vm5525, %v5935
    %5941 = vst.msk [vmem:[#allocation2 + $0x820] sm:$0xff] %vm5525, %v5937
    %5942 = vrot.lane.b32.xlu0 %v5876, 117
    %v5943 = vpop.permute.xlu0 %5942
    %5944 = vrot.lane.b32.xlu0 %v5879, 117
    %v5945 = vpop.permute.xlu0 %5944
    %5948 = vst.msk [vmem:[#allocation2 + $0x8c0] sm:$0xff] %vm5525, %v5943
    %5949 = vst.msk [vmem:[#allocation2 + $0x960] sm:$0xff] %vm5525, %v5945
    %5950 = vrot.lane.b32.xlu0 %v5876, 116
    %v5951 = vpop.permute.xlu0 %5950
    %5952 = vrot.lane.b32.xlu0 %v5879, 116
    %v5953 = vpop.permute.xlu0 %5952
    %5956 = vst.msk [vmem:[#allocation2 + $0xa00] sm:$0xff] %vm5525, %v5951
    %5957 = vst.msk [vmem:[#allocation2 + $0xaa0] sm:$0xff] %vm5525, %v5953
    %5958 = vst.msk [vmem:[#allocation2 + $0x8] sm:$0xff] %vm5525, %v5884
    %5959 = vst.msk [vmem:[#allocation2 + $0xa8] sm:$0xff] %vm5525, %v5887
    %5962 = vrot.lane.b32.xlu0 %v5884, 127
    %v5963 = vpop.permute.xlu0 %5962
    %5964 = vrot.lane.b32.xlu0 %v5887, 127
    %v5965 = vpop.permute.xlu0 %5964
    %5968 = vst.msk [vmem:[#allocation2 + $0x148] sm:$0xff] %vm5525, %v5963
    %5969 = vst.msk [vmem:[#allocation2 + $0x1e8] sm:$0xff] %vm5525, %v5965
    %5970 = vrot.lane.b32.xlu0 %v5884, 126
    %v5971 = vpop.permute.xlu0 %5970
    %5972 = vrot.lane.b32.xlu0 %v5887, 126
    %v5973 = vpop.permute.xlu0 %5972
    %5976 = vst.msk [vmem:[#allocation2 + $0x288] sm:$0xff] %vm5525, %v5971
    %5977 = vst.msk [vmem:[#allocation2 + $0x328] sm:$0xff] %vm5525, %v5973
    %5978 = vrot.lane.b32.xlu0 %v5884, 123
    %v5979 = vpop.permute.xlu0 %5978
    %5980 = vrot.lane.b32.xlu0 %v5887, 123
    %v5981 = vpop.permute.xlu0 %5980
    %5984 = vst.msk [vmem:[#allocation2 + $0x3c8] sm:$0xff] %vm5525, %v5979
    %5985 = vst.msk [vmem:[#allocation2 + $0x468] sm:$0xff] %vm5525, %v5981
    %5986 = vrot.lane.b32.xlu0 %v5884, 122
    %v5987 = vpop.permute.xlu0 %5986
    %5988 = vrot.lane.b32.xlu0 %v5887, 122
    %v5989 = vpop.permute.xlu0 %5988
    %5992 = vst.msk [vmem:[#allocation2 + $0x508] sm:$0xff] %vm5525, %v5987
    %5993 = vst.msk [vmem:[#allocation2 + $0x5a8] sm:$0xff] %vm5525, %v5989
    %5994 = vrot.lane.b32.xlu0 %v5884, 121
    %v5995 = vpop.permute.xlu0 %5994
    %5996 = vrot.lane.b32.xlu0 %v5887, 121
    %v5997 = vpop.permute.xlu0 %5996
    %6000 = vst.msk [vmem:[#allocation2 + $0x648] sm:$0xff] %vm5525, %v5995
    %6001 = vst.msk [vmem:[#allocation2 + $0x6e8] sm:$0xff] %vm5525, %v5997
    %6002 = vrot.lane.b32.xlu0 %v5884, 118
    %v6003 = vpop.permute.xlu0 %6002
    %6004 = vrot.lane.b32.xlu0 %v5887, 118
    %v6005 = vpop.permute.xlu0 %6004
    %6008 = vst.msk [vmem:[#allocation2 + $0x788] sm:$0xff] %vm5525, %v6003
    %6009 = vst.msk [vmem:[#allocation2 + $0x828] sm:$0xff] %vm5525, %v6005
    %6010 = vrot.lane.b32.xlu0 %v5884, 117
    %v6011 = vpop.permute.xlu0 %6010
    %6012 = vrot.lane.b32.xlu0 %v5887, 117
    %v6013 = vpop.permute.xlu0 %6012
    %6016 = vst.msk [vmem:[#allocation2 + $0x8c8] sm:$0xff] %vm5525, %v6011
    %6017 = vst.msk [vmem:[#allocation2 + $0x968] sm:$0xff] %vm5525, %v6013
    %6018 = vrot.lane.b32.xlu0 %v5884, 116
    %v6019 = vpop.permute.xlu0 %6018
    %6020 = vrot.lane.b32.xlu0 %v5887, 116
    %v6021 = vpop.permute.xlu0 %6020
    %6024 = vst.msk [vmem:[#allocation2 + $0xa08] sm:$0xff] %vm5525, %v6019
    %6025 = vst.msk [vmem:[#allocation2 + $0xaa8] sm:$0xff] %vm5525, %v6021
    %v6026 = vld [vmem:[%s9] sm:$0xff]
    %v6027 = vld [vmem:[%s9 + $0x8] sm:$0xff]
    %v6028 = vld [vmem:[%s9 + $0x10] sm:$0xff]
    %v6029 = vld [vmem:[%s9 + $0x18] sm:$0xff]
    %v6030 = vld [vmem:[#allocation2] sm:$0xff]
    %v6031 = vld [vmem:[#allocation2 + $0x8] sm:$0xff]
    %v6032 = vld [vmem:[#allocation2 + $0xa0] sm:$0xff]
    %v6033 = vld [vmem:[#allocation2 + $0xa8] sm:$0xff]
    %v6034 = vld [vmem:[#allocation2 + $0x140] sm:$0xff]
    %v6035 = vld [vmem:[#allocation2 + $0x148] sm:$0xff]
    %v6036 = vld [vmem:[#allocation2 + $0x1e0] sm:$0xff]
    %v6037 = vld [vmem:[#allocation2 + $0x1e8] sm:$0xff]
    %v6038 = vld [vmem:[#allocation2 + $0x280] sm:$0xff]
    %v6039 = vld [vmem:[#allocation2 + $0x288] sm:$0xff]
    %v6040 = vld [vmem:[#allocation2 + $0x320] sm:$0xff]
    %v6041 = vld [vmem:[#allocation2 + $0x328] sm:$0xff]
    %v6042 = vld [vmem:[#allocation2 + $0x3c0] sm:$0xff]
    %v6043 = vld [vmem:[#allocation2 + $0x3c8] sm:$0xff]
    %v6044 = vld [vmem:[#allocation2 + $0x460] sm:$0xff]
    %v6045 = vld [vmem:[#allocation2 + $0x468] sm:$0xff]
    %v6046 = vld [vmem:[#allocation2 + $0x500] sm:$0xff]
    %v6047 = vld [vmem:[#allocation2 + $0x508] sm:$0xff]
    %v6048 = vld [vmem:[#allocation2 + $0x5a0] sm:$0xff]
    %v6049 = vld [vmem:[#allocation2 + $0x5a8] sm:$0xff]
    %v6050 = vld [vmem:[#allocation2 + $0x640] sm:$0xff]
    %v6051 = vld [vmem:[#allocation2 + $0x648] sm:$0xff]
    %v6052 = vld [vmem:[#allocation2 + $0x6e0] sm:$0xff]
    %v6053 = vld [vmem:[#allocation2 + $0x6e8] sm:$0xff]
    %v6054 = vld [vmem:[#allocation2 + $0x780] sm:$0xff]
    %v6055 = vld [vmem:[#allocation2 + $0x788] sm:$0xff]
    %v6056 = vld [vmem:[#allocation2 + $0x820] sm:$0xff]
    %v6057 = vld [vmem:[#allocation2 + $0x828] sm:$0xff]
    %v6058 = vld [vmem:[#allocation2 + $0x8c0] sm:$0xff]
    %v6059 = vld [vmem:[#allocation2 + $0x8c8] sm:$0xff]
    %v6060 = vld [vmem:[#allocation2 + $0x960] sm:$0xff]
    %v6061 = vld [vmem:[#allocation2 + $0x968] sm:$0xff]
    %v6062 = vld [vmem:[#allocation2 + $0xa00] sm:$0xff]
    %v6063 = vld [vmem:[#allocation2 + $0xa08] sm:$0xff]
    %v6064 = vld [vmem:[#allocation2 + $0xaa0] sm:$0xff]
    %v6065 = vld [vmem:[#allocation2 + $0xaa8] sm:$0xff]
    %v6066 = vld [vmem:[%s10] sm:$0xff]
    %v6067 = vld [vmem:[%s10 + $0x8] sm:$0xff]
    %6069 = vset.pattern.permute.xlu0 0
    %6070 = vperm.xlu0 %6069, %v6066
    %v6071 = vpop.permute.xlu0 %6070
    %6074 = vset.pattern.permute.xlu0 0
    %6075 = vperm.xlu0 %6074, %v6067
    %v6076 = vpop.permute.xlu0 %6075
    %v6079 = vsel %vm5714, %v6027, 0
    %v6082 = vsel %vm5714, %v6029, 0
    %6084 = vmatprep.subr.mxu0 %v6061
    %6085 = vmatpush1.msra.mxu0 %v6060
    %6086 = vmatprep.subr.mxu0 %v6059
    %6087 = vmatpush1.msra.mxu0 %v6058
    %6088 = vmatprep.subr.mxu0 %v6057
    %6089 = vmatpush1.msra.mxu0 %v6056
    %6090 = vmatprep.subr.mxu0 %v6055
    %6091 = vmatpush1.msra.mxu0 %v6054
    %6092 = vmatprep.subr.mxu0 %v6053
    %6093 = vmatpush1.msra.mxu0 %v6052
    %6094 = vmatprep.subr.mxu0 %v6051
    %6095 = vmatpush1.msra.mxu0 %v6050
    %6096 = vmatprep.subr.mxu0 %v6049
    %6097 = vmatpush1.msra.mxu0 %v6048
    %6098 = vmatprep.subr.mxu0 %v6047
    %6099 = vmatpush1.msra.mxu0 %v6046
    %6100 = vmatprep.subr.mxu0 %v6045
    %6101 = vmatpush1.msra.mxu0 %v6044
    %6102 = vmatprep.subr.mxu0 %v6043
    %6103 = vmatpush1.msra.mxu0 %v6042
    %6104 = vmatprep.subr.mxu0 %v6041
    %6105 = vmatpush1.msra.mxu0 %v6040
    %6106 = vmatprep.subr.mxu0 %v6039
    %6107 = vmatpush1.msra.mxu0 %v6038
    %6108 = vmatprep.subr.mxu0 %v6037
    %6109 = vmatpush1.msra.mxu0 %v6036
    %6110 = vmatprep.subr.mxu0 %v6035
    %6111 = vmatpush1.msra.mxu0 %v6034
    %6112 = vmatprep.subr.mxu0 %v6033
    %6113 = vmatpush1.msra.mxu0 %v6032
    %6114 = vmatprep.subr.mxu0 %v6031
    %6115 = vmatpush1.msra.mxu0 %v6030
    %6116 = vmatprep.subr.mxu0 0.0
    %6117 = vmatpush2.msra.mxu0 0.0
    %6118 = vmatprep.subr.mxu0 0.0
    %6119 = vmatpush2.msra.mxu0 0.0
    %6120 = vmatprep.subr.mxu0 0.0
    %6121 = vmatpush2.msra.mxu0 0.0
    %6122 = vmatprep.subr.mxu0 0.0
    %6123 = vmatpush2.msra.mxu0 0.0
    %6124 = vmatprep.subr.mxu0 0.0
    %6125 = vmatpush2.msra.mxu0 0.0
    %6126 = vmatprep.subr.mxu0 0.0
    %6127 = vmatpush2.msra.mxu0 0.0
    %6128 = vmatprep.subr.mxu0 0.0
    %6129 = vmatpush2.msra.mxu0 0.0
    %6130 = vmatprep.subr.mxu0 0.0
    %6131 = vmatpush2.msra.mxu0 0.0
    %6132 = vmatprep.subr.mxu0 0.0
    %6133 = vmatpush2.msra.mxu0 0.0
    %6134 = vmatprep.subr.mxu0 0.0
    %6135 = vmatpush2.msra.mxu0 0.0
    %6136 = vmatprep.subr.mxu0 0.0
    %6137 = vmatpush2.msra.mxu0 0.0
    %6138 = vmatprep.subr.mxu0 0.0
    %6139 = vmatpush2.msra.mxu0 0.0
    %6140 = vmatprep.subr.mxu0 0.0
    %6141 = vmatpush2.msra.mxu0 0.0
    %6142 = vmatprep.subr.mxu0 0.0
    %6143 = vmatpush2.msra.mxu0 0.0
    %6144 = vmatprep.subr.mxu0 %v6065
    %6145 = vmatpush2.msra.mxu0 %v6064
    %6146 = vmatprep.subr.mxu0 %v6063
    %6147 = vmatpush2.msra.mxu0 %v6062
    %6148 = vmatprep.mubr.f32.mxu0 %v6079
    %6149 = vmatmul.mubr.f32.gmra.mxu0 %v6026
    %v6150 = vpop.f32.mrf.mxu0
    %v6151 = vadd.f32 %v6071, %v6150
    %v6152 = vpop.f32.mrf.mxu0
    %v6153 = vadd.f32 %v6071, %v6152
    %6154 = vmatprep.mubr.f32.mxu0 %v6082
    %6155 = vmatmul.mubr.f32.gmra.mxu0 %v6028
    %v6156 = vpop.f32.mrf.mxu0
    %v6157 = vadd.f32 %v6076, %v6156
    %v6158 = vpop.f32.mrf.mxu0
    %v6159 = vadd.f32 %v6076, %v6158
    %6160 = vdwg.mxu0
    %v6161 = vmax.f32 %v6151, 0.0
    %v6162 = vmax.f32 %v6153, 0.0
    %v6163 = vmax.f32 %v6157, 0.0
    %v6164 = vmax.f32 %v6159, 0.0
    %vm6165 = vcmask 114688
    %6166 = vst.msk [vmem:[#allocation2] sm:$0x1] %vm6165, %v6161
    %v6168 = vrot.slane %v6161, 1
    %6169 = vrot.lane.b32.xlu0 %v6168, 15
    %v6170 = vpop.permute.xlu0 %6169
    %vm6172 = vcmask 237688
    %6173 = vst.msk [vmem:[#allocation2] sm:$0x1] %vm6172, %v6170
    %v6174 = vrot.slane %v6161, 2
    %6175 = vrot.lane.b32.xlu0 %v6174, 30
    %v6176 = vpop.permute.xlu0 %6175
    %vm6178 = vcmask 360688
    %6179 = vst.msk [vmem:[#allocation2] sm:$0x1] %vm6178, %v6176
    %v6180 = vrot.slane %v6161, 3
    %6181 = vrot.lane.b32.xlu0 %v6180, 45
    %v6182 = vpop.permute.xlu0 %6181
    %vm6184 = vcmask 483688
    %6185 = vst.msk [vmem:[#allocation2] sm:$0x1] %vm6184, %v6182
    %v6186 = vrot.slane %v6161, 4
    %6187 = vrot.lane.b32.xlu0 %v6186, 60
    %v6188 = vpop.permute.xlu0 %6187
    %vm6190 = vcmask 606688
    %6191 = vst.msk [vmem:[#allocation2] sm:$0x1] %vm6190, %v6188
    %v6192 = vrot.slane %v6161, 5
    %6193 = vrot.lane.b32.xlu0 %v6192, 75
    %v6194 = vpop.permute.xlu0 %6193
    %vm6196 = vcmask 729688
    %6197 = vst.msk [vmem:[#allocation2] sm:$0x1] %vm6196, %v6194
    %v6198 = vrot.slane %v6161, 6
    %6199 = vrot.lane.b32.xlu0 %v6198, 90
    %v6200 = vpop.permute.xlu0 %6199
    %vm6202 = vcmask 852688
    %6203 = vst.msk [vmem:[#allocation2] sm:$0x1] %vm6202, %v6200
    %v6204 = vrot.slane %v6161, 7
    %6205 = vrot.lane.b32.xlu0 %v6204, 105
    %v6206 = vpop.permute.xlu0 %6205
    %vm6208 = vcmask 975688
    %6209 = vst.msk [vmem:[#allocation2] sm:$0x1] %vm6208, %v6206
    %6211 = vrot.lane.b32.xlu0 %v6163, 120
    %v6212 = vpop.permute.xlu0 %6211
    %vm6214 = vcmask 1041344
    %6215 = vst.msk [vmem:[#allocation2] sm:$0x1] %vm6214, %v6212
    %vm6216 = vcmask 49152
    %6217 = vst.msk [vmem:[#allocation2 + $0x8] sm:$0x1] %vm6216, %v6212
    %v6218 = vrot.slane %v6163, 1
    %6219 = vrot.lane.b32.xlu0 %v6218, 7
    %v6220 = vpop.permute.xlu0 %6219
    %vm6222 = vcmask 172088
    %6223 = vst.msk [vmem:[#allocation2 + $0x8] sm:$0x1] %vm6222, %v6220
    %v6224 = vrot.slane %v6163, 2
    %6225 = vrot.lane.b32.xlu0 %v6224, 22
    %v6226 = vpop.permute.xlu0 %6225
    %vm6228 = vcmask 295088
    %6229 = vst.msk [vmem:[#allocation2 + $0x8] sm:$0x1] %vm6228, %v6226
    %v6230 = vrot.slane %v6163, 3
    %6231 = vrot.lane.b32.xlu0 %v6230, 37
    %v6232 = vpop.permute.xlu0 %6231
    %vm6234 = vcmask 418088
    %6235 = vst.msk [vmem:[#allocation2 + $0x8] sm:$0x1] %vm6234, %v6232
    %v6236 = vrot.slane %v6163, 4
    %6237 = vrot.lane.b32.xlu0 %v6236, 52
    %v6238 = vpop.permute.xlu0 %6237
    %vm6240 = vcmask 541088
    %6241 = vst.msk [vmem:[#allocation2 + $0x8] sm:$0x1] %vm6240, %v6238
    %v6242 = vrot.slane %v6163, 5
    %6243 = vrot.lane.b32.xlu0 %v6242, 67
    %v6244 = vpop.permute.xlu0 %6243
    %vm6246 = vcmask 664088
    %6247 = vst.msk [vmem:[#allocation2 + $0x8] sm:$0x1] %vm6246, %v6244
    %v6248 = vrot.slane %v6163, 6
    %6249 = vrot.lane.b32.xlu0 %v6248, 82
    %v6250 = vpop.permute.xlu0 %6249
    %vm6252 = vcmask 787088
    %6253 = vst.msk [vmem:[#allocation2 + $0x8] sm:$0x1] %vm6252, %v6250
    %v6254 = vrot.slane %v6163, 7
    %6255 = vrot.lane.b32.xlu0 %v6254, 97
    %v6256 = vpop.permute.xlu0 %6255
    %vm6258 = vcmask 910088
    %6259 = vst.msk [vmem:[#allocation2 + $0x8] sm:$0x1] %vm6258, %v6256
    %6260 = vst.msk [vmem:[#allocation2 + $0x1] sm:$0x1] %vm6165, %v6162
    %v6262 = vrot.slane %v6162, 1
    %6263 = vrot.lane.b32.xlu0 %v6262, 15
    %v6264 = vpop.permute.xlu0 %6263
    %6266 = vst.msk [vmem:[#allocation2 + $0x1] sm:$0x1] %vm6172, %v6264
    %v6267 = vrot.slane %v6162, 2
    %6268 = vrot.lane.b32.xlu0 %v6267, 30
    %v6269 = vpop.permute.xlu0 %6268
    %6271 = vst.msk [vmem:[#allocation2 + $0x1] sm:$0x1] %vm6178, %v6269
    %v6272 = vrot.slane %v6162, 3
    %6273 = vrot.lane.b32.xlu0 %v6272, 45
    %v6274 = vpop.permute.xlu0 %6273
    %6276 = vst.msk [vmem:[#allocation2 + $0x1] sm:$0x1] %vm6184, %v6274
    %v6277 = vrot.slane %v6162, 4
    %6278 = vrot.lane.b32.xlu0 %v6277, 60
    %v6279 = vpop.permute.xlu0 %6278
    %6281 = vst.msk [vmem:[#allocation2 + $0x1] sm:$0x1] %vm6190, %v6279
    %v6282 = vrot.slane %v6162, 5
    %6283 = vrot.lane.b32.xlu0 %v6282, 75
    %v6284 = vpop.permute.xlu0 %6283
    %6286 = vst.msk [vmem:[#allocation2 + $0x1] sm:$0x1] %vm6196, %v6284
    %v6287 = vrot.slane %v6162, 6
    %6288 = vrot.lane.b32.xlu0 %v6287, 90
    %v6289 = vpop.permute.xlu0 %6288
    %6291 = vst.msk [vmem:[#allocation2 + $0x1] sm:$0x1] %vm6202, %v6289
    %v6292 = vrot.slane %v6162, 7
    %6293 = vrot.lane.b32.xlu0 %v6292, 105
    %v6294 = vpop.permute.xlu0 %6293
    %6296 = vst.msk [vmem:[#allocation2 + $0x1] sm:$0x1] %vm6208, %v6294
    %6298 = vrot.lane.b32.xlu0 %v6164, 120
    %v6299 = vpop.permute.xlu0 %6298
    %6301 = vst.msk [vmem:[#allocation2 + $0x1] sm:$0x1] %vm6214, %v6299
    %6302 = vst.msk [vmem:[#allocation2 + $0x9] sm:$0x1] %vm6216, %v6299
    %v6303 = vrot.slane %v6164, 1
    %6304 = vrot.lane.b32.xlu0 %v6303, 7
    %v6305 = vpop.permute.xlu0 %6304
    %6307 = vst.msk [vmem:[#allocation2 + $0x9] sm:$0x1] %vm6222, %v6305
    %v6308 = vrot.slane %v6164, 2
    %6309 = vrot.lane.b32.xlu0 %v6308, 22
    %v6310 = vpop.permute.xlu0 %6309
    %6312 = vst.msk [vmem:[#allocation2 + $0x9] sm:$0x1] %vm6228, %v6310
    %v6313 = vrot.slane %v6164, 3
    %6314 = vrot.lane.b32.xlu0 %v6313, 37
    %v6315 = vpop.permute.xlu0 %6314
    %6317 = vst.msk [vmem:[#allocation2 + $0x9] sm:$0x1] %vm6234, %v6315
    %v6318 = vrot.slane %v6164, 4
    %6319 = vrot.lane.b32.xlu0 %v6318, 52
    %v6320 = vpop.permute.xlu0 %6319
    %6322 = vst.msk [vmem:[#allocation2 + $0x9] sm:$0x1] %vm6240, %v6320
    %v6323 = vrot.slane %v6164, 5
    %6324 = vrot.lane.b32.xlu0 %v6323, 67
    %v6325 = vpop.permute.xlu0 %6324
    %6327 = vst.msk [vmem:[#allocation2 + $0x9] sm:$0x1] %vm6246, %v6325
    %v6328 = vrot.slane %v6164, 6
    %6329 = vrot.lane.b32.xlu0 %v6328, 82
    %v6330 = vpop.permute.xlu0 %6329
    %6332 = vst.msk [vmem:[#allocation2 + $0x9] sm:$0x1] %vm6252, %v6330
    %v6333 = vrot.slane %v6164, 7
    %6334 = vrot.lane.b32.xlu0 %v6333, 97
    %v6335 = vpop.permute.xlu0 %6334
    %6337 = vst.msk [vmem:[#allocation2 + $0x9] sm:$0x1] %vm6258, %v6335
    %v6338 = vld [vmem:[#allocation2] sm:$0x3]
    %v6339 = vld [vmem:[#allocation2 + $0x8] sm:$0x3]
    %v6340 = vld [vmem:[%s15] sm:$0xff]
    %v6341 = vld [vmem:[%s15 + $0x8] sm:$0xff]
    %v6342 = vld [vmem:[%s15 + $0x10] sm:$0xff]
    %v6343 = vld [vmem:[%s15 + $0x18] sm:$0xff]
    %v6344 = vld [vmem:[%s15 + $0x20] sm:$0xff]
    %v6345 = vld [vmem:[%s15 + $0x28] sm:$0xff]
    %v6346 = vld [vmem:[%s15 + $0x30] sm:$0xff]
    %v6347 = vld [vmem:[%s15 + $0x38] sm:$0xff]
    %v6348 = vld [vmem:[%s15 + $0x40] sm:$0xff]
    %v6349 = vld [vmem:[%s15 + $0x48] sm:$0xff]
    %v6350 = vld [vmem:[%s15 + $0x50] sm:$0xff]
    %v6351 = vld [vmem:[%s15 + $0x58] sm:$0xff]
    %v6352 = vld [vmem:[%s15 + $0x60] sm:$0xff]
    %v6353 = vld [vmem:[%s15 + $0x68] sm:$0xff]
    %v6354 = vld [vmem:[%s15 + $0x70] sm:$0xff]
    %v6355 = vld [vmem:[%s15 + $0x78] sm:$0xff]
    %v6356 = vld [vmem:[%s15 + $0x80] sm:$0xff]
    %v6357 = vld [vmem:[%s15 + $0x88] sm:$0xff]
    %v6358 = vld [vmem:[%s15 + $0x90] sm:$0xff]
    %v6359 = vld [vmem:[%s15 + $0x98] sm:$0xff]
    %v6360 = vld [vmem:[%s15 + $0xa0] sm:$0xff]
    %v6361 = vld [vmem:[%s15 + $0xa8] sm:$0xff]
    %v6362 = vld [vmem:[%s15 + $0xb0] sm:$0xff]
    %v6363 = vld [vmem:[%s15 + $0xb8] sm:$0xff]
    %v6364 = vld [vmem:[%s15 + $0xc0] sm:$0xff]
    %v6365 = vld [vmem:[%s15 + $0xc8] sm:$0xff]
    %v6366 = vld [vmem:[%s15 + $0xd0] sm:$0xff]
    %v6367 = vld [vmem:[%s15 + $0xd8] sm:$0xff]
    %v6368 = vld [vmem:[%s15 + $0xe0] sm:$0xff]
    %v6369 = vld [vmem:[%s15 + $0xe8] sm:$0xff]
    %v6370 = vld [vmem:[%s15 + $0xf0] sm:$0xff]
    %v6371 = vld [vmem:[%s15 + $0xf8] sm:$0xff]
    %v6372 = vld [vmem:[%s15 + $0x100] sm:$0xff]
    %v6373 = vld [vmem:[%s15 + $0x108] sm:$0xff]
    %v6374 = vld [vmem:[%s15 + $0x110] sm:$0xff]
    %v6375 = vld [vmem:[%s15 + $0x118] sm:$0xff]
    %v6376 = vld [vmem:[%s15 + $0x120] sm:$0xff]
    %v6377 = vld [vmem:[%s15 + $0x128] sm:$0xff]
    %v6378 = vld [vmem:[%s15 + $0x130] sm:$0xff]
    %v6379 = vld [vmem:[%s15 + $0x138] sm:$0xff]
    %v6380 = vld [vmem:[%s15 + $0x140] sm:$0xff]
    %v6381 = vld [vmem:[%s15 + $0x148] sm:$0xff]
    %v6382 = vld [vmem:[%s15 + $0x150] sm:$0xff]
    %v6383 = vld [vmem:[%s15 + $0x158] sm:$0xff]
    %v6384 = vld [vmem:[%s15 + $0x160] sm:$0xff]
    %v6385 = vld [vmem:[%s15 + $0x168] sm:$0xff]
    %v6386 = vld [vmem:[%s15 + $0x170] sm:$0xff]
    %v6387 = vld [vmem:[%s15 + $0x178] sm:$0xff]
    %v6388 = vld [vmem:[%s15 + $0x180] sm:$0xff]
    %v6389 = vld [vmem:[%s15 + $0x188] sm:$0xff]
    %v6390 = vld [vmem:[%s15 + $0x190] sm:$0xff]
    %v6391 = vld [vmem:[%s15 + $0x198] sm:$0xff]
    %v6392 = vld [vmem:[%s15 + $0x1a0] sm:$0xff]
    %v6393 = vld [vmem:[%s15 + $0x1a8] sm:$0xff]
    %v6394 = vld [vmem:[%s15 + $0x1b0] sm:$0xff]
    %v6395 = vld [vmem:[%s15 + $0x1b8] sm:$0xff]
    %v6396 = vld [vmem:[%s15 + $0x1c0] sm:$0xff]
    %v6397 = vld [vmem:[%s15 + $0x1c8] sm:$0xff]
    %v6398 = vld [vmem:[%s15 + $0x1d0] sm:$0xff]
    %v6399 = vld [vmem:[%s15 + $0x1d8] sm:$0xff]
    %v6400 = vld [vmem:[%s16] sm:$0x3]
    %v6402 = vlaneseq
    %v6403 = vshrl.u32 %v6402, 7
    %v6404 = vsub.s32 0, %v6403
    %v6405 = vrot.slane %v6400, %v6404
    %v6406 = vlaneseq
    %v6407 = vshrl.u32 %v6406, 7
    %v6408 = vsub.s32 1, %v6407
    %v6409 = vrot.slane %v6400, %v6408
    %vm6412 = vcmask 916480
    %v6414 = vsel %vm6412, %v6339, 0
    %6416 = vmatprep.subr.mxu0 %v6371
    %6417 = vmatpush1.msra.mxu0 %v6370
    %6418 = vmatprep.subr.mxu0 %v6369
    %6419 = vmatpush1.msra.mxu0 %v6368
    %6420 = vmatprep.subr.mxu0 %v6367
    %6421 = vmatpush1.msra.mxu0 %v6366
    %6422 = vmatprep.subr.mxu0 %v6365
    %6423 = vmatpush1.msra.mxu0 %v6364
    %6424 = vmatprep.subr.mxu0 %v6363
    %6425 = vmatpush1.msra.mxu0 %v6362
    %6426 = vmatprep.subr.mxu0 %v6361
    %6427 = vmatpush1.msra.mxu0 %v6360
    %6428 = vmatprep.subr.mxu0 %v6359
    %6429 = vmatpush1.msra.mxu0 %v6358
    %6430 = vmatprep.subr.mxu0 %v6357
    %6431 = vmatpush1.msra.mxu0 %v6356
    %6432 = vmatprep.subr.mxu0 %v6355
    %6433 = vmatpush1.msra.mxu0 %v6354
    %6434 = vmatprep.subr.mxu0 %v6353
    %6435 = vmatpush1.msra.mxu0 %v6352
    %6436 = vmatprep.subr.mxu0 %v6351
    %6437 = vmatpush1.msra.mxu0 %v6350
    %6438 = vmatprep.subr.mxu0 %v6349
    %6439 = vmatpush1.msra.mxu0 %v6348
    %6440 = vmatprep.subr.mxu0 %v6347
    %6441 = vmatpush1.msra.mxu0 %v6346
    %6442 = vmatprep.subr.mxu0 %v6345
    %6443 = vmatpush1.msra.mxu0 %v6344
    %6444 = vmatprep.subr.mxu0 %v6343
    %6445 = vmatpush1.msra.mxu0 %v6342
    %6446 = vmatprep.subr.mxu0 %v6341
    %6447 = vmatpush1.msra.mxu0 %v6340
    %6448 = vmatprep.subr.mxu0 0.0
    %6449 = vmatpush2.msra.mxu0 0.0
    %6450 = vmatprep.subr.mxu0 0.0
    %6451 = vmatpush2.msra.mxu0 0.0
    %6452 = vmatprep.subr.mxu0 %v6399
    %6453 = vmatpush2.msra.mxu0 %v6398
    %6454 = vmatprep.subr.mxu0 %v6397
    %6455 = vmatpush2.msra.mxu0 %v6396
    %6456 = vmatprep.subr.mxu0 %v6395
    %6457 = vmatpush2.msra.mxu0 %v6394
    %6458 = vmatprep.subr.mxu0 %v6393
    %6459 = vmatpush2.msra.mxu0 %v6392
    %6460 = vmatprep.subr.mxu0 %v6391
    %6461 = vmatpush2.msra.mxu0 %v6390
    %6462 = vmatprep.subr.mxu0 %v6389
    %6463 = vmatpush2.msra.mxu0 %v6388
    %6464 = vmatprep.subr.mxu0 %v6387
    %6465 = vmatpush2.msra.mxu0 %v6386
    %6466 = vmatprep.subr.mxu0 %v6385
    %6467 = vmatpush2.msra.mxu0 %v6384
    %6468 = vmatprep.subr.mxu0 %v6383
    %6469 = vmatpush2.msra.mxu0 %v6382
    %6470 = vmatprep.subr.mxu0 %v6381
    %6471 = vmatpush2.msra.mxu0 %v6380
    %6472 = vmatprep.subr.mxu0 %v6379
    %6473 = vmatpush2.msra.mxu0 %v6378
    %6474 = vmatprep.subr.mxu0 %v6377
    %6475 = vmatpush2.msra.mxu0 %v6376
    %6476 = vmatprep.subr.mxu0 %v6375
    %6477 = vmatpush2.msra.mxu0 %v6374
    %6478 = vmatprep.subr.mxu0 %v6373
    %6479 = vmatpush2.msra.mxu0 %v6372
    %6480 = vmatprep.mubr.f32.mxu0 %v6414
    %6481 = vmatmul.mubr.f32.gmra.mxu0 %v6338
    %v6482 = vpop.f32.mrf.mxu0
    %v6483 = vadd.f32 %v6405, %v6482
    %v6484 = vpop.f32.mrf.mxu0
    %v6485 = vadd.f32 %v6409, %v6484
    %6486 = vdwg.mxu0
    %v6487 = vmax.f32 %v6483, 0.0
    %v6488 = vmax.f32 %v6485, 0.0
    %v6489 = vld [vmem:[%s17] sm:$0xff]
    %v6490 = vld [vmem:[%s17 + $0x8] sm:$0xff]
    %v6491 = vld [vmem:[%s17 + $0x10] sm:$0xff]
    %v6492 = vld [vmem:[%s17 + $0x18] sm:$0xff]
    %v6493 = vld [vmem:[%s17 + $0x20] sm:$0xff]
    %v6494 = vld [vmem:[%s17 + $0x28] sm:$0xff]
    %v6495 = vld [vmem:[%s17 + $0x30] sm:$0xff]
    %v6496 = vld [vmem:[%s17 + $0x38] sm:$0xff]
    %v6497 = vld [vmem:[%s17 + $0x40] sm:$0xff]
    %v6498 = vld [vmem:[%s17 + $0x48] sm:$0xff]
    %v6499 = vld [vmem:[%s17 + $0x50] sm:$0xff]
    %v6500 = vld [vmem:[%s17 + $0x58] sm:$0xff]
    %v6501 = vld [vmem:[%s17 + $0x60] sm:$0xff]
    %v6502 = vld [vmem:[%s17 + $0x68] sm:$0xff]
    %v6503 = vld [vmem:[%s17 + $0x70] sm:$0xff]
    %v6504 = vld [vmem:[%s17 + $0x78] sm:$0xff]
    %v6505 = vld [vmem:[%s17 + $0x80] sm:$0xff]
    %v6506 = vld [vmem:[%s17 + $0x88] sm:$0xff]
    %v6507 = vld [vmem:[%s18] sm:$0x1]
    %v6509 = vlaneseq
    %v6510 = vshrl.u32 %v6509, 7
    %v6511 = vsub.s32 0, %v6510
    %v6512 = vrot.slane %v6507, %v6511
    %v6515 = vsel %vm5714, %v6488, 0
    %6517 = vmatprep.subr.mxu0 0.0
    %6518 = vmatpush1.msra.mxu0 %v6504
    %6519 = vmatprep.subr.mxu0 0.0
    %6520 = vmatpush1.msra.mxu0 %v6503
    %6521 = vmatprep.subr.mxu0 0.0
    %6522 = vmatpush1.msra.mxu0 %v6502
    %6523 = vmatprep.subr.mxu0 0.0
    %6524 = vmatpush1.msra.mxu0 %v6501
    %6525 = vmatprep.subr.mxu0 0.0
    %6526 = vmatpush1.msra.mxu0 %v6500
    %6527 = vmatprep.subr.mxu0 0.0
    %6528 = vmatpush1.msra.mxu0 %v6499
    %6529 = vmatprep.subr.mxu0 0.0
    %6530 = vmatpush1.msra.mxu0 %v6498
    %6531 = vmatprep.subr.mxu0 0.0
    %6532 = vmatpush1.msra.mxu0 %v6497
    %6533 = vmatprep.subr.mxu0 0.0
    %6534 = vmatpush1.msra.mxu0 %v6496
    %6535 = vmatprep.subr.mxu0 0.0
    %6536 = vmatpush1.msra.mxu0 %v6495
    %6537 = vmatprep.subr.mxu0 0.0
    %6538 = vmatpush1.msra.mxu0 %v6494
    %6539 = vmatprep.subr.mxu0 0.0
    %6540 = vmatpush1.msra.mxu0 %v6493
    %6541 = vmatprep.subr.mxu0 0.0
    %6542 = vmatpush1.msra.mxu0 %v6492
    %6543 = vmatprep.subr.mxu0 0.0
    %6544 = vmatpush1.msra.mxu0 %v6491
    %6545 = vmatprep.subr.mxu0 0.0
    %6546 = vmatpush1.msra.mxu0 %v6490
    %6547 = vmatprep.subr.mxu0 0.0
    %6548 = vmatpush1.msra.mxu0 %v6489
    %6549 = vmatprep.subr.mxu0 0.0
    %6550 = vmatpush2.msra.mxu0 0.0
    %6551 = vmatprep.subr.mxu0 0.0
    %6552 = vmatpush2.msra.mxu0 0.0
    %6553 = vmatprep.subr.mxu0 0.0
    %6554 = vmatpush2.msra.mxu0 0.0
    %6555 = vmatprep.subr.mxu0 0.0
    %6556 = vmatpush2.msra.mxu0 0.0
    %6557 = vmatprep.subr.mxu0 0.0
    %6558 = vmatpush2.msra.mxu0 0.0
    %6559 = vmatprep.subr.mxu0 0.0
    %6560 = vmatpush2.msra.mxu0 0.0
    %6561 = vmatprep.subr.mxu0 0.0
    %6562 = vmatpush2.msra.mxu0 0.0
    %6563 = vmatprep.subr.mxu0 0.0
    %6564 = vmatpush2.msra.mxu0 0.0
    %6565 = vmatprep.subr.mxu0 0.0
    %6566 = vmatpush2.msra.mxu0 0.0
    %6567 = vmatprep.subr.mxu0 0.0
    %6568 = vmatpush2.msra.mxu0 0.0
    %6569 = vmatprep.subr.mxu0 0.0
    %6570 = vmatpush2.msra.mxu0 0.0
    %6571 = vmatprep.subr.mxu0 0.0
    %6572 = vmatpush2.msra.mxu0 0.0
    %6573 = vmatprep.subr.mxu0 0.0
    %6574 = vmatpush2.msra.mxu0 0.0
    %6575 = vmatprep.subr.mxu0 0.0
    %6576 = vmatpush2.msra.mxu0 0.0
    %6577 = vmatprep.subr.mxu0 0.0
    %6578 = vmatpush2.msra.mxu0 %v6506
    %6579 = vmatprep.subr.mxu0 0.0
    %6580 = vmatpush2.msra.mxu0 %v6505
    %6581 = vmatprep.mubr.f32.mxu0 %v6515
    %6582 = vmatmul.mubr.f32.gmra.mxu0 %v6487
    %v6583 = vpop.f32.mrf.mxu0
    %v6584 = vadd.f32 %v6512, %v6583
    %v6585 = vpop.f32.mrf.mxu0
    %6586 = vdwg.mxu0
    %v6587 = vmax.f32 %v6584, 0.0
    %v6588 = vld [vmem:[%s19] sm:$0xff]
    %v6589 = vld [vmem:[%s19 + $0x8] sm:$0xff]
    %v6590 = vld [vmem:[%s19 + $0x10] sm:$0xff]
    %v6591 = vld [vmem:[%s19 + $0x18] sm:$0xff]
    %v6592 = vld [vmem:[%s19 + $0x20] sm:$0xff]
    %v6593 = vld [vmem:[%s19 + $0x28] sm:$0xff]
    %v6594 = vld [vmem:[%s19 + $0x30] sm:$0xff]
    %v6595 = vld [vmem:[%s19 + $0x38] sm:$0xff]
    %v6596 = vld [vmem:[%s19 + $0x40] sm:$0xff]
    %v6597 = vld [vmem:[%s20] sm:$0x1]
    %v6599 = vlaneseq
    %v6600 = vshrl.u32 %v6599, 7
    %v6601 = vsub.s32 0, %v6600
    %v6602 = vrot.slane %v6597, %v6601
    %v6605 = vsel %vm1133, %v6587, 0
    %6607 = vmatprep.subr.mxu0 0.0
    %6608 = vmatpush1.msra.mxu0 0.0
    %6609 = vmatprep.subr.mxu0 0.0
    %6610 = vmatpush1.msra.mxu0 0.0
    %6611 = vmatprep.subr.mxu0 0.0
    %6612 = vmatpush1.msra.mxu0 0.0
    %6613 = vmatprep.subr.mxu0 0.0
    %6614 = vmatpush1.msra.mxu0 0.0
    %6615 = vmatprep.subr.mxu0 0.0
    %6616 = vmatpush1.msra.mxu0 0.0
    %6617 = vmatprep.subr.mxu0 0.0
    %6618 = vmatpush1.msra.mxu0 0.0
    %6619 = vmatprep.subr.mxu0 0.0
    %6620 = vmatpush1.msra.mxu0 0.0
    %6621 = vmatprep.subr.mxu0 0.0
    %6622 = vmatpush1.msra.mxu0 %v6596
    %6623 = vmatprep.subr.mxu0 0.0
    %6624 = vmatpush1.msra.mxu0 %v6595
    %6625 = vmatprep.subr.mxu0 0.0
    %6626 = vmatpush1.msra.mxu0 %v6594
    %6627 = vmatprep.subr.mxu0 0.0
    %6628 = vmatpush1.msra.mxu0 %v6593
    %6629 = vmatprep.subr.mxu0 0.0
    %6630 = vmatpush1.msra.mxu0 %v6592
    %6631 = vmatprep.subr.mxu0 0.0
    %6632 = vmatpush1.msra.mxu0 %v6591
    %6633 = vmatprep.subr.mxu0 0.0
    %6634 = vmatpush1.msra.mxu0 %v6590
    %6635 = vmatprep.subr.mxu0 0.0
    %6636 = vmatpush1.msra.mxu0 %v6589
    %6637 = vmatprep.subr.mxu0 0.0
    %6638 = vmatpush1.msra.mxu0 %v6588
    %6639 = vmatprep.subr.mxu0 0.0
    %6640 = vmatpush2.msra.mxu0 0.0
    %6641 = vmatprep.subr.mxu0 0.0
    %6642 = vmatpush2.msra.mxu0 0.0
    %6643 = vmatprep.subr.mxu0 0.0
    %6644 = vmatpush2.msra.mxu0 0.0
    %6645 = vmatprep.subr.mxu0 0.0
    %6646 = vmatpush2.msra.mxu0 0.0
    %6647 = vmatprep.subr.mxu0 0.0
    %6648 = vmatpush2.msra.mxu0 0.0
    %6649 = vmatprep.subr.mxu0 0.0
    %6650 = vmatpush2.msra.mxu0 0.0
    %6651 = vmatprep.subr.mxu0 0.0
    %6652 = vmatpush2.msra.mxu0 0.0
    %6653 = vmatprep.subr.mxu0 0.0
    %6654 = vmatpush2.msra.mxu0 0.0
    %6655 = vmatprep.subr.mxu0 0.0
    %6656 = vmatpush2.msra.mxu0 0.0
    %6657 = vmatprep.subr.mxu0 0.0
    %6658 = vmatpush2.msra.mxu0 0.0
    %6659 = vmatprep.subr.mxu0 0.0
    %6660 = vmatpush2.msra.mxu0 0.0
    %6661 = vmatprep.subr.mxu0 0.0
    %6662 = vmatpush2.msra.mxu0 0.0
    %6663 = vmatprep.subr.mxu0 0.0
    %6664 = vmatpush2.msra.mxu0 0.0
    %6665 = vmatprep.subr.mxu0 0.0
    %6666 = vmatpush2.msra.mxu0 0.0
    %6667 = vmatprep.subr.mxu0 0.0
    %6668 = vmatpush2.msra.mxu0 0.0
    %6669 = vmatprep.subr.mxu0 0.0
    %6670 = vmatpush2.msra.mxu0 0.0
    %6671 = vmatprep.mubr.f32.mxu0 0.0
    %6672 = vmatmul.mubr.f32.gmra.mxu0 %v6605
    %v6673 = vpop.f32.mrf.mxu0
    %v6674 = vadd.f32 %v6602, %v6673
    %v6675 = vpop.f32.mrf.mxu0
    %6676 = vdwg.mxu0
    %6677 = vst [vmem:[#allocation3] sm:$0x3] %v6674
    // Predicated region
    $region86: #{mymodel_forward.1} parent=1 // pred_check
      _
    $region87: #{mymodel_forward.1} parent=1 // pred_check_branch
      %6679 = sbr.rel (0) target = $region89
    $region88: #{mymodel_forward.1} parent=1 // pred_region
      %s6681 = ssub.s32 32, 32
      %6682 = vsyncadd [#allocation4], %s6681
      %s6684 = sshll.u32 [#allocation3], 4
      %s6685 = int_to_ptr.vmem [resolvable:$true] %s6684
      %6687 = dma.vmem_to_hbm [thread:$0]  %s6685, 32, %s21, [#allocation4]
    $region89: #{mymodel_forward.1} parent=1 // pred_fallthru
      _
    // Predicated region
    $region90: #{mymodel_forward.1} parent=1 // pred_check
      _
    $region91: #{mymodel_forward.1} parent=1 // pred_check_branch
      %6689 = sbr.rel (0) target = $region93
    $region92: #{mymodel_forward.1} parent=1 // pred_region
      %6690 = dma.done [#allocation4], 32
    $region93: #{mymodel_forward.1} parent=1 // pred_fallthru
      _
    %6691 = vsyncpa [#allocation4], 1

</llo_original>
